<compile_context>
chip_gen: v7x
topology: tpu7x:2x2x1
jax: 0.10.0
libtpu: 0.0.40
codegen_flags: <defaults>
</compile_context>

<pallas_src>
import numpy as np
import jax
import jax.numpy as jnp
from jax.experimental import pallas as pl
from jax.experimental.pallas import tpu as pltpu

HID = 512            # fixed hidden width in the module
NET_ARCH = [64, 64]  # pi / vf head widths (activation_fn = ReLU)
HEAD_PAD = 128       # both 64-wide heads packed into one 128-lane block
TM = 256             # default token tile (rows per grid step)


def _round_up(x, m):
    return ((x + m - 1) // m) * m


# --------------------------------- kernel ------------------------------------


def _fused_kernel(x_ref, w1, b1,
                  pw2, pb2, pw3, pb3, pw4, pb4, pw5, pb5,
                  qw2, qb2, qw3, qb3, qw4, qb4, qw5, qb5,
                  ph1w, qh1w, hb1, h2w, hb2, fw, fb,
                  out_ref):
    f32, bf16 = jnp.float32, jnp.bfloat16
    x = x_ref[...]  # (TM, Fp) bf16 — one-hot(action_id) already folded into features

    # layer 1 of BOTH nets fused into one short-K, wide-N matmul: (TM,Fp)x(Fp,1024)
    h1c = jnp.maximum(jnp.dot(x, w1[...], preferred_element_type=f32) + b1[...], 0.0)
    h1p = h1c[:, :HID]     # policy trunk h1   (lane-aligned static slices)
    h1q = h1c[:, HID:]     # q trunk h1

    def trunk(h1, w2, b2, w3, b3, w4, b4, w5, b5):
        # _h2 = relu(linear3(relu(linear2(h1))) + h1)
        t = jnp.maximum(jnp.dot(h1.astype(bf16), w2[...],
                                preferred_element_type=f32) + b2[...], 0.0)
        h2 = jnp.maximum(jnp.dot(t.astype(bf16), w3[...],
                                 preferred_element_type=f32) + b3[...] + h1, 0.0)
        # h = relu(linear5(relu(linear4(_h2))) + _h2 + _h1)
        t = jnp.maximum(jnp.dot(h2.astype(bf16), w4[...],
                                preferred_element_type=f32) + b4[...], 0.0)
        h = jnp.maximum(jnp.dot(t.astype(bf16), w5[...],
                                preferred_element_type=f32) + b5[...] + h2 + h1, 0.0)
        return h.astype(bf16)  # (TM, HID)

    hp = trunk(h1p, pw2, pb2, pw3, pb3, pw4, pb4, pw5, pb5)
    hq = trunk(h1q, qw2, qb2, qw3, qb3, qw4, qb4, qw5, qb5)

    # heads packed into disjoint lane halves: policy -> lanes 0..63, q -> 64..127.
    g = jnp.maximum(
        jnp.dot(hp, ph1w[...], preferred_element_type=f32)
        + jnp.dot(hq, qh1w[...], preferred_element_type=f32)
        + hb1[...], 0.0)
    # head layer 2: single block-diagonal (128,128) matmul for both heads
    g = jnp.maximum(jnp.dot(g.astype(bf16), h2w[...],
                            preferred_element_type=f32) + hb2[...], 0.0)
    # both final 64->1 projections in one matmul: lane 0 = policy logit, lane 1 = q
    out_ref[...] = jnp.dot(g.astype(bf16), fw[...],
                           preferred_element_type=f32) + fb[...]


def fused_tokens_forward(x, kparams, tm=TM):
    """x: (T, Fp) bf16 tokens. Returns (policy_logit, q_value), each (T,) f32."""
    T, Fp = x.shape
    if T == 0:  # empty grid guard
        return jnp.zeros((0,), jnp.float32), jnp.zeros((0,), jnp.float32)

    # Adaptive token tile: don't pad tiny T up to a full 256-row tile, and aim for
    # n_tiles >= 2 so the "parallel" grid axis can shard across v7x's 2 TensorCores.
    tm_eff = min(tm, max(16, _round_up(-(-T // 2), 16)))
    n_tiles = pl.cdiv(T, tm_eff)
    Tp = n_tiles * tm_eff
    if Tp != T:
        x = jnp.pad(x, ((0, Tp - T), (0, 0)))

    flat = kparams["flat"]
    # Grid-invariant weights/biases (constant index_map) -> single-buffered:
    # frees ~4.7 MiB of VMEM vs. the default double buffering.
    weight_specs = [
        pl.BlockSpec(tuple(p.shape), lambda i: (0, 0), pipeline_mode=pl.Buffered(1))
        for p in flat
    ]

    weight_bytes = sum(int(np.prod(p.shape)) * p.dtype.itemsize for p in flat)
    flops_per_row = 2 * (Fp * 2 * HID            # fused layer 1 (N=1024)
                         + 2 * 4 * HID * HID     # 2 trunks x 4 layers of 512x512
                         + 2 * HID * HEAD_PAD    # 2 head layer-1 matmuls
                         + 2 * HEAD_PAD * HEAD_PAD)  # packed head-2 + final
    cost = pl.CostEstimate(
        flops=int(Tp) * int(flops_per_row),
        transcendentals=0,
        bytes_accessed=int(weight_bytes + Tp * Fp * 2 + Tp * HEAD_PAD * 4))

    out = pl.pallas_call(
        _fused_kernel,
        out_shape=jax.ShapeDtypeStruct((Tp, HEAD_PAD), jnp.float32),
        grid_spec=pltpu.PrefetchScalarGridSpec(
            num_scalar_prefetch=0,
            grid=(n_tiles,),
            in_specs=[pl.BlockSpec((tm_eff, Fp), lambda i: (i, 0))] + weight_specs,
            out_specs=pl.BlockSpec((tm_eff, HEAD_PAD), lambda i: (i, 0)),
        ),
        compiler_params=pltpu.CompilerParams(
            dimension_semantics=("parallel",),
            vmem_limit_bytes=32 * 1024 * 1024),
        cost_estimate=cost,
    )(x, *flat)
    return out[:T, 0], out[:T, 1]


# ---------------- parameter construction (deterministic, orthogonal init) -----


def _orth(key, shape, gain):
    return jax.nn.initializers.orthogonal(scale=gain)(key, shape, jnp.float32)


def _orth_linear(key, in_dim, out_dim, gain):
    # PyTorch: weight (out, in) orthogonal_, bias zero.  Stored transposed (in, out).
    w = _orth(key, (out_dim, in_dim), gain).T
    return w, jnp.zeros((out_dim,), jnp.float32)


def build_params(key, feature_dim, action_dim):
    keys = list(jax.random.split(key, 20))
    it = iter(keys)
    s2 = float(np.sqrt(2.0))

    def trunk():
        layers = [_orth_linear(next(it), feature_dim, HID, s2)]
        for _ in range(4):
            layers.append(_orth_linear(next(it), HID, HID, s2))
        return layers

    def head(gain):
        dims = [HID] + NET_ARCH
        layers = [_orth_linear(next(it), a, b, gain) for a, b in zip(dims[:-1], dims[1:])]
        layers.append(_orth_linear(next(it), dims[-1], 1, gain))
        return layers

    policy_trunk = trunk()
    q_trunk = trunk()
    policy_head = head(0.01)   # policy_net gain 0.01
    q_head = head(1.0)         # action_value_net gain 1
    embed = _orth(next(it), (action_dim, HID), s2)
    return {"policy_trunk": policy_trunk, "policy_head": policy_head,
            "q_trunk": q_trunk, "q_head": q_head, "embed": embed}


def pack_kernel_params(params, action_dim):
    """Build the flat, kernel-ready (bf16 weights / f32 biases) operand list."""
    bf16, f32 = jnp.bfloat16, jnp.float32
    embed = params["embed"]
    feature_dim = params["policy_trunk"][0][0].shape[0]
    fin = feature_dim + action_dim                 # features + one-hot(action_id)
    fp = _round_up(fin, 128)                       # lane-pad the input width

    def pad2(a, rows, cols):
        return jnp.pad(a, ((0, rows - a.shape[0]), (0, cols - a.shape[1])))

    # ---- fused layer 1 of both nets (embedding folded in, concat along N) ----
    def fold_w1(trunk):
        w1, b1 = trunk[0]
        return pad2(jnp.concatenate([w1, embed], axis=0), fp, HID), b1

    pw1f, pb1 = fold_w1(params["policy_trunk"])
    qw1f, qb1 = fold_w1(params["q_trunk"])
    w1 = jnp.concatenate([pw1f, qw1f], axis=1).astype(bf16)            # (fp, 1024)
    b1 = jnp.concatenate([pb1, qb1]).reshape(1, 2 * HID).astype(f32)   # (1, 1024)

    def trunk_rest(trunk):
        flat = []
        for w, b in trunk[1:]:
            flat += [w.astype(bf16), b.reshape(1, HID).astype(f32)]
        return flat

    p_rest = trunk_rest(params["policy_trunk"])
    q_rest = trunk_rest(params["q_trunk"])

    # ---- heads packed into disjoint lane halves (policy 0..63, q 64..127) ----
    (ph1w_r, ph1b_r), (ph2w_r, ph2b_r), (ph3w_r, ph3b_r) = params["policy_head"]
    (qh1w_r, qh1b_r), (qh2w_r, qh2b_r), (qh3w_r, qh3b_r) = params["q_head"]
    half = NET_ARCH[0]                    # 64; 2*half == HEAD_PAD

    ph1w = jnp.zeros((HID, HEAD_PAD), f32).at[:, :half].set(ph1w_r)
    qh1w = jnp.zeros((HID, HEAD_PAD), f32).at[:, half:2 * half].set(qh1w_r)
    hb1 = (jnp.zeros((1, HEAD_PAD), f32)
           .at[0, :half].set(ph1b_r).at[0, half:2 * half].set(qh1b_r))

    h2w = (jnp.zeros((HEAD_PAD, HEAD_PAD), f32)
           .at[:half, :half].set(ph2w_r)
           .at[half:2 * half, half:2 * half].set(qh2w_r))
    hb2 = (jnp.zeros((1, HEAD_PAD), f32)
           .at[0, :half].set(ph2b_r).at[0, half:2 * half].set(qh2b_r))

    # final 64->1 of both heads in one matmul: lane 0 <- policy, lane 1 <- q
    fw = (jnp.zeros((HEAD_PAD, HEAD_PAD), f32)
          .at[:half, 0].set(ph3w_r[:, 0])
          .at[half:2 * half, 1].set(qh3w_r[:, 0]))
    fb = jnp.zeros((1, HEAD_PAD), f32).at[0, 0].set(ph3b_r[0]).at[0, 1].set(qh3b_r[0])

    flat = tuple([w1, b1] + p_rest + q_rest +
                 [ph1w.astype(bf16), qh1w.astype(bf16), hb1,
                  h2w.astype(bf16), hb2, fw.astype(bf16), fb])
    return {"flat": flat, "fp": fp}


# ---------------- forward (mirrors NeuRDSequentialNetwork.forward) ------------


def neurd_forward(features, action_mask, action_feats_list, action_mask_np, kparams,
                  tm=TM):
    """
    features:        (B, obs_dim) float
    action_mask:     (B, A) float {0,1}
    action_feats:    list of B arrays (n_avail_i, action_feat_dim)
    action_mask_np:  numpy copy of the mask (needed for static shapes)
    returns (logits, q) each (B, A)
    """
    B = features.shape[0]
    A = action_mask_np.shape[-1]
    bidx_np, aid_np = np.nonzero(action_mask_np)   # row-major, like torch.nonzero
    bidx = jnp.asarray(bidx_np, jnp.int32)
    aid = jnp.asarray(aid_np, jnp.int32)

    # features.type(LongTensor).float() -> truncation toward zero, then
    # repeat_interleave by n_avail == gather at bidx (nonzero is row-major)
    f = features.astype(jnp.int32).astype(jnp.float32)[bidx]
    a_m = action_mask.astype(jnp.float32)[bidx]
    a_f = jnp.concatenate(action_feats_list, axis=0)
    onehot = jax.nn.one_hot(aid, A, dtype=jnp.float32)   # replaces action_embed gather
    x = jnp.concatenate([f, a_m, a_f, onehot], axis=-1)  # (T, feature_dim + A)

    fp = kparams["fp"]
    if x.shape[1] != fp:
        x = jnp.pad(x, ((0, 0), (0, fp - x.shape[1])))
    x = x.astype(jnp.bfloat16)

    pol, qv = fused_tokens_forward(x, kparams, tm=tm)

    # logits[action_mask.bool()] = policy_net(policy_h).flatten()  (same for q)
    logits = jnp.zeros((B, A), jnp.float32).at[bidx, aid].set(pol)
    q = jnp.zeros((B, A), jnp.float32).at[bidx, aid].set(qv)
    return logits, q


# ---------------- pure-JAX reference (mirrors kernel precision) ---------------


def reference_forward(features, action_mask, action_feats_list, action_mask_np, params):
    bf16, f32 = jnp.bfloat16, jnp.float32
    B = features.shape[0]
    A = action_mask_np.shape[-1]
    bidx_np, aid_np = np.nonzero(action_mask_np)
    bidx = jnp.asarray(bidx_np, jnp.int32)
    aid = jnp.asarray(aid_np, jnp.int32)

    f = features.astype(jnp.int32).astype(jnp.float32)[bidx]
    a_m = action_mask.astype(jnp.float32)[bidx]
    a_f = jnp.concatenate(action_feats_list, axis=0)
    x = jnp.concatenate([f, a_m, a_f], axis=-1)

    def lin(v, w, b):
        return jnp.dot(v.astype(bf16), w.astype(bf16), preferred_element_type=f32) + b

    emb = params["embed"].astype(bf16).astype(f32)[aid]

    def run(trunk, head):
        (w1, b1), (w2, b2), (w3, b3), (w4, b4), (w5, b5) = trunk
        h1 = jax.nn.relu(lin(x, w1, b1) + emb)
        h2 = jax.nn.relu(lin(jax.nn.relu(lin(h1, w2, b2)), w3, b3) + h1)
        h = jax.nn.relu(lin(jax.nn.relu(lin(h2, w4, b4)), w5, b5) + h2 + h1)
        (hw1, hb1), (hw2, hb2), (hw3, hb3) = head
        g = jax.nn.relu(lin(h, hw1, hb1))
        g = jax.nn.relu(lin(g, hw2, hb2))
        return lin(g, hw3, hb3)[:, 0]

    pol = run(params["policy_trunk"], params["policy_head"])
    qv = run(params["q_trunk"], params["q_head"])
    logits = jnp.zeros((B, A), f32).at[bidx, aid].set(pol)
    q = jnp.zeros((B, A), f32).at[bidx, aid].set(qv)
    return logits, q


if __name__ == "__main__":
    key = jax.random.PRNGKey(0)
    k_feat, k_af, k_params = jax.random.split(key, 3)

    B, A = 2, 8
    obs_dim, act_feat_dim = 16, 8
    feature_dim = obs_dim + A + act_feat_dim   # input dim of policy_linear / q_linear

    # deterministic action mask with varying availability per row
    mask_np = np.zeros((B, A), np.float32)
    mask_np[0, [0, 2, 3, 5, 7]] = 1.0
    mask_np[1, [1, 4, 6]] = 1.0
    action_mask = jnp.asarray(mask_np)

    features = 3.0 * jax.random.normal(k_feat, (B, obs_dim), jnp.float32)

    # per-batch available-action features (concatenated along dim 0 in forward)
    action_feats_list = []
    af_keys = jax.random.split(k_af, B)
    for b in range(B):
        n_avail = int(mask_np[b].sum())
        action_feats_list.append(
            jax.random.normal(af_keys[b], (n_avail, act_feat_dim), jnp.float32))

    params = build_params(k_params, feature_dim, A)
    kparams = pack_kernel_params(params, A)

    logits, q = neurd_forward(features, action_mask, action_feats_list, mask_np, kparams)
    jax.block_until_ready((logits, q))

    ref_logits, ref_q = reference_forward(features, action_mask, action_feats_list,
                                          mask_np, params)
    jax.block_until_ready((ref_logits, ref_q))

    assert logits.shape == (B, A) and q.shape == (B, A)
    assert bool(jnp.all(jnp.isfinite(logits))) and bool(jnp.all(jnp.isfinite(q)))
    assert bool(jnp.allclose(logits, ref_logits, rtol=2e-2, atol=2e-2))
    assert bool(jnp.allclose(q, ref_q, rtol=2e-2, atol=2e-2))
    print("KERNEL_OK")
</pallas_src>

<mosaic_0001>
module attributes {stable_mosaic.version = 11 : i64} {
  func.func @_fused_kernel(%arg0: i32, %arg1: memref<16x128xbf16, #tpu.memory_space<vmem>>, %arg2: memref<128x1024xbf16, #tpu.memory_space<vmem>>, %arg3: memref<1x1024xf32, #tpu.memory_space<vmem>>, %arg4: memref<512x512xbf16, #tpu.memory_space<vmem>>, %arg5: memref<1x512xf32, #tpu.memory_space<vmem>>, %arg6: memref<512x512xbf16, #tpu.memory_space<vmem>>, %arg7: memref<1x512xf32, #tpu.memory_space<vmem>>, %arg8: memref<512x512xbf16, #tpu.memory_space<vmem>>, %arg9: memref<1x512xf32, #tpu.memory_space<vmem>>, %arg10: memref<512x512xbf16, #tpu.memory_space<vmem>>, %arg11: memref<1x512xf32, #tpu.memory_space<vmem>>, %arg12: memref<512x512xbf16, #tpu.memory_space<vmem>>, %arg13: memref<1x512xf32, #tpu.memory_space<vmem>>, %arg14: memref<512x512xbf16, #tpu.memory_space<vmem>>, %arg15: memref<1x512xf32, #tpu.memory_space<vmem>>, %arg16: memref<512x512xbf16, #tpu.memory_space<vmem>>, %arg17: memref<1x512xf32, #tpu.memory_space<vmem>>, %arg18: memref<512x512xbf16, #tpu.memory_space<vmem>>, %arg19: memref<1x512xf32, #tpu.memory_space<vmem>>, %arg20: memref<512x128xbf16, #tpu.memory_space<vmem>>, %arg21: memref<512x128xbf16, #tpu.memory_space<vmem>>, %arg22: memref<1x128xf32, #tpu.memory_space<vmem>>, %arg23: memref<128x128xbf16, #tpu.memory_space<vmem>>, %arg24: memref<1x128xf32, #tpu.memory_space<vmem>>, %arg25: memref<128x128xbf16, #tpu.memory_space<vmem>>, %arg26: memref<1x128xf32, #tpu.memory_space<vmem>>, %arg27: memref<16x128xf32, #tpu.memory_space<vmem>>) attributes {dimension_semantics = [#tpu.dimension_semantics<parallel>], iteration_bounds = array<i64: 1>, scalar_prefetch = 0 : i64, scratch_operands = 0 : i64, tpu.core_type = #tpu.core_type<tc>, window_params = [{transform_indices = @transform_0, window_bounds = array<i64: 16, 128>}, {pipeline_mode = #tpu.pipeline_mode<synchronous>, transform_indices = @transform_1, window_bounds = array<i64: 128, 1024>}, {pipeline_mode = #tpu.pipeline_mode<synchronous>, transform_indices = @transform_2, window_bounds = array<i64: 1, 1024>}, {pipeline_mode = #tpu.pipeline_mode<synchronous>, transform_indices = @transform_3, window_bounds = array<i64: 512, 512>}, {pipeline_mode = #tpu.pipeline_mode<synchronous>, transform_indices = @transform_4, window_bounds = array<i64: 1, 512>}, {pipeline_mode = #tpu.pipeline_mode<synchronous>, transform_indices = @transform_5, window_bounds = array<i64: 512, 512>}, {pipeline_mode = #tpu.pipeline_mode<synchronous>, transform_indices = @transform_6, window_bounds = array<i64: 1, 512>}, {pipeline_mode = #tpu.pipeline_mode<synchronous>, transform_indices = @transform_7, window_bounds = array<i64: 512, 512>}, {pipeline_mode = #tpu.pipeline_mode<synchronous>, transform_indices = @transform_8, window_bounds = array<i64: 1, 512>}, {pipeline_mode = #tpu.pipeline_mode<synchronous>, transform_indices = @transform_9, window_bounds = array<i64: 512, 512>}, {pipeline_mode = #tpu.pipeline_mode<synchronous>, transform_indices = @transform_10, window_bounds = array<i64: 1, 512>}, {pipeline_mode = #tpu.pipeline_mode<synchronous>, transform_indices = @transform_11, window_bounds = array<i64: 512, 512>}, {pipeline_mode = #tpu.pipeline_mode<synchronous>, transform_indices = @transform_12, window_bounds = array<i64: 1, 512>}, {pipeline_mode = #tpu.pipeline_mode<synchronous>, transform_indices = @transform_13, window_bounds = array<i64: 512, 512>}, {pipeline_mode = #tpu.pipeline_mode<synchronous>, transform_indices = @transform_14, window_bounds = array<i64: 1, 512>}, {pipeline_mode = #tpu.pipeline_mode<synchronous>, transform_indices = @transform_15, window_bounds = array<i64: 512, 512>}, {pipeline_mode = #tpu.pipeline_mode<synchronous>, transform_indices = @transform_16, window_bounds = array<i64: 1, 512>}, {pipeline_mode = #tpu.pipeline_mode<synchronous>, transform_indices = @transform_17, window_bounds = array<i64: 512, 512>}, {pipeline_mode = #tpu.pipeline_mode<synchronous>, transform_indices = @transform_18, window_bounds = array<i64: 1, 512>}, {pipeline_mode = #tpu.pipeline_mode<synchronous>, transform_indices = @transform_19, window_bounds = array<i64: 512, 128>}, {pipeline_mode = #tpu.pipeline_mode<synchronous>, transform_indices = @transform_20, window_bounds = array<i64: 512, 128>}, {pipeline_mode = #tpu.pipeline_mode<synchronous>, transform_indices = @transform_21, window_bounds = array<i64: 1, 128>}, {pipeline_mode = #tpu.pipeline_mode<synchronous>, transform_indices = @transform_22, window_bounds = array<i64: 128, 128>}, {pipeline_mode = #tpu.pipeline_mode<synchronous>, transform_indices = @transform_23, window_bounds = array<i64: 1, 128>}, {pipeline_mode = #tpu.pipeline_mode<synchronous>, transform_indices = @transform_24, window_bounds = array<i64: 128, 128>}, {pipeline_mode = #tpu.pipeline_mode<synchronous>, transform_indices = @transform_25, window_bounds = array<i64: 1, 128>}, {transform_indices = @transform_26, window_bounds = array<i64: 16, 128>}]} {
    %c0 = arith.constant 0 : index
    %c0_0 = arith.constant 0 : index
    %0 = vector.load %arg1[%c0, %c0_0] : memref<16x128xbf16, #tpu.memory_space<vmem>>, vector<16x128xbf16>
    %c0_1 = arith.constant 0 : index
    %c0_2 = arith.constant 0 : index
    %1 = vector.load %arg2[%c0_1, %c0_2] : memref<128x1024xbf16, #tpu.memory_space<vmem>>, vector<128x1024xbf16>
    %cst = arith.constant dense<0.000000e+00> : vector<16x1024xf32>
    %2 = tpu.matmul %0, %1, %cst {dimension_numbers = #tpu.dot_dimension_numbers<[1], [0], [0], [1], [0, 0, 1, 1], [], []>} : vector<16x128xbf16>, vector<128x1024xbf16>, vector<16x1024xf32> -> vector<16x1024xf32>
    %c0_3 = arith.constant 0 : index
    %c0_4 = arith.constant 0 : index
    %3 = vector.load %arg3[%c0_3, %c0_4] : memref<1x1024xf32, #tpu.memory_space<vmem>>, vector<1x1024xf32>
    %4 = vector.broadcast %3 : vector<1x1024xf32> to vector<16x1024xf32>
    %5 = arith.addf %2, %4 : vector<16x1024xf32>
    %cst_5 = arith.constant 0.000000e+00 : f32
    %6 = vector.broadcast %cst_5 : f32 to vector<16x1024xf32>
    %7 = arith.maximumf %5, %6 : vector<16x1024xf32>
    %8 = vector.extract_strided_slice %7 {offsets = [0, 0], sizes = [16, 512], strides = [1, 1]} : vector<16x1024xf32> to vector<16x512xf32>
    %9 = vector.extract_strided_slice %7 {offsets = [0, 512], sizes = [16, 512], strides = [1, 1]} : vector<16x1024xf32> to vector<16x512xf32>
    %10 = arith.truncf %8 : vector<16x512xf32> to vector<16x512xbf16>
    %c0_6 = arith.constant 0 : index
    %c0_7 = arith.constant 0 : index
    %11 = vector.load %arg4[%c0_6, %c0_7] : memref<512x512xbf16, #tpu.memory_space<vmem>>, vector<512x512xbf16>
    %cst_8 = arith.constant dense<0.000000e+00> : vector<16x512xf32>
    %12 = tpu.matmul %10, %11, %cst_8 {dimension_numbers = #tpu.dot_dimension_numbers<[1], [0], [0], [1], [0, 0, 1, 1], [], []>} : vector<16x512xbf16>, vector<512x512xbf16>, vector<16x512xf32> -> vector<16x512xf32>
    %c0_9 = arith.constant 0 : index
    %c0_10 = arith.constant 0 : index
    %13 = vector.load %arg5[%c0_9, %c0_10] : memref<1x512xf32, #tpu.memory_space<vmem>>, vector<1x512xf32>
    %14 = vector.broadcast %13 : vector<1x512xf32> to vector<16x512xf32>
    %15 = arith.addf %12, %14 : vector<16x512xf32>
    %cst_11 = arith.constant 0.000000e+00 : f32
    %16 = vector.broadcast %cst_11 : f32 to vector<16x512xf32>
    %17 = arith.maximumf %15, %16 : vector<16x512xf32>
    %18 = arith.truncf %17 : vector<16x512xf32> to vector<16x512xbf16>
    %c0_12 = arith.constant 0 : index
    %c0_13 = arith.constant 0 : index
    %19 = vector.load %arg6[%c0_12, %c0_13] : memref<512x512xbf16, #tpu.memory_space<vmem>>, vector<512x512xbf16>
    %cst_14 = arith.constant dense<0.000000e+00> : vector<16x512xf32>
    %20 = tpu.matmul %18, %19, %cst_14 {dimension_numbers = #tpu.dot_dimension_numbers<[1], [0], [0], [1], [0, 0, 1, 1], [], []>} : vector<16x512xbf16>, vector<512x512xbf16>, vector<16x512xf32> -> vector<16x512xf32>
    %c0_15 = arith.constant 0 : index
    %c0_16 = arith.constant 0 : index
    %21 = vector.load %arg7[%c0_15, %c0_16] : memref<1x512xf32, #tpu.memory_space<vmem>>, vector<1x512xf32>
    %22 = vector.broadcast %21 : vector<1x512xf32> to vector<16x512xf32>
    %23 = arith.addf %20, %22 : vector<16x512xf32>
    %24 = arith.addf %23, %8 : vector<16x512xf32>
    %cst_17 = arith.constant 0.000000e+00 : f32
    %25 = vector.broadcast %cst_17 : f32 to vector<16x512xf32>
    %26 = arith.maximumf %24, %25 : vector<16x512xf32>
    %27 = arith.truncf %26 : vector<16x512xf32> to vector<16x512xbf16>
    %c0_18 = arith.constant 0 : index
    %c0_19 = arith.constant 0 : index
    %28 = vector.load %arg8[%c0_18, %c0_19] : memref<512x512xbf16, #tpu.memory_space<vmem>>, vector<512x512xbf16>
    %cst_20 = arith.constant dense<0.000000e+00> : vector<16x512xf32>
    %29 = tpu.matmul %27, %28, %cst_20 {dimension_numbers = #tpu.dot_dimension_numbers<[1], [0], [0], [1], [0, 0, 1, 1], [], []>} : vector<16x512xbf16>, vector<512x512xbf16>, vector<16x512xf32> -> vector<16x512xf32>
    %c0_21 = arith.constant 0 : index
    %c0_22 = arith.constant 0 : index
    %30 = vector.load %arg9[%c0_21, %c0_22] : memref<1x512xf32, #tpu.memory_space<vmem>>, vector<1x512xf32>
    %31 = vector.broadcast %30 : vector<1x512xf32> to vector<16x512xf32>
    %32 = arith.addf %29, %31 : vector<16x512xf32>
    %cst_23 = arith.constant 0.000000e+00 : f32
    %33 = vector.broadcast %cst_23 : f32 to vector<16x512xf32>
    %34 = arith.maximumf %32, %33 : vector<16x512xf32>
    %35 = arith.truncf %34 : vector<16x512xf32> to vector<16x512xbf16>
    %c0_24 = arith.constant 0 : index
    %c0_25 = arith.constant 0 : index
    %36 = vector.load %arg10[%c0_24, %c0_25] : memref<512x512xbf16, #tpu.memory_space<vmem>>, vector<512x512xbf16>
    %cst_26 = arith.constant dense<0.000000e+00> : vector<16x512xf32>
    %37 = tpu.matmul %35, %36, %cst_26 {dimension_numbers = #tpu.dot_dimension_numbers<[1], [0], [0], [1], [0, 0, 1, 1], [], []>} : vector<16x512xbf16>, vector<512x512xbf16>, vector<16x512xf32> -> vector<16x512xf32>
    %c0_27 = arith.constant 0 : index
    %c0_28 = arith.constant 0 : index
    %38 = vector.load %arg11[%c0_27, %c0_28] : memref<1x512xf32, #tpu.memory_space<vmem>>, vector<1x512xf32>
    %39 = vector.broadcast %38 : vector<1x512xf32> to vector<16x512xf32>
    %40 = arith.addf %37, %39 : vector<16x512xf32>
    %41 = arith.addf %40, %26 : vector<16x512xf32>
    %42 = arith.addf %41, %8 : vector<16x512xf32>
    %cst_29 = arith.constant 0.000000e+00 : f32
    %43 = vector.broadcast %cst_29 : f32 to vector<16x512xf32>
    %44 = arith.maximumf %42, %43 : vector<16x512xf32>
    %45 = arith.truncf %44 : vector<16x512xf32> to vector<16x512xbf16>
    %46 = arith.truncf %9 : vector<16x512xf32> to vector<16x512xbf16>
    %c0_30 = arith.constant 0 : index
    %c0_31 = arith.constant 0 : index
    %47 = vector.load %arg12[%c0_30, %c0_31] : memref<512x512xbf16, #tpu.memory_space<vmem>>, vector<512x512xbf16>
    %cst_32 = arith.constant dense<0.000000e+00> : vector<16x512xf32>
    %48 = tpu.matmul %46, %47, %cst_32 {dimension_numbers = #tpu.dot_dimension_numbers<[1], [0], [0], [1], [0, 0, 1, 1], [], []>} : vector<16x512xbf16>, vector<512x512xbf16>, vector<16x512xf32> -> vector<16x512xf32>
    %c0_33 = arith.constant 0 : index
    %c0_34 = arith.constant 0 : index
    %49 = vector.load %arg13[%c0_33, %c0_34] : memref<1x512xf32, #tpu.memory_space<vmem>>, vector<1x512xf32>
    %50 = vector.broadcast %49 : vector<1x512xf32> to vector<16x512xf32>
    %51 = arith.addf %48, %50 : vector<16x512xf32>
    %cst_35 = arith.constant 0.000000e+00 : f32
    %52 = vector.broadcast %cst_35 : f32 to vector<16x512xf32>
    %53 = arith.maximumf %51, %52 : vector<16x512xf32>
    %54 = arith.truncf %53 : vector<16x512xf32> to vector<16x512xbf16>
    %c0_36 = arith.constant 0 : index
    %c0_37 = arith.constant 0 : index
    %55 = vector.load %arg14[%c0_36, %c0_37] : memref<512x512xbf16, #tpu.memory_space<vmem>>, vector<512x512xbf16>
    %cst_38 = arith.constant dense<0.000000e+00> : vector<16x512xf32>
    %56 = tpu.matmul %54, %55, %cst_38 {dimension_numbers = #tpu.dot_dimension_numbers<[1], [0], [0], [1], [0, 0, 1, 1], [], []>} : vector<16x512xbf16>, vector<512x512xbf16>, vector<16x512xf32> -> vector<16x512xf32>
    %c0_39 = arith.constant 0 : index
    %c0_40 = arith.constant 0 : index
    %57 = vector.load %arg15[%c0_39, %c0_40] : memref<1x512xf32, #tpu.memory_space<vmem>>, vector<1x512xf32>
    %58 = vector.broadcast %57 : vector<1x512xf32> to vector<16x512xf32>
    %59 = arith.addf %56, %58 : vector<16x512xf32>
    %60 = arith.addf %59, %9 : vector<16x512xf32>
    %cst_41 = arith.constant 0.000000e+00 : f32
    %61 = vector.broadcast %cst_41 : f32 to vector<16x512xf32>
    %62 = arith.maximumf %60, %61 : vector<16x512xf32>
    %63 = arith.truncf %62 : vector<16x512xf32> to vector<16x512xbf16>
    %c0_42 = arith.constant 0 : index
    %c0_43 = arith.constant 0 : index
    %64 = vector.load %arg16[%c0_42, %c0_43] : memref<512x512xbf16, #tpu.memory_space<vmem>>, vector<512x512xbf16>
    %cst_44 = arith.constant dense<0.000000e+00> : vector<16x512xf32>
    %65 = tpu.matmul %63, %64, %cst_44 {dimension_numbers = #tpu.dot_dimension_numbers<[1], [0], [0], [1], [0, 0, 1, 1], [], []>} : vector<16x512xbf16>, vector<512x512xbf16>, vector<16x512xf32> -> vector<16x512xf32>
    %c0_45 = arith.constant 0 : index
    %c0_46 = arith.constant 0 : index
    %66 = vector.load %arg17[%c0_45, %c0_46] : memref<1x512xf32, #tpu.memory_space<vmem>>, vector<1x512xf32>
    %67 = vector.broadcast %66 : vector<1x512xf32> to vector<16x512xf32>
    %68 = arith.addf %65, %67 : vector<16x512xf32>
    %cst_47 = arith.constant 0.000000e+00 : f32
    %69 = vector.broadcast %cst_47 : f32 to vector<16x512xf32>
    %70 = arith.maximumf %68, %69 : vector<16x512xf32>
    %71 = arith.truncf %70 : vector<16x512xf32> to vector<16x512xbf16>
    %c0_48 = arith.constant 0 : index
    %c0_49 = arith.constant 0 : index
    %72 = vector.load %arg18[%c0_48, %c0_49] : memref<512x512xbf16, #tpu.memory_space<vmem>>, vector<512x512xbf16>
    %cst_50 = arith.constant dense<0.000000e+00> : vector<16x512xf32>
    %73 = tpu.matmul %71, %72, %cst_50 {dimension_numbers = #tpu.dot_dimension_numbers<[1], [0], [0], [1], [0, 0, 1, 1], [], []>} : vector<16x512xbf16>, vector<512x512xbf16>, vector<16x512xf32> -> vector<16x512xf32>
    %c0_51 = arith.constant 0 : index
    %c0_52 = arith.constant 0 : index
    %74 = vector.load %arg19[%c0_51, %c0_52] : memref<1x512xf32, #tpu.memory_space<vmem>>, vector<1x512xf32>
    %75 = vector.broadcast %74 : vector<1x512xf32> to vector<16x512xf32>
    %76 = arith.addf %73, %75 : vector<16x512xf32>
    %77 = arith.addf %76, %62 : vector<16x512xf32>
    %78 = arith.addf %77, %9 : vector<16x512xf32>
    %cst_53 = arith.constant 0.000000e+00 : f32
    %79 = vector.broadcast %cst_53 : f32 to vector<16x512xf32>
    %80 = arith.maximumf %78, %79 : vector<16x512xf32>
    %81 = arith.truncf %80 : vector<16x512xf32> to vector<16x512xbf16>
    %c0_54 = arith.constant 0 : index
    %c0_55 = arith.constant 0 : index
    %82 = vector.load %arg20[%c0_54, %c0_55] : memref<512x128xbf16, #tpu.memory_space<vmem>>, vector<512x128xbf16>
    %cst_56 = arith.constant dense<0.000000e+00> : vector<16x128xf32>
    %83 = tpu.matmul %45, %82, %cst_56 {dimension_numbers = #tpu.dot_dimension_numbers<[1], [0], [0], [1], [0, 0, 1, 1], [], []>} : vector<16x512xbf16>, vector<512x128xbf16>, vector<16x128xf32> -> vector<16x128xf32>
    %c0_57 = arith.constant 0 : index
    %c0_58 = arith.constant 0 : index
    %84 = vector.load %arg21[%c0_57, %c0_58] : memref<512x128xbf16, #tpu.memory_space<vmem>>, vector<512x128xbf16>
    %cst_59 = arith.constant dense<0.000000e+00> : vector<16x128xf32>
    %85 = tpu.matmul %81, %84, %cst_59 {dimension_numbers = #tpu.dot_dimension_numbers<[1], [0], [0], [1], [0, 0, 1, 1], [], []>} : vector<16x512xbf16>, vector<512x128xbf16>, vector<16x128xf32> -> vector<16x128xf32>
    %86 = arith.addf %83, %85 : vector<16x128xf32>
    %c0_60 = arith.constant 0 : index
    %c0_61 = arith.constant 0 : index
    %87 = vector.load %arg22[%c0_60, %c0_61] : memref<1x128xf32, #tpu.memory_space<vmem>>, vector<1x128xf32>
    %88 = vector.broadcast %87 : vector<1x128xf32> to vector<16x128xf32>
    %89 = arith.addf %86, %88 : vector<16x128xf32>
    %cst_62 = arith.constant 0.000000e+00 : f32
    %90 = vector.broadcast %cst_62 : f32 to vector<16x128xf32>
    %91 = arith.maximumf %89, %90 : vector<16x128xf32>
    %92 = arith.truncf %91 : vector<16x128xf32> to vector<16x128xbf16>
    %c0_63 = arith.constant 0 : index
    %c0_64 = arith.constant 0 : index
    %93 = vector.load %arg23[%c0_63, %c0_64] : memref<128x128xbf16, #tpu.memory_space<vmem>>, vector<128x128xbf16>
    %cst_65 = arith.constant dense<0.000000e+00> : vector<16x128xf32>
    %94 = tpu.matmul %92, %93, %cst_65 {dimension_numbers = #tpu.dot_dimension_numbers<[1], [0], [0], [1], [0, 0, 1, 1], [], []>} : vector<16x128xbf16>, vector<128x128xbf16>, vector<16x128xf32> -> vector<16x128xf32>
    %c0_66 = arith.constant 0 : index
    %c0_67 = arith.constant 0 : index
    %95 = vector.load %arg24[%c0_66, %c0_67] : memref<1x128xf32, #tpu.memory_space<vmem>>, vector<1x128xf32>
    %96 = vector.broadcast %95 : vector<1x128xf32> to vector<16x128xf32>
    %97 = arith.addf %94, %96 : vector<16x128xf32>
    %cst_68 = arith.constant 0.000000e+00 : f32
    %98 = vector.broadcast %cst_68 : f32 to vector<16x128xf32>
    %99 = arith.maximumf %97, %98 : vector<16x128xf32>
    %100 = arith.truncf %99 : vector<16x128xf32> to vector<16x128xbf16>
    %c0_69 = arith.constant 0 : index
    %c0_70 = arith.constant 0 : index
    %101 = vector.load %arg25[%c0_69, %c0_70] : memref<128x128xbf16, #tpu.memory_space<vmem>>, vector<128x128xbf16>
    %cst_71 = arith.constant dense<0.000000e+00> : vector<16x128xf32>
    %102 = tpu.matmul %100, %101, %cst_71 {dimension_numbers = #tpu.dot_dimension_numbers<[1], [0], [0], [1], [0, 0, 1, 1], [], []>} : vector<16x128xbf16>, vector<128x128xbf16>, vector<16x128xf32> -> vector<16x128xf32>
    %c0_72 = arith.constant 0 : index
    %c0_73 = arith.constant 0 : index
    %103 = vector.load %arg26[%c0_72, %c0_73] : memref<1x128xf32, #tpu.memory_space<vmem>>, vector<1x128xf32>
    %104 = vector.broadcast %103 : vector<1x128xf32> to vector<16x128xf32>
    %105 = arith.addf %102, %104 : vector<16x128xf32>
    %c0_74 = arith.constant 0 : index
    %c0_75 = arith.constant 0 : index
    %106 = vector.load %arg27[%c0_74, %c0_75] : memref<16x128xf32, #tpu.memory_space<vmem>>, vector<16x128xf32>
    tpu.vector_store %arg27[%c0_74, %c0_75], %105 {strides = array<i32>} : memref<16x128xf32, #tpu.memory_space<vmem>>, vector<16x128xf32>,
    return
  }
  func.func @transform_0(%arg0: i32) -> (i32, i32) {
    %c0_i32 = arith.constant 0 : i32
    %c0_i32_0 = arith.constant 0 : i32
    return %arg0, %c0_i32 : i32, i32
  }
  func.func @transform_1(%arg0: i32) -> (i32, i32) {
    %c0_i32 = arith.constant 0 : i32
    %c0_i32_0 = arith.constant 0 : i32
    %c0_i32_1 = arith.constant 0 : i32
    return %c0_i32, %c0_i32_0 : i32, i32
  }
  func.func @transform_2(%arg0: i32) -> (i32, i32) {
    %c0_i32 = arith.constant 0 : i32
    %c0_i32_0 = arith.constant 0 : i32
    %c0_i32_1 = arith.constant 0 : i32
    return %c0_i32, %c0_i32_0 : i32, i32
  }
  func.func @transform_3(%arg0: i32) -> (i32, i32) {
    %c0_i32 = arith.constant 0 : i32
    %c0_i32_0 = arith.constant 0 : i32
    %c0_i32_1 = arith.constant 0 : i32
    return %c0_i32, %c0_i32_0 : i32, i32
  }
  func.func @transform_4(%arg0: i32) -> (i32, i32) {
    %c0_i32 = arith.constant 0 : i32
    %c0_i32_0 = arith.constant 0 : i32
    %c0_i32_1 = arith.constant 0 : i32
    return %c0_i32, %c0_i32_0 : i32, i32
  }
  func.func @transform_5(%arg0: i32) -> (i32, i32) {
    %c0_i32 = arith.constant 0 : i32
    %c0_i32_0 = arith.constant 0 : i32
    %c0_i32_1 = arith.constant 0 : i32
    return %c0_i32, %c0_i32_0 : i32, i32
  }
  func.func @transform_6(%arg0: i32) -> (i32, i32) {
    %c0_i32 = arith.constant 0 : i32
    %c0_i32_0 = arith.constant 0 : i32
    %c0_i32_1 = arith.constant 0 : i32
    return %c0_i32, %c0_i32_0 : i32, i32
  }
  func.func @transform_7(%arg0: i32) -> (i32, i32) {
    %c0_i32 = arith.constant 0 : i32
    %c0_i32_0 = arith.constant 0 : i32
    %c0_i32_1 = arith.constant 0 : i32
    return %c0_i32, %c0_i32_0 : i32, i32
  }
  func.func @transform_8(%arg0: i32) -> (i32, i32) {
    %c0_i32 = arith.constant 0 : i32
    %c0_i32_0 = arith.constant 0 : i32
    %c0_i32_1 = arith.constant 0 : i32
    return %c0_i32, %c0_i32_0 : i32, i32
  }
  func.func @transform_9(%arg0: i32) -> (i32, i32) {
    %c0_i32 = arith.constant 0 : i32
    %c0_i32_0 = arith.constant 0 : i32
    %c0_i32_1 = arith.constant 0 : i32
    return %c0_i32, %c0_i32_0 : i32, i32
  }
  func.func @transform_10(%arg0: i32) -> (i32, i32) {
    %c0_i32 = arith.constant 0 : i32
    %c0_i32_0 = arith.constant 0 : i32
    %c0_i32_1 = arith.constant 0 : i32
    return %c0_i32, %c0_i32_0 : i32, i32
  }
  func.func @transform_11(%arg0: i32) -> (i32, i32) {
    %c0_i32 = arith.constant 0 : i32
    %c0_i32_0 = arith.constant 0 : i32
    %c0_i32_1 = arith.constant 0 : i32
    return %c0_i32, %c0_i32_0 : i32, i32
  }
  func.func @transform_12(%arg0: i32) -> (i32, i32) {
    %c0_i32 = arith.constant 0 : i32
    %c0_i32_0 = arith.constant 0 : i32
    %c0_i32_1 = arith.constant 0 : i32
    return %c0_i32, %c0_i32_0 : i32, i32
  }
  func.func @transform_13(%arg0: i32) -> (i32, i32) {
    %c0_i32 = arith.constant 0 : i32
    %c0_i32_0 = arith.constant 0 : i32
    %c0_i32_1 = arith.constant 0 : i32
    return %c0_i32, %c0_i32_0 : i32, i32
  }
  func.func @transform_14(%arg0: i32) -> (i32, i32) {
    %c0_i32 = arith.constant 0 : i32
    %c0_i32_0 = arith.constant 0 : i32
    %c0_i32_1 = arith.constant 0 : i32
    return %c0_i32, %c0_i32_0 : i32, i32
  }
  func.func @transform_15(%arg0: i32) -> (i32, i32) {
    %c0_i32 = arith.constant 0 : i32
    %c0_i32_0 = arith.constant 0 : i32
    %c0_i32_1 = arith.constant 0 : i32
    return %c0_i32, %c0_i32_0 : i32, i32
  }
  func.func @transform_16(%arg0: i32) -> (i32, i32) {
    %c0_i32 = arith.constant 0 : i32
    %c0_i32_0 = arith.constant 0 : i32
    %c0_i32_1 = arith.constant 0 : i32
    return %c0_i32, %c0_i32_0 : i32, i32
  }
  func.func @transform_17(%arg0: i32) -> (i32, i32) {
    %c0_i32 = arith.constant 0 : i32
    %c0_i32_0 = arith.constant 0 : i32
    %c0_i32_1 = arith.constant 0 : i32
    return %c0_i32, %c0_i32_0 : i32, i32
  }
  func.func @transform_18(%arg0: i32) -> (i32, i32) {
    %c0_i32 = arith.constant 0 : i32
    %c0_i32_0 = arith.constant 0 : i32
    %c0_i32_1 = arith.constant 0 : i32
    return %c0_i32, %c0_i32_0 : i32, i32
  }
  func.func @transform_19(%arg0: i32) -> (i32, i32) {
    %c0_i32 = arith.constant 0 : i32
    %c0_i32_0 = arith.constant 0 : i32
    %c0_i32_1 = arith.constant 0 : i32
    return %c0_i32, %c0_i32_0 : i32, i32
  }
  func.func @transform_20(%arg0: i32) -> (i32, i32) {
    %c0_i32 = arith.constant 0 : i32
    %c0_i32_0 = arith.constant 0 : i32
    %c0_i32_1 = arith.constant 0 : i32
    return %c0_i32, %c0_i32_0 : i32, i32
  }
  func.func @transform_21(%arg0: i32) -> (i32, i32) {
    %c0_i32 = arith.constant 0 : i32
    %c0_i32_0 = arith.constant 0 : i32
    %c0_i32_1 = arith.constant 0 : i32
    return %c0_i32, %c0_i32_0 : i32, i32
  }
  func.func @transform_22(%arg0: i32) -> (i32, i32) {
    %c0_i32 = arith.constant 0 : i32
    %c0_i32_0 = arith.constant 0 : i32
    %c0_i32_1 = arith.constant 0 : i32
    return %c0_i32, %c0_i32_0 : i32, i32
  }
  func.func @transform_23(%arg0: i32) -> (i32, i32) {
    %c0_i32 = arith.constant 0 : i32
    %c0_i32_0 = arith.constant 0 : i32
    %c0_i32_1 = arith.constant 0 : i32
    return %c0_i32, %c0_i32_0 : i32, i32
  }
  func.func @transform_24(%arg0: i32) -> (i32, i32) {
    %c0_i32 = arith.constant 0 : i32
    %c0_i32_0 = arith.constant 0 : i32
    %c0_i32_1 = arith.constant 0 : i32
    return %c0_i32, %c0_i32_0 : i32, i32
  }
  func.func @transform_25(%arg0: i32) -> (i32, i32) {
    %c0_i32 = arith.constant 0 : i32
    %c0_i32_0 = arith.constant 0 : i32
    %c0_i32_1 = arith.constant 0 : i32
    return %c0_i32, %c0_i32_0 : i32, i32
  }
  func.func @transform_26(%arg0: i32) -> (i32, i32) {
    %c0_i32 = arith.constant 0 : i32
    %c0_i32_0 = arith.constant 0 : i32
    return %arg0, %c0_i32 : i32, i32
  }
}

</mosaic_0001>

<llo_original>
// kernel: tpu_custom_call.1
$region0: #{tpu_custom_call.1}
  #allocation0 [shape = 'u32[]', space=smem, size = 0x4, offset = 0x4, fixed_abs, tag = 'smem constant byte address 0x4 - core index']
  #allocation1 [shape = 'u32[144,128]{1,0:T(1,128)}', space=vmem, size = 0x12000, scoped, tag = 'internal scratch']
  %s0 = inlined_call_operand.hbm [shape: bf16[16,128], index: 0, kind: input, shape index: {}]
  %s1 = inlined_call_operand.hbm [shape: bf16[128,1024], index: 1, kind: input, shape index: {}]
  %s2 = inlined_call_operand.hbm [shape: f32[1,1024], index: 2, kind: input, shape index: {}]
  %s3 = inlined_call_operand.hbm [shape: bf16[512,512], index: 3, kind: input, shape index: {}]
  %s4 = inlined_call_operand.vmem [shape: f32[1,512], index: 4, kind: input, shape index: {}]
  %s5 = inlined_call_operand.hbm [shape: bf16[512,512], index: 5, kind: input, shape index: {}]
  %s6 = inlined_call_operand.vmem [shape: f32[1,512], index: 6, kind: input, shape index: {}]
  %s7 = inlined_call_operand.hbm [shape: bf16[512,512], index: 7, kind: input, shape index: {}]
  %s8 = inlined_call_operand.vmem [shape: f32[1,512], index: 8, kind: input, shape index: {}]
  %s9 = inlined_call_operand.hbm [shape: bf16[512,512], index: 9, kind: input, shape index: {}]
  %s10 = inlined_call_operand.vmem [shape: f32[1,512], index: 10, kind: input, shape index: {}]
  %s11 = inlined_call_operand.hbm [shape: bf16[512,512], index: 11, kind: input, shape index: {}]
  %s12 = inlined_call_operand.hbm [shape: f32[1,512], index: 12, kind: input, shape index: {}]
  %s13 = inlined_call_operand.hbm [shape: bf16[512,512], index: 13, kind: input, shape index: {}]
  %s14 = inlined_call_operand.hbm [shape: f32[1,512], index: 14, kind: input, shape index: {}]
  %s15 = inlined_call_operand.hbm [shape: bf16[512,512], index: 15, kind: input, shape index: {}]
  %s16 = inlined_call_operand.hbm [shape: f32[1,512], index: 16, kind: input, shape index: {}]
  %s17 = inlined_call_operand.hbm [shape: bf16[512,512], index: 17, kind: input, shape index: {}]
  %s18 = inlined_call_operand.hbm [shape: f32[1,512], index: 18, kind: input, shape index: {}]
  %s19 = inlined_call_operand.hbm [shape: bf16[512,128], index: 19, kind: input, shape index: {}]
  %s20 = inlined_call_operand.hbm [shape: bf16[512,128], index: 20, kind: input, shape index: {}]
  %s21 = inlined_call_operand.vmem [shape: f32[1,128], index: 21, kind: input, shape index: {}]
  %s22 = inlined_call_operand.vmem [shape: bf16[128,128], index: 22, kind: input, shape index: {}]
  %s23 = inlined_call_operand.vmem [shape: f32[1,128], index: 23, kind: input, shape index: {}]
  %s24 = inlined_call_operand.hbm [shape: bf16[128,128], index: 24, kind: input, shape index: {}]
  %s25 = inlined_call_operand.vmem [shape: f32[1,128], index: 25, kind: input, shape index: {}]
  %s26 = inlined_call_operand.hbm [shape: f32[16,128], index: 26, kind: output, shape index: {}]
  %s27 = sld [smem:[#allocation0]]
  $region186: #{tpu_custom_call.1} parent=0
    _
  %s29 = ssub.s32 1, %s27
  %s30 = scalar_select 0, %s29, %s27
  $region1: #{tpu_custom_call.1} parent=0
    #allocation2 [shape = 'u8[4096]{0}', space=vmem, size = 0x1000, scoped, tag = 'input window, operand 0, single buffered']
    #allocation3 [shape = 's32[1]{0}', space=sflag, size = 0x4, scoped, tag = 'scoped memory for tpu_custom_call.1']
    #allocation4 [shape = 's32[1]{0}', space=sflag, size = 0x4, scoped, tag = 'scoped memory for tpu_custom_call.1']
    #allocation5 [shape = 'u8[262144]{0}', space=vmem, size = 0x40000, scoped, tag = 'input window, operand 1, single buffered']
    #allocation6 [shape = 's32[1]{0}', space=sflag, size = 0x4, scoped, tag = 'scoped memory for tpu_custom_call.1']
    #allocation7 [shape = 'u8[4096]{0}', space=vmem, size = 0x1000, scoped, tag = 'input window, operand 2, single buffered']
    #allocation8 [shape = 'u8[524288]{0}', space=vmem, size = 0x80000, scoped, tag = 'input window, operand 3, single buffered']
    #allocation9 [shape = 's32[1]{0}', space=sflag, size = 0x4, scoped, tag = 'scoped memory for tpu_custom_call.1']
    #allocation10 [shape = 'u8[524288]{0}', space=vmem, size = 0x80000, scoped, tag = 'input window, operand 5, single buffered']
    #allocation11 [shape = 'u8[524288]{0}', space=vmem, size = 0x80000, scoped, tag = 'input window, operand 7, single buffered']
    #allocation12 [shape = 's32[1]{0}', space=sflag, size = 0x4, scoped, tag = 'scoped memory for tpu_custom_call.1']
    #allocation13 [shape = 'u8[524288]{0}', space=vmem, size = 0x80000, scoped, tag = 'input window, operand 9, single buffered']
    #allocation14 [shape = 'u8[524288]{0}', space=vmem, size = 0x80000, scoped, tag = 'input window, operand 11, single buffered']
    #allocation15 [shape = 's32[1]{0}', space=sflag, size = 0x4, scoped, tag = 'scoped memory for tpu_custom_call.1']
    #allocation16 [shape = 'u8[2048]{0}', space=vmem, size = 0x800, scoped, tag = 'input window, operand 12, single buffered']
    #allocation17 [shape = 'u8[524288]{0}', space=vmem, size = 0x80000, scoped, tag = 'input window, operand 13, single buffered']
    #allocation18 [shape = 's32[1]{0}', space=sflag, size = 0x4, scoped, tag = 'scoped memory for tpu_custom_call.1']
    #allocation19 [shape = 'u8[2048]{0}', space=vmem, size = 0x800, scoped, tag = 'input window, operand 14, single buffered']
    #allocation20 [shape = 'u8[524288]{0}', space=vmem, size = 0x80000, scoped, tag = 'input window, operand 15, single buffered']
    #allocation21 [shape = 's32[1]{0}', space=sflag, size = 0x4, scoped, tag = 'scoped memory for tpu_custom_call.1']
    #allocation22 [shape = 'u8[2048]{0}', space=vmem, size = 0x800, scoped, tag = 'input window, operand 16, single buffered']
    #allocation23 [shape = 'u8[524288]{0}', space=vmem, size = 0x80000, scoped, tag = 'input window, operand 17, single buffered']
    #allocation24 [shape = 's32[1]{0}', space=sflag, size = 0x4, scoped, tag = 'scoped memory for tpu_custom_call.1']
    #allocation25 [shape = 'u8[2048]{0}', space=vmem, size = 0x800, scoped, tag = 'input window, operand 18, single buffered']
    #allocation26 [shape = 'u8[131072]{0}', space=vmem, size = 0x20000, scoped, tag = 'input window, operand 19, single buffered']
    #allocation27 [shape = 's32[1]{0}', space=sflag, size = 0x4, scoped, tag = 'scoped memory for tpu_custom_call.1']
    #allocation28 [shape = 'u8[131072]{0}', space=vmem, size = 0x20000, scoped, tag = 'input window, operand 20, single buffered']
    #allocation29 [shape = 'u8[32768]{0}', space=vmem, size = 0x8000, scoped, tag = 'input window, operand 24, single buffered']
    #allocation30 [shape = 's32[1]{0}', space=sflag, size = 0x4, scoped, tag = 'scoped memory for tpu_custom_call.1']
    #allocation31 [shape = 'u8[8192]{0}', space=vmem, size = 0x2000, scoped, tag = 'output window, operand 0, single buffered']
    %31 = vsyncpa [#allocation3], 0
    %32 = vsyncpa [#allocation6], 0
    %33 = vsyncpa [#allocation9], 0
    %34 = vsyncpa [#allocation12], 0
    %35 = vsyncpa [#allocation15], 0
    %36 = vsyncpa [#allocation18], 0
    %37 = vsyncpa [#allocation21], 0
    %38 = vsyncpa [#allocation24], 0
    %39 = vsyncpa [#allocation27], 0
    %40 = vsyncpa [#allocation30], 0
    %41 = vsyncpa [#allocation4], 0
    // Predicated region
    $region2: #{tpu_custom_call.1} parent=1 // pred_check
      _
    $region3: #{tpu_custom_call.1} parent=1 // pred_check_branch
      %43 = sbr.rel (0) target = $region5
    $region4: #{tpu_custom_call.1} parent=1 // pred_region
      %s45 = ssub.s32 128, 128
      %46 = vsyncadd [#allocation3], %s45
      %s47 = sshll.u32 [#allocation2], 4
      %s48 = int_to_ptr.vmem [resolvable:$true] %s47
      %53 = dma.hbm_to_vmem [thread:$0]  %s0, 128, %s48, [#allocation3], 64, 64, 4
    $region5: #{tpu_custom_call.1} parent=1 // pred_fallthru
      _
    // Predicated region
    $region6: #{tpu_custom_call.1} parent=1 // pred_check
      _
    $region7: #{tpu_custom_call.1} parent=1 // pred_check_branch
      %55 = sbr.rel (0) target = $region9
    $region8: #{tpu_custom_call.1} parent=1 // pred_region
      %s57 = ssub.s32 8192, 8192
      %58 = vsyncadd [#allocation6], %s57
      %s59 = sshll.u32 [#allocation5], 4
      %s60 = int_to_ptr.vmem [resolvable:$true] %s59
      %65 = dma.hbm_to_vmem [thread:$0]  %s1, 8192, %s60, [#allocation6], 512, 512, 32
    $region9: #{tpu_custom_call.1} parent=1 // pred_fallthru
      _
    // Predicated region
    $region10: #{tpu_custom_call.1} parent=1 // pred_check
      _
    $region11: #{tpu_custom_call.1} parent=1 // pred_check_branch
      %67 = sbr.rel (0) target = $region13
    $region12: #{tpu_custom_call.1} parent=1 // pred_region
      %s69 = ssub.s32 128, 128
      %70 = vsyncadd [#allocation6], %s69
      %s72 = sshll.u32 [#allocation7], 4
      %s73 = int_to_ptr.vmem [resolvable:$true] %s72
      %75 = dma.hbm_to_vmem [thread:$0]  %s2, 128, %s73, [#allocation6]
    $region13: #{tpu_custom_call.1} parent=1 // pred_fallthru
      _
    // Predicated region
    $region14: #{tpu_custom_call.1} parent=1 // pred_check
      _
    $region15: #{tpu_custom_call.1} parent=1 // pred_check_branch
      %77 = sbr.rel (0) target = $region17
    $region16: #{tpu_custom_call.1} parent=1 // pred_region
      %s79 = ssub.s32 16384, 16384
      %80 = vsyncadd [#allocation9], %s79
      %s81 = sshll.u32 [#allocation8], 4
      %s82 = int_to_ptr.vmem [resolvable:$true] %s81
      %87 = dma.hbm_to_vmem [thread:$0]  %s3, 16384, %s82, [#allocation9], 256, 256, 16
    $region17: #{tpu_custom_call.1} parent=1 // pred_fallthru
      _
    // Predicated region
    $region18: #{tpu_custom_call.1} parent=1 // pred_check
      _
    $region19: #{tpu_custom_call.1} parent=1 // pred_check_branch
      %89 = sbr.rel (0) target = $region21
    $region20: #{tpu_custom_call.1} parent=1 // pred_region
      _
    $region21: #{tpu_custom_call.1} parent=1 // pred_fallthru
      _
    // Predicated region
    $region22: #{tpu_custom_call.1} parent=1 // pred_check
      _
    $region23: #{tpu_custom_call.1} parent=1 // pred_check_branch
      %91 = sbr.rel (0) target = $region25
    $region24: #{tpu_custom_call.1} parent=1 // pred_region
      %s93 = ssub.s32 16384, 16384
      %94 = vsyncadd [#allocation9], %s93
      %s95 = sshll.u32 [#allocation10], 4
      %s96 = int_to_ptr.vmem [resolvable:$true] %s95
      %101 = dma.hbm_to_vmem [thread:$0]  %s5, 16384, %s96, [#allocation9], 256, 256, 16
    $region25: #{tpu_custom_call.1} parent=1 // pred_fallthru
      _
    // Predicated region
    $region26: #{tpu_custom_call.1} parent=1 // pred_check
      _
    $region27: #{tpu_custom_call.1} parent=1 // pred_check_branch
      %103 = sbr.rel (0) target = $region29
    $region28: #{tpu_custom_call.1} parent=1 // pred_region
      _
    $region29: #{tpu_custom_call.1} parent=1 // pred_fallthru
      _
    // Predicated region
    $region30: #{tpu_custom_call.1} parent=1 // pred_check
      _
    $region31: #{tpu_custom_call.1} parent=1 // pred_check_branch
      %105 = sbr.rel (0) target = $region33
    $region32: #{tpu_custom_call.1} parent=1 // pred_region
      %s107 = ssub.s32 16384, 16384
      %108 = vsyncadd [#allocation12], %s107
      %s109 = sshll.u32 [#allocation11], 4
      %s110 = int_to_ptr.vmem [resolvable:$true] %s109
      %115 = dma.hbm_to_vmem [thread:$0]  %s7, 16384, %s110, [#allocation12], 256, 256, 16
    $region33: #{tpu_custom_call.1} parent=1 // pred_fallthru
      _
    // Predicated region
    $region34: #{tpu_custom_call.1} parent=1 // pred_check
      _
    $region35: #{tpu_custom_call.1} parent=1 // pred_check_branch
      %117 = sbr.rel (0) target = $region37
    $region36: #{tpu_custom_call.1} parent=1 // pred_region
      _
    $region37: #{tpu_custom_call.1} parent=1 // pred_fallthru
      _
    // Predicated region
    $region38: #{tpu_custom_call.1} parent=1 // pred_check
      _
    $region39: #{tpu_custom_call.1} parent=1 // pred_check_branch
      %119 = sbr.rel (0) target = $region41
    $region40: #{tpu_custom_call.1} parent=1 // pred_region
      %s121 = ssub.s32 16384, 16384
      %122 = vsyncadd [#allocation12], %s121
      %s123 = sshll.u32 [#allocation13], 4
      %s124 = int_to_ptr.vmem [resolvable:$true] %s123
      %129 = dma.hbm_to_vmem [thread:$0]  %s9, 16384, %s124, [#allocation12], 256, 256, 16
    $region41: #{tpu_custom_call.1} parent=1 // pred_fallthru
      _
    // Predicated region
    $region42: #{tpu_custom_call.1} parent=1 // pred_check
      _
    $region43: #{tpu_custom_call.1} parent=1 // pred_check_branch
      %131 = sbr.rel (0) target = $region45
    $region44: #{tpu_custom_call.1} parent=1 // pred_region
      _
    $region45: #{tpu_custom_call.1} parent=1 // pred_fallthru
      _
    // Predicated region
    $region46: #{tpu_custom_call.1} parent=1 // pred_check
      _
    $region47: #{tpu_custom_call.1} parent=1 // pred_check_branch
      %133 = sbr.rel (0) target = $region49
    $region48: #{tpu_custom_call.1} parent=1 // pred_region
      %s135 = ssub.s32 16384, 16384
      %136 = vsyncadd [#allocation15], %s135
      %s137 = sshll.u32 [#allocation14], 4
      %s138 = int_to_ptr.vmem [resolvable:$true] %s137
      %143 = dma.hbm_to_vmem [thread:$0]  %s11, 16384, %s138, [#allocation15], 256, 256, 16
    $region49: #{tpu_custom_call.1} parent=1 // pred_fallthru
      _
    // Predicated region
    $region50: #{tpu_custom_call.1} parent=1 // pred_check
      _
    $region51: #{tpu_custom_call.1} parent=1 // pred_check_branch
      %145 = sbr.rel (0) target = $region53
    $region52: #{tpu_custom_call.1} parent=1 // pred_region
      %s147 = ssub.s32 64, 64
      %148 = vsyncadd [#allocation15], %s147
      %s150 = sshll.u32 [#allocation16], 4
      %s151 = int_to_ptr.vmem [resolvable:$true] %s150
      %153 = dma.hbm_to_vmem [thread:$0]  %s12, 64, %s151, [#allocation15]
    $region53: #{tpu_custom_call.1} parent=1 // pred_fallthru
      _
    // Predicated region
    $region54: #{tpu_custom_call.1} parent=1 // pred_check
      _
    $region55: #{tpu_custom_call.1} parent=1 // pred_check_branch
      %155 = sbr.rel (0) target = $region57
    $region56: #{tpu_custom_call.1} parent=1 // pred_region
      %s157 = ssub.s32 16384, 16384
      %158 = vsyncadd [#allocation18], %s157
      %s159 = sshll.u32 [#allocation17], 4
      %s160 = int_to_ptr.vmem [resolvable:$true] %s159
      %165 = dma.hbm_to_vmem [thread:$0]  %s13, 16384, %s160, [#allocation18], 256, 256, 16
    $region57: #{tpu_custom_call.1} parent=1 // pred_fallthru
      _
    // Predicated region
    $region58: #{tpu_custom_call.1} parent=1 // pred_check
      _
    $region59: #{tpu_custom_call.1} parent=1 // pred_check_branch
      %167 = sbr.rel (0) target = $region61
    $region60: #{tpu_custom_call.1} parent=1 // pred_region
      %s169 = ssub.s32 64, 64
      %170 = vsyncadd [#allocation18], %s169
      %s172 = sshll.u32 [#allocation19], 4
      %s173 = int_to_ptr.vmem [resolvable:$true] %s172
      %175 = dma.hbm_to_vmem [thread:$0]  %s14, 64, %s173, [#allocation18]
    $region61: #{tpu_custom_call.1} parent=1 // pred_fallthru
      _
    // Predicated region
    $region62: #{tpu_custom_call.1} parent=1 // pred_check
      _
    $region63: #{tpu_custom_call.1} parent=1 // pred_check_branch
      %177 = sbr.rel (0) target = $region65
    $region64: #{tpu_custom_call.1} parent=1 // pred_region
      %s179 = ssub.s32 16384, 16384
      %180 = vsyncadd [#allocation21], %s179
      %s181 = sshll.u32 [#allocation20], 4
      %s182 = int_to_ptr.vmem [resolvable:$true] %s181
      %187 = dma.hbm_to_vmem [thread:$0]  %s15, 16384, %s182, [#allocation21], 256, 256, 16
    $region65: #{tpu_custom_call.1} parent=1 // pred_fallthru
      _
    // Predicated region
    $region66: #{tpu_custom_call.1} parent=1 // pred_check
      _
    $region67: #{tpu_custom_call.1} parent=1 // pred_check_branch
      %189 = sbr.rel (0) target = $region69
    $region68: #{tpu_custom_call.1} parent=1 // pred_region
      %s191 = ssub.s32 64, 64
      %192 = vsyncadd [#allocation21], %s191
      %s194 = sshll.u32 [#allocation22], 4
      %s195 = int_to_ptr.vmem [resolvable:$true] %s194
      %197 = dma.hbm_to_vmem [thread:$0]  %s16, 64, %s195, [#allocation21]
    $region69: #{tpu_custom_call.1} parent=1 // pred_fallthru
      _
    // Predicated region
    $region70: #{tpu_custom_call.1} parent=1 // pred_check
      _
    $region71: #{tpu_custom_call.1} parent=1 // pred_check_branch
      %199 = sbr.rel (0) target = $region73
    $region72: #{tpu_custom_call.1} parent=1 // pred_region
      %s201 = ssub.s32 16384, 16384
      %202 = vsyncadd [#allocation24], %s201
      %s203 = sshll.u32 [#allocation23], 4
      %s204 = int_to_ptr.vmem [resolvable:$true] %s203
      %209 = dma.hbm_to_vmem [thread:$0]  %s17, 16384, %s204, [#allocation24], 256, 256, 16
    $region73: #{tpu_custom_call.1} parent=1 // pred_fallthru
      _
    // Predicated region
    $region74: #{tpu_custom_call.1} parent=1 // pred_check
      _
    $region75: #{tpu_custom_call.1} parent=1 // pred_check_branch
      %211 = sbr.rel (0) target = $region77
    $region76: #{tpu_custom_call.1} parent=1 // pred_region
      %s213 = ssub.s32 64, 64
      %214 = vsyncadd [#allocation24], %s213
      %s216 = sshll.u32 [#allocation25], 4
      %s217 = int_to_ptr.vmem [resolvable:$true] %s216
      %219 = dma.hbm_to_vmem [thread:$0]  %s18, 64, %s217, [#allocation24]
    $region77: #{tpu_custom_call.1} parent=1 // pred_fallthru
      _
    // Predicated region
    $region78: #{tpu_custom_call.1} parent=1 // pred_check
      _
    $region79: #{tpu_custom_call.1} parent=1 // pred_check_branch
      %221 = sbr.rel (0) target = $region81
    $region80: #{tpu_custom_call.1} parent=1 // pred_region
      %s223 = ssub.s32 4096, 4096
      %224 = vsyncadd [#allocation27], %s223
      %s225 = sshll.u32 [#allocation26], 4
      %s226 = int_to_ptr.vmem [resolvable:$true] %s225
      %231 = dma.hbm_to_vmem [thread:$0]  %s19, 4096, %s226, [#allocation27], 64, 64, 4
    $region81: #{tpu_custom_call.1} parent=1 // pred_fallthru
      _
    // Predicated region
    $region82: #{tpu_custom_call.1} parent=1 // pred_check
      _
    $region83: #{tpu_custom_call.1} parent=1 // pred_check_branch
      %233 = sbr.rel (0) target = $region85
    $region84: #{tpu_custom_call.1} parent=1 // pred_region
      %s235 = ssub.s32 4096, 4096
      %236 = vsyncadd [#allocation27], %s235
      %s237 = sshll.u32 [#allocation28], 4
      %s238 = int_to_ptr.vmem [resolvable:$true] %s237
      %243 = dma.hbm_to_vmem [thread:$0]  %s20, 4096, %s238, [#allocation27], 64, 64, 4
    $region85: #{tpu_custom_call.1} parent=1 // pred_fallthru
      _
    // Predicated region
    $region86: #{tpu_custom_call.1} parent=1 // pred_check
      _
    $region87: #{tpu_custom_call.1} parent=1 // pred_check_branch
      %245 = sbr.rel (0) target = $region89
    $region88: #{tpu_custom_call.1} parent=1 // pred_region
      _
    $region89: #{tpu_custom_call.1} parent=1 // pred_fallthru
      _
    // Predicated region
    $region90: #{tpu_custom_call.1} parent=1 // pred_check
      _
    $region91: #{tpu_custom_call.1} parent=1 // pred_check_branch
      %247 = sbr.rel (0) target = $region93
    $region92: #{tpu_custom_call.1} parent=1 // pred_region
      _
    $region93: #{tpu_custom_call.1} parent=1 // pred_fallthru
      _
    // Predicated region
    $region94: #{tpu_custom_call.1} parent=1 // pred_check
      _
    $region95: #{tpu_custom_call.1} parent=1 // pred_check_branch
      %249 = sbr.rel (0) target = $region97
    $region96: #{tpu_custom_call.1} parent=1 // pred_region
      _
    $region97: #{tpu_custom_call.1} parent=1 // pred_fallthru
      _
    // Predicated region
    $region98: #{tpu_custom_call.1} parent=1 // pred_check
      _
    $region99: #{tpu_custom_call.1} parent=1 // pred_check_branch
      %251 = sbr.rel (0) target = $region101
    $region100: #{tpu_custom_call.1} parent=1 // pred_region
      %s253 = ssub.s32 1024, 1024
      %254 = vsyncadd [#allocation30], %s253
      %s255 = sshll.u32 [#allocation29], 4
      %s256 = int_to_ptr.vmem [resolvable:$true] %s255
      %261 = dma.hbm_to_vmem [thread:$0]  %s24, 1024, %s256, [#allocation30], 64, 64, 4
    $region101: #{tpu_custom_call.1} parent=1 // pred_fallthru
      _
    // Predicated region
    $region102: #{tpu_custom_call.1} parent=1 // pred_check
      _
    $region103: #{tpu_custom_call.1} parent=1 // pred_check_branch
      %263 = sbr.rel (0) target = $region105
    $region104: #{tpu_custom_call.1} parent=1 // pred_region
      _
    $region105: #{tpu_custom_call.1} parent=1 // pred_fallthru
      _
    // Predicated region
    $region106: #{tpu_custom_call.1} parent=1 // pred_check
      _
    $region107: #{tpu_custom_call.1} parent=1 // pred_check_branch
      %265 = sbr.rel (0) target = $region109
    $region108: #{tpu_custom_call.1} parent=1 // pred_region
      %266 = dma.done [#allocation3], 128
    $region109: #{tpu_custom_call.1} parent=1 // pred_fallthru
      _
    // Predicated region
    $region110: #{tpu_custom_call.1} parent=1 // pred_check
      _
    $region111: #{tpu_custom_call.1} parent=1 // pred_check_branch
      %268 = sbr.rel (0) target = $region113
    $region112: #{tpu_custom_call.1} parent=1 // pred_region
      %269 = dma.done [#allocation6], 8192
    $region113: #{tpu_custom_call.1} parent=1 // pred_fallthru
      _
    // Predicated region
    $region114: #{tpu_custom_call.1} parent=1 // pred_check
      _
    $region115: #{tpu_custom_call.1} parent=1 // pred_check_branch
      %271 = sbr.rel (0) target = $region117
    $region116: #{tpu_custom_call.1} parent=1 // pred_region
      %272 = dma.done [#allocation6], 128
    $region117: #{tpu_custom_call.1} parent=1 // pred_fallthru
      _
    // Predicated region
    $region118: #{tpu_custom_call.1} parent=1 // pred_check
      _
    $region119: #{tpu_custom_call.1} parent=1 // pred_check_branch
      %274 = sbr.rel (0) target = $region121
    $region120: #{tpu_custom_call.1} parent=1 // pred_region
      %275 = dma.done [#allocation9], 16384
    $region121: #{tpu_custom_call.1} parent=1 // pred_fallthru
      _
    // Predicated region
    $region122: #{tpu_custom_call.1} parent=1 // pred_check
      _
    $region123: #{tpu_custom_call.1} parent=1 // pred_check_branch
      %277 = sbr.rel (0) target = $region125
    $region124: #{tpu_custom_call.1} parent=1 // pred_region
      %278 = dma.done [#allocation9], 16384
    $region125: #{tpu_custom_call.1} parent=1 // pred_fallthru
      _
    // Predicated region
    $region126: #{tpu_custom_call.1} parent=1 // pred_check
      _
    $region127: #{tpu_custom_call.1} parent=1 // pred_check_branch
      %280 = sbr.rel (0) target = $region129
    $region128: #{tpu_custom_call.1} parent=1 // pred_region
      %281 = dma.done [#allocation12], 16384
    $region129: #{tpu_custom_call.1} parent=1 // pred_fallthru
      _
    // Predicated region
    $region130: #{tpu_custom_call.1} parent=1 // pred_check
      _
    $region131: #{tpu_custom_call.1} parent=1 // pred_check_branch
      %283 = sbr.rel (0) target = $region133
    $region132: #{tpu_custom_call.1} parent=1 // pred_region
      %284 = dma.done [#allocation12], 16384
    $region133: #{tpu_custom_call.1} parent=1 // pred_fallthru
      _
    // Predicated region
    $region134: #{tpu_custom_call.1} parent=1 // pred_check
      _
    $region135: #{tpu_custom_call.1} parent=1 // pred_check_branch
      %286 = sbr.rel (0) target = $region137
    $region136: #{tpu_custom_call.1} parent=1 // pred_region
      %287 = dma.done [#allocation15], 16384
    $region137: #{tpu_custom_call.1} parent=1 // pred_fallthru
      _
    // Predicated region
    $region138: #{tpu_custom_call.1} parent=1 // pred_check
      _
    $region139: #{tpu_custom_call.1} parent=1 // pred_check_branch
      %289 = sbr.rel (0) target = $region141
    $region140: #{tpu_custom_call.1} parent=1 // pred_region
      %290 = dma.done [#allocation15], 64
    $region141: #{tpu_custom_call.1} parent=1 // pred_fallthru
      _
    // Predicated region
    $region142: #{tpu_custom_call.1} parent=1 // pred_check
      _
    $region143: #{tpu_custom_call.1} parent=1 // pred_check_branch
      %292 = sbr.rel (0) target = $region145
    $region144: #{tpu_custom_call.1} parent=1 // pred_region
      %293 = dma.done [#allocation18], 16384
    $region145: #{tpu_custom_call.1} parent=1 // pred_fallthru
      _
    // Predicated region
    $region146: #{tpu_custom_call.1} parent=1 // pred_check
      _
    $region147: #{tpu_custom_call.1} parent=1 // pred_check_branch
      %295 = sbr.rel (0) target = $region149
    $region148: #{tpu_custom_call.1} parent=1 // pred_region
      %296 = dma.done [#allocation18], 64
    $region149: #{tpu_custom_call.1} parent=1 // pred_fallthru
      _
    // Predicated region
    $region150: #{tpu_custom_call.1} parent=1 // pred_check
      _
    $region151: #{tpu_custom_call.1} parent=1 // pred_check_branch
      %298 = sbr.rel (0) target = $region153
    $region152: #{tpu_custom_call.1} parent=1 // pred_region
      %299 = dma.done [#allocation21], 16384
    $region153: #{tpu_custom_call.1} parent=1 // pred_fallthru
      _
    // Predicated region
    $region154: #{tpu_custom_call.1} parent=1 // pred_check
      _
    $region155: #{tpu_custom_call.1} parent=1 // pred_check_branch
      %301 = sbr.rel (0) target = $region157
    $region156: #{tpu_custom_call.1} parent=1 // pred_region
      %302 = dma.done [#allocation21], 64
    $region157: #{tpu_custom_call.1} parent=1 // pred_fallthru
      _
    // Predicated region
    $region158: #{tpu_custom_call.1} parent=1 // pred_check
      _
    $region159: #{tpu_custom_call.1} parent=1 // pred_check_branch
      %304 = sbr.rel (0) target = $region161
    $region160: #{tpu_custom_call.1} parent=1 // pred_region
      %305 = dma.done [#allocation24], 16384
    $region161: #{tpu_custom_call.1} parent=1 // pred_fallthru
      _
    // Predicated region
    $region162: #{tpu_custom_call.1} parent=1 // pred_check
      _
    $region163: #{tpu_custom_call.1} parent=1 // pred_check_branch
      %307 = sbr.rel (0) target = $region165
    $region164: #{tpu_custom_call.1} parent=1 // pred_region
      %308 = dma.done [#allocation24], 64
    $region165: #{tpu_custom_call.1} parent=1 // pred_fallthru
      _
    // Predicated region
    $region166: #{tpu_custom_call.1} parent=1 // pred_check
      _
    $region167: #{tpu_custom_call.1} parent=1 // pred_check_branch
      %310 = sbr.rel (0) target = $region169
    $region168: #{tpu_custom_call.1} parent=1 // pred_region
      %311 = dma.done [#allocation27], 4096
    $region169: #{tpu_custom_call.1} parent=1 // pred_fallthru
      _
    // Predicated region
    $region170: #{tpu_custom_call.1} parent=1 // pred_check
      _
    $region171: #{tpu_custom_call.1} parent=1 // pred_check_branch
      %313 = sbr.rel (0) target = $region173
    $region172: #{tpu_custom_call.1} parent=1 // pred_region
      %314 = dma.done [#allocation27], 4096
    $region173: #{tpu_custom_call.1} parent=1 // pred_fallthru
      _
    // Predicated region
    $region174: #{tpu_custom_call.1} parent=1 // pred_check
      _
    $region175: #{tpu_custom_call.1} parent=1 // pred_check_branch
      %316 = sbr.rel (0) target = $region177
    $region176: #{tpu_custom_call.1} parent=1 // pred_region
      %317 = dma.done [#allocation30], 1024
    $region177: #{tpu_custom_call.1} parent=1 // pred_fallthru
      _
    %v319 = vld [vmem:[#allocation2] sm:$0xf]
    %v320 = vld [vmem:[#allocation2 + $0x4] sm:$0xf]
    %v321 = vld [vmem:[#allocation5] sm:$0xff]
    %v322 = vld [vmem:[#allocation5 + $0x8] sm:$0xff]
    %v323 = vld [vmem:[#allocation5 + $0x10] sm:$0xff]
    %v324 = vld [vmem:[#allocation5 + $0x18] sm:$0xff]
    %v325 = vld [vmem:[#allocation5 + $0x20] sm:$0xff]
    %v326 = vld [vmem:[#allocation5 + $0x28] sm:$0xff]
    %v327 = vld [vmem:[#allocation5 + $0x30] sm:$0xff]
    %v328 = vld [vmem:[#allocation5 + $0x38] sm:$0xff]
    %v329 = vld [vmem:[#allocation5 + $0x40] sm:$0xff]
    %v330 = vld [vmem:[#allocation5 + $0x48] sm:$0xff]
    %v331 = vld [vmem:[#allocation5 + $0x50] sm:$0xff]
    %v332 = vld [vmem:[#allocation5 + $0x58] sm:$0xff]
    %v333 = vld [vmem:[#allocation5 + $0x60] sm:$0xff]
    %v334 = vld [vmem:[#allocation5 + $0x68] sm:$0xff]
    %v335 = vld [vmem:[#allocation5 + $0x70] sm:$0xff]
    %v336 = vld [vmem:[#allocation5 + $0x78] sm:$0xff]
    %v337 = vld [vmem:[#allocation5 + $0x80] sm:$0xff]
    %v338 = vld [vmem:[#allocation5 + $0x88] sm:$0xff]
    %v339 = vld [vmem:[#allocation5 + $0x90] sm:$0xff]
    %v340 = vld [vmem:[#allocation5 + $0x98] sm:$0xff]
    %v341 = vld [vmem:[#allocation5 + $0xa0] sm:$0xff]
    %v342 = vld [vmem:[#allocation5 + $0xa8] sm:$0xff]
    %v343 = vld [vmem:[#allocation5 + $0xb0] sm:$0xff]
    %v344 = vld [vmem:[#allocation5 + $0xb8] sm:$0xff]
    %v345 = vld [vmem:[#allocation5 + $0xc0] sm:$0xff]
    %v346 = vld [vmem:[#allocation5 + $0xc8] sm:$0xff]
    %v347 = vld [vmem:[#allocation5 + $0xd0] sm:$0xff]
    %v348 = vld [vmem:[#allocation5 + $0xd8] sm:$0xff]
    %v349 = vld [vmem:[#allocation5 + $0xe0] sm:$0xff]
    %v350 = vld [vmem:[#allocation5 + $0xe8] sm:$0xff]
    %v351 = vld [vmem:[#allocation5 + $0xf0] sm:$0xff]
    %v352 = vld [vmem:[#allocation5 + $0xf8] sm:$0xff]
    %v353 = vld [vmem:[#allocation5 + $0x100] sm:$0xff]
    %v354 = vld [vmem:[#allocation5 + $0x108] sm:$0xff]
    %v355 = vld [vmem:[#allocation5 + $0x110] sm:$0xff]
    %v356 = vld [vmem:[#allocation5 + $0x118] sm:$0xff]
    %v357 = vld [vmem:[#allocation5 + $0x120] sm:$0xff]
    %v358 = vld [vmem:[#allocation5 + $0x128] sm:$0xff]
    %v359 = vld [vmem:[#allocation5 + $0x130] sm:$0xff]
    %v360 = vld [vmem:[#allocation5 + $0x138] sm:$0xff]
    %v361 = vld [vmem:[#allocation5 + $0x140] sm:$0xff]
    %v362 = vld [vmem:[#allocation5 + $0x148] sm:$0xff]
    %v363 = vld [vmem:[#allocation5 + $0x150] sm:$0xff]
    %v364 = vld [vmem:[#allocation5 + $0x158] sm:$0xff]
    %v365 = vld [vmem:[#allocation5 + $0x160] sm:$0xff]
    %v366 = vld [vmem:[#allocation5 + $0x168] sm:$0xff]
    %v367 = vld [vmem:[#allocation5 + $0x170] sm:$0xff]
    %v368 = vld [vmem:[#allocation5 + $0x178] sm:$0xff]
    %v369 = vld [vmem:[#allocation5 + $0x180] sm:$0xff]
    %v370 = vld [vmem:[#allocation5 + $0x188] sm:$0xff]
    %v371 = vld [vmem:[#allocation5 + $0x190] sm:$0xff]
    %v372 = vld [vmem:[#allocation5 + $0x198] sm:$0xff]
    %v373 = vld [vmem:[#allocation5 + $0x1a0] sm:$0xff]
    %v374 = vld [vmem:[#allocation5 + $0x1a8] sm:$0xff]
    %v375 = vld [vmem:[#allocation5 + $0x1b0] sm:$0xff]
    %v376 = vld [vmem:[#allocation5 + $0x1b8] sm:$0xff]
    %v377 = vld [vmem:[#allocation5 + $0x1c0] sm:$0xff]
    %v378 = vld [vmem:[#allocation5 + $0x1c8] sm:$0xff]
    %v379 = vld [vmem:[#allocation5 + $0x1d0] sm:$0xff]
    %v380 = vld [vmem:[#allocation5 + $0x1d8] sm:$0xff]
    %v381 = vld [vmem:[#allocation5 + $0x1e0] sm:$0xff]
    %v382 = vld [vmem:[#allocation5 + $0x1e8] sm:$0xff]
    %v383 = vld [vmem:[#allocation5 + $0x1f0] sm:$0xff]
    %v384 = vld [vmem:[#allocation5 + $0x1f8] sm:$0xff]
    %v385 = vld [vmem:[#allocation7] sm:$0xff]
    %v387 = vlaneseq
    %v388 = vshrl.u32 %v387, 7
    %v389 = vsub.s32 0, %v388
    %v390 = vrot.slane %v385, %v389
    %v391 = vlaneseq
    %v392 = vshrl.u32 %v391, 7
    %v393 = vsub.s32 1, %v392
    %v394 = vrot.slane %v385, %v393
    %v395 = vlaneseq
    %v396 = vshrl.u32 %v395, 7
    %v397 = vsub.s32 2, %v396
    %v398 = vrot.slane %v385, %v397
    %v399 = vlaneseq
    %v400 = vshrl.u32 %v399, 7
    %v401 = vsub.s32 3, %v400
    %v402 = vrot.slane %v385, %v401
    %v403 = vlaneseq
    %v404 = vshrl.u32 %v403, 7
    %v405 = vsub.s32 4, %v404
    %v406 = vrot.slane %v385, %v405
    %v407 = vlaneseq
    %v408 = vshrl.u32 %v407, 7
    %v409 = vsub.s32 5, %v408
    %v410 = vrot.slane %v385, %v409
    %v411 = vlaneseq
    %v412 = vshrl.u32 %v411, 7
    %v413 = vsub.s32 6, %v412
    %v414 = vrot.slane %v385, %v413
    %v415 = vlaneseq
    %v416 = vshrl.u32 %v415, 7
    %v417 = vsub.s32 7, %v416
    %v418 = vrot.slane %v385, %v417
    %v429 = vunpack.c.l.b16 %v319
    %v430 = vunpack.c.l.b16 %v320
    %v431 = vpack.c.b16 %v430, %v429
    %v497 = vunpack.c.l.b16 %v321
    %v498 = vunpack.c.h.b16 %v321
    %v499 = vunpack.c.l.b16 %v322
    %v500 = vunpack.c.h.b16 %v322
    %v501 = vunpack.c.l.b16 %v323
    %v502 = vunpack.c.h.b16 %v323
    %v503 = vunpack.c.l.b16 %v324
    %v504 = vunpack.c.h.b16 %v324
    %v505 = vunpack.c.l.b16 %v325
    %v506 = vunpack.c.h.b16 %v325
    %v507 = vunpack.c.l.b16 %v326
    %v508 = vunpack.c.h.b16 %v326
    %v509 = vunpack.c.l.b16 %v327
    %v510 = vunpack.c.h.b16 %v327
    %v511 = vunpack.c.l.b16 %v328
    %v512 = vunpack.c.h.b16 %v328
    %v513 = vunpack.c.l.b16 %v329
    %v514 = vunpack.c.h.b16 %v329
    %v515 = vunpack.c.l.b16 %v330
    %v516 = vunpack.c.h.b16 %v330
    %v517 = vunpack.c.l.b16 %v331
    %v518 = vunpack.c.h.b16 %v331
    %v519 = vunpack.c.l.b16 %v332
    %v520 = vunpack.c.h.b16 %v332
    %v521 = vunpack.c.l.b16 %v333
    %v522 = vunpack.c.h.b16 %v333
    %v523 = vunpack.c.l.b16 %v334
    %v524 = vunpack.c.h.b16 %v334
    %v525 = vunpack.c.l.b16 %v335
    %v526 = vunpack.c.h.b16 %v335
    %v527 = vunpack.c.l.b16 %v336
    %v528 = vunpack.c.h.b16 %v336
    %v529 = vunpack.c.l.b16 %v337
    %v530 = vunpack.c.h.b16 %v337
    %v531 = vunpack.c.l.b16 %v338
    %v532 = vunpack.c.h.b16 %v338
    %v533 = vunpack.c.l.b16 %v339
    %v534 = vunpack.c.h.b16 %v339
    %v535 = vunpack.c.l.b16 %v340
    %v536 = vunpack.c.h.b16 %v340
    %v537 = vunpack.c.l.b16 %v341
    %v538 = vunpack.c.h.b16 %v341
    %v539 = vunpack.c.l.b16 %v342
    %v540 = vunpack.c.h.b16 %v342
    %v541 = vunpack.c.l.b16 %v343
    %v542 = vunpack.c.h.b16 %v343
    %v543 = vunpack.c.l.b16 %v344
    %v544 = vunpack.c.h.b16 %v344
    %v545 = vunpack.c.l.b16 %v345
    %v546 = vunpack.c.h.b16 %v345
    %v547 = vunpack.c.l.b16 %v346
    %v548 = vunpack.c.h.b16 %v346
    %v549 = vunpack.c.l.b16 %v347
    %v550 = vunpack.c.h.b16 %v347
    %v551 = vunpack.c.l.b16 %v348
    %v552 = vunpack.c.h.b16 %v348
    %v553 = vunpack.c.l.b16 %v349
    %v554 = vunpack.c.h.b16 %v349
    %v555 = vunpack.c.l.b16 %v350
    %v556 = vunpack.c.h.b16 %v350
    %v557 = vunpack.c.l.b16 %v351
    %v558 = vunpack.c.h.b16 %v351
    %v559 = vunpack.c.l.b16 %v352
    %v560 = vunpack.c.h.b16 %v352
    %v561 = vunpack.c.l.b16 %v353
    %v562 = vunpack.c.h.b16 %v353
    %v563 = vunpack.c.l.b16 %v354
    %v564 = vunpack.c.h.b16 %v354
    %v565 = vunpack.c.l.b16 %v355
    %v566 = vunpack.c.h.b16 %v355
    %v567 = vunpack.c.l.b16 %v356
    %v568 = vunpack.c.h.b16 %v356
    %v569 = vunpack.c.l.b16 %v357
    %v570 = vunpack.c.h.b16 %v357
    %v571 = vunpack.c.l.b16 %v358
    %v572 = vunpack.c.h.b16 %v358
    %v573 = vunpack.c.l.b16 %v359
    %v574 = vunpack.c.h.b16 %v359
    %v575 = vunpack.c.l.b16 %v360
    %v576 = vunpack.c.h.b16 %v360
    %v577 = vunpack.c.l.b16 %v361
    %v578 = vunpack.c.h.b16 %v361
    %v579 = vunpack.c.l.b16 %v362
    %v580 = vunpack.c.h.b16 %v362
    %v581 = vunpack.c.l.b16 %v363
    %v582 = vunpack.c.h.b16 %v363
    %v583 = vunpack.c.l.b16 %v364
    %v584 = vunpack.c.h.b16 %v364
    %v585 = vunpack.c.l.b16 %v365
    %v586 = vunpack.c.h.b16 %v365
    %v587 = vunpack.c.l.b16 %v366
    %v588 = vunpack.c.h.b16 %v366
    %v589 = vunpack.c.l.b16 %v367
    %v590 = vunpack.c.h.b16 %v367
    %v591 = vunpack.c.l.b16 %v368
    %v592 = vunpack.c.h.b16 %v368
    %v593 = vunpack.c.l.b16 %v369
    %v594 = vunpack.c.h.b16 %v369
    %v595 = vunpack.c.l.b16 %v370
    %v596 = vunpack.c.h.b16 %v370
    %v597 = vunpack.c.l.b16 %v371
    %v598 = vunpack.c.h.b16 %v371
    %v599 = vunpack.c.l.b16 %v372
    %v600 = vunpack.c.h.b16 %v372
    %v601 = vunpack.c.l.b16 %v373
    %v602 = vunpack.c.h.b16 %v373
    %v603 = vunpack.c.l.b16 %v374
    %v604 = vunpack.c.h.b16 %v374
    %v605 = vunpack.c.l.b16 %v375
    %v606 = vunpack.c.h.b16 %v375
    %v607 = vunpack.c.l.b16 %v376
    %v608 = vunpack.c.h.b16 %v376
    %v609 = vunpack.c.l.b16 %v377
    %v610 = vunpack.c.h.b16 %v377
    %v611 = vunpack.c.l.b16 %v378
    %v612 = vunpack.c.h.b16 %v378
    %v613 = vunpack.c.l.b16 %v379
    %v614 = vunpack.c.h.b16 %v379
    %v615 = vunpack.c.l.b16 %v380
    %v616 = vunpack.c.h.b16 %v380
    %v617 = vunpack.c.l.b16 %v381
    %v618 = vunpack.c.h.b16 %v381
    %v619 = vunpack.c.l.b16 %v382
    %v620 = vunpack.c.h.b16 %v382
    %v621 = vunpack.c.l.b16 %v383
    %v622 = vunpack.c.h.b16 %v383
    %v623 = vunpack.c.l.b16 %v384
    %v624 = vunpack.c.h.b16 %v384
    %v625 = vpack.c.b16 %v505, %v497
    %v626 = vpack.c.b16 %v506, %v498
    %v627 = vpack.c.b16 %v507, %v499
    %v628 = vpack.c.b16 %v508, %v500
    %v629 = vpack.c.b16 %v509, %v501
    %v630 = vpack.c.b16 %v510, %v502
    %v631 = vpack.c.b16 %v511, %v503
    %v632 = vpack.c.b16 %v512, %v504
    %v633 = vpack.c.b16 %v521, %v513
    %v634 = vpack.c.b16 %v522, %v514
    %v635 = vpack.c.b16 %v523, %v515
    %v636 = vpack.c.b16 %v524, %v516
    %v637 = vpack.c.b16 %v525, %v517
    %v638 = vpack.c.b16 %v526, %v518
    %v639 = vpack.c.b16 %v527, %v519
    %v640 = vpack.c.b16 %v528, %v520
    %v641 = vpack.c.b16 %v537, %v529
    %v642 = vpack.c.b16 %v538, %v530
    %v643 = vpack.c.b16 %v539, %v531
    %v644 = vpack.c.b16 %v540, %v532
    %v645 = vpack.c.b16 %v541, %v533
    %v646 = vpack.c.b16 %v542, %v534
    %v647 = vpack.c.b16 %v543, %v535
    %v648 = vpack.c.b16 %v544, %v536
    %v649 = vpack.c.b16 %v553, %v545
    %v650 = vpack.c.b16 %v554, %v546
    %v651 = vpack.c.b16 %v555, %v547
    %v652 = vpack.c.b16 %v556, %v548
    %v653 = vpack.c.b16 %v557, %v549
    %v654 = vpack.c.b16 %v558, %v550
    %v655 = vpack.c.b16 %v559, %v551
    %v656 = vpack.c.b16 %v560, %v552
    %v657 = vpack.c.b16 %v569, %v561
    %v658 = vpack.c.b16 %v570, %v562
    %v659 = vpack.c.b16 %v571, %v563
    %v660 = vpack.c.b16 %v572, %v564
    %v661 = vpack.c.b16 %v573, %v565
    %v662 = vpack.c.b16 %v574, %v566
    %v663 = vpack.c.b16 %v575, %v567
    %v664 = vpack.c.b16 %v576, %v568
    %v665 = vpack.c.b16 %v585, %v577
    %v666 = vpack.c.b16 %v586, %v578
    %v667 = vpack.c.b16 %v587, %v579
    %v668 = vpack.c.b16 %v588, %v580
    %v669 = vpack.c.b16 %v589, %v581
    %v670 = vpack.c.b16 %v590, %v582
    %v671 = vpack.c.b16 %v591, %v583
    %v672 = vpack.c.b16 %v592, %v584
    %v673 = vpack.c.b16 %v601, %v593
    %v674 = vpack.c.b16 %v602, %v594
    %v675 = vpack.c.b16 %v603, %v595
    %v676 = vpack.c.b16 %v604, %v596
    %v677 = vpack.c.b16 %v605, %v597
    %v678 = vpack.c.b16 %v606, %v598
    %v679 = vpack.c.b16 %v607, %v599
    %v680 = vpack.c.b16 %v608, %v600
    %v681 = vpack.c.b16 %v617, %v609
    %v682 = vpack.c.b16 %v618, %v610
    %v683 = vpack.c.b16 %v619, %v611
    %v684 = vpack.c.b16 %v620, %v612
    %v685 = vpack.c.b16 %v621, %v613
    %v686 = vpack.c.b16 %v622, %v614
    %v687 = vpack.c.b16 %v623, %v615
    %v688 = vpack.c.b16 %v624, %v616
    %753 = vmatprep.subr.bf16.mxu0 %v626
    %754 = vmatpush1.bf16.msra.mxu0 %v625
    %755 = vmatprep.subr.bf16.mxu0 %v634
    %756 = vmatpush1.bf16.msra.mxu0 %v633
    %757 = vmatprep.subr.bf16.mxu0 %v642
    %758 = vmatpush1.bf16.msra.mxu0 %v641
    %759 = vmatprep.subr.bf16.mxu0 %v650
    %760 = vmatpush1.bf16.msra.mxu0 %v649
    %761 = vmatprep.subr.bf16.mxu0 %v658
    %762 = vmatpush1.bf16.msra.mxu0 %v657
    %763 = vmatprep.subr.bf16.mxu0 %v666
    %764 = vmatpush1.bf16.msra.mxu0 %v665
    %765 = vmatprep.subr.bf16.mxu0 %v674
    %766 = vmatpush1.bf16.msra.mxu0 %v673
    %767 = vmatprep.subr.bf16.mxu0 %v682
    %768 = vmatpush1.bf16.msra.mxu0 %v681
    %769 = vmatprep.subr.bf16.mxu0 0
    %770 = vmatpush1.bf16.msra.mxu0 0
    %771 = vmatprep.subr.bf16.mxu0 0
    %772 = vmatpush1.bf16.msra.mxu0 0
    %773 = vmatprep.subr.bf16.mxu0 0
    %774 = vmatpush1.bf16.msra.mxu0 0
    %775 = vmatprep.subr.bf16.mxu0 0
    %776 = vmatpush1.bf16.msra.mxu0 0
    %777 = vmatprep.subr.bf16.mxu0 0
    %778 = vmatpush1.bf16.msra.mxu0 0
    %779 = vmatprep.subr.bf16.mxu0 0
    %780 = vmatpush1.bf16.msra.mxu0 0
    %781 = vmatprep.subr.bf16.mxu0 0
    %782 = vmatpush1.bf16.msra.mxu0 0
    %783 = vmatprep.subr.bf16.mxu0 0
    %784 = vmatpush1.bf16.msra.mxu0 0
    %785 = vmatprep.mubr.bf16.mxu0 0
    %786 = vmatmul.mubr.bf16.gmra.mrb[0].mxu0 %v431
    %v787 = vpop.f32.mrb[0].mxu0
    %v788 = vadd.f32 %v390, %v787
    %v789 = vpop.f32.mrb[0].mxu0
    %v790 = vadd.f32 %v394, %v789
    %v791 = vpop.f32.mrb[0].mxu0
    %v792 = vadd.f32 %v390, %v791
    %v793 = vpop.f32.mrb[0].mxu0
    %v794 = vadd.f32 %v394, %v793
    %795 = vdwg.mxu0
    %796 = vmatprep.subr.bf16.mxu0 %v628
    %797 = vmatpush1.bf16.msra.mxu0 %v627
    %798 = vmatprep.subr.bf16.mxu0 %v636
    %799 = vmatpush1.bf16.msra.mxu0 %v635
    %800 = vmatprep.subr.bf16.mxu0 %v644
    %801 = vmatpush1.bf16.msra.mxu0 %v643
    %802 = vmatprep.subr.bf16.mxu0 %v652
    %803 = vmatpush1.bf16.msra.mxu0 %v651
    %804 = vmatprep.subr.bf16.mxu0 %v660
    %805 = vmatpush1.bf16.msra.mxu0 %v659
    %806 = vmatprep.subr.bf16.mxu0 %v668
    %807 = vmatpush1.bf16.msra.mxu0 %v667
    %808 = vmatprep.subr.bf16.mxu0 %v676
    %809 = vmatpush1.bf16.msra.mxu0 %v675
    %810 = vmatprep.subr.bf16.mxu0 %v684
    %811 = vmatpush1.bf16.msra.mxu0 %v683
    %812 = vmatprep.subr.bf16.mxu0 0
    %813 = vmatpush1.bf16.msra.mxu0 0
    %814 = vmatprep.subr.bf16.mxu0 0
    %815 = vmatpush1.bf16.msra.mxu0 0
    %816 = vmatprep.subr.bf16.mxu0 0
    %817 = vmatpush1.bf16.msra.mxu0 0
    %818 = vmatprep.subr.bf16.mxu0 0
    %819 = vmatpush1.bf16.msra.mxu0 0
    %820 = vmatprep.subr.bf16.mxu0 0
    %821 = vmatpush1.bf16.msra.mxu0 0
    %822 = vmatprep.subr.bf16.mxu0 0
    %823 = vmatpush1.bf16.msra.mxu0 0
    %824 = vmatprep.subr.bf16.mxu0 0
    %825 = vmatpush1.bf16.msra.mxu0 0
    %826 = vmatprep.subr.bf16.mxu0 0
    %827 = vmatpush1.bf16.msra.mxu0 0
    %828 = vmatprep.mubr.bf16.mxu0 0
    %829 = vmatmul.mubr.bf16.gmra.mrb[0].mxu0 %v431
    %v830 = vpop.f32.mrb[0].mxu0
    %v831 = vadd.f32 %v398, %v830
    %v832 = vpop.f32.mrb[0].mxu0
    %v833 = vadd.f32 %v402, %v832
    %v834 = vpop.f32.mrb[0].mxu0
    %v835 = vadd.f32 %v398, %v834
    %v836 = vpop.f32.mrb[0].mxu0
    %v837 = vadd.f32 %v402, %v836
    %838 = vdwg.mxu0
    %839 = vmatprep.subr.bf16.mxu0 %v630
    %840 = vmatpush1.bf16.msra.mxu0 %v629
    %841 = vmatprep.subr.bf16.mxu0 %v638
    %842 = vmatpush1.bf16.msra.mxu0 %v637
    %843 = vmatprep.subr.bf16.mxu0 %v646
    %844 = vmatpush1.bf16.msra.mxu0 %v645
    %845 = vmatprep.subr.bf16.mxu0 %v654
    %846 = vmatpush1.bf16.msra.mxu0 %v653
    %847 = vmatprep.subr.bf16.mxu0 %v662
    %848 = vmatpush1.bf16.msra.mxu0 %v661
    %849 = vmatprep.subr.bf16.mxu0 %v670
    %850 = vmatpush1.bf16.msra.mxu0 %v669
    %851 = vmatprep.subr.bf16.mxu0 %v678
    %852 = vmatpush1.bf16.msra.mxu0 %v677
    %853 = vmatprep.subr.bf16.mxu0 %v686
    %854 = vmatpush1.bf16.msra.mxu0 %v685
    %855 = vmatprep.subr.bf16.mxu0 0
    %856 = vmatpush1.bf16.msra.mxu0 0
    %857 = vmatprep.subr.bf16.mxu0 0
    %858 = vmatpush1.bf16.msra.mxu0 0
    %859 = vmatprep.subr.bf16.mxu0 0
    %860 = vmatpush1.bf16.msra.mxu0 0
    %861 = vmatprep.subr.bf16.mxu0 0
    %862 = vmatpush1.bf16.msra.mxu0 0
    %863 = vmatprep.subr.bf16.mxu0 0
    %864 = vmatpush1.bf16.msra.mxu0 0
    %865 = vmatprep.subr.bf16.mxu0 0
    %866 = vmatpush1.bf16.msra.mxu0 0
    %867 = vmatprep.subr.bf16.mxu0 0
    %868 = vmatpush1.bf16.msra.mxu0 0
    %869 = vmatprep.subr.bf16.mxu0 0
    %870 = vmatpush1.bf16.msra.mxu0 0
    %871 = vmatprep.mubr.bf16.mxu0 0
    %872 = vmatmul.mubr.bf16.gmra.mrb[0].mxu0 %v431
    %v873 = vpop.f32.mrb[0].mxu0
    %v874 = vadd.f32 %v406, %v873
    %v875 = vpop.f32.mrb[0].mxu0
    %v876 = vadd.f32 %v410, %v875
    %v877 = vpop.f32.mrb[0].mxu0
    %v878 = vadd.f32 %v406, %v877
    %v879 = vpop.f32.mrb[0].mxu0
    %v880 = vadd.f32 %v410, %v879
    %881 = vdwg.mxu0
    %882 = vmatprep.subr.bf16.mxu0 %v632
    %883 = vmatpush1.bf16.msra.mxu0 %v631
    %884 = vmatprep.subr.bf16.mxu0 %v640
    %885 = vmatpush1.bf16.msra.mxu0 %v639
    %886 = vmatprep.subr.bf16.mxu0 %v648
    %887 = vmatpush1.bf16.msra.mxu0 %v647
    %888 = vmatprep.subr.bf16.mxu0 %v656
    %889 = vmatpush1.bf16.msra.mxu0 %v655
    %890 = vmatprep.subr.bf16.mxu0 %v664
    %891 = vmatpush1.bf16.msra.mxu0 %v663
    %892 = vmatprep.subr.bf16.mxu0 %v672
    %893 = vmatpush1.bf16.msra.mxu0 %v671
    %894 = vmatprep.subr.bf16.mxu0 %v680
    %895 = vmatpush1.bf16.msra.mxu0 %v679
    %896 = vmatprep.subr.bf16.mxu0 %v688
    %897 = vmatpush1.bf16.msra.mxu0 %v687
    %898 = vmatprep.subr.bf16.mxu0 0
    %899 = vmatpush1.bf16.msra.mxu0 0
    %900 = vmatprep.subr.bf16.mxu0 0
    %901 = vmatpush1.bf16.msra.mxu0 0
    %902 = vmatprep.subr.bf16.mxu0 0
    %903 = vmatpush1.bf16.msra.mxu0 0
    %904 = vmatprep.subr.bf16.mxu0 0
    %905 = vmatpush1.bf16.msra.mxu0 0
    %906 = vmatprep.subr.bf16.mxu0 0
    %907 = vmatpush1.bf16.msra.mxu0 0
    %908 = vmatprep.subr.bf16.mxu0 0
    %909 = vmatpush1.bf16.msra.mxu0 0
    %910 = vmatprep.subr.bf16.mxu0 0
    %911 = vmatpush1.bf16.msra.mxu0 0
    %912 = vmatprep.subr.bf16.mxu0 0
    %913 = vmatpush1.bf16.msra.mxu0 0
    %914 = vmatprep.mubr.bf16.mxu0 0
    %915 = vmatmul.mubr.bf16.gmra.mrb[0].mxu0 %v431
    %v916 = vpop.f32.mrb[0].mxu0
    %v917 = vadd.f32 %v414, %v916
    %v918 = vpop.f32.mrb[0].mxu0
    %v919 = vadd.f32 %v418, %v918
    %v920 = vpop.f32.mrb[0].mxu0
    %v921 = vadd.f32 %v414, %v920
    %v922 = vpop.f32.mrb[0].mxu0
    %v923 = vadd.f32 %v418, %v922
    %924 = vdwg.mxu0
    %v925 = vmax.f32 %v788, 0.0
    %v926 = vmax.f32 %v790, 0.0
    %v927 = vmax.f32 %v831, 0.0
    %v928 = vmax.f32 %v833, 0.0
    %v929 = vmax.f32 %v874, 0.0
    %v930 = vmax.f32 %v876, 0.0
    %v931 = vmax.f32 %v917, 0.0
    %v932 = vmax.f32 %v919, 0.0
    %v933 = vmax.f32 %v792, 0.0
    %v934 = vmax.f32 %v794, 0.0
    %v935 = vmax.f32 %v835, 0.0
    %v936 = vmax.f32 %v837, 0.0
    %v937 = vmax.f32 %v878, 0.0
    %v938 = vmax.f32 %v880, 0.0
    %v939 = vmax.f32 %v921, 0.0
    %v940 = vmax.f32 %v923, 0.0
    %v941 = vpack.c.bf16 %v933, %v925
    %v942 = vpack.c.bf16 %v934, %v926
    %v943 = vpack.c.bf16 %v935, %v927
    %v944 = vpack.c.bf16 %v936, %v928
    %v945 = vld [vmem:[#allocation8] sm:$0xff]
    %v946 = vld [vmem:[#allocation8 + $0x8] sm:$0xff]
    %v947 = vld [vmem:[#allocation8 + $0x10] sm:$0xff]
    %v948 = vld [vmem:[#allocation8 + $0x18] sm:$0xff]
    %v949 = vld [vmem:[#allocation8 + $0x20] sm:$0xff]
    %v950 = vld [vmem:[#allocation8 + $0x28] sm:$0xff]
    %v951 = vld [vmem:[#allocation8 + $0x30] sm:$0xff]
    %v952 = vld [vmem:[#allocation8 + $0x38] sm:$0xff]
    %v953 = vld [vmem:[#allocation8 + $0x40] sm:$0xff]
    %v954 = vld [vmem:[#allocation8 + $0x48] sm:$0xff]
    %v955 = vld [vmem:[#allocation8 + $0x50] sm:$0xff]
    %v956 = vld [vmem:[#allocation8 + $0x58] sm:$0xff]
    %v957 = vld [vmem:[#allocation8 + $0x60] sm:$0xff]
    %v958 = vld [vmem:[#allocation8 + $0x68] sm:$0xff]
    %v959 = vld [vmem:[#allocation8 + $0x70] sm:$0xff]
    %v960 = vld [vmem:[#allocation8 + $0x78] sm:$0xff]
    %v961 = vld [vmem:[#allocation8 + $0x80] sm:$0xff]
    %v962 = vld [vmem:[#allocation8 + $0x88] sm:$0xff]
    %v963 = vld [vmem:[#allocation8 + $0x90] sm:$0xff]
    %v964 = vld [vmem:[#allocation8 + $0x98] sm:$0xff]
    %v965 = vld [vmem:[#allocation8 + $0xa0] sm:$0xff]
    %v966 = vld [vmem:[#allocation8 + $0xa8] sm:$0xff]
    %v967 = vld [vmem:[#allocation8 + $0xb0] sm:$0xff]
    %v968 = vld [vmem:[#allocation8 + $0xb8] sm:$0xff]
    %v969 = vld [vmem:[#allocation8 + $0xc0] sm:$0xff]
    %v970 = vld [vmem:[#allocation8 + $0xc8] sm:$0xff]
    %v971 = vld [vmem:[#allocation8 + $0xd0] sm:$0xff]
    %v972 = vld [vmem:[#allocation8 + $0xd8] sm:$0xff]
    %v973 = vld [vmem:[#allocation8 + $0xe0] sm:$0xff]
    %v974 = vld [vmem:[#allocation8 + $0xe8] sm:$0xff]
    %v975 = vld [vmem:[#allocation8 + $0xf0] sm:$0xff]
    %v976 = vld [vmem:[#allocation8 + $0xf8] sm:$0xff]
    %v977 = vld [vmem:[#allocation8 + $0x100] sm:$0xff]
    %v978 = vld [vmem:[#allocation8 + $0x108] sm:$0xff]
    %v979 = vld [vmem:[#allocation8 + $0x110] sm:$0xff]
    %v980 = vld [vmem:[#allocation8 + $0x118] sm:$0xff]
    %v981 = vld [vmem:[#allocation8 + $0x120] sm:$0xff]
    %v982 = vld [vmem:[#allocation8 + $0x128] sm:$0xff]
    %v983 = vld [vmem:[#allocation8 + $0x130] sm:$0xff]
    %v984 = vld [vmem:[#allocation8 + $0x138] sm:$0xff]
    %v985 = vld [vmem:[#allocation8 + $0x140] sm:$0xff]
    %v986 = vld [vmem:[#allocation8 + $0x148] sm:$0xff]
    %v987 = vld [vmem:[#allocation8 + $0x150] sm:$0xff]
    %v988 = vld [vmem:[#allocation8 + $0x158] sm:$0xff]
    %v989 = vld [vmem:[#allocation8 + $0x160] sm:$0xff]
    %v990 = vld [vmem:[#allocation8 + $0x168] sm:$0xff]
    %v991 = vld [vmem:[#allocation8 + $0x170] sm:$0xff]
    %v992 = vld [vmem:[#allocation8 + $0x178] sm:$0xff]
    %v993 = vld [vmem:[#allocation8 + $0x180] sm:$0xff]
    %v994 = vld [vmem:[#allocation8 + $0x188] sm:$0xff]
    %v995 = vld [vmem:[#allocation8 + $0x190] sm:$0xff]
    %v996 = vld [vmem:[#allocation8 + $0x198] sm:$0xff]
    %v997 = vld [vmem:[#allocation8 + $0x1a0] sm:$0xff]
    %v998 = vld [vmem:[#allocation8 + $0x1a8] sm:$0xff]
    %v999 = vld [vmem:[#allocation8 + $0x1b0] sm:$0xff]
    %v1000 = vld [vmem:[#allocation8 + $0x1b8] sm:$0xff]
    %v1001 = vld [vmem:[#allocation8 + $0x1c0] sm:$0xff]
    %v1002 = vld [vmem:[#allocation8 + $0x1c8] sm:$0xff]
    %v1003 = vld [vmem:[#allocation8 + $0x1d0] sm:$0xff]
    %v1004 = vld [vmem:[#allocation8 + $0x1d8] sm:$0xff]
    %v1005 = vld [vmem:[#allocation8 + $0x1e0] sm:$0xff]
    %v1006 = vld [vmem:[#allocation8 + $0x1e8] sm:$0xff]
    %v1007 = vld [vmem:[#allocation8 + $0x1f0] sm:$0xff]
    %v1008 = vld [vmem:[#allocation8 + $0x1f8] sm:$0xff]
    %v1009 = vld [vmem:[#allocation8 + $0x200] sm:$0xff]
    %v1010 = vld [vmem:[#allocation8 + $0x208] sm:$0xff]
    %v1011 = vld [vmem:[#allocation8 + $0x210] sm:$0xff]
    %v1012 = vld [vmem:[#allocation8 + $0x218] sm:$0xff]
    %v1013 = vld [vmem:[#allocation8 + $0x220] sm:$0xff]
    %v1014 = vld [vmem:[#allocation8 + $0x228] sm:$0xff]
    %v1015 = vld [vmem:[#allocation8 + $0x230] sm:$0xff]
    %v1016 = vld [vmem:[#allocation8 + $0x238] sm:$0xff]
    %v1017 = vld [vmem:[#allocation8 + $0x240] sm:$0xff]
    %v1018 = vld [vmem:[#allocation8 + $0x248] sm:$0xff]
    %v1019 = vld [vmem:[#allocation8 + $0x250] sm:$0xff]
    %v1020 = vld [vmem:[#allocation8 + $0x258] sm:$0xff]
    %v1021 = vld [vmem:[#allocation8 + $0x260] sm:$0xff]
    %v1022 = vld [vmem:[#allocation8 + $0x268] sm:$0xff]
    %v1023 = vld [vmem:[#allocation8 + $0x270] sm:$0xff]
    %v1024 = vld [vmem:[#allocation8 + $0x278] sm:$0xff]
    %v1025 = vld [vmem:[#allocation8 + $0x280] sm:$0xff]
    %v1026 = vld [vmem:[#allocation8 + $0x288] sm:$0xff]
    %v1027 = vld [vmem:[#allocation8 + $0x290] sm:$0xff]
    %v1028 = vld [vmem:[#allocation8 + $0x298] sm:$0xff]
    %v1029 = vld [vmem:[#allocation8 + $0x2a0] sm:$0xff]
    %v1030 = vld [vmem:[#allocation8 + $0x2a8] sm:$0xff]
    %v1031 = vld [vmem:[#allocation8 + $0x2b0] sm:$0xff]
    %v1032 = vld [vmem:[#allocation8 + $0x2b8] sm:$0xff]
    %v1033 = vld [vmem:[#allocation8 + $0x2c0] sm:$0xff]
    %v1034 = vld [vmem:[#allocation8 + $0x2c8] sm:$0xff]
    %v1035 = vld [vmem:[#allocation8 + $0x2d0] sm:$0xff]
    %v1036 = vld [vmem:[#allocation8 + $0x2d8] sm:$0xff]
    %v1037 = vld [vmem:[#allocation8 + $0x2e0] sm:$0xff]
    %v1038 = vld [vmem:[#allocation8 + $0x2e8] sm:$0xff]
    %v1039 = vld [vmem:[#allocation8 + $0x2f0] sm:$0xff]
    %v1040 = vld [vmem:[#allocation8 + $0x2f8] sm:$0xff]
    %v1041 = vld [vmem:[#allocation8 + $0x300] sm:$0xff]
    %v1042 = vld [vmem:[#allocation8 + $0x308] sm:$0xff]
    %v1043 = vld [vmem:[#allocation8 + $0x310] sm:$0xff]
    %v1044 = vld [vmem:[#allocation8 + $0x318] sm:$0xff]
    %v1045 = vld [vmem:[#allocation8 + $0x320] sm:$0xff]
    %v1046 = vld [vmem:[#allocation8 + $0x328] sm:$0xff]
    %v1047 = vld [vmem:[#allocation8 + $0x330] sm:$0xff]
    %v1048 = vld [vmem:[#allocation8 + $0x338] sm:$0xff]
    %v1049 = vld [vmem:[#allocation8 + $0x340] sm:$0xff]
    %v1050 = vld [vmem:[#allocation8 + $0x348] sm:$0xff]
    %v1051 = vld [vmem:[#allocation8 + $0x350] sm:$0xff]
    %v1052 = vld [vmem:[#allocation8 + $0x358] sm:$0xff]
    %v1053 = vld [vmem:[#allocation8 + $0x360] sm:$0xff]
    %v1054 = vld [vmem:[#allocation8 + $0x368] sm:$0xff]
    %v1055 = vld [vmem:[#allocation8 + $0x370] sm:$0xff]
    %v1056 = vld [vmem:[#allocation8 + $0x378] sm:$0xff]
    %v1057 = vld [vmem:[#allocation8 + $0x380] sm:$0xff]
    %v1058 = vld [vmem:[#allocation8 + $0x388] sm:$0xff]
    %v1059 = vld [vmem:[#allocation8 + $0x390] sm:$0xff]
    %v1060 = vld [vmem:[#allocation8 + $0x398] sm:$0xff]
    %v1061 = vld [vmem:[#allocation8 + $0x3a0] sm:$0xff]
    %v1062 = vld [vmem:[#allocation8 + $0x3a8] sm:$0xff]
    %v1063 = vld [vmem:[#allocation8 + $0x3b0] sm:$0xff]
    %v1064 = vld [vmem:[#allocation8 + $0x3b8] sm:$0xff]
    %v1065 = vld [vmem:[#allocation8 + $0x3c0] sm:$0xff]
    %v1066 = vld [vmem:[#allocation8 + $0x3c8] sm:$0xff]
    %v1067 = vld [vmem:[#allocation8 + $0x3d0] sm:$0xff]
    %v1068 = vld [vmem:[#allocation8 + $0x3d8] sm:$0xff]
    %v1069 = vld [vmem:[#allocation8 + $0x3e0] sm:$0xff]
    %v1070 = vld [vmem:[#allocation8 + $0x3e8] sm:$0xff]
    %v1071 = vld [vmem:[#allocation8 + $0x3f0] sm:$0xff]
    %v1072 = vld [vmem:[#allocation8 + $0x3f8] sm:$0xff]
    %v1073 = vld [vmem:[%s4] sm:$0xf]
    %v1075 = vlaneseq
    %v1076 = vshrl.u32 %v1075, 7
    %v1077 = vsub.s32 0, %v1076
    %v1078 = vrot.slane %v1073, %v1077
    %v1079 = vlaneseq
    %v1080 = vshrl.u32 %v1079, 7
    %v1081 = vsub.s32 1, %v1080
    %v1082 = vrot.slane %v1073, %v1081
    %v1083 = vlaneseq
    %v1084 = vshrl.u32 %v1083, 7
    %v1085 = vsub.s32 2, %v1084
    %v1086 = vrot.slane %v1073, %v1085
    %v1087 = vlaneseq
    %v1088 = vshrl.u32 %v1087, 7
    %v1089 = vsub.s32 3, %v1088
    %v1090 = vrot.slane %v1073, %v1089
    %v1223 = vunpack.c.l.b16 %v945
    %v1224 = vunpack.c.h.b16 %v945
    %v1225 = vunpack.c.l.b16 %v946
    %v1226 = vunpack.c.h.b16 %v946
    %v1227 = vunpack.c.l.b16 %v947
    %v1228 = vunpack.c.h.b16 %v947
    %v1229 = vunpack.c.l.b16 %v948
    %v1230 = vunpack.c.h.b16 %v948
    %v1231 = vunpack.c.l.b16 %v949
    %v1232 = vunpack.c.h.b16 %v949
    %v1233 = vunpack.c.l.b16 %v950
    %v1234 = vunpack.c.h.b16 %v950
    %v1235 = vunpack.c.l.b16 %v951
    %v1236 = vunpack.c.h.b16 %v951
    %v1237 = vunpack.c.l.b16 %v952
    %v1238 = vunpack.c.h.b16 %v952
    %v1239 = vunpack.c.l.b16 %v953
    %v1240 = vunpack.c.h.b16 %v953
    %v1241 = vunpack.c.l.b16 %v954
    %v1242 = vunpack.c.h.b16 %v954
    %v1243 = vunpack.c.l.b16 %v955
    %v1244 = vunpack.c.h.b16 %v955
    %v1245 = vunpack.c.l.b16 %v956
    %v1246 = vunpack.c.h.b16 %v956
    %v1247 = vunpack.c.l.b16 %v957
    %v1248 = vunpack.c.h.b16 %v957
    %v1249 = vunpack.c.l.b16 %v958
    %v1250 = vunpack.c.h.b16 %v958
    %v1251 = vunpack.c.l.b16 %v959
    %v1252 = vunpack.c.h.b16 %v959
    %v1253 = vunpack.c.l.b16 %v960
    %v1254 = vunpack.c.h.b16 %v960
    %v1255 = vunpack.c.l.b16 %v961
    %v1256 = vunpack.c.h.b16 %v961
    %v1257 = vunpack.c.l.b16 %v962
    %v1258 = vunpack.c.h.b16 %v962
    %v1259 = vunpack.c.l.b16 %v963
    %v1260 = vunpack.c.h.b16 %v963
    %v1261 = vunpack.c.l.b16 %v964
    %v1262 = vunpack.c.h.b16 %v964
    %v1263 = vunpack.c.l.b16 %v965
    %v1264 = vunpack.c.h.b16 %v965
    %v1265 = vunpack.c.l.b16 %v966
    %v1266 = vunpack.c.h.b16 %v966
    %v1267 = vunpack.c.l.b16 %v967
    %v1268 = vunpack.c.h.b16 %v967
    %v1269 = vunpack.c.l.b16 %v968
    %v1270 = vunpack.c.h.b16 %v968
    %v1271 = vunpack.c.l.b16 %v969
    %v1272 = vunpack.c.h.b16 %v969
    %v1273 = vunpack.c.l.b16 %v970
    %v1274 = vunpack.c.h.b16 %v970
    %v1275 = vunpack.c.l.b16 %v971
    %v1276 = vunpack.c.h.b16 %v971
    %v1277 = vunpack.c.l.b16 %v972
    %v1278 = vunpack.c.h.b16 %v972
    %v1279 = vunpack.c.l.b16 %v973
    %v1280 = vunpack.c.h.b16 %v973
    %v1281 = vunpack.c.l.b16 %v974
    %v1282 = vunpack.c.h.b16 %v974
    %v1283 = vunpack.c.l.b16 %v975
    %v1284 = vunpack.c.h.b16 %v975
    %v1285 = vunpack.c.l.b16 %v976
    %v1286 = vunpack.c.h.b16 %v976
    %v1287 = vunpack.c.l.b16 %v977
    %v1288 = vunpack.c.h.b16 %v977
    %v1289 = vunpack.c.l.b16 %v978
    %v1290 = vunpack.c.h.b16 %v978
    %v1291 = vunpack.c.l.b16 %v979
    %v1292 = vunpack.c.h.b16 %v979
    %v1293 = vunpack.c.l.b16 %v980
    %v1294 = vunpack.c.h.b16 %v980
    %v1295 = vunpack.c.l.b16 %v981
    %v1296 = vunpack.c.h.b16 %v981
    %v1297 = vunpack.c.l.b16 %v982
    %v1298 = vunpack.c.h.b16 %v982
    %v1299 = vunpack.c.l.b16 %v983
    %v1300 = vunpack.c.h.b16 %v983
    %v1301 = vunpack.c.l.b16 %v984
    %v1302 = vunpack.c.h.b16 %v984
    %v1303 = vunpack.c.l.b16 %v985
    %v1304 = vunpack.c.h.b16 %v985
    %v1305 = vunpack.c.l.b16 %v986
    %v1306 = vunpack.c.h.b16 %v986
    %v1307 = vunpack.c.l.b16 %v987
    %v1308 = vunpack.c.h.b16 %v987
    %v1309 = vunpack.c.l.b16 %v988
    %v1310 = vunpack.c.h.b16 %v988
    %v1311 = vunpack.c.l.b16 %v989
    %v1312 = vunpack.c.h.b16 %v989
    %v1313 = vunpack.c.l.b16 %v990
    %v1314 = vunpack.c.h.b16 %v990
    %v1315 = vunpack.c.l.b16 %v991
    %v1316 = vunpack.c.h.b16 %v991
    %v1317 = vunpack.c.l.b16 %v992
    %v1318 = vunpack.c.h.b16 %v992
    %v1319 = vunpack.c.l.b16 %v993
    %v1320 = vunpack.c.h.b16 %v993
    %v1321 = vunpack.c.l.b16 %v994
    %v1322 = vunpack.c.h.b16 %v994
    %v1323 = vunpack.c.l.b16 %v995
    %v1324 = vunpack.c.h.b16 %v995
    %v1325 = vunpack.c.l.b16 %v996
    %v1326 = vunpack.c.h.b16 %v996
    %v1327 = vunpack.c.l.b16 %v997
    %v1328 = vunpack.c.h.b16 %v997
    %v1329 = vunpack.c.l.b16 %v998
    %v1330 = vunpack.c.h.b16 %v998
    %v1331 = vunpack.c.l.b16 %v999
    %v1332 = vunpack.c.h.b16 %v999
    %v1333 = vunpack.c.l.b16 %v1000
    %v1334 = vunpack.c.h.b16 %v1000
    %v1335 = vunpack.c.l.b16 %v1001
    %v1336 = vunpack.c.h.b16 %v1001
    %v1337 = vunpack.c.l.b16 %v1002
    %v1338 = vunpack.c.h.b16 %v1002
    %v1339 = vunpack.c.l.b16 %v1003
    %v1340 = vunpack.c.h.b16 %v1003
    %v1341 = vunpack.c.l.b16 %v1004
    %v1342 = vunpack.c.h.b16 %v1004
    %v1343 = vunpack.c.l.b16 %v1005
    %v1344 = vunpack.c.h.b16 %v1005
    %v1345 = vunpack.c.l.b16 %v1006
    %v1346 = vunpack.c.h.b16 %v1006
    %v1347 = vunpack.c.l.b16 %v1007
    %v1348 = vunpack.c.h.b16 %v1007
    %v1349 = vunpack.c.l.b16 %v1008
    %v1350 = vunpack.c.h.b16 %v1008
    %v1351 = vunpack.c.l.b16 %v1009
    %v1352 = vunpack.c.h.b16 %v1009
    %v1353 = vunpack.c.l.b16 %v1010
    %v1354 = vunpack.c.h.b16 %v1010
    %v1355 = vunpack.c.l.b16 %v1011
    %v1356 = vunpack.c.h.b16 %v1011
    %v1357 = vunpack.c.l.b16 %v1012
    %v1358 = vunpack.c.h.b16 %v1012
    %v1359 = vunpack.c.l.b16 %v1013
    %v1360 = vunpack.c.h.b16 %v1013
    %v1361 = vunpack.c.l.b16 %v1014
    %v1362 = vunpack.c.h.b16 %v1014
    %v1363 = vunpack.c.l.b16 %v1015
    %v1364 = vunpack.c.h.b16 %v1015
    %v1365 = vunpack.c.l.b16 %v1016
    %v1366 = vunpack.c.h.b16 %v1016
    %v1367 = vunpack.c.l.b16 %v1017
    %v1368 = vunpack.c.h.b16 %v1017
    %v1369 = vunpack.c.l.b16 %v1018
    %v1370 = vunpack.c.h.b16 %v1018
    %v1371 = vunpack.c.l.b16 %v1019
    %v1372 = vunpack.c.h.b16 %v1019
    %v1373 = vunpack.c.l.b16 %v1020
    %v1374 = vunpack.c.h.b16 %v1020
    %v1375 = vunpack.c.l.b16 %v1021
    %v1376 = vunpack.c.h.b16 %v1021
    %v1377 = vunpack.c.l.b16 %v1022
    %v1378 = vunpack.c.h.b16 %v1022
    %v1379 = vunpack.c.l.b16 %v1023
    %v1380 = vunpack.c.h.b16 %v1023
    %v1381 = vunpack.c.l.b16 %v1024
    %v1382 = vunpack.c.h.b16 %v1024
    %v1383 = vunpack.c.l.b16 %v1025
    %v1384 = vunpack.c.h.b16 %v1025
    %v1385 = vunpack.c.l.b16 %v1026
    %v1386 = vunpack.c.h.b16 %v1026
    %v1387 = vunpack.c.l.b16 %v1027
    %v1388 = vunpack.c.h.b16 %v1027
    %v1389 = vunpack.c.l.b16 %v1028
    %v1390 = vunpack.c.h.b16 %v1028
    %v1391 = vunpack.c.l.b16 %v1029
    %v1392 = vunpack.c.h.b16 %v1029
    %v1393 = vunpack.c.l.b16 %v1030
    %v1394 = vunpack.c.h.b16 %v1030
    %v1395 = vunpack.c.l.b16 %v1031
    %v1396 = vunpack.c.h.b16 %v1031
    %v1397 = vunpack.c.l.b16 %v1032
    %v1398 = vunpack.c.h.b16 %v1032
    %v1399 = vunpack.c.l.b16 %v1033
    %v1400 = vunpack.c.h.b16 %v1033
    %v1401 = vunpack.c.l.b16 %v1034
    %v1402 = vunpack.c.h.b16 %v1034
    %v1403 = vunpack.c.l.b16 %v1035
    %v1404 = vunpack.c.h.b16 %v1035
    %v1405 = vunpack.c.l.b16 %v1036
    %v1406 = vunpack.c.h.b16 %v1036
    %v1407 = vunpack.c.l.b16 %v1037
    %v1408 = vunpack.c.h.b16 %v1037
    %v1409 = vunpack.c.l.b16 %v1038
    %v1410 = vunpack.c.h.b16 %v1038
    %v1411 = vunpack.c.l.b16 %v1039
    %v1412 = vunpack.c.h.b16 %v1039
    %v1413 = vunpack.c.l.b16 %v1040
    %v1414 = vunpack.c.h.b16 %v1040
    %v1415 = vunpack.c.l.b16 %v1041
    %v1416 = vunpack.c.h.b16 %v1041
    %v1417 = vunpack.c.l.b16 %v1042
    %v1418 = vunpack.c.h.b16 %v1042
    %v1419 = vunpack.c.l.b16 %v1043
    %v1420 = vunpack.c.h.b16 %v1043
    %v1421 = vunpack.c.l.b16 %v1044
    %v1422 = vunpack.c.h.b16 %v1044
    %v1423 = vunpack.c.l.b16 %v1045
    %v1424 = vunpack.c.h.b16 %v1045
    %v1425 = vunpack.c.l.b16 %v1046
    %v1426 = vunpack.c.h.b16 %v1046
    %v1427 = vunpack.c.l.b16 %v1047
    %v1428 = vunpack.c.h.b16 %v1047
    %v1429 = vunpack.c.l.b16 %v1048
    %v1430 = vunpack.c.h.b16 %v1048
    %v1431 = vunpack.c.l.b16 %v1049
    %v1432 = vunpack.c.h.b16 %v1049
    %v1433 = vunpack.c.l.b16 %v1050
    %v1434 = vunpack.c.h.b16 %v1050
    %v1435 = vunpack.c.l.b16 %v1051
    %v1436 = vunpack.c.h.b16 %v1051
    %v1437 = vunpack.c.l.b16 %v1052
    %v1438 = vunpack.c.h.b16 %v1052
    %v1439 = vunpack.c.l.b16 %v1053
    %v1440 = vunpack.c.h.b16 %v1053
    %v1441 = vunpack.c.l.b16 %v1054
    %v1442 = vunpack.c.h.b16 %v1054
    %v1443 = vunpack.c.l.b16 %v1055
    %v1444 = vunpack.c.h.b16 %v1055
    %v1445 = vunpack.c.l.b16 %v1056
    %v1446 = vunpack.c.h.b16 %v1056
    %v1447 = vunpack.c.l.b16 %v1057
    %v1448 = vunpack.c.h.b16 %v1057
    %v1449 = vunpack.c.l.b16 %v1058
    %v1450 = vunpack.c.h.b16 %v1058
    %v1451 = vunpack.c.l.b16 %v1059
    %v1452 = vunpack.c.h.b16 %v1059
    %v1453 = vunpack.c.l.b16 %v1060
    %v1454 = vunpack.c.h.b16 %v1060
    %v1455 = vunpack.c.l.b16 %v1061
    %v1456 = vunpack.c.h.b16 %v1061
    %v1457 = vunpack.c.l.b16 %v1062
    %v1458 = vunpack.c.h.b16 %v1062
    %v1459 = vunpack.c.l.b16 %v1063
    %v1460 = vunpack.c.h.b16 %v1063
    %v1461 = vunpack.c.l.b16 %v1064
    %v1462 = vunpack.c.h.b16 %v1064
    %v1463 = vunpack.c.l.b16 %v1065
    %v1464 = vunpack.c.h.b16 %v1065
    %v1465 = vunpack.c.l.b16 %v1066
    %v1466 = vunpack.c.h.b16 %v1066
    %v1467 = vunpack.c.l.b16 %v1067
    %v1468 = vunpack.c.h.b16 %v1067
    %v1469 = vunpack.c.l.b16 %v1068
    %v1470 = vunpack.c.h.b16 %v1068
    %v1471 = vunpack.c.l.b16 %v1069
    %v1472 = vunpack.c.h.b16 %v1069
    %v1473 = vunpack.c.l.b16 %v1070
    %v1474 = vunpack.c.h.b16 %v1070
    %v1475 = vunpack.c.l.b16 %v1071
    %v1476 = vunpack.c.h.b16 %v1071
    %v1477 = vunpack.c.l.b16 %v1072
    %v1478 = vunpack.c.h.b16 %v1072
    %v1479 = vpack.c.b16 %v1227, %v1223
    %v1480 = vpack.c.b16 %v1228, %v1224
    %v1481 = vpack.c.b16 %v1229, %v1225
    %v1482 = vpack.c.b16 %v1230, %v1226
    %v1483 = vpack.c.b16 %v1235, %v1231
    %v1484 = vpack.c.b16 %v1236, %v1232
    %v1485 = vpack.c.b16 %v1237, %v1233
    %v1486 = vpack.c.b16 %v1238, %v1234
    %v1487 = vpack.c.b16 %v1243, %v1239
    %v1488 = vpack.c.b16 %v1244, %v1240
    %v1489 = vpack.c.b16 %v1245, %v1241
    %v1490 = vpack.c.b16 %v1246, %v1242
    %v1491 = vpack.c.b16 %v1251, %v1247
    %v1492 = vpack.c.b16 %v1252, %v1248
    %v1493 = vpack.c.b16 %v1253, %v1249
    %v1494 = vpack.c.b16 %v1254, %v1250
    %v1495 = vpack.c.b16 %v1259, %v1255
    %v1496 = vpack.c.b16 %v1260, %v1256
    %v1497 = vpack.c.b16 %v1261, %v1257
    %v1498 = vpack.c.b16 %v1262, %v1258
    %v1499 = vpack.c.b16 %v1267, %v1263
    %v1500 = vpack.c.b16 %v1268, %v1264
    %v1501 = vpack.c.b16 %v1269, %v1265
    %v1502 = vpack.c.b16 %v1270, %v1266
    %v1503 = vpack.c.b16 %v1275, %v1271
    %v1504 = vpack.c.b16 %v1276, %v1272
    %v1505 = vpack.c.b16 %v1277, %v1273
    %v1506 = vpack.c.b16 %v1278, %v1274
    %v1507 = vpack.c.b16 %v1283, %v1279
    %v1508 = vpack.c.b16 %v1284, %v1280
    %v1509 = vpack.c.b16 %v1285, %v1281
    %v1510 = vpack.c.b16 %v1286, %v1282
    %v1511 = vpack.c.b16 %v1291, %v1287
    %v1512 = vpack.c.b16 %v1292, %v1288
    %v1513 = vpack.c.b16 %v1293, %v1289
    %v1514 = vpack.c.b16 %v1294, %v1290
    %v1515 = vpack.c.b16 %v1299, %v1295
    %v1516 = vpack.c.b16 %v1300, %v1296
    %v1517 = vpack.c.b16 %v1301, %v1297
    %v1518 = vpack.c.b16 %v1302, %v1298
    %v1519 = vpack.c.b16 %v1307, %v1303
    %v1520 = vpack.c.b16 %v1308, %v1304
    %v1521 = vpack.c.b16 %v1309, %v1305
    %v1522 = vpack.c.b16 %v1310, %v1306
    %v1523 = vpack.c.b16 %v1315, %v1311
    %v1524 = vpack.c.b16 %v1316, %v1312
    %v1525 = vpack.c.b16 %v1317, %v1313
    %v1526 = vpack.c.b16 %v1318, %v1314
    %v1527 = vpack.c.b16 %v1323, %v1319
    %v1528 = vpack.c.b16 %v1324, %v1320
    %v1529 = vpack.c.b16 %v1325, %v1321
    %v1530 = vpack.c.b16 %v1326, %v1322
    %v1531 = vpack.c.b16 %v1331, %v1327
    %v1532 = vpack.c.b16 %v1332, %v1328
    %v1533 = vpack.c.b16 %v1333, %v1329
    %v1534 = vpack.c.b16 %v1334, %v1330
    %v1535 = vpack.c.b16 %v1339, %v1335
    %v1536 = vpack.c.b16 %v1340, %v1336
    %v1537 = vpack.c.b16 %v1341, %v1337
    %v1538 = vpack.c.b16 %v1342, %v1338
    %v1539 = vpack.c.b16 %v1347, %v1343
    %v1540 = vpack.c.b16 %v1348, %v1344
    %v1541 = vpack.c.b16 %v1349, %v1345
    %v1542 = vpack.c.b16 %v1350, %v1346
    %v1543 = vpack.c.b16 %v1355, %v1351
    %v1544 = vpack.c.b16 %v1356, %v1352
    %v1545 = vpack.c.b16 %v1357, %v1353
    %v1546 = vpack.c.b16 %v1358, %v1354
    %v1547 = vpack.c.b16 %v1363, %v1359
    %v1548 = vpack.c.b16 %v1364, %v1360
    %v1549 = vpack.c.b16 %v1365, %v1361
    %v1550 = vpack.c.b16 %v1366, %v1362
    %v1551 = vpack.c.b16 %v1371, %v1367
    %v1552 = vpack.c.b16 %v1372, %v1368
    %v1553 = vpack.c.b16 %v1373, %v1369
    %v1554 = vpack.c.b16 %v1374, %v1370
    %v1555 = vpack.c.b16 %v1379, %v1375
    %v1556 = vpack.c.b16 %v1380, %v1376
    %v1557 = vpack.c.b16 %v1381, %v1377
    %v1558 = vpack.c.b16 %v1382, %v1378
    %v1559 = vpack.c.b16 %v1387, %v1383
    %v1560 = vpack.c.b16 %v1388, %v1384
    %v1561 = vpack.c.b16 %v1389, %v1385
    %v1562 = vpack.c.b16 %v1390, %v1386
    %v1563 = vpack.c.b16 %v1395, %v1391
    %v1564 = vpack.c.b16 %v1396, %v1392
    %v1565 = vpack.c.b16 %v1397, %v1393
    %v1566 = vpack.c.b16 %v1398, %v1394
    %v1567 = vpack.c.b16 %v1403, %v1399
    %v1568 = vpack.c.b16 %v1404, %v1400
    %v1569 = vpack.c.b16 %v1405, %v1401
    %v1570 = vpack.c.b16 %v1406, %v1402
    %v1571 = vpack.c.b16 %v1411, %v1407
    %v1572 = vpack.c.b16 %v1412, %v1408
    %v1573 = vpack.c.b16 %v1413, %v1409
    %v1574 = vpack.c.b16 %v1414, %v1410
    %v1575 = vpack.c.b16 %v1419, %v1415
    %v1576 = vpack.c.b16 %v1420, %v1416
    %v1577 = vpack.c.b16 %v1421, %v1417
    %v1578 = vpack.c.b16 %v1422, %v1418
    %v1579 = vpack.c.b16 %v1427, %v1423
    %v1580 = vpack.c.b16 %v1428, %v1424
    %v1581 = vpack.c.b16 %v1429, %v1425
    %v1582 = vpack.c.b16 %v1430, %v1426
    %v1583 = vpack.c.b16 %v1435, %v1431
    %v1584 = vpack.c.b16 %v1436, %v1432
    %v1585 = vpack.c.b16 %v1437, %v1433
    %v1586 = vpack.c.b16 %v1438, %v1434
    %v1587 = vpack.c.b16 %v1443, %v1439
    %v1588 = vpack.c.b16 %v1444, %v1440
    %v1589 = vpack.c.b16 %v1445, %v1441
    %v1590 = vpack.c.b16 %v1446, %v1442
    %v1591 = vpack.c.b16 %v1451, %v1447
    %v1592 = vpack.c.b16 %v1452, %v1448
    %v1593 = vpack.c.b16 %v1453, %v1449
    %v1594 = vpack.c.b16 %v1454, %v1450
    %v1595 = vpack.c.b16 %v1459, %v1455
    %v1596 = vpack.c.b16 %v1460, %v1456
    %v1597 = vpack.c.b16 %v1461, %v1457
    %v1598 = vpack.c.b16 %v1462, %v1458
    %v1599 = vpack.c.b16 %v1467, %v1463
    %v1600 = vpack.c.b16 %v1468, %v1464
    %v1601 = vpack.c.b16 %v1469, %v1465
    %v1602 = vpack.c.b16 %v1470, %v1466
    %v1603 = vpack.c.b16 %v1475, %v1471
    %v1604 = vpack.c.b16 %v1476, %v1472
    %v1605 = vpack.c.b16 %v1477, %v1473
    %v1606 = vpack.c.b16 %v1478, %v1474
    %1735 = vmatprep.subr.bf16.mxu0 %v1480
    %1736 = vmatpush1.bf16.msra.mxu0 %v1479
    %1737 = vmatprep.subr.bf16.mxu0 %v1484
    %1738 = vmatpush1.bf16.msra.mxu0 %v1483
    %1739 = vmatprep.subr.bf16.mxu0 %v1488
    %1740 = vmatpush1.bf16.msra.mxu0 %v1487
    %1741 = vmatprep.subr.bf16.mxu0 %v1492
    %1742 = vmatpush1.bf16.msra.mxu0 %v1491
    %1743 = vmatprep.subr.bf16.mxu0 %v1496
    %1744 = vmatpush1.bf16.msra.mxu0 %v1495
    %1745 = vmatprep.subr.bf16.mxu0 %v1500
    %1746 = vmatpush1.bf16.msra.mxu0 %v1499
    %1747 = vmatprep.subr.bf16.mxu0 %v1504
    %1748 = vmatpush1.bf16.msra.mxu0 %v1503
    %1749 = vmatprep.subr.bf16.mxu0 %v1508
    %1750 = vmatpush1.bf16.msra.mxu0 %v1507
    %1751 = vmatprep.subr.bf16.mxu0 %v1512
    %1752 = vmatpush1.bf16.msra.mxu0 %v1511
    %1753 = vmatprep.subr.bf16.mxu0 %v1516
    %1754 = vmatpush1.bf16.msra.mxu0 %v1515
    %1755 = vmatprep.subr.bf16.mxu0 %v1520
    %1756 = vmatpush1.bf16.msra.mxu0 %v1519
    %1757 = vmatprep.subr.bf16.mxu0 %v1524
    %1758 = vmatpush1.bf16.msra.mxu0 %v1523
    %1759 = vmatprep.subr.bf16.mxu0 %v1528
    %1760 = vmatpush1.bf16.msra.mxu0 %v1527
    %1761 = vmatprep.subr.bf16.mxu0 %v1532
    %1762 = vmatpush1.bf16.msra.mxu0 %v1531
    %1763 = vmatprep.subr.bf16.mxu0 %v1536
    %1764 = vmatpush1.bf16.msra.mxu0 %v1535
    %1765 = vmatprep.subr.bf16.mxu0 %v1540
    %1766 = vmatpush1.bf16.msra.mxu0 %v1539
    %1767 = vmatprep.mubr.bf16.mxu0 %v942
    %1768 = vmatmul.mubr.bf16.gmra.mrb[0].mxu0 %v941
    %v1769 = vpop.f32.mrb[0].mxu0
    %v1770 = vadd.f32 %v1078, %v1769
    %v1771 = vpop.f32.mrb[0].mxu0
    %v1772 = vadd.f32 %v1082, %v1771
    %v1773 = vpop.f32.mrb[0].mxu0
    %v1774 = vadd.f32 %v1078, %v1773
    %v1775 = vpop.f32.mrb[0].mxu0
    %v1776 = vadd.f32 %v1082, %v1775
    %1777 = vdwg.mxu0
    %1778 = vmatprep.subr.bf16.mxu0 %v1544
    %1779 = vmatpush1.bf16.msra.mxu0 %v1543
    %1780 = vmatprep.subr.bf16.mxu0 %v1548
    %1781 = vmatpush1.bf16.msra.mxu0 %v1547
    %1782 = vmatprep.subr.bf16.mxu0 %v1552
    %1783 = vmatpush1.bf16.msra.mxu0 %v1551
    %1784 = vmatprep.subr.bf16.mxu0 %v1556
    %1785 = vmatpush1.bf16.msra.mxu0 %v1555
    %1786 = vmatprep.subr.bf16.mxu0 %v1560
    %1787 = vmatpush1.bf16.msra.mxu0 %v1559
    %1788 = vmatprep.subr.bf16.mxu0 %v1564
    %1789 = vmatpush1.bf16.msra.mxu0 %v1563
    %1790 = vmatprep.subr.bf16.mxu0 %v1568
    %1791 = vmatpush1.bf16.msra.mxu0 %v1567
    %1792 = vmatprep.subr.bf16.mxu0 %v1572
    %1793 = vmatpush1.bf16.msra.mxu0 %v1571
    %1794 = vmatprep.subr.bf16.mxu0 %v1576
    %1795 = vmatpush1.bf16.msra.mxu0 %v1575
    %1796 = vmatprep.subr.bf16.mxu0 %v1580
    %1797 = vmatpush1.bf16.msra.mxu0 %v1579
    %1798 = vmatprep.subr.bf16.mxu0 %v1584
    %1799 = vmatpush1.bf16.msra.mxu0 %v1583
    %1800 = vmatprep.subr.bf16.mxu0 %v1588
    %1801 = vmatpush1.bf16.msra.mxu0 %v1587
    %1802 = vmatprep.subr.bf16.mxu0 %v1592
    %1803 = vmatpush1.bf16.msra.mxu0 %v1591
    %1804 = vmatprep.subr.bf16.mxu0 %v1596
    %1805 = vmatpush1.bf16.msra.mxu0 %v1595
    %1806 = vmatprep.subr.bf16.mxu0 %v1600
    %1807 = vmatpush1.bf16.msra.mxu0 %v1599
    %1808 = vmatprep.subr.bf16.mxu0 %v1604
    %1809 = vmatpush1.bf16.msra.mxu0 %v1603
    %1810 = vmatprep.mubr.bf16.mxu0 %v944
    %1811 = vmatmul.mubr.bf16.gmra.mrb[0].mxu0 %v943
    %v1812 = vpop.f32.mrb[0].mxu0
    %v1813 = vadd.f32 %v1770, %v1812
    %v1814 = vpop.f32.mrb[0].mxu0
    %v1815 = vadd.f32 %v1772, %v1814
    %v1816 = vpop.f32.mrb[0].mxu0
    %v1817 = vadd.f32 %v1774, %v1816
    %v1818 = vpop.f32.mrb[0].mxu0
    %v1819 = vadd.f32 %v1776, %v1818
    %1820 = vdwg.mxu0
    %1821 = vmatprep.subr.bf16.mxu0 %v1482
    %1822 = vmatpush1.bf16.msra.mxu0 %v1481
    %1823 = vmatprep.subr.bf16.mxu0 %v1486
    %1824 = vmatpush1.bf16.msra.mxu0 %v1485
    %1825 = vmatprep.subr.bf16.mxu0 %v1490
    %1826 = vmatpush1.bf16.msra.mxu0 %v1489
    %1827 = vmatprep.subr.bf16.mxu0 %v1494
    %1828 = vmatpush1.bf16.msra.mxu0 %v1493
    %1829 = vmatprep.subr.bf16.mxu0 %v1498
    %1830 = vmatpush1.bf16.msra.mxu0 %v1497
    %1831 = vmatprep.subr.bf16.mxu0 %v1502
    %1832 = vmatpush1.bf16.msra.mxu0 %v1501
    %1833 = vmatprep.subr.bf16.mxu0 %v1506
    %1834 = vmatpush1.bf16.msra.mxu0 %v1505
    %1835 = vmatprep.subr.bf16.mxu0 %v1510
    %1836 = vmatpush1.bf16.msra.mxu0 %v1509
    %1837 = vmatprep.subr.bf16.mxu0 %v1514
    %1838 = vmatpush1.bf16.msra.mxu0 %v1513
    %1839 = vmatprep.subr.bf16.mxu0 %v1518
    %1840 = vmatpush1.bf16.msra.mxu0 %v1517
    %1841 = vmatprep.subr.bf16.mxu0 %v1522
    %1842 = vmatpush1.bf16.msra.mxu0 %v1521
    %1843 = vmatprep.subr.bf16.mxu0 %v1526
    %1844 = vmatpush1.bf16.msra.mxu0 %v1525
    %1845 = vmatprep.subr.bf16.mxu0 %v1530
    %1846 = vmatpush1.bf16.msra.mxu0 %v1529
    %1847 = vmatprep.subr.bf16.mxu0 %v1534
    %1848 = vmatpush1.bf16.msra.mxu0 %v1533
    %1849 = vmatprep.subr.bf16.mxu0 %v1538
    %1850 = vmatpush1.bf16.msra.mxu0 %v1537
    %1851 = vmatprep.subr.bf16.mxu0 %v1542
    %1852 = vmatpush1.bf16.msra.mxu0 %v1541
    %1853 = vmatprep.mubr.bf16.mxu0 %v942
    %1854 = vmatmul.mubr.bf16.gmra.mrb[0].mxu0 %v941
    %v1855 = vpop.f32.mrb[0].mxu0
    %v1856 = vadd.f32 %v1086, %v1855
    %v1857 = vpop.f32.mrb[0].mxu0
    %v1858 = vadd.f32 %v1090, %v1857
    %v1859 = vpop.f32.mrb[0].mxu0
    %v1860 = vadd.f32 %v1086, %v1859
    %v1861 = vpop.f32.mrb[0].mxu0
    %v1862 = vadd.f32 %v1090, %v1861
    %1863 = vdwg.mxu0
    %1864 = vmatprep.subr.bf16.mxu0 %v1546
    %1865 = vmatpush1.bf16.msra.mxu0 %v1545
    %1866 = vmatprep.subr.bf16.mxu0 %v1550
    %1867 = vmatpush1.bf16.msra.mxu0 %v1549
    %1868 = vmatprep.subr.bf16.mxu0 %v1554
    %1869 = vmatpush1.bf16.msra.mxu0 %v1553
    %1870 = vmatprep.subr.bf16.mxu0 %v1558
    %1871 = vmatpush1.bf16.msra.mxu0 %v1557
    %1872 = vmatprep.subr.bf16.mxu0 %v1562
    %1873 = vmatpush1.bf16.msra.mxu0 %v1561
    %1874 = vmatprep.subr.bf16.mxu0 %v1566
    %1875 = vmatpush1.bf16.msra.mxu0 %v1565
    %1876 = vmatprep.subr.bf16.mxu0 %v1570
    %1877 = vmatpush1.bf16.msra.mxu0 %v1569
    %1878 = vmatprep.subr.bf16.mxu0 %v1574
    %1879 = vmatpush1.bf16.msra.mxu0 %v1573
    %1880 = vmatprep.subr.bf16.mxu0 %v1578
    %1881 = vmatpush1.bf16.msra.mxu0 %v1577
    %1882 = vmatprep.subr.bf16.mxu0 %v1582
    %1883 = vmatpush1.bf16.msra.mxu0 %v1581
    %1884 = vmatprep.subr.bf16.mxu0 %v1586
    %1885 = vmatpush1.bf16.msra.mxu0 %v1585
    %1886 = vmatprep.subr.bf16.mxu0 %v1590
    %1887 = vmatpush1.bf16.msra.mxu0 %v1589
    %1888 = vmatprep.subr.bf16.mxu0 %v1594
    %1889 = vmatpush1.bf16.msra.mxu0 %v1593
    %1890 = vmatprep.subr.bf16.mxu0 %v1598
    %1891 = vmatpush1.bf16.msra.mxu0 %v1597
    %1892 = vmatprep.subr.bf16.mxu0 %v1602
    %1893 = vmatpush1.bf16.msra.mxu0 %v1601
    %1894 = vmatprep.subr.bf16.mxu0 %v1606
    %1895 = vmatpush1.bf16.msra.mxu0 %v1605
    %1896 = vmatprep.mubr.bf16.mxu0 %v944
    %1897 = vmatmul.mubr.bf16.gmra.mrb[0].mxu0 %v943
    %v1898 = vpop.f32.mrb[0].mxu0
    %v1899 = vadd.f32 %v1856, %v1898
    %v1900 = vpop.f32.mrb[0].mxu0
    %v1901 = vadd.f32 %v1858, %v1900
    %v1902 = vpop.f32.mrb[0].mxu0
    %v1903 = vadd.f32 %v1860, %v1902
    %v1904 = vpop.f32.mrb[0].mxu0
    %v1905 = vadd.f32 %v1862, %v1904
    %1906 = vdwg.mxu0
    %v1907 = vmax.f32 %v1813, 0.0
    %v1908 = vmax.f32 %v1815, 0.0
    %v1909 = vmax.f32 %v1899, 0.0
    %v1910 = vmax.f32 %v1901, 0.0
    %v1911 = vmax.f32 %v1817, 0.0
    %v1912 = vmax.f32 %v1819, 0.0
    %v1913 = vmax.f32 %v1903, 0.0
    %v1914 = vmax.f32 %v1905, 0.0
    %v1915 = vpack.c.bf16 %v1911, %v1907
    %v1916 = vpack.c.bf16 %v1912, %v1908
    %v1917 = vpack.c.bf16 %v1913, %v1909
    %v1918 = vpack.c.bf16 %v1914, %v1910
    %v1919 = vld [vmem:[#allocation10] sm:$0xff]
    %v1920 = vld [vmem:[#allocation10 + $0x8] sm:$0xff]
    %v1921 = vld [vmem:[#allocation10 + $0x10] sm:$0xff]
    %v1922 = vld [vmem:[#allocation10 + $0x18] sm:$0xff]
    %v1923 = vld [vmem:[#allocation10 + $0x20] sm:$0xff]
    %v1924 = vld [vmem:[#allocation10 + $0x28] sm:$0xff]
    %v1925 = vld [vmem:[#allocation10 + $0x30] sm:$0xff]
    %v1926 = vld [vmem:[#allocation10 + $0x38] sm:$0xff]
    %v1927 = vld [vmem:[#allocation10 + $0x40] sm:$0xff]
    %v1928 = vld [vmem:[#allocation10 + $0x48] sm:$0xff]
    %v1929 = vld [vmem:[#allocation10 + $0x50] sm:$0xff]
    %v1930 = vld [vmem:[#allocation10 + $0x58] sm:$0xff]
    %v1931 = vld [vmem:[#allocation10 + $0x60] sm:$0xff]
    %v1932 = vld [vmem:[#allocation10 + $0x68] sm:$0xff]
    %v1933 = vld [vmem:[#allocation10 + $0x70] sm:$0xff]
    %v1934 = vld [vmem:[#allocation10 + $0x78] sm:$0xff]
    %v1935 = vld [vmem:[#allocation10 + $0x80] sm:$0xff]
    %v1936 = vld [vmem:[#allocation10 + $0x88] sm:$0xff]
    %v1937 = vld [vmem:[#allocation10 + $0x90] sm:$0xff]
    %v1938 = vld [vmem:[#allocation10 + $0x98] sm:$0xff]
    %v1939 = vld [vmem:[#allocation10 + $0xa0] sm:$0xff]
    %v1940 = vld [vmem:[#allocation10 + $0xa8] sm:$0xff]
    %v1941 = vld [vmem:[#allocation10 + $0xb0] sm:$0xff]
    %v1942 = vld [vmem:[#allocation10 + $0xb8] sm:$0xff]
    %v1943 = vld [vmem:[#allocation10 + $0xc0] sm:$0xff]
    %v1944 = vld [vmem:[#allocation10 + $0xc8] sm:$0xff]
    %v1945 = vld [vmem:[#allocation10 + $0xd0] sm:$0xff]
    %v1946 = vld [vmem:[#allocation10 + $0xd8] sm:$0xff]
    %v1947 = vld [vmem:[#allocation10 + $0xe0] sm:$0xff]
    %v1948 = vld [vmem:[#allocation10 + $0xe8] sm:$0xff]
    %v1949 = vld [vmem:[#allocation10 + $0xf0] sm:$0xff]
    %v1950 = vld [vmem:[#allocation10 + $0xf8] sm:$0xff]
    %v1951 = vld [vmem:[#allocation10 + $0x100] sm:$0xff]
    %v1952 = vld [vmem:[#allocation10 + $0x108] sm:$0xff]
    %v1953 = vld [vmem:[#allocation10 + $0x110] sm:$0xff]
    %v1954 = vld [vmem:[#allocation10 + $0x118] sm:$0xff]
    %v1955 = vld [vmem:[#allocation10 + $0x120] sm:$0xff]
    %v1956 = vld [vmem:[#allocation10 + $0x128] sm:$0xff]
    %v1957 = vld [vmem:[#allocation10 + $0x130] sm:$0xff]
    %v1958 = vld [vmem:[#allocation10 + $0x138] sm:$0xff]
    %v1959 = vld [vmem:[#allocation10 + $0x140] sm:$0xff]
    %v1960 = vld [vmem:[#allocation10 + $0x148] sm:$0xff]
    %v1961 = vld [vmem:[#allocation10 + $0x150] sm:$0xff]
    %v1962 = vld [vmem:[#allocation10 + $0x158] sm:$0xff]
    %v1963 = vld [vmem:[#allocation10 + $0x160] sm:$0xff]
    %v1964 = vld [vmem:[#allocation10 + $0x168] sm:$0xff]
    %v1965 = vld [vmem:[#allocation10 + $0x170] sm:$0xff]
    %v1966 = vld [vmem:[#allocation10 + $0x178] sm:$0xff]
    %v1967 = vld [vmem:[#allocation10 + $0x180] sm:$0xff]
    %v1968 = vld [vmem:[#allocation10 + $0x188] sm:$0xff]
    %v1969 = vld [vmem:[#allocation10 + $0x190] sm:$0xff]
    %v1970 = vld [vmem:[#allocation10 + $0x198] sm:$0xff]
    %v1971 = vld [vmem:[#allocation10 + $0x1a0] sm:$0xff]
    %v1972 = vld [vmem:[#allocation10 + $0x1a8] sm:$0xff]
    %v1973 = vld [vmem:[#allocation10 + $0x1b0] sm:$0xff]
    %v1974 = vld [vmem:[#allocation10 + $0x1b8] sm:$0xff]
    %v1975 = vld [vmem:[#allocation10 + $0x1c0] sm:$0xff]
    %v1976 = vld [vmem:[#allocation10 + $0x1c8] sm:$0xff]
    %v1977 = vld [vmem:[#allocation10 + $0x1d0] sm:$0xff]
    %v1978 = vld [vmem:[#allocation10 + $0x1d8] sm:$0xff]
    %v1979 = vld [vmem:[#allocation10 + $0x1e0] sm:$0xff]
    %v1980 = vld [vmem:[#allocation10 + $0x1e8] sm:$0xff]
    %v1981 = vld [vmem:[#allocation10 + $0x1f0] sm:$0xff]
    %v1982 = vld [vmem:[#allocation10 + $0x1f8] sm:$0xff]
    %v1983 = vld [vmem:[#allocation10 + $0x200] sm:$0xff]
    %v1984 = vld [vmem:[#allocation10 + $0x208] sm:$0xff]
    %v1985 = vld [vmem:[#allocation10 + $0x210] sm:$0xff]
    %v1986 = vld [vmem:[#allocation10 + $0x218] sm:$0xff]
    %v1987 = vld [vmem:[#allocation10 + $0x220] sm:$0xff]
    %v1988 = vld [vmem:[#allocation10 + $0x228] sm:$0xff]
    %v1989 = vld [vmem:[#allocation10 + $0x230] sm:$0xff]
    %v1990 = vld [vmem:[#allocation10 + $0x238] sm:$0xff]
    %v1991 = vld [vmem:[#allocation10 + $0x240] sm:$0xff]
    %v1992 = vld [vmem:[#allocation10 + $0x248] sm:$0xff]
    %v1993 = vld [vmem:[#allocation10 + $0x250] sm:$0xff]
    %v1994 = vld [vmem:[#allocation10 + $0x258] sm:$0xff]
    %v1995 = vld [vmem:[#allocation10 + $0x260] sm:$0xff]
    %v1996 = vld [vmem:[#allocation10 + $0x268] sm:$0xff]
    %v1997 = vld [vmem:[#allocation10 + $0x270] sm:$0xff]
    %v1998 = vld [vmem:[#allocation10 + $0x278] sm:$0xff]
    %v1999 = vld [vmem:[#allocation10 + $0x280] sm:$0xff]
    %v2000 = vld [vmem:[#allocation10 + $0x288] sm:$0xff]
    %v2001 = vld [vmem:[#allocation10 + $0x290] sm:$0xff]
    %v2002 = vld [vmem:[#allocation10 + $0x298] sm:$0xff]
    %v2003 = vld [vmem:[#allocation10 + $0x2a0] sm:$0xff]
    %v2004 = vld [vmem:[#allocation10 + $0x2a8] sm:$0xff]
    %v2005 = vld [vmem:[#allocation10 + $0x2b0] sm:$0xff]
    %v2006 = vld [vmem:[#allocation10 + $0x2b8] sm:$0xff]
    %v2007 = vld [vmem:[#allocation10 + $0x2c0] sm:$0xff]
    %v2008 = vld [vmem:[#allocation10 + $0x2c8] sm:$0xff]
    %v2009 = vld [vmem:[#allocation10 + $0x2d0] sm:$0xff]
    %v2010 = vld [vmem:[#allocation10 + $0x2d8] sm:$0xff]
    %v2011 = vld [vmem:[#allocation10 + $0x2e0] sm:$0xff]
    %v2012 = vld [vmem:[#allocation10 + $0x2e8] sm:$0xff]
    %v2013 = vld [vmem:[#allocation10 + $0x2f0] sm:$0xff]
    %v2014 = vld [vmem:[#allocation10 + $0x2f8] sm:$0xff]
    %v2015 = vld [vmem:[#allocation10 + $0x300] sm:$0xff]
    %v2016 = vld [vmem:[#allocation10 + $0x308] sm:$0xff]
    %v2017 = vld [vmem:[#allocation10 + $0x310] sm:$0xff]
    %v2018 = vld [vmem:[#allocation10 + $0x318] sm:$0xff]
    %v2019 = vld [vmem:[#allocation10 + $0x320] sm:$0xff]
    %v2020 = vld [vmem:[#allocation10 + $0x328] sm:$0xff]
    %v2021 = vld [vmem:[#allocation10 + $0x330] sm:$0xff]
    %v2022 = vld [vmem:[#allocation10 + $0x338] sm:$0xff]
    %v2023 = vld [vmem:[#allocation10 + $0x340] sm:$0xff]
    %v2024 = vld [vmem:[#allocation10 + $0x348] sm:$0xff]
    %v2025 = vld [vmem:[#allocation10 + $0x350] sm:$0xff]
    %v2026 = vld [vmem:[#allocation10 + $0x358] sm:$0xff]
    %v2027 = vld [vmem:[#allocation10 + $0x360] sm:$0xff]
    %v2028 = vld [vmem:[#allocation10 + $0x368] sm:$0xff]
    %v2029 = vld [vmem:[#allocation10 + $0x370] sm:$0xff]
    %v2030 = vld [vmem:[#allocation10 + $0x378] sm:$0xff]
    %v2031 = vld [vmem:[#allocation10 + $0x380] sm:$0xff]
    %v2032 = vld [vmem:[#allocation10 + $0x388] sm:$0xff]
    %v2033 = vld [vmem:[#allocation10 + $0x390] sm:$0xff]
    %v2034 = vld [vmem:[#allocation10 + $0x398] sm:$0xff]
    %v2035 = vld [vmem:[#allocation10 + $0x3a0] sm:$0xff]
    %v2036 = vld [vmem:[#allocation10 + $0x3a8] sm:$0xff]
    %v2037 = vld [vmem:[#allocation10 + $0x3b0] sm:$0xff]
    %v2038 = vld [vmem:[#allocation10 + $0x3b8] sm:$0xff]
    %v2039 = vld [vmem:[#allocation10 + $0x3c0] sm:$0xff]
    %v2040 = vld [vmem:[#allocation10 + $0x3c8] sm:$0xff]
    %v2041 = vld [vmem:[#allocation10 + $0x3d0] sm:$0xff]
    %v2042 = vld [vmem:[#allocation10 + $0x3d8] sm:$0xff]
    %v2043 = vld [vmem:[#allocation10 + $0x3e0] sm:$0xff]
    %v2044 = vld [vmem:[#allocation10 + $0x3e8] sm:$0xff]
    %v2045 = vld [vmem:[#allocation10 + $0x3f0] sm:$0xff]
    %v2046 = vld [vmem:[#allocation10 + $0x3f8] sm:$0xff]
    %v2047 = vld [vmem:[%s6] sm:$0xf]
    %v2049 = vlaneseq
    %v2050 = vshrl.u32 %v2049, 7
    %v2051 = vsub.s32 0, %v2050
    %v2052 = vrot.slane %v2047, %v2051
    %v2053 = vlaneseq
    %v2054 = vshrl.u32 %v2053, 7
    %v2055 = vsub.s32 1, %v2054
    %v2056 = vrot.slane %v2047, %v2055
    %v2057 = vlaneseq
    %v2058 = vshrl.u32 %v2057, 7
    %v2059 = vsub.s32 2, %v2058
    %v2060 = vrot.slane %v2047, %v2059
    %v2061 = vlaneseq
    %v2062 = vshrl.u32 %v2061, 7
    %v2063 = vsub.s32 3, %v2062
    %v2064 = vrot.slane %v2047, %v2063
    %v2197 = vunpack.c.l.b16 %v1919
    %v2198 = vunpack.c.h.b16 %v1919
    %v2199 = vunpack.c.l.b16 %v1920
    %v2200 = vunpack.c.h.b16 %v1920
    %v2201 = vunpack.c.l.b16 %v1921
    %v2202 = vunpack.c.h.b16 %v1921
    %v2203 = vunpack.c.l.b16 %v1922
    %v2204 = vunpack.c.h.b16 %v1922
    %v2205 = vunpack.c.l.b16 %v1923
    %v2206 = vunpack.c.h.b16 %v1923
    %v2207 = vunpack.c.l.b16 %v1924
    %v2208 = vunpack.c.h.b16 %v1924
    %v2209 = vunpack.c.l.b16 %v1925
    %v2210 = vunpack.c.h.b16 %v1925
    %v2211 = vunpack.c.l.b16 %v1926
    %v2212 = vunpack.c.h.b16 %v1926
    %v2213 = vunpack.c.l.b16 %v1927
    %v2214 = vunpack.c.h.b16 %v1927
    %v2215 = vunpack.c.l.b16 %v1928
    %v2216 = vunpack.c.h.b16 %v1928
    %v2217 = vunpack.c.l.b16 %v1929
    %v2218 = vunpack.c.h.b16 %v1929
    %v2219 = vunpack.c.l.b16 %v1930
    %v2220 = vunpack.c.h.b16 %v1930
    %v2221 = vunpack.c.l.b16 %v1931
    %v2222 = vunpack.c.h.b16 %v1931
    %v2223 = vunpack.c.l.b16 %v1932
    %v2224 = vunpack.c.h.b16 %v1932
    %v2225 = vunpack.c.l.b16 %v1933
    %v2226 = vunpack.c.h.b16 %v1933
    %v2227 = vunpack.c.l.b16 %v1934
    %v2228 = vunpack.c.h.b16 %v1934
    %v2229 = vunpack.c.l.b16 %v1935
    %v2230 = vunpack.c.h.b16 %v1935
    %v2231 = vunpack.c.l.b16 %v1936
    %v2232 = vunpack.c.h.b16 %v1936
    %v2233 = vunpack.c.l.b16 %v1937
    %v2234 = vunpack.c.h.b16 %v1937
    %v2235 = vunpack.c.l.b16 %v1938
    %v2236 = vunpack.c.h.b16 %v1938
    %v2237 = vunpack.c.l.b16 %v1939
    %v2238 = vunpack.c.h.b16 %v1939
    %v2239 = vunpack.c.l.b16 %v1940
    %v2240 = vunpack.c.h.b16 %v1940
    %v2241 = vunpack.c.l.b16 %v1941
    %v2242 = vunpack.c.h.b16 %v1941
    %v2243 = vunpack.c.l.b16 %v1942
    %v2244 = vunpack.c.h.b16 %v1942
    %v2245 = vunpack.c.l.b16 %v1943
    %v2246 = vunpack.c.h.b16 %v1943
    %v2247 = vunpack.c.l.b16 %v1944
    %v2248 = vunpack.c.h.b16 %v1944
    %v2249 = vunpack.c.l.b16 %v1945
    %v2250 = vunpack.c.h.b16 %v1945
    %v2251 = vunpack.c.l.b16 %v1946
    %v2252 = vunpack.c.h.b16 %v1946
    %v2253 = vunpack.c.l.b16 %v1947
    %v2254 = vunpack.c.h.b16 %v1947
    %v2255 = vunpack.c.l.b16 %v1948
    %v2256 = vunpack.c.h.b16 %v1948
    %v2257 = vunpack.c.l.b16 %v1949
    %v2258 = vunpack.c.h.b16 %v1949
    %v2259 = vunpack.c.l.b16 %v1950
    %v2260 = vunpack.c.h.b16 %v1950
    %v2261 = vunpack.c.l.b16 %v1951
    %v2262 = vunpack.c.h.b16 %v1951
    %v2263 = vunpack.c.l.b16 %v1952
    %v2264 = vunpack.c.h.b16 %v1952
    %v2265 = vunpack.c.l.b16 %v1953
    %v2266 = vunpack.c.h.b16 %v1953
    %v2267 = vunpack.c.l.b16 %v1954
    %v2268 = vunpack.c.h.b16 %v1954
    %v2269 = vunpack.c.l.b16 %v1955
    %v2270 = vunpack.c.h.b16 %v1955
    %v2271 = vunpack.c.l.b16 %v1956
    %v2272 = vunpack.c.h.b16 %v1956
    %v2273 = vunpack.c.l.b16 %v1957
    %v2274 = vunpack.c.h.b16 %v1957
    %v2275 = vunpack.c.l.b16 %v1958
    %v2276 = vunpack.c.h.b16 %v1958
    %v2277 = vunpack.c.l.b16 %v1959
    %v2278 = vunpack.c.h.b16 %v1959
    %v2279 = vunpack.c.l.b16 %v1960
    %v2280 = vunpack.c.h.b16 %v1960
    %v2281 = vunpack.c.l.b16 %v1961
    %v2282 = vunpack.c.h.b16 %v1961
    %v2283 = vunpack.c.l.b16 %v1962
    %v2284 = vunpack.c.h.b16 %v1962
    %v2285 = vunpack.c.l.b16 %v1963
    %v2286 = vunpack.c.h.b16 %v1963
    %v2287 = vunpack.c.l.b16 %v1964
    %v2288 = vunpack.c.h.b16 %v1964
    %v2289 = vunpack.c.l.b16 %v1965
    %v2290 = vunpack.c.h.b16 %v1965
    %v2291 = vunpack.c.l.b16 %v1966
    %v2292 = vunpack.c.h.b16 %v1966
    %v2293 = vunpack.c.l.b16 %v1967
    %v2294 = vunpack.c.h.b16 %v1967
    %v2295 = vunpack.c.l.b16 %v1968
    %v2296 = vunpack.c.h.b16 %v1968
    %v2297 = vunpack.c.l.b16 %v1969
    %v2298 = vunpack.c.h.b16 %v1969
    %v2299 = vunpack.c.l.b16 %v1970
    %v2300 = vunpack.c.h.b16 %v1970
    %v2301 = vunpack.c.l.b16 %v1971
    %v2302 = vunpack.c.h.b16 %v1971
    %v2303 = vunpack.c.l.b16 %v1972
    %v2304 = vunpack.c.h.b16 %v1972
    %v2305 = vunpack.c.l.b16 %v1973
    %v2306 = vunpack.c.h.b16 %v1973
    %v2307 = vunpack.c.l.b16 %v1974
    %v2308 = vunpack.c.h.b16 %v1974
    %v2309 = vunpack.c.l.b16 %v1975
    %v2310 = vunpack.c.h.b16 %v1975
    %v2311 = vunpack.c.l.b16 %v1976
    %v2312 = vunpack.c.h.b16 %v1976
    %v2313 = vunpack.c.l.b16 %v1977
    %v2314 = vunpack.c.h.b16 %v1977
    %v2315 = vunpack.c.l.b16 %v1978
    %v2316 = vunpack.c.h.b16 %v1978
    %v2317 = vunpack.c.l.b16 %v1979
    %v2318 = vunpack.c.h.b16 %v1979
    %v2319 = vunpack.c.l.b16 %v1980
    %v2320 = vunpack.c.h.b16 %v1980
    %v2321 = vunpack.c.l.b16 %v1981
    %v2322 = vunpack.c.h.b16 %v1981
    %v2323 = vunpack.c.l.b16 %v1982
    %v2324 = vunpack.c.h.b16 %v1982
    %v2325 = vunpack.c.l.b16 %v1983
    %v2326 = vunpack.c.h.b16 %v1983
    %v2327 = vunpack.c.l.b16 %v1984
    %v2328 = vunpack.c.h.b16 %v1984
    %v2329 = vunpack.c.l.b16 %v1985
    %v2330 = vunpack.c.h.b16 %v1985
    %v2331 = vunpack.c.l.b16 %v1986
    %v2332 = vunpack.c.h.b16 %v1986
    %v2333 = vunpack.c.l.b16 %v1987
    %v2334 = vunpack.c.h.b16 %v1987
    %v2335 = vunpack.c.l.b16 %v1988
    %v2336 = vunpack.c.h.b16 %v1988
    %v2337 = vunpack.c.l.b16 %v1989
    %v2338 = vunpack.c.h.b16 %v1989
    %v2339 = vunpack.c.l.b16 %v1990
    %v2340 = vunpack.c.h.b16 %v1990
    %v2341 = vunpack.c.l.b16 %v1991
    %v2342 = vunpack.c.h.b16 %v1991
    %v2343 = vunpack.c.l.b16 %v1992
    %v2344 = vunpack.c.h.b16 %v1992
    %v2345 = vunpack.c.l.b16 %v1993
    %v2346 = vunpack.c.h.b16 %v1993
    %v2347 = vunpack.c.l.b16 %v1994
    %v2348 = vunpack.c.h.b16 %v1994
    %v2349 = vunpack.c.l.b16 %v1995
    %v2350 = vunpack.c.h.b16 %v1995
    %v2351 = vunpack.c.l.b16 %v1996
    %v2352 = vunpack.c.h.b16 %v1996
    %v2353 = vunpack.c.l.b16 %v1997
    %v2354 = vunpack.c.h.b16 %v1997
    %v2355 = vunpack.c.l.b16 %v1998
    %v2356 = vunpack.c.h.b16 %v1998
    %v2357 = vunpack.c.l.b16 %v1999
    %v2358 = vunpack.c.h.b16 %v1999
    %v2359 = vunpack.c.l.b16 %v2000
    %v2360 = vunpack.c.h.b16 %v2000
    %v2361 = vunpack.c.l.b16 %v2001
    %v2362 = vunpack.c.h.b16 %v2001
    %v2363 = vunpack.c.l.b16 %v2002
    %v2364 = vunpack.c.h.b16 %v2002
    %v2365 = vunpack.c.l.b16 %v2003
    %v2366 = vunpack.c.h.b16 %v2003
    %v2367 = vunpack.c.l.b16 %v2004
    %v2368 = vunpack.c.h.b16 %v2004
    %v2369 = vunpack.c.l.b16 %v2005
    %v2370 = vunpack.c.h.b16 %v2005
    %v2371 = vunpack.c.l.b16 %v2006
    %v2372 = vunpack.c.h.b16 %v2006
    %v2373 = vunpack.c.l.b16 %v2007
    %v2374 = vunpack.c.h.b16 %v2007
    %v2375 = vunpack.c.l.b16 %v2008
    %v2376 = vunpack.c.h.b16 %v2008
    %v2377 = vunpack.c.l.b16 %v2009
    %v2378 = vunpack.c.h.b16 %v2009
    %v2379 = vunpack.c.l.b16 %v2010
    %v2380 = vunpack.c.h.b16 %v2010
    %v2381 = vunpack.c.l.b16 %v2011
    %v2382 = vunpack.c.h.b16 %v2011
    %v2383 = vunpack.c.l.b16 %v2012
    %v2384 = vunpack.c.h.b16 %v2012
    %v2385 = vunpack.c.l.b16 %v2013
    %v2386 = vunpack.c.h.b16 %v2013
    %v2387 = vunpack.c.l.b16 %v2014
    %v2388 = vunpack.c.h.b16 %v2014
    %v2389 = vunpack.c.l.b16 %v2015
    %v2390 = vunpack.c.h.b16 %v2015
    %v2391 = vunpack.c.l.b16 %v2016
    %v2392 = vunpack.c.h.b16 %v2016
    %v2393 = vunpack.c.l.b16 %v2017
    %v2394 = vunpack.c.h.b16 %v2017
    %v2395 = vunpack.c.l.b16 %v2018
    %v2396 = vunpack.c.h.b16 %v2018
    %v2397 = vunpack.c.l.b16 %v2019
    %v2398 = vunpack.c.h.b16 %v2019
    %v2399 = vunpack.c.l.b16 %v2020
    %v2400 = vunpack.c.h.b16 %v2020
    %v2401 = vunpack.c.l.b16 %v2021
    %v2402 = vunpack.c.h.b16 %v2021
    %v2403 = vunpack.c.l.b16 %v2022
    %v2404 = vunpack.c.h.b16 %v2022
    %v2405 = vunpack.c.l.b16 %v2023
    %v2406 = vunpack.c.h.b16 %v2023
    %v2407 = vunpack.c.l.b16 %v2024
    %v2408 = vunpack.c.h.b16 %v2024
    %v2409 = vunpack.c.l.b16 %v2025
    %v2410 = vunpack.c.h.b16 %v2025
    %v2411 = vunpack.c.l.b16 %v2026
    %v2412 = vunpack.c.h.b16 %v2026
    %v2413 = vunpack.c.l.b16 %v2027
    %v2414 = vunpack.c.h.b16 %v2027
    %v2415 = vunpack.c.l.b16 %v2028
    %v2416 = vunpack.c.h.b16 %v2028
    %v2417 = vunpack.c.l.b16 %v2029
    %v2418 = vunpack.c.h.b16 %v2029
    %v2419 = vunpack.c.l.b16 %v2030
    %v2420 = vunpack.c.h.b16 %v2030
    %v2421 = vunpack.c.l.b16 %v2031
    %v2422 = vunpack.c.h.b16 %v2031
    %v2423 = vunpack.c.l.b16 %v2032
    %v2424 = vunpack.c.h.b16 %v2032
    %v2425 = vunpack.c.l.b16 %v2033
    %v2426 = vunpack.c.h.b16 %v2033
    %v2427 = vunpack.c.l.b16 %v2034
    %v2428 = vunpack.c.h.b16 %v2034
    %v2429 = vunpack.c.l.b16 %v2035
    %v2430 = vunpack.c.h.b16 %v2035
    %v2431 = vunpack.c.l.b16 %v2036
    %v2432 = vunpack.c.h.b16 %v2036
    %v2433 = vunpack.c.l.b16 %v2037
    %v2434 = vunpack.c.h.b16 %v2037
    %v2435 = vunpack.c.l.b16 %v2038
    %v2436 = vunpack.c.h.b16 %v2038
    %v2437 = vunpack.c.l.b16 %v2039
    %v2438 = vunpack.c.h.b16 %v2039
    %v2439 = vunpack.c.l.b16 %v2040
    %v2440 = vunpack.c.h.b16 %v2040
    %v2441 = vunpack.c.l.b16 %v2041
    %v2442 = vunpack.c.h.b16 %v2041
    %v2443 = vunpack.c.l.b16 %v2042
    %v2444 = vunpack.c.h.b16 %v2042
    %v2445 = vunpack.c.l.b16 %v2043
    %v2446 = vunpack.c.h.b16 %v2043
    %v2447 = vunpack.c.l.b16 %v2044
    %v2448 = vunpack.c.h.b16 %v2044
    %v2449 = vunpack.c.l.b16 %v2045
    %v2450 = vunpack.c.h.b16 %v2045
    %v2451 = vunpack.c.l.b16 %v2046
    %v2452 = vunpack.c.h.b16 %v2046
    %v2453 = vpack.c.b16 %v2201, %v2197
    %v2454 = vpack.c.b16 %v2202, %v2198
    %v2455 = vpack.c.b16 %v2203, %v2199
    %v2456 = vpack.c.b16 %v2204, %v2200
    %v2457 = vpack.c.b16 %v2209, %v2205
    %v2458 = vpack.c.b16 %v2210, %v2206
    %v2459 = vpack.c.b16 %v2211, %v2207
    %v2460 = vpack.c.b16 %v2212, %v2208
    %v2461 = vpack.c.b16 %v2217, %v2213
    %v2462 = vpack.c.b16 %v2218, %v2214
    %v2463 = vpack.c.b16 %v2219, %v2215
    %v2464 = vpack.c.b16 %v2220, %v2216
    %v2465 = vpack.c.b16 %v2225, %v2221
    %v2466 = vpack.c.b16 %v2226, %v2222
    %v2467 = vpack.c.b16 %v2227, %v2223
    %v2468 = vpack.c.b16 %v2228, %v2224
    %v2469 = vpack.c.b16 %v2233, %v2229
    %v2470 = vpack.c.b16 %v2234, %v2230
    %v2471 = vpack.c.b16 %v2235, %v2231
    %v2472 = vpack.c.b16 %v2236, %v2232
    %v2473 = vpack.c.b16 %v2241, %v2237
    %v2474 = vpack.c.b16 %v2242, %v2238
    %v2475 = vpack.c.b16 %v2243, %v2239
    %v2476 = vpack.c.b16 %v2244, %v2240
    %v2477 = vpack.c.b16 %v2249, %v2245
    %v2478 = vpack.c.b16 %v2250, %v2246
    %v2479 = vpack.c.b16 %v2251, %v2247
    %v2480 = vpack.c.b16 %v2252, %v2248
    %v2481 = vpack.c.b16 %v2257, %v2253
    %v2482 = vpack.c.b16 %v2258, %v2254
    %v2483 = vpack.c.b16 %v2259, %v2255
    %v2484 = vpack.c.b16 %v2260, %v2256
    %v2485 = vpack.c.b16 %v2265, %v2261
    %v2486 = vpack.c.b16 %v2266, %v2262
    %v2487 = vpack.c.b16 %v2267, %v2263
    %v2488 = vpack.c.b16 %v2268, %v2264
    %v2489 = vpack.c.b16 %v2273, %v2269
    %v2490 = vpack.c.b16 %v2274, %v2270
    %v2491 = vpack.c.b16 %v2275, %v2271
    %v2492 = vpack.c.b16 %v2276, %v2272
    %v2493 = vpack.c.b16 %v2281, %v2277
    %v2494 = vpack.c.b16 %v2282, %v2278
    %v2495 = vpack.c.b16 %v2283, %v2279
    %v2496 = vpack.c.b16 %v2284, %v2280
    %v2497 = vpack.c.b16 %v2289, %v2285
    %v2498 = vpack.c.b16 %v2290, %v2286
    %v2499 = vpack.c.b16 %v2291, %v2287
    %v2500 = vpack.c.b16 %v2292, %v2288
    %v2501 = vpack.c.b16 %v2297, %v2293
    %v2502 = vpack.c.b16 %v2298, %v2294
    %v2503 = vpack.c.b16 %v2299, %v2295
    %v2504 = vpack.c.b16 %v2300, %v2296
    %v2505 = vpack.c.b16 %v2305, %v2301
    %v2506 = vpack.c.b16 %v2306, %v2302
    %v2507 = vpack.c.b16 %v2307, %v2303
    %v2508 = vpack.c.b16 %v2308, %v2304
    %v2509 = vpack.c.b16 %v2313, %v2309
    %v2510 = vpack.c.b16 %v2314, %v2310
    %v2511 = vpack.c.b16 %v2315, %v2311
    %v2512 = vpack.c.b16 %v2316, %v2312
    %v2513 = vpack.c.b16 %v2321, %v2317
    %v2514 = vpack.c.b16 %v2322, %v2318
    %v2515 = vpack.c.b16 %v2323, %v2319
    %v2516 = vpack.c.b16 %v2324, %v2320
    %v2517 = vpack.c.b16 %v2329, %v2325
    %v2518 = vpack.c.b16 %v2330, %v2326
    %v2519 = vpack.c.b16 %v2331, %v2327
    %v2520 = vpack.c.b16 %v2332, %v2328
    %v2521 = vpack.c.b16 %v2337, %v2333
    %v2522 = vpack.c.b16 %v2338, %v2334
    %v2523 = vpack.c.b16 %v2339, %v2335
    %v2524 = vpack.c.b16 %v2340, %v2336
    %v2525 = vpack.c.b16 %v2345, %v2341
    %v2526 = vpack.c.b16 %v2346, %v2342
    %v2527 = vpack.c.b16 %v2347, %v2343
    %v2528 = vpack.c.b16 %v2348, %v2344
    %v2529 = vpack.c.b16 %v2353, %v2349
    %v2530 = vpack.c.b16 %v2354, %v2350
    %v2531 = vpack.c.b16 %v2355, %v2351
    %v2532 = vpack.c.b16 %v2356, %v2352
    %v2533 = vpack.c.b16 %v2361, %v2357
    %v2534 = vpack.c.b16 %v2362, %v2358
    %v2535 = vpack.c.b16 %v2363, %v2359
    %v2536 = vpack.c.b16 %v2364, %v2360
    %v2537 = vpack.c.b16 %v2369, %v2365
    %v2538 = vpack.c.b16 %v2370, %v2366
    %v2539 = vpack.c.b16 %v2371, %v2367
    %v2540 = vpack.c.b16 %v2372, %v2368
    %v2541 = vpack.c.b16 %v2377, %v2373
    %v2542 = vpack.c.b16 %v2378, %v2374
    %v2543 = vpack.c.b16 %v2379, %v2375
    %v2544 = vpack.c.b16 %v2380, %v2376
    %v2545 = vpack.c.b16 %v2385, %v2381
    %v2546 = vpack.c.b16 %v2386, %v2382
    %v2547 = vpack.c.b16 %v2387, %v2383
    %v2548 = vpack.c.b16 %v2388, %v2384
    %v2549 = vpack.c.b16 %v2393, %v2389
    %v2550 = vpack.c.b16 %v2394, %v2390
    %v2551 = vpack.c.b16 %v2395, %v2391
    %v2552 = vpack.c.b16 %v2396, %v2392
    %v2553 = vpack.c.b16 %v2401, %v2397
    %v2554 = vpack.c.b16 %v2402, %v2398
    %v2555 = vpack.c.b16 %v2403, %v2399
    %v2556 = vpack.c.b16 %v2404, %v2400
    %v2557 = vpack.c.b16 %v2409, %v2405
    %v2558 = vpack.c.b16 %v2410, %v2406
    %v2559 = vpack.c.b16 %v2411, %v2407
    %v2560 = vpack.c.b16 %v2412, %v2408
    %v2561 = vpack.c.b16 %v2417, %v2413
    %v2562 = vpack.c.b16 %v2418, %v2414
    %v2563 = vpack.c.b16 %v2419, %v2415
    %v2564 = vpack.c.b16 %v2420, %v2416
    %v2565 = vpack.c.b16 %v2425, %v2421
    %v2566 = vpack.c.b16 %v2426, %v2422
    %v2567 = vpack.c.b16 %v2427, %v2423
    %v2568 = vpack.c.b16 %v2428, %v2424
    %v2569 = vpack.c.b16 %v2433, %v2429
    %v2570 = vpack.c.b16 %v2434, %v2430
    %v2571 = vpack.c.b16 %v2435, %v2431
    %v2572 = vpack.c.b16 %v2436, %v2432
    %v2573 = vpack.c.b16 %v2441, %v2437
    %v2574 = vpack.c.b16 %v2442, %v2438
    %v2575 = vpack.c.b16 %v2443, %v2439
    %v2576 = vpack.c.b16 %v2444, %v2440
    %v2577 = vpack.c.b16 %v2449, %v2445
    %v2578 = vpack.c.b16 %v2450, %v2446
    %v2579 = vpack.c.b16 %v2451, %v2447
    %v2580 = vpack.c.b16 %v2452, %v2448
    %2709 = vmatprep.subr.bf16.mxu0 %v2454
    %2710 = vmatpush1.bf16.msra.mxu0 %v2453
    %2711 = vmatprep.subr.bf16.mxu0 %v2458
    %2712 = vmatpush1.bf16.msra.mxu0 %v2457
    %2713 = vmatprep.subr.bf16.mxu0 %v2462
    %2714 = vmatpush1.bf16.msra.mxu0 %v2461
    %2715 = vmatprep.subr.bf16.mxu0 %v2466
    %2716 = vmatpush1.bf16.msra.mxu0 %v2465
    %2717 = vmatprep.subr.bf16.mxu0 %v2470
    %2718 = vmatpush1.bf16.msra.mxu0 %v2469
    %2719 = vmatprep.subr.bf16.mxu0 %v2474
    %2720 = vmatpush1.bf16.msra.mxu0 %v2473
    %2721 = vmatprep.subr.bf16.mxu0 %v2478
    %2722 = vmatpush1.bf16.msra.mxu0 %v2477
    %2723 = vmatprep.subr.bf16.mxu0 %v2482
    %2724 = vmatpush1.bf16.msra.mxu0 %v2481
    %2725 = vmatprep.subr.bf16.mxu0 %v2486
    %2726 = vmatpush1.bf16.msra.mxu0 %v2485
    %2727 = vmatprep.subr.bf16.mxu0 %v2490
    %2728 = vmatpush1.bf16.msra.mxu0 %v2489
    %2729 = vmatprep.subr.bf16.mxu0 %v2494
    %2730 = vmatpush1.bf16.msra.mxu0 %v2493
    %2731 = vmatprep.subr.bf16.mxu0 %v2498
    %2732 = vmatpush1.bf16.msra.mxu0 %v2497
    %2733 = vmatprep.subr.bf16.mxu0 %v2502
    %2734 = vmatpush1.bf16.msra.mxu0 %v2501
    %2735 = vmatprep.subr.bf16.mxu0 %v2506
    %2736 = vmatpush1.bf16.msra.mxu0 %v2505
    %2737 = vmatprep.subr.bf16.mxu0 %v2510
    %2738 = vmatpush1.bf16.msra.mxu0 %v2509
    %2739 = vmatprep.subr.bf16.mxu0 %v2514
    %2740 = vmatpush1.bf16.msra.mxu0 %v2513
    %2741 = vmatprep.mubr.bf16.mxu0 %v1916
    %2742 = vmatmul.mubr.bf16.gmra.mrb[0].mxu0 %v1915
    %v2743 = vpop.f32.mrb[0].mxu0
    %v2744 = vadd.f32 %v2052, %v2743
    %v2745 = vpop.f32.mrb[0].mxu0
    %v2746 = vadd.f32 %v2056, %v2745
    %v2747 = vpop.f32.mrb[0].mxu0
    %v2748 = vadd.f32 %v2052, %v2747
    %v2749 = vpop.f32.mrb[0].mxu0
    %v2750 = vadd.f32 %v2056, %v2749
    %2751 = vdwg.mxu0
    %2752 = vmatprep.subr.bf16.mxu0 %v2518
    %2753 = vmatpush1.bf16.msra.mxu0 %v2517
    %2754 = vmatprep.subr.bf16.mxu0 %v2522
    %2755 = vmatpush1.bf16.msra.mxu0 %v2521
    %2756 = vmatprep.subr.bf16.mxu0 %v2526
    %2757 = vmatpush1.bf16.msra.mxu0 %v2525
    %2758 = vmatprep.subr.bf16.mxu0 %v2530
    %2759 = vmatpush1.bf16.msra.mxu0 %v2529
    %2760 = vmatprep.subr.bf16.mxu0 %v2534
    %2761 = vmatpush1.bf16.msra.mxu0 %v2533
    %2762 = vmatprep.subr.bf16.mxu0 %v2538
    %2763 = vmatpush1.bf16.msra.mxu0 %v2537
    %2764 = vmatprep.subr.bf16.mxu0 %v2542
    %2765 = vmatpush1.bf16.msra.mxu0 %v2541
    %2766 = vmatprep.subr.bf16.mxu0 %v2546
    %2767 = vmatpush1.bf16.msra.mxu0 %v2545
    %2768 = vmatprep.subr.bf16.mxu0 %v2550
    %2769 = vmatpush1.bf16.msra.mxu0 %v2549
    %2770 = vmatprep.subr.bf16.mxu0 %v2554
    %2771 = vmatpush1.bf16.msra.mxu0 %v2553
    %2772 = vmatprep.subr.bf16.mxu0 %v2558
    %2773 = vmatpush1.bf16.msra.mxu0 %v2557
    %2774 = vmatprep.subr.bf16.mxu0 %v2562
    %2775 = vmatpush1.bf16.msra.mxu0 %v2561
    %2776 = vmatprep.subr.bf16.mxu0 %v2566
    %2777 = vmatpush1.bf16.msra.mxu0 %v2565
    %2778 = vmatprep.subr.bf16.mxu0 %v2570
    %2779 = vmatpush1.bf16.msra.mxu0 %v2569
    %2780 = vmatprep.subr.bf16.mxu0 %v2574
    %2781 = vmatpush1.bf16.msra.mxu0 %v2573
    %2782 = vmatprep.subr.bf16.mxu0 %v2578
    %2783 = vmatpush1.bf16.msra.mxu0 %v2577
    %2784 = vmatprep.mubr.bf16.mxu0 %v1918
    %2785 = vmatmul.mubr.bf16.gmra.mrb[0].mxu0 %v1917
    %v2786 = vpop.f32.mrb[0].mxu0
    %v2787 = vadd.f32 %v2744, %v2786
    %v2788 = vpop.f32.mrb[0].mxu0
    %v2789 = vadd.f32 %v2746, %v2788
    %v2790 = vpop.f32.mrb[0].mxu0
    %v2791 = vadd.f32 %v2748, %v2790
    %v2792 = vpop.f32.mrb[0].mxu0
    %v2793 = vadd.f32 %v2750, %v2792
    %2794 = vdwg.mxu0
    %2795 = vmatprep.subr.bf16.mxu0 %v2456
    %2796 = vmatpush1.bf16.msra.mxu0 %v2455
    %2797 = vmatprep.subr.bf16.mxu0 %v2460
    %2798 = vmatpush1.bf16.msra.mxu0 %v2459
    %2799 = vmatprep.subr.bf16.mxu0 %v2464
    %2800 = vmatpush1.bf16.msra.mxu0 %v2463
    %2801 = vmatprep.subr.bf16.mxu0 %v2468
    %2802 = vmatpush1.bf16.msra.mxu0 %v2467
    %2803 = vmatprep.subr.bf16.mxu0 %v2472
    %2804 = vmatpush1.bf16.msra.mxu0 %v2471
    %2805 = vmatprep.subr.bf16.mxu0 %v2476
    %2806 = vmatpush1.bf16.msra.mxu0 %v2475
    %2807 = vmatprep.subr.bf16.mxu0 %v2480
    %2808 = vmatpush1.bf16.msra.mxu0 %v2479
    %2809 = vmatprep.subr.bf16.mxu0 %v2484
    %2810 = vmatpush1.bf16.msra.mxu0 %v2483
    %2811 = vmatprep.subr.bf16.mxu0 %v2488
    %2812 = vmatpush1.bf16.msra.mxu0 %v2487
    %2813 = vmatprep.subr.bf16.mxu0 %v2492
    %2814 = vmatpush1.bf16.msra.mxu0 %v2491
    %2815 = vmatprep.subr.bf16.mxu0 %v2496
    %2816 = vmatpush1.bf16.msra.mxu0 %v2495
    %2817 = vmatprep.subr.bf16.mxu0 %v2500
    %2818 = vmatpush1.bf16.msra.mxu0 %v2499
    %2819 = vmatprep.subr.bf16.mxu0 %v2504
    %2820 = vmatpush1.bf16.msra.mxu0 %v2503
    %2821 = vmatprep.subr.bf16.mxu0 %v2508
    %2822 = vmatpush1.bf16.msra.mxu0 %v2507
    %2823 = vmatprep.subr.bf16.mxu0 %v2512
    %2824 = vmatpush1.bf16.msra.mxu0 %v2511
    %2825 = vmatprep.subr.bf16.mxu0 %v2516
    %2826 = vmatpush1.bf16.msra.mxu0 %v2515
    %2827 = vmatprep.mubr.bf16.mxu0 %v1916
    %2828 = vmatmul.mubr.bf16.gmra.mrb[0].mxu0 %v1915
    %v2829 = vpop.f32.mrb[0].mxu0
    %v2830 = vadd.f32 %v2060, %v2829
    %v2831 = vpop.f32.mrb[0].mxu0
    %v2832 = vadd.f32 %v2064, %v2831
    %v2833 = vpop.f32.mrb[0].mxu0
    %v2834 = vadd.f32 %v2060, %v2833
    %v2835 = vpop.f32.mrb[0].mxu0
    %v2836 = vadd.f32 %v2064, %v2835
    %2837 = vdwg.mxu0
    %2838 = vmatprep.subr.bf16.mxu0 %v2520
    %2839 = vmatpush1.bf16.msra.mxu0 %v2519
    %2840 = vmatprep.subr.bf16.mxu0 %v2524
    %2841 = vmatpush1.bf16.msra.mxu0 %v2523
    %2842 = vmatprep.subr.bf16.mxu0 %v2528
    %2843 = vmatpush1.bf16.msra.mxu0 %v2527
    %2844 = vmatprep.subr.bf16.mxu0 %v2532
    %2845 = vmatpush1.bf16.msra.mxu0 %v2531
    %2846 = vmatprep.subr.bf16.mxu0 %v2536
    %2847 = vmatpush1.bf16.msra.mxu0 %v2535
    %2848 = vmatprep.subr.bf16.mxu0 %v2540
    %2849 = vmatpush1.bf16.msra.mxu0 %v2539
    %2850 = vmatprep.subr.bf16.mxu0 %v2544
    %2851 = vmatpush1.bf16.msra.mxu0 %v2543
    %2852 = vmatprep.subr.bf16.mxu0 %v2548
    %2853 = vmatpush1.bf16.msra.mxu0 %v2547
    %2854 = vmatprep.subr.bf16.mxu0 %v2552
    %2855 = vmatpush1.bf16.msra.mxu0 %v2551
    %2856 = vmatprep.subr.bf16.mxu0 %v2556
    %2857 = vmatpush1.bf16.msra.mxu0 %v2555
    %2858 = vmatprep.subr.bf16.mxu0 %v2560
    %2859 = vmatpush1.bf16.msra.mxu0 %v2559
    %2860 = vmatprep.subr.bf16.mxu0 %v2564
    %2861 = vmatpush1.bf16.msra.mxu0 %v2563
    %2862 = vmatprep.subr.bf16.mxu0 %v2568
    %2863 = vmatpush1.bf16.msra.mxu0 %v2567
    %2864 = vmatprep.subr.bf16.mxu0 %v2572
    %2865 = vmatpush1.bf16.msra.mxu0 %v2571
    %2866 = vmatprep.subr.bf16.mxu0 %v2576
    %2867 = vmatpush1.bf16.msra.mxu0 %v2575
    %2868 = vmatprep.subr.bf16.mxu0 %v2580
    %2869 = vmatpush1.bf16.msra.mxu0 %v2579
    %2870 = vmatprep.mubr.bf16.mxu0 %v1918
    %2871 = vmatmul.mubr.bf16.gmra.mrb[0].mxu0 %v1917
    %v2872 = vpop.f32.mrb[0].mxu0
    %v2873 = vadd.f32 %v2830, %v2872
    %v2874 = vpop.f32.mrb[0].mxu0
    %v2875 = vadd.f32 %v2832, %v2874
    %v2876 = vpop.f32.mrb[0].mxu0
    %v2877 = vadd.f32 %v2834, %v2876
    %v2878 = vpop.f32.mrb[0].mxu0
    %v2879 = vadd.f32 %v2836, %v2878
    %2880 = vdwg.mxu0
    %v2881 = vadd.f32 %v2787, %v925
    %v2882 = vadd.f32 %v2789, %v926
    %v2883 = vadd.f32 %v2873, %v927
    %v2884 = vadd.f32 %v2875, %v928
    %v2885 = vadd.f32 %v2791, %v933
    %v2886 = vadd.f32 %v2793, %v934
    %v2887 = vadd.f32 %v2877, %v935
    %v2888 = vadd.f32 %v2879, %v936
    %v2889 = vmax.f32 %v2881, 0.0
    %v2890 = vmax.f32 %v2882, 0.0
    %v2891 = vmax.f32 %v2883, 0.0
    %v2892 = vmax.f32 %v2884, 0.0
    %v2893 = vmax.f32 %v2885, 0.0
    %v2894 = vmax.f32 %v2886, 0.0
    %v2895 = vmax.f32 %v2887, 0.0
    %v2896 = vmax.f32 %v2888, 0.0
    %v2897 = vpack.c.bf16 %v2893, %v2889
    %v2898 = vpack.c.bf16 %v2894, %v2890
    %v2899 = vpack.c.bf16 %v2895, %v2891
    %v2900 = vpack.c.bf16 %v2896, %v2892
    %v2901 = vld [vmem:[#allocation11] sm:$0xff]
    %v2902 = vld [vmem:[#allocation11 + $0x8] sm:$0xff]
    %v2903 = vld [vmem:[#allocation11 + $0x10] sm:$0xff]
    %v2904 = vld [vmem:[#allocation11 + $0x18] sm:$0xff]
    %v2905 = vld [vmem:[#allocation11 + $0x20] sm:$0xff]
    %v2906 = vld [vmem:[#allocation11 + $0x28] sm:$0xff]
    %v2907 = vld [vmem:[#allocation11 + $0x30] sm:$0xff]
    %v2908 = vld [vmem:[#allocation11 + $0x38] sm:$0xff]
    %v2909 = vld [vmem:[#allocation11 + $0x40] sm:$0xff]
    %v2910 = vld [vmem:[#allocation11 + $0x48] sm:$0xff]
    %v2911 = vld [vmem:[#allocation11 + $0x50] sm:$0xff]
    %v2912 = vld [vmem:[#allocation11 + $0x58] sm:$0xff]
    %v2913 = vld [vmem:[#allocation11 + $0x60] sm:$0xff]
    %v2914 = vld [vmem:[#allocation11 + $0x68] sm:$0xff]
    %v2915 = vld [vmem:[#allocation11 + $0x70] sm:$0xff]
    %v2916 = vld [vmem:[#allocation11 + $0x78] sm:$0xff]
    %v2917 = vld [vmem:[#allocation11 + $0x80] sm:$0xff]
    %v2918 = vld [vmem:[#allocation11 + $0x88] sm:$0xff]
    %v2919 = vld [vmem:[#allocation11 + $0x90] sm:$0xff]
    %v2920 = vld [vmem:[#allocation11 + $0x98] sm:$0xff]
    %v2921 = vld [vmem:[#allocation11 + $0xa0] sm:$0xff]
    %v2922 = vld [vmem:[#allocation11 + $0xa8] sm:$0xff]
    %v2923 = vld [vmem:[#allocation11 + $0xb0] sm:$0xff]
    %v2924 = vld [vmem:[#allocation11 + $0xb8] sm:$0xff]
    %v2925 = vld [vmem:[#allocation11 + $0xc0] sm:$0xff]
    %v2926 = vld [vmem:[#allocation11 + $0xc8] sm:$0xff]
    %v2927 = vld [vmem:[#allocation11 + $0xd0] sm:$0xff]
    %v2928 = vld [vmem:[#allocation11 + $0xd8] sm:$0xff]
    %v2929 = vld [vmem:[#allocation11 + $0xe0] sm:$0xff]
    %v2930 = vld [vmem:[#allocation11 + $0xe8] sm:$0xff]
    %v2931 = vld [vmem:[#allocation11 + $0xf0] sm:$0xff]
    %v2932 = vld [vmem:[#allocation11 + $0xf8] sm:$0xff]
    %v2933 = vld [vmem:[#allocation11 + $0x100] sm:$0xff]
    %v2934 = vld [vmem:[#allocation11 + $0x108] sm:$0xff]
    %v2935 = vld [vmem:[#allocation11 + $0x110] sm:$0xff]
    %v2936 = vld [vmem:[#allocation11 + $0x118] sm:$0xff]
    %v2937 = vld [vmem:[#allocation11 + $0x120] sm:$0xff]
    %v2938 = vld [vmem:[#allocation11 + $0x128] sm:$0xff]
    %v2939 = vld [vmem:[#allocation11 + $0x130] sm:$0xff]
    %v2940 = vld [vmem:[#allocation11 + $0x138] sm:$0xff]
    %v2941 = vld [vmem:[#allocation11 + $0x140] sm:$0xff]
    %v2942 = vld [vmem:[#allocation11 + $0x148] sm:$0xff]
    %v2943 = vld [vmem:[#allocation11 + $0x150] sm:$0xff]
    %v2944 = vld [vmem:[#allocation11 + $0x158] sm:$0xff]
    %v2945 = vld [vmem:[#allocation11 + $0x160] sm:$0xff]
    %v2946 = vld [vmem:[#allocation11 + $0x168] sm:$0xff]
    %v2947 = vld [vmem:[#allocation11 + $0x170] sm:$0xff]
    %v2948 = vld [vmem:[#allocation11 + $0x178] sm:$0xff]
    %v2949 = vld [vmem:[#allocation11 + $0x180] sm:$0xff]
    %v2950 = vld [vmem:[#allocation11 + $0x188] sm:$0xff]
    %v2951 = vld [vmem:[#allocation11 + $0x190] sm:$0xff]
    %v2952 = vld [vmem:[#allocation11 + $0x198] sm:$0xff]
    %v2953 = vld [vmem:[#allocation11 + $0x1a0] sm:$0xff]
    %v2954 = vld [vmem:[#allocation11 + $0x1a8] sm:$0xff]
    %v2955 = vld [vmem:[#allocation11 + $0x1b0] sm:$0xff]
    %v2956 = vld [vmem:[#allocation11 + $0x1b8] sm:$0xff]
    %v2957 = vld [vmem:[#allocation11 + $0x1c0] sm:$0xff]
    %v2958 = vld [vmem:[#allocation11 + $0x1c8] sm:$0xff]
    %v2959 = vld [vmem:[#allocation11 + $0x1d0] sm:$0xff]
    %v2960 = vld [vmem:[#allocation11 + $0x1d8] sm:$0xff]
    %v2961 = vld [vmem:[#allocation11 + $0x1e0] sm:$0xff]
    %v2962 = vld [vmem:[#allocation11 + $0x1e8] sm:$0xff]
    %v2963 = vld [vmem:[#allocation11 + $0x1f0] sm:$0xff]
    %v2964 = vld [vmem:[#allocation11 + $0x1f8] sm:$0xff]
    %v2965 = vld [vmem:[#allocation11 + $0x200] sm:$0xff]
    %v2966 = vld [vmem:[#allocation11 + $0x208] sm:$0xff]
    %v2967 = vld [vmem:[#allocation11 + $0x210] sm:$0xff]
    %v2968 = vld [vmem:[#allocation11 + $0x218] sm:$0xff]
    %v2969 = vld [vmem:[#allocation11 + $0x220] sm:$0xff]
    %v2970 = vld [vmem:[#allocation11 + $0x228] sm:$0xff]
    %v2971 = vld [vmem:[#allocation11 + $0x230] sm:$0xff]
    %v2972 = vld [vmem:[#allocation11 + $0x238] sm:$0xff]
    %v2973 = vld [vmem:[#allocation11 + $0x240] sm:$0xff]
    %v2974 = vld [vmem:[#allocation11 + $0x248] sm:$0xff]
    %v2975 = vld [vmem:[#allocation11 + $0x250] sm:$0xff]
    %v2976 = vld [vmem:[#allocation11 + $0x258] sm:$0xff]
    %v2977 = vld [vmem:[#allocation11 + $0x260] sm:$0xff]
    %v2978 = vld [vmem:[#allocation11 + $0x268] sm:$0xff]
    %v2979 = vld [vmem:[#allocation11 + $0x270] sm:$0xff]
    %v2980 = vld [vmem:[#allocation11 + $0x278] sm:$0xff]
    %v2981 = vld [vmem:[#allocation11 + $0x280] sm:$0xff]
    %v2982 = vld [vmem:[#allocation11 + $0x288] sm:$0xff]
    %v2983 = vld [vmem:[#allocation11 + $0x290] sm:$0xff]
    %v2984 = vld [vmem:[#allocation11 + $0x298] sm:$0xff]
    %v2985 = vld [vmem:[#allocation11 + $0x2a0] sm:$0xff]
    %v2986 = vld [vmem:[#allocation11 + $0x2a8] sm:$0xff]
    %v2987 = vld [vmem:[#allocation11 + $0x2b0] sm:$0xff]
    %v2988 = vld [vmem:[#allocation11 + $0x2b8] sm:$0xff]
    %v2989 = vld [vmem:[#allocation11 + $0x2c0] sm:$0xff]
    %v2990 = vld [vmem:[#allocation11 + $0x2c8] sm:$0xff]
    %v2991 = vld [vmem:[#allocation11 + $0x2d0] sm:$0xff]
    %v2992 = vld [vmem:[#allocation11 + $0x2d8] sm:$0xff]
    %v2993 = vld [vmem:[#allocation11 + $0x2e0] sm:$0xff]
    %v2994 = vld [vmem:[#allocation11 + $0x2e8] sm:$0xff]
    %v2995 = vld [vmem:[#allocation11 + $0x2f0] sm:$0xff]
    %v2996 = vld [vmem:[#allocation11 + $0x2f8] sm:$0xff]
    %v2997 = vld [vmem:[#allocation11 + $0x300] sm:$0xff]
    %v2998 = vld [vmem:[#allocation11 + $0x308] sm:$0xff]
    %v2999 = vld [vmem:[#allocation11 + $0x310] sm:$0xff]
    %v3000 = vld [vmem:[#allocation11 + $0x318] sm:$0xff]
    %v3001 = vld [vmem:[#allocation11 + $0x320] sm:$0xff]
    %v3002 = vld [vmem:[#allocation11 + $0x328] sm:$0xff]
    %v3003 = vld [vmem:[#allocation11 + $0x330] sm:$0xff]
    %v3004 = vld [vmem:[#allocation11 + $0x338] sm:$0xff]
    %v3005 = vld [vmem:[#allocation11 + $0x340] sm:$0xff]
    %v3006 = vld [vmem:[#allocation11 + $0x348] sm:$0xff]
    %v3007 = vld [vmem:[#allocation11 + $0x350] sm:$0xff]
    %v3008 = vld [vmem:[#allocation11 + $0x358] sm:$0xff]
    %v3009 = vld [vmem:[#allocation11 + $0x360] sm:$0xff]
    %v3010 = vld [vmem:[#allocation11 + $0x368] sm:$0xff]
    %v3011 = vld [vmem:[#allocation11 + $0x370] sm:$0xff]
    %v3012 = vld [vmem:[#allocation11 + $0x378] sm:$0xff]
    %v3013 = vld [vmem:[#allocation11 + $0x380] sm:$0xff]
    %v3014 = vld [vmem:[#allocation11 + $0x388] sm:$0xff]
    %v3015 = vld [vmem:[#allocation11 + $0x390] sm:$0xff]
    %v3016 = vld [vmem:[#allocation11 + $0x398] sm:$0xff]
    %v3017 = vld [vmem:[#allocation11 + $0x3a0] sm:$0xff]
    %v3018 = vld [vmem:[#allocation11 + $0x3a8] sm:$0xff]
    %v3019 = vld [vmem:[#allocation11 + $0x3b0] sm:$0xff]
    %v3020 = vld [vmem:[#allocation11 + $0x3b8] sm:$0xff]
    %v3021 = vld [vmem:[#allocation11 + $0x3c0] sm:$0xff]
    %v3022 = vld [vmem:[#allocation11 + $0x3c8] sm:$0xff]
    %v3023 = vld [vmem:[#allocation11 + $0x3d0] sm:$0xff]
    %v3024 = vld [vmem:[#allocation11 + $0x3d8] sm:$0xff]
    %v3025 = vld [vmem:[#allocation11 + $0x3e0] sm:$0xff]
    %v3026 = vld [vmem:[#allocation11 + $0x3e8] sm:$0xff]
    %v3027 = vld [vmem:[#allocation11 + $0x3f0] sm:$0xff]
    %v3028 = vld [vmem:[#allocation11 + $0x3f8] sm:$0xff]
    %v3029 = vld [vmem:[%s8] sm:$0xf]
    %v3031 = vlaneseq
    %v3032 = vshrl.u32 %v3031, 7
    %v3033 = vsub.s32 0, %v3032
    %v3034 = vrot.slane %v3029, %v3033
    %v3035 = vlaneseq
    %v3036 = vshrl.u32 %v3035, 7
    %v3037 = vsub.s32 1, %v3036
    %v3038 = vrot.slane %v3029, %v3037
    %v3039 = vlaneseq
    %v3040 = vshrl.u32 %v3039, 7
    %v3041 = vsub.s32 2, %v3040
    %v3042 = vrot.slane %v3029, %v3041
    %v3043 = vlaneseq
    %v3044 = vshrl.u32 %v3043, 7
    %v3045 = vsub.s32 3, %v3044
    %v3046 = vrot.slane %v3029, %v3045
    %v3179 = vunpack.c.l.b16 %v2901
    %v3180 = vunpack.c.h.b16 %v2901
    %v3181 = vunpack.c.l.b16 %v2902
    %v3182 = vunpack.c.h.b16 %v2902
    %v3183 = vunpack.c.l.b16 %v2903
    %v3184 = vunpack.c.h.b16 %v2903
    %v3185 = vunpack.c.l.b16 %v2904
    %v3186 = vunpack.c.h.b16 %v2904
    %v3187 = vunpack.c.l.b16 %v2905
    %v3188 = vunpack.c.h.b16 %v2905
    %v3189 = vunpack.c.l.b16 %v2906
    %v3190 = vunpack.c.h.b16 %v2906
    %v3191 = vunpack.c.l.b16 %v2907
    %v3192 = vunpack.c.h.b16 %v2907
    %v3193 = vunpack.c.l.b16 %v2908
    %v3194 = vunpack.c.h.b16 %v2908
    %v3195 = vunpack.c.l.b16 %v2909
    %v3196 = vunpack.c.h.b16 %v2909
    %v3197 = vunpack.c.l.b16 %v2910
    %v3198 = vunpack.c.h.b16 %v2910
    %v3199 = vunpack.c.l.b16 %v2911
    %v3200 = vunpack.c.h.b16 %v2911
    %v3201 = vunpack.c.l.b16 %v2912
    %v3202 = vunpack.c.h.b16 %v2912
    %v3203 = vunpack.c.l.b16 %v2913
    %v3204 = vunpack.c.h.b16 %v2913
    %v3205 = vunpack.c.l.b16 %v2914
    %v3206 = vunpack.c.h.b16 %v2914
    %v3207 = vunpack.c.l.b16 %v2915
    %v3208 = vunpack.c.h.b16 %v2915
    %v3209 = vunpack.c.l.b16 %v2916
    %v3210 = vunpack.c.h.b16 %v2916
    %v3211 = vunpack.c.l.b16 %v2917
    %v3212 = vunpack.c.h.b16 %v2917
    %v3213 = vunpack.c.l.b16 %v2918
    %v3214 = vunpack.c.h.b16 %v2918
    %v3215 = vunpack.c.l.b16 %v2919
    %v3216 = vunpack.c.h.b16 %v2919
    %v3217 = vunpack.c.l.b16 %v2920
    %v3218 = vunpack.c.h.b16 %v2920
    %v3219 = vunpack.c.l.b16 %v2921
    %v3220 = vunpack.c.h.b16 %v2921
    %v3221 = vunpack.c.l.b16 %v2922
    %v3222 = vunpack.c.h.b16 %v2922
    %v3223 = vunpack.c.l.b16 %v2923
    %v3224 = vunpack.c.h.b16 %v2923
    %v3225 = vunpack.c.l.b16 %v2924
    %v3226 = vunpack.c.h.b16 %v2924
    %v3227 = vunpack.c.l.b16 %v2925
    %v3228 = vunpack.c.h.b16 %v2925
    %v3229 = vunpack.c.l.b16 %v2926
    %v3230 = vunpack.c.h.b16 %v2926
    %v3231 = vunpack.c.l.b16 %v2927
    %v3232 = vunpack.c.h.b16 %v2927
    %v3233 = vunpack.c.l.b16 %v2928
    %v3234 = vunpack.c.h.b16 %v2928
    %v3235 = vunpack.c.l.b16 %v2929
    %v3236 = vunpack.c.h.b16 %v2929
    %v3237 = vunpack.c.l.b16 %v2930
    %v3238 = vunpack.c.h.b16 %v2930
    %v3239 = vunpack.c.l.b16 %v2931
    %v3240 = vunpack.c.h.b16 %v2931
    %v3241 = vunpack.c.l.b16 %v2932
    %v3242 = vunpack.c.h.b16 %v2932
    %v3243 = vunpack.c.l.b16 %v2933
    %v3244 = vunpack.c.h.b16 %v2933
    %v3245 = vunpack.c.l.b16 %v2934
    %v3246 = vunpack.c.h.b16 %v2934
    %v3247 = vunpack.c.l.b16 %v2935
    %v3248 = vunpack.c.h.b16 %v2935
    %v3249 = vunpack.c.l.b16 %v2936
    %v3250 = vunpack.c.h.b16 %v2936
    %v3251 = vunpack.c.l.b16 %v2937
    %v3252 = vunpack.c.h.b16 %v2937
    %v3253 = vunpack.c.l.b16 %v2938
    %v3254 = vunpack.c.h.b16 %v2938
    %v3255 = vunpack.c.l.b16 %v2939
    %v3256 = vunpack.c.h.b16 %v2939
    %v3257 = vunpack.c.l.b16 %v2940
    %v3258 = vunpack.c.h.b16 %v2940
    %v3259 = vunpack.c.l.b16 %v2941
    %v3260 = vunpack.c.h.b16 %v2941
    %v3261 = vunpack.c.l.b16 %v2942
    %v3262 = vunpack.c.h.b16 %v2942
    %v3263 = vunpack.c.l.b16 %v2943
    %v3264 = vunpack.c.h.b16 %v2943
    %v3265 = vunpack.c.l.b16 %v2944
    %v3266 = vunpack.c.h.b16 %v2944
    %v3267 = vunpack.c.l.b16 %v2945
    %v3268 = vunpack.c.h.b16 %v2945
    %v3269 = vunpack.c.l.b16 %v2946
    %v3270 = vunpack.c.h.b16 %v2946
    %v3271 = vunpack.c.l.b16 %v2947
    %v3272 = vunpack.c.h.b16 %v2947
    %v3273 = vunpack.c.l.b16 %v2948
    %v3274 = vunpack.c.h.b16 %v2948
    %v3275 = vunpack.c.l.b16 %v2949
    %v3276 = vunpack.c.h.b16 %v2949
    %v3277 = vunpack.c.l.b16 %v2950
    %v3278 = vunpack.c.h.b16 %v2950
    %v3279 = vunpack.c.l.b16 %v2951
    %v3280 = vunpack.c.h.b16 %v2951
    %v3281 = vunpack.c.l.b16 %v2952
    %v3282 = vunpack.c.h.b16 %v2952
    %v3283 = vunpack.c.l.b16 %v2953
    %v3284 = vunpack.c.h.b16 %v2953
    %v3285 = vunpack.c.l.b16 %v2954
    %v3286 = vunpack.c.h.b16 %v2954
    %v3287 = vunpack.c.l.b16 %v2955
    %v3288 = vunpack.c.h.b16 %v2955
    %v3289 = vunpack.c.l.b16 %v2956
    %v3290 = vunpack.c.h.b16 %v2956
    %v3291 = vunpack.c.l.b16 %v2957
    %v3292 = vunpack.c.h.b16 %v2957
    %v3293 = vunpack.c.l.b16 %v2958
    %v3294 = vunpack.c.h.b16 %v2958
    %v3295 = vunpack.c.l.b16 %v2959
    %v3296 = vunpack.c.h.b16 %v2959
    %v3297 = vunpack.c.l.b16 %v2960
    %v3298 = vunpack.c.h.b16 %v2960
    %v3299 = vunpack.c.l.b16 %v2961
    %v3300 = vunpack.c.h.b16 %v2961
    %v3301 = vunpack.c.l.b16 %v2962
    %v3302 = vunpack.c.h.b16 %v2962
    %v3303 = vunpack.c.l.b16 %v2963
    %v3304 = vunpack.c.h.b16 %v2963
    %v3305 = vunpack.c.l.b16 %v2964
    %v3306 = vunpack.c.h.b16 %v2964
    %v3307 = vunpack.c.l.b16 %v2965
    %v3308 = vunpack.c.h.b16 %v2965
    %v3309 = vunpack.c.l.b16 %v2966
    %v3310 = vunpack.c.h.b16 %v2966
    %v3311 = vunpack.c.l.b16 %v2967
    %v3312 = vunpack.c.h.b16 %v2967
    %v3313 = vunpack.c.l.b16 %v2968
    %v3314 = vunpack.c.h.b16 %v2968
    %v3315 = vunpack.c.l.b16 %v2969
    %v3316 = vunpack.c.h.b16 %v2969
    %v3317 = vunpack.c.l.b16 %v2970
    %v3318 = vunpack.c.h.b16 %v2970
    %v3319 = vunpack.c.l.b16 %v2971
    %v3320 = vunpack.c.h.b16 %v2971
    %v3321 = vunpack.c.l.b16 %v2972
    %v3322 = vunpack.c.h.b16 %v2972
    %v3323 = vunpack.c.l.b16 %v2973
    %v3324 = vunpack.c.h.b16 %v2973
    %v3325 = vunpack.c.l.b16 %v2974
    %v3326 = vunpack.c.h.b16 %v2974
    %v3327 = vunpack.c.l.b16 %v2975
    %v3328 = vunpack.c.h.b16 %v2975
    %v3329 = vunpack.c.l.b16 %v2976
    %v3330 = vunpack.c.h.b16 %v2976
    %v3331 = vunpack.c.l.b16 %v2977
    %v3332 = vunpack.c.h.b16 %v2977
    %v3333 = vunpack.c.l.b16 %v2978
    %v3334 = vunpack.c.h.b16 %v2978
    %v3335 = vunpack.c.l.b16 %v2979
    %v3336 = vunpack.c.h.b16 %v2979
    %v3337 = vunpack.c.l.b16 %v2980
    %v3338 = vunpack.c.h.b16 %v2980
    %v3339 = vunpack.c.l.b16 %v2981
    %v3340 = vunpack.c.h.b16 %v2981
    %v3341 = vunpack.c.l.b16 %v2982
    %v3342 = vunpack.c.h.b16 %v2982
    %v3343 = vunpack.c.l.b16 %v2983
    %v3344 = vunpack.c.h.b16 %v2983
    %v3345 = vunpack.c.l.b16 %v2984
    %v3346 = vunpack.c.h.b16 %v2984
    %v3347 = vunpack.c.l.b16 %v2985
    %v3348 = vunpack.c.h.b16 %v2985
    %v3349 = vunpack.c.l.b16 %v2986
    %v3350 = vunpack.c.h.b16 %v2986
    %v3351 = vunpack.c.l.b16 %v2987
    %v3352 = vunpack.c.h.b16 %v2987
    %v3353 = vunpack.c.l.b16 %v2988
    %v3354 = vunpack.c.h.b16 %v2988
    %v3355 = vunpack.c.l.b16 %v2989
    %v3356 = vunpack.c.h.b16 %v2989
    %v3357 = vunpack.c.l.b16 %v2990
    %v3358 = vunpack.c.h.b16 %v2990
    %v3359 = vunpack.c.l.b16 %v2991
    %v3360 = vunpack.c.h.b16 %v2991
    %v3361 = vunpack.c.l.b16 %v2992
    %v3362 = vunpack.c.h.b16 %v2992
    %v3363 = vunpack.c.l.b16 %v2993
    %v3364 = vunpack.c.h.b16 %v2993
    %v3365 = vunpack.c.l.b16 %v2994
    %v3366 = vunpack.c.h.b16 %v2994
    %v3367 = vunpack.c.l.b16 %v2995
    %v3368 = vunpack.c.h.b16 %v2995
    %v3369 = vunpack.c.l.b16 %v2996
    %v3370 = vunpack.c.h.b16 %v2996
    %v3371 = vunpack.c.l.b16 %v2997
    %v3372 = vunpack.c.h.b16 %v2997
    %v3373 = vunpack.c.l.b16 %v2998
    %v3374 = vunpack.c.h.b16 %v2998
    %v3375 = vunpack.c.l.b16 %v2999
    %v3376 = vunpack.c.h.b16 %v2999
    %v3377 = vunpack.c.l.b16 %v3000
    %v3378 = vunpack.c.h.b16 %v3000
    %v3379 = vunpack.c.l.b16 %v3001
    %v3380 = vunpack.c.h.b16 %v3001
    %v3381 = vunpack.c.l.b16 %v3002
    %v3382 = vunpack.c.h.b16 %v3002
    %v3383 = vunpack.c.l.b16 %v3003
    %v3384 = vunpack.c.h.b16 %v3003
    %v3385 = vunpack.c.l.b16 %v3004
    %v3386 = vunpack.c.h.b16 %v3004
    %v3387 = vunpack.c.l.b16 %v3005
    %v3388 = vunpack.c.h.b16 %v3005
    %v3389 = vunpack.c.l.b16 %v3006
    %v3390 = vunpack.c.h.b16 %v3006
    %v3391 = vunpack.c.l.b16 %v3007
    %v3392 = vunpack.c.h.b16 %v3007
    %v3393 = vunpack.c.l.b16 %v3008
    %v3394 = vunpack.c.h.b16 %v3008
    %v3395 = vunpack.c.l.b16 %v3009
    %v3396 = vunpack.c.h.b16 %v3009
    %v3397 = vunpack.c.l.b16 %v3010
    %v3398 = vunpack.c.h.b16 %v3010
    %v3399 = vunpack.c.l.b16 %v3011
    %v3400 = vunpack.c.h.b16 %v3011
    %v3401 = vunpack.c.l.b16 %v3012
    %v3402 = vunpack.c.h.b16 %v3012
    %v3403 = vunpack.c.l.b16 %v3013
    %v3404 = vunpack.c.h.b16 %v3013
    %v3405 = vunpack.c.l.b16 %v3014
    %v3406 = vunpack.c.h.b16 %v3014
    %v3407 = vunpack.c.l.b16 %v3015
    %v3408 = vunpack.c.h.b16 %v3015
    %v3409 = vunpack.c.l.b16 %v3016
    %v3410 = vunpack.c.h.b16 %v3016
    %v3411 = vunpack.c.l.b16 %v3017
    %v3412 = vunpack.c.h.b16 %v3017
    %v3413 = vunpack.c.l.b16 %v3018
    %v3414 = vunpack.c.h.b16 %v3018
    %v3415 = vunpack.c.l.b16 %v3019
    %v3416 = vunpack.c.h.b16 %v3019
    %v3417 = vunpack.c.l.b16 %v3020
    %v3418 = vunpack.c.h.b16 %v3020
    %v3419 = vunpack.c.l.b16 %v3021
    %v3420 = vunpack.c.h.b16 %v3021
    %v3421 = vunpack.c.l.b16 %v3022
    %v3422 = vunpack.c.h.b16 %v3022
    %v3423 = vunpack.c.l.b16 %v3023
    %v3424 = vunpack.c.h.b16 %v3023
    %v3425 = vunpack.c.l.b16 %v3024
    %v3426 = vunpack.c.h.b16 %v3024
    %v3427 = vunpack.c.l.b16 %v3025
    %v3428 = vunpack.c.h.b16 %v3025
    %v3429 = vunpack.c.l.b16 %v3026
    %v3430 = vunpack.c.h.b16 %v3026
    %v3431 = vunpack.c.l.b16 %v3027
    %v3432 = vunpack.c.h.b16 %v3027
    %v3433 = vunpack.c.l.b16 %v3028
    %v3434 = vunpack.c.h.b16 %v3028
    %v3435 = vpack.c.b16 %v3183, %v3179
    %v3436 = vpack.c.b16 %v3184, %v3180
    %v3437 = vpack.c.b16 %v3185, %v3181
    %v3438 = vpack.c.b16 %v3186, %v3182
    %v3439 = vpack.c.b16 %v3191, %v3187
    %v3440 = vpack.c.b16 %v3192, %v3188
    %v3441 = vpack.c.b16 %v3193, %v3189
    %v3442 = vpack.c.b16 %v3194, %v3190
    %v3443 = vpack.c.b16 %v3199, %v3195
    %v3444 = vpack.c.b16 %v3200, %v3196
    %v3445 = vpack.c.b16 %v3201, %v3197
    %v3446 = vpack.c.b16 %v3202, %v3198
    %v3447 = vpack.c.b16 %v3207, %v3203
    %v3448 = vpack.c.b16 %v3208, %v3204
    %v3449 = vpack.c.b16 %v3209, %v3205
    %v3450 = vpack.c.b16 %v3210, %v3206
    %v3451 = vpack.c.b16 %v3215, %v3211
    %v3452 = vpack.c.b16 %v3216, %v3212
    %v3453 = vpack.c.b16 %v3217, %v3213
    %v3454 = vpack.c.b16 %v3218, %v3214
    %v3455 = vpack.c.b16 %v3223, %v3219
    %v3456 = vpack.c.b16 %v3224, %v3220
    %v3457 = vpack.c.b16 %v3225, %v3221
    %v3458 = vpack.c.b16 %v3226, %v3222
    %v3459 = vpack.c.b16 %v3231, %v3227
    %v3460 = vpack.c.b16 %v3232, %v3228
    %v3461 = vpack.c.b16 %v3233, %v3229
    %v3462 = vpack.c.b16 %v3234, %v3230
    %v3463 = vpack.c.b16 %v3239, %v3235
    %v3464 = vpack.c.b16 %v3240, %v3236
    %v3465 = vpack.c.b16 %v3241, %v3237
    %v3466 = vpack.c.b16 %v3242, %v3238
    %v3467 = vpack.c.b16 %v3247, %v3243
    %v3468 = vpack.c.b16 %v3248, %v3244
    %v3469 = vpack.c.b16 %v3249, %v3245
    %v3470 = vpack.c.b16 %v3250, %v3246
    %v3471 = vpack.c.b16 %v3255, %v3251
    %v3472 = vpack.c.b16 %v3256, %v3252
    %v3473 = vpack.c.b16 %v3257, %v3253
    %v3474 = vpack.c.b16 %v3258, %v3254
    %v3475 = vpack.c.b16 %v3263, %v3259
    %v3476 = vpack.c.b16 %v3264, %v3260
    %v3477 = vpack.c.b16 %v3265, %v3261
    %v3478 = vpack.c.b16 %v3266, %v3262
    %v3479 = vpack.c.b16 %v3271, %v3267
    %v3480 = vpack.c.b16 %v3272, %v3268
    %v3481 = vpack.c.b16 %v3273, %v3269
    %v3482 = vpack.c.b16 %v3274, %v3270
    %v3483 = vpack.c.b16 %v3279, %v3275
    %v3484 = vpack.c.b16 %v3280, %v3276
    %v3485 = vpack.c.b16 %v3281, %v3277
    %v3486 = vpack.c.b16 %v3282, %v3278
    %v3487 = vpack.c.b16 %v3287, %v3283
    %v3488 = vpack.c.b16 %v3288, %v3284
    %v3489 = vpack.c.b16 %v3289, %v3285
    %v3490 = vpack.c.b16 %v3290, %v3286
    %v3491 = vpack.c.b16 %v3295, %v3291
    %v3492 = vpack.c.b16 %v3296, %v3292
    %v3493 = vpack.c.b16 %v3297, %v3293
    %v3494 = vpack.c.b16 %v3298, %v3294
    %v3495 = vpack.c.b16 %v3303, %v3299
    %v3496 = vpack.c.b16 %v3304, %v3300
    %v3497 = vpack.c.b16 %v3305, %v3301
    %v3498 = vpack.c.b16 %v3306, %v3302
    %v3499 = vpack.c.b16 %v3311, %v3307
    %v3500 = vpack.c.b16 %v3312, %v3308
    %v3501 = vpack.c.b16 %v3313, %v3309
    %v3502 = vpack.c.b16 %v3314, %v3310
    %v3503 = vpack.c.b16 %v3319, %v3315
    %v3504 = vpack.c.b16 %v3320, %v3316
    %v3505 = vpack.c.b16 %v3321, %v3317
    %v3506 = vpack.c.b16 %v3322, %v3318
    %v3507 = vpack.c.b16 %v3327, %v3323
    %v3508 = vpack.c.b16 %v3328, %v3324
    %v3509 = vpack.c.b16 %v3329, %v3325
    %v3510 = vpack.c.b16 %v3330, %v3326
    %v3511 = vpack.c.b16 %v3335, %v3331
    %v3512 = vpack.c.b16 %v3336, %v3332
    %v3513 = vpack.c.b16 %v3337, %v3333
    %v3514 = vpack.c.b16 %v3338, %v3334
    %v3515 = vpack.c.b16 %v3343, %v3339
    %v3516 = vpack.c.b16 %v3344, %v3340
    %v3517 = vpack.c.b16 %v3345, %v3341
    %v3518 = vpack.c.b16 %v3346, %v3342
    %v3519 = vpack.c.b16 %v3351, %v3347
    %v3520 = vpack.c.b16 %v3352, %v3348
    %v3521 = vpack.c.b16 %v3353, %v3349
    %v3522 = vpack.c.b16 %v3354, %v3350
    %v3523 = vpack.c.b16 %v3359, %v3355
    %v3524 = vpack.c.b16 %v3360, %v3356
    %v3525 = vpack.c.b16 %v3361, %v3357
    %v3526 = vpack.c.b16 %v3362, %v3358
    %v3527 = vpack.c.b16 %v3367, %v3363
    %v3528 = vpack.c.b16 %v3368, %v3364
    %v3529 = vpack.c.b16 %v3369, %v3365
    %v3530 = vpack.c.b16 %v3370, %v3366
    %v3531 = vpack.c.b16 %v3375, %v3371
    %v3532 = vpack.c.b16 %v3376, %v3372
    %v3533 = vpack.c.b16 %v3377, %v3373
    %v3534 = vpack.c.b16 %v3378, %v3374
    %v3535 = vpack.c.b16 %v3383, %v3379
    %v3536 = vpack.c.b16 %v3384, %v3380
    %v3537 = vpack.c.b16 %v3385, %v3381
    %v3538 = vpack.c.b16 %v3386, %v3382
    %v3539 = vpack.c.b16 %v3391, %v3387
    %v3540 = vpack.c.b16 %v3392, %v3388
    %v3541 = vpack.c.b16 %v3393, %v3389
    %v3542 = vpack.c.b16 %v3394, %v3390
    %v3543 = vpack.c.b16 %v3399, %v3395
    %v3544 = vpack.c.b16 %v3400, %v3396
    %v3545 = vpack.c.b16 %v3401, %v3397
    %v3546 = vpack.c.b16 %v3402, %v3398
    %v3547 = vpack.c.b16 %v3407, %v3403
    %v3548 = vpack.c.b16 %v3408, %v3404
    %v3549 = vpack.c.b16 %v3409, %v3405
    %v3550 = vpack.c.b16 %v3410, %v3406
    %v3551 = vpack.c.b16 %v3415, %v3411
    %v3552 = vpack.c.b16 %v3416, %v3412
    %v3553 = vpack.c.b16 %v3417, %v3413
    %v3554 = vpack.c.b16 %v3418, %v3414
    %v3555 = vpack.c.b16 %v3423, %v3419
    %v3556 = vpack.c.b16 %v3424, %v3420
    %v3557 = vpack.c.b16 %v3425, %v3421
    %v3558 = vpack.c.b16 %v3426, %v3422
    %v3559 = vpack.c.b16 %v3431, %v3427
    %v3560 = vpack.c.b16 %v3432, %v3428
    %v3561 = vpack.c.b16 %v3433, %v3429
    %v3562 = vpack.c.b16 %v3434, %v3430
    %3691 = vmatprep.subr.bf16.mxu0 %v3436
    %3692 = vmatpush1.bf16.msra.mxu0 %v3435
    %3693 = vmatprep.subr.bf16.mxu0 %v3440
    %3694 = vmatpush1.bf16.msra.mxu0 %v3439
    %3695 = vmatprep.subr.bf16.mxu0 %v3444
    %3696 = vmatpush1.bf16.msra.mxu0 %v3443
    %3697 = vmatprep.subr.bf16.mxu0 %v3448
    %3698 = vmatpush1.bf16.msra.mxu0 %v3447
    %3699 = vmatprep.subr.bf16.mxu0 %v3452
    %3700 = vmatpush1.bf16.msra.mxu0 %v3451
    %3701 = vmatprep.subr.bf16.mxu0 %v3456
    %3702 = vmatpush1.bf16.msra.mxu0 %v3455
    %3703 = vmatprep.subr.bf16.mxu0 %v3460
    %3704 = vmatpush1.bf16.msra.mxu0 %v3459
    %3705 = vmatprep.subr.bf16.mxu0 %v3464
    %3706 = vmatpush1.bf16.msra.mxu0 %v3463
    %3707 = vmatprep.subr.bf16.mxu0 %v3468
    %3708 = vmatpush1.bf16.msra.mxu0 %v3467
    %3709 = vmatprep.subr.bf16.mxu0 %v3472
    %3710 = vmatpush1.bf16.msra.mxu0 %v3471
    %3711 = vmatprep.subr.bf16.mxu0 %v3476
    %3712 = vmatpush1.bf16.msra.mxu0 %v3475
    %3713 = vmatprep.subr.bf16.mxu0 %v3480
    %3714 = vmatpush1.bf16.msra.mxu0 %v3479
    %3715 = vmatprep.subr.bf16.mxu0 %v3484
    %3716 = vmatpush1.bf16.msra.mxu0 %v3483
    %3717 = vmatprep.subr.bf16.mxu0 %v3488
    %3718 = vmatpush1.bf16.msra.mxu0 %v3487
    %3719 = vmatprep.subr.bf16.mxu0 %v3492
    %3720 = vmatpush1.bf16.msra.mxu0 %v3491
    %3721 = vmatprep.subr.bf16.mxu0 %v3496
    %3722 = vmatpush1.bf16.msra.mxu0 %v3495
    %3723 = vmatprep.mubr.bf16.mxu0 %v2898
    %3724 = vmatmul.mubr.bf16.gmra.mrb[0].mxu0 %v2897
    %v3725 = vpop.f32.mrb[0].mxu0
    %v3726 = vadd.f32 %v3034, %v3725
    %v3727 = vpop.f32.mrb[0].mxu0
    %v3728 = vadd.f32 %v3038, %v3727
    %v3729 = vpop.f32.mrb[0].mxu0
    %v3730 = vadd.f32 %v3034, %v3729
    %v3731 = vpop.f32.mrb[0].mxu0
    %v3732 = vadd.f32 %v3038, %v3731
    %3733 = vdwg.mxu0
    %3734 = vmatprep.subr.bf16.mxu0 %v3500
    %3735 = vmatpush1.bf16.msra.mxu0 %v3499
    %3736 = vmatprep.subr.bf16.mxu0 %v3504
    %3737 = vmatpush1.bf16.msra.mxu0 %v3503
    %3738 = vmatprep.subr.bf16.mxu0 %v3508
    %3739 = vmatpush1.bf16.msra.mxu0 %v3507
    %3740 = vmatprep.subr.bf16.mxu0 %v3512
    %3741 = vmatpush1.bf16.msra.mxu0 %v3511
    %3742 = vmatprep.subr.bf16.mxu0 %v3516
    %3743 = vmatpush1.bf16.msra.mxu0 %v3515
    %3744 = vmatprep.subr.bf16.mxu0 %v3520
    %3745 = vmatpush1.bf16.msra.mxu0 %v3519
    %3746 = vmatprep.subr.bf16.mxu0 %v3524
    %3747 = vmatpush1.bf16.msra.mxu0 %v3523
    %3748 = vmatprep.subr.bf16.mxu0 %v3528
    %3749 = vmatpush1.bf16.msra.mxu0 %v3527
    %3750 = vmatprep.subr.bf16.mxu0 %v3532
    %3751 = vmatpush1.bf16.msra.mxu0 %v3531
    %3752 = vmatprep.subr.bf16.mxu0 %v3536
    %3753 = vmatpush1.bf16.msra.mxu0 %v3535
    %3754 = vmatprep.subr.bf16.mxu0 %v3540
    %3755 = vmatpush1.bf16.msra.mxu0 %v3539
    %3756 = vmatprep.subr.bf16.mxu0 %v3544
    %3757 = vmatpush1.bf16.msra.mxu0 %v3543
    %3758 = vmatprep.subr.bf16.mxu0 %v3548
    %3759 = vmatpush1.bf16.msra.mxu0 %v3547
    %3760 = vmatprep.subr.bf16.mxu0 %v3552
    %3761 = vmatpush1.bf16.msra.mxu0 %v3551
    %3762 = vmatprep.subr.bf16.mxu0 %v3556
    %3763 = vmatpush1.bf16.msra.mxu0 %v3555
    %3764 = vmatprep.subr.bf16.mxu0 %v3560
    %3765 = vmatpush1.bf16.msra.mxu0 %v3559
    %3766 = vmatprep.mubr.bf16.mxu0 %v2900
    %3767 = vmatmul.mubr.bf16.gmra.mrb[0].mxu0 %v2899
    %v3768 = vpop.f32.mrb[0].mxu0
    %v3769 = vadd.f32 %v3726, %v3768
    %v3770 = vpop.f32.mrb[0].mxu0
    %v3771 = vadd.f32 %v3728, %v3770
    %v3772 = vpop.f32.mrb[0].mxu0
    %v3773 = vadd.f32 %v3730, %v3772
    %v3774 = vpop.f32.mrb[0].mxu0
    %v3775 = vadd.f32 %v3732, %v3774
    %3776 = vdwg.mxu0
    %3777 = vmatprep.subr.bf16.mxu0 %v3438
    %3778 = vmatpush1.bf16.msra.mxu0 %v3437
    %3779 = vmatprep.subr.bf16.mxu0 %v3442
    %3780 = vmatpush1.bf16.msra.mxu0 %v3441
    %3781 = vmatprep.subr.bf16.mxu0 %v3446
    %3782 = vmatpush1.bf16.msra.mxu0 %v3445
    %3783 = vmatprep.subr.bf16.mxu0 %v3450
    %3784 = vmatpush1.bf16.msra.mxu0 %v3449
    %3785 = vmatprep.subr.bf16.mxu0 %v3454
    %3786 = vmatpush1.bf16.msra.mxu0 %v3453
    %3787 = vmatprep.subr.bf16.mxu0 %v3458
    %3788 = vmatpush1.bf16.msra.mxu0 %v3457
    %3789 = vmatprep.subr.bf16.mxu0 %v3462
    %3790 = vmatpush1.bf16.msra.mxu0 %v3461
    %3791 = vmatprep.subr.bf16.mxu0 %v3466
    %3792 = vmatpush1.bf16.msra.mxu0 %v3465
    %3793 = vmatprep.subr.bf16.mxu0 %v3470
    %3794 = vmatpush1.bf16.msra.mxu0 %v3469
    %3795 = vmatprep.subr.bf16.mxu0 %v3474
    %3796 = vmatpush1.bf16.msra.mxu0 %v3473
    %3797 = vmatprep.subr.bf16.mxu0 %v3478
    %3798 = vmatpush1.bf16.msra.mxu0 %v3477
    %3799 = vmatprep.subr.bf16.mxu0 %v3482
    %3800 = vmatpush1.bf16.msra.mxu0 %v3481
    %3801 = vmatprep.subr.bf16.mxu0 %v3486
    %3802 = vmatpush1.bf16.msra.mxu0 %v3485
    %3803 = vmatprep.subr.bf16.mxu0 %v3490
    %3804 = vmatpush1.bf16.msra.mxu0 %v3489
    %3805 = vmatprep.subr.bf16.mxu0 %v3494
    %3806 = vmatpush1.bf16.msra.mxu0 %v3493
    %3807 = vmatprep.subr.bf16.mxu0 %v3498
    %3808 = vmatpush1.bf16.msra.mxu0 %v3497
    %3809 = vmatprep.mubr.bf16.mxu0 %v2898
    %3810 = vmatmul.mubr.bf16.gmra.mrb[0].mxu0 %v2897
    %v3811 = vpop.f32.mrb[0].mxu0
    %v3812 = vadd.f32 %v3042, %v3811
    %v3813 = vpop.f32.mrb[0].mxu0
    %v3814 = vadd.f32 %v3046, %v3813
    %v3815 = vpop.f32.mrb[0].mxu0
    %v3816 = vadd.f32 %v3042, %v3815
    %v3817 = vpop.f32.mrb[0].mxu0
    %v3818 = vadd.f32 %v3046, %v3817
    %3819 = vdwg.mxu0
    %3820 = vmatprep.subr.bf16.mxu0 %v3502
    %3821 = vmatpush1.bf16.msra.mxu0 %v3501
    %3822 = vmatprep.subr.bf16.mxu0 %v3506
    %3823 = vmatpush1.bf16.msra.mxu0 %v3505
    %3824 = vmatprep.subr.bf16.mxu0 %v3510
    %3825 = vmatpush1.bf16.msra.mxu0 %v3509
    %3826 = vmatprep.subr.bf16.mxu0 %v3514
    %3827 = vmatpush1.bf16.msra.mxu0 %v3513
    %3828 = vmatprep.subr.bf16.mxu0 %v3518
    %3829 = vmatpush1.bf16.msra.mxu0 %v3517
    %3830 = vmatprep.subr.bf16.mxu0 %v3522
    %3831 = vmatpush1.bf16.msra.mxu0 %v3521
    %3832 = vmatprep.subr.bf16.mxu0 %v3526
    %3833 = vmatpush1.bf16.msra.mxu0 %v3525
    %3834 = vmatprep.subr.bf16.mxu0 %v3530
    %3835 = vmatpush1.bf16.msra.mxu0 %v3529
    %3836 = vmatprep.subr.bf16.mxu0 %v3534
    %3837 = vmatpush1.bf16.msra.mxu0 %v3533
    %3838 = vmatprep.subr.bf16.mxu0 %v3538
    %3839 = vmatpush1.bf16.msra.mxu0 %v3537
    %3840 = vmatprep.subr.bf16.mxu0 %v3542
    %3841 = vmatpush1.bf16.msra.mxu0 %v3541
    %3842 = vmatprep.subr.bf16.mxu0 %v3546
    %3843 = vmatpush1.bf16.msra.mxu0 %v3545
    %3844 = vmatprep.subr.bf16.mxu0 %v3550
    %3845 = vmatpush1.bf16.msra.mxu0 %v3549
    %3846 = vmatprep.subr.bf16.mxu0 %v3554
    %3847 = vmatpush1.bf16.msra.mxu0 %v3553
    %3848 = vmatprep.subr.bf16.mxu0 %v3558
    %3849 = vmatpush1.bf16.msra.mxu0 %v3557
    %3850 = vmatprep.subr.bf16.mxu0 %v3562
    %3851 = vmatpush1.bf16.msra.mxu0 %v3561
    %3852 = vmatprep.mubr.bf16.mxu0 %v2900
    %3853 = vmatmul.mubr.bf16.gmra.mrb[0].mxu0 %v2899
    %v3854 = vpop.f32.mrb[0].mxu0
    %v3855 = vadd.f32 %v3812, %v3854
    %v3856 = vpop.f32.mrb[0].mxu0
    %v3857 = vadd.f32 %v3814, %v3856
    %v3858 = vpop.f32.mrb[0].mxu0
    %v3859 = vadd.f32 %v3816, %v3858
    %v3860 = vpop.f32.mrb[0].mxu0
    %v3861 = vadd.f32 %v3818, %v3860
    %3862 = vdwg.mxu0
    %v3863 = vmax.f32 %v3769, 0.0
    %v3864 = vmax.f32 %v3771, 0.0
    %v3865 = vmax.f32 %v3855, 0.0
    %v3866 = vmax.f32 %v3857, 0.0
    %v3867 = vmax.f32 %v3773, 0.0
    %v3868 = vmax.f32 %v3775, 0.0
    %v3869 = vmax.f32 %v3859, 0.0
    %v3870 = vmax.f32 %v3861, 0.0
    %v3871 = vpack.c.bf16 %v3867, %v3863
    %v3872 = vpack.c.bf16 %v3868, %v3864
    %v3873 = vpack.c.bf16 %v3869, %v3865
    %v3874 = vpack.c.bf16 %v3870, %v3866
    %v3875 = vld [vmem:[#allocation13] sm:$0xff]
    %v3876 = vld [vmem:[#allocation13 + $0x8] sm:$0xff]
    %v3877 = vld [vmem:[#allocation13 + $0x10] sm:$0xff]
    %v3878 = vld [vmem:[#allocation13 + $0x18] sm:$0xff]
    %v3879 = vld [vmem:[#allocation13 + $0x20] sm:$0xff]
    %v3880 = vld [vmem:[#allocation13 + $0x28] sm:$0xff]
    %v3881 = vld [vmem:[#allocation13 + $0x30] sm:$0xff]
    %v3882 = vld [vmem:[#allocation13 + $0x38] sm:$0xff]
    %v3883 = vld [vmem:[#allocation13 + $0x40] sm:$0xff]
    %v3884 = vld [vmem:[#allocation13 + $0x48] sm:$0xff]
    %v3885 = vld [vmem:[#allocation13 + $0x50] sm:$0xff]
    %v3886 = vld [vmem:[#allocation13 + $0x58] sm:$0xff]
    %v3887 = vld [vmem:[#allocation13 + $0x60] sm:$0xff]
    %v3888 = vld [vmem:[#allocation13 + $0x68] sm:$0xff]
    %v3889 = vld [vmem:[#allocation13 + $0x70] sm:$0xff]
    %v3890 = vld [vmem:[#allocation13 + $0x78] sm:$0xff]
    %v3891 = vld [vmem:[#allocation13 + $0x80] sm:$0xff]
    %v3892 = vld [vmem:[#allocation13 + $0x88] sm:$0xff]
    %v3893 = vld [vmem:[#allocation13 + $0x90] sm:$0xff]
    %v3894 = vld [vmem:[#allocation13 + $0x98] sm:$0xff]
    %v3895 = vld [vmem:[#allocation13 + $0xa0] sm:$0xff]
    %v3896 = vld [vmem:[#allocation13 + $0xa8] sm:$0xff]
    %v3897 = vld [vmem:[#allocation13 + $0xb0] sm:$0xff]
    %v3898 = vld [vmem:[#allocation13 + $0xb8] sm:$0xff]
    %v3899 = vld [vmem:[#allocation13 + $0xc0] sm:$0xff]
    %v3900 = vld [vmem:[#allocation13 + $0xc8] sm:$0xff]
    %v3901 = vld [vmem:[#allocation13 + $0xd0] sm:$0xff]
    %v3902 = vld [vmem:[#allocation13 + $0xd8] sm:$0xff]
    %v3903 = vld [vmem:[#allocation13 + $0xe0] sm:$0xff]
    %v3904 = vld [vmem:[#allocation13 + $0xe8] sm:$0xff]
    %v3905 = vld [vmem:[#allocation13 + $0xf0] sm:$0xff]
    %v3906 = vld [vmem:[#allocation13 + $0xf8] sm:$0xff]
    %v3907 = vld [vmem:[#allocation13 + $0x100] sm:$0xff]
    %v3908 = vld [vmem:[#allocation13 + $0x108] sm:$0xff]
    %v3909 = vld [vmem:[#allocation13 + $0x110] sm:$0xff]
    %v3910 = vld [vmem:[#allocation13 + $0x118] sm:$0xff]
    %v3911 = vld [vmem:[#allocation13 + $0x120] sm:$0xff]
    %v3912 = vld [vmem:[#allocation13 + $0x128] sm:$0xff]
    %v3913 = vld [vmem:[#allocation13 + $0x130] sm:$0xff]
    %v3914 = vld [vmem:[#allocation13 + $0x138] sm:$0xff]
    %v3915 = vld [vmem:[#allocation13 + $0x140] sm:$0xff]
    %v3916 = vld [vmem:[#allocation13 + $0x148] sm:$0xff]
    %v3917 = vld [vmem:[#allocation13 + $0x150] sm:$0xff]
    %v3918 = vld [vmem:[#allocation13 + $0x158] sm:$0xff]
    %v3919 = vld [vmem:[#allocation13 + $0x160] sm:$0xff]
    %v3920 = vld [vmem:[#allocation13 + $0x168] sm:$0xff]
    %v3921 = vld [vmem:[#allocation13 + $0x170] sm:$0xff]
    %v3922 = vld [vmem:[#allocation13 + $0x178] sm:$0xff]
    %v3923 = vld [vmem:[#allocation13 + $0x180] sm:$0xff]
    %v3924 = vld [vmem:[#allocation13 + $0x188] sm:$0xff]
    %v3925 = vld [vmem:[#allocation13 + $0x190] sm:$0xff]
    %v3926 = vld [vmem:[#allocation13 + $0x198] sm:$0xff]
    %v3927 = vld [vmem:[#allocation13 + $0x1a0] sm:$0xff]
    %v3928 = vld [vmem:[#allocation13 + $0x1a8] sm:$0xff]
    %v3929 = vld [vmem:[#allocation13 + $0x1b0] sm:$0xff]
    %v3930 = vld [vmem:[#allocation13 + $0x1b8] sm:$0xff]
    %v3931 = vld [vmem:[#allocation13 + $0x1c0] sm:$0xff]
    %v3932 = vld [vmem:[#allocation13 + $0x1c8] sm:$0xff]
    %v3933 = vld [vmem:[#allocation13 + $0x1d0] sm:$0xff]
    %v3934 = vld [vmem:[#allocation13 + $0x1d8] sm:$0xff]
    %v3935 = vld [vmem:[#allocation13 + $0x1e0] sm:$0xff]
    %v3936 = vld [vmem:[#allocation13 + $0x1e8] sm:$0xff]
    %v3937 = vld [vmem:[#allocation13 + $0x1f0] sm:$0xff]
    %v3938 = vld [vmem:[#allocation13 + $0x1f8] sm:$0xff]
    %v3939 = vld [vmem:[#allocation13 + $0x200] sm:$0xff]
    %v3940 = vld [vmem:[#allocation13 + $0x208] sm:$0xff]
    %v3941 = vld [vmem:[#allocation13 + $0x210] sm:$0xff]
    %v3942 = vld [vmem:[#allocation13 + $0x218] sm:$0xff]
    %v3943 = vld [vmem:[#allocation13 + $0x220] sm:$0xff]
    %v3944 = vld [vmem:[#allocation13 + $0x228] sm:$0xff]
    %v3945 = vld [vmem:[#allocation13 + $0x230] sm:$0xff]
    %v3946 = vld [vmem:[#allocation13 + $0x238] sm:$0xff]
    %v3947 = vld [vmem:[#allocation13 + $0x240] sm:$0xff]
    %v3948 = vld [vmem:[#allocation13 + $0x248] sm:$0xff]
    %v3949 = vld [vmem:[#allocation13 + $0x250] sm:$0xff]
    %v3950 = vld [vmem:[#allocation13 + $0x258] sm:$0xff]
    %v3951 = vld [vmem:[#allocation13 + $0x260] sm:$0xff]
    %v3952 = vld [vmem:[#allocation13 + $0x268] sm:$0xff]
    %v3953 = vld [vmem:[#allocation13 + $0x270] sm:$0xff]
    %v3954 = vld [vmem:[#allocation13 + $0x278] sm:$0xff]
    %v3955 = vld [vmem:[#allocation13 + $0x280] sm:$0xff]
    %v3956 = vld [vmem:[#allocation13 + $0x288] sm:$0xff]
    %v3957 = vld [vmem:[#allocation13 + $0x290] sm:$0xff]
    %v3958 = vld [vmem:[#allocation13 + $0x298] sm:$0xff]
    %v3959 = vld [vmem:[#allocation13 + $0x2a0] sm:$0xff]
    %v3960 = vld [vmem:[#allocation13 + $0x2a8] sm:$0xff]
    %v3961 = vld [vmem:[#allocation13 + $0x2b0] sm:$0xff]
    %v3962 = vld [vmem:[#allocation13 + $0x2b8] sm:$0xff]
    %v3963 = vld [vmem:[#allocation13 + $0x2c0] sm:$0xff]
    %v3964 = vld [vmem:[#allocation13 + $0x2c8] sm:$0xff]
    %v3965 = vld [vmem:[#allocation13 + $0x2d0] sm:$0xff]
    %v3966 = vld [vmem:[#allocation13 + $0x2d8] sm:$0xff]
    %v3967 = vld [vmem:[#allocation13 + $0x2e0] sm:$0xff]
    %v3968 = vld [vmem:[#allocation13 + $0x2e8] sm:$0xff]
    %v3969 = vld [vmem:[#allocation13 + $0x2f0] sm:$0xff]
    %v3970 = vld [vmem:[#allocation13 + $0x2f8] sm:$0xff]
    %v3971 = vld [vmem:[#allocation13 + $0x300] sm:$0xff]
    %v3972 = vld [vmem:[#allocation13 + $0x308] sm:$0xff]
    %v3973 = vld [vmem:[#allocation13 + $0x310] sm:$0xff]
    %v3974 = vld [vmem:[#allocation13 + $0x318] sm:$0xff]
    %v3975 = vld [vmem:[#allocation13 + $0x320] sm:$0xff]
    %v3976 = vld [vmem:[#allocation13 + $0x328] sm:$0xff]
    %v3977 = vld [vmem:[#allocation13 + $0x330] sm:$0xff]
    %v3978 = vld [vmem:[#allocation13 + $0x338] sm:$0xff]
    %v3979 = vld [vmem:[#allocation13 + $0x340] sm:$0xff]
    %v3980 = vld [vmem:[#allocation13 + $0x348] sm:$0xff]
    %v3981 = vld [vmem:[#allocation13 + $0x350] sm:$0xff]
    %v3982 = vld [vmem:[#allocation13 + $0x358] sm:$0xff]
    %v3983 = vld [vmem:[#allocation13 + $0x360] sm:$0xff]
    %v3984 = vld [vmem:[#allocation13 + $0x368] sm:$0xff]
    %v3985 = vld [vmem:[#allocation13 + $0x370] sm:$0xff]
    %v3986 = vld [vmem:[#allocation13 + $0x378] sm:$0xff]
    %v3987 = vld [vmem:[#allocation13 + $0x380] sm:$0xff]
    %v3988 = vld [vmem:[#allocation13 + $0x388] sm:$0xff]
    %v3989 = vld [vmem:[#allocation13 + $0x390] sm:$0xff]
    %v3990 = vld [vmem:[#allocation13 + $0x398] sm:$0xff]
    %v3991 = vld [vmem:[#allocation13 + $0x3a0] sm:$0xff]
    %v3992 = vld [vmem:[#allocation13 + $0x3a8] sm:$0xff]
    %v3993 = vld [vmem:[#allocation13 + $0x3b0] sm:$0xff]
    %v3994 = vld [vmem:[#allocation13 + $0x3b8] sm:$0xff]
    %v3995 = vld [vmem:[#allocation13 + $0x3c0] sm:$0xff]
    %v3996 = vld [vmem:[#allocation13 + $0x3c8] sm:$0xff]
    %v3997 = vld [vmem:[#allocation13 + $0x3d0] sm:$0xff]
    %v3998 = vld [vmem:[#allocation13 + $0x3d8] sm:$0xff]
    %v3999 = vld [vmem:[#allocation13 + $0x3e0] sm:$0xff]
    %v4000 = vld [vmem:[#allocation13 + $0x3e8] sm:$0xff]
    %v4001 = vld [vmem:[#allocation13 + $0x3f0] sm:$0xff]
    %v4002 = vld [vmem:[#allocation13 + $0x3f8] sm:$0xff]
    %v4003 = vld [vmem:[%s10] sm:$0xf]
    %v4005 = vlaneseq
    %v4006 = vshrl.u32 %v4005, 7
    %v4007 = vsub.s32 0, %v4006
    %v4008 = vrot.slane %v4003, %v4007
    %v4009 = vlaneseq
    %v4010 = vshrl.u32 %v4009, 7
    %v4011 = vsub.s32 1, %v4010
    %v4012 = vrot.slane %v4003, %v4011
    %v4013 = vlaneseq
    %v4014 = vshrl.u32 %v4013, 7
    %v4015 = vsub.s32 2, %v4014
    %v4016 = vrot.slane %v4003, %v4015
    %v4017 = vlaneseq
    %v4018 = vshrl.u32 %v4017, 7
    %v4019 = vsub.s32 3, %v4018
    %v4020 = vrot.slane %v4003, %v4019
    %v4153 = vunpack.c.l.b16 %v3875
    %v4154 = vunpack.c.h.b16 %v3875
    %v4155 = vunpack.c.l.b16 %v3876
    %v4156 = vunpack.c.h.b16 %v3876
    %v4157 = vunpack.c.l.b16 %v3877
    %v4158 = vunpack.c.h.b16 %v3877
    %v4159 = vunpack.c.l.b16 %v3878
    %v4160 = vunpack.c.h.b16 %v3878
    %v4161 = vunpack.c.l.b16 %v3879
    %v4162 = vunpack.c.h.b16 %v3879
    %v4163 = vunpack.c.l.b16 %v3880
    %v4164 = vunpack.c.h.b16 %v3880
    %v4165 = vunpack.c.l.b16 %v3881
    %v4166 = vunpack.c.h.b16 %v3881
    %v4167 = vunpack.c.l.b16 %v3882
    %v4168 = vunpack.c.h.b16 %v3882
    %v4169 = vunpack.c.l.b16 %v3883
    %v4170 = vunpack.c.h.b16 %v3883
    %v4171 = vunpack.c.l.b16 %v3884
    %v4172 = vunpack.c.h.b16 %v3884
    %v4173 = vunpack.c.l.b16 %v3885
    %v4174 = vunpack.c.h.b16 %v3885
    %v4175 = vunpack.c.l.b16 %v3886
    %v4176 = vunpack.c.h.b16 %v3886
    %v4177 = vunpack.c.l.b16 %v3887
    %v4178 = vunpack.c.h.b16 %v3887
    %v4179 = vunpack.c.l.b16 %v3888
    %v4180 = vunpack.c.h.b16 %v3888
    %v4181 = vunpack.c.l.b16 %v3889
    %v4182 = vunpack.c.h.b16 %v3889
    %v4183 = vunpack.c.l.b16 %v3890
    %v4184 = vunpack.c.h.b16 %v3890
    %v4185 = vunpack.c.l.b16 %v3891
    %v4186 = vunpack.c.h.b16 %v3891
    %v4187 = vunpack.c.l.b16 %v3892
    %v4188 = vunpack.c.h.b16 %v3892
    %v4189 = vunpack.c.l.b16 %v3893
    %v4190 = vunpack.c.h.b16 %v3893
    %v4191 = vunpack.c.l.b16 %v3894
    %v4192 = vunpack.c.h.b16 %v3894
    %v4193 = vunpack.c.l.b16 %v3895
    %v4194 = vunpack.c.h.b16 %v3895
    %v4195 = vunpack.c.l.b16 %v3896
    %v4196 = vunpack.c.h.b16 %v3896
    %v4197 = vunpack.c.l.b16 %v3897
    %v4198 = vunpack.c.h.b16 %v3897
    %v4199 = vunpack.c.l.b16 %v3898
    %v4200 = vunpack.c.h.b16 %v3898
    %v4201 = vunpack.c.l.b16 %v3899
    %v4202 = vunpack.c.h.b16 %v3899
    %v4203 = vunpack.c.l.b16 %v3900
    %v4204 = vunpack.c.h.b16 %v3900
    %v4205 = vunpack.c.l.b16 %v3901
    %v4206 = vunpack.c.h.b16 %v3901
    %v4207 = vunpack.c.l.b16 %v3902
    %v4208 = vunpack.c.h.b16 %v3902
    %v4209 = vunpack.c.l.b16 %v3903
    %v4210 = vunpack.c.h.b16 %v3903
    %v4211 = vunpack.c.l.b16 %v3904
    %v4212 = vunpack.c.h.b16 %v3904
    %v4213 = vunpack.c.l.b16 %v3905
    %v4214 = vunpack.c.h.b16 %v3905
    %v4215 = vunpack.c.l.b16 %v3906
    %v4216 = vunpack.c.h.b16 %v3906
    %v4217 = vunpack.c.l.b16 %v3907
    %v4218 = vunpack.c.h.b16 %v3907
    %v4219 = vunpack.c.l.b16 %v3908
    %v4220 = vunpack.c.h.b16 %v3908
    %v4221 = vunpack.c.l.b16 %v3909
    %v4222 = vunpack.c.h.b16 %v3909
    %v4223 = vunpack.c.l.b16 %v3910
    %v4224 = vunpack.c.h.b16 %v3910
    %v4225 = vunpack.c.l.b16 %v3911
    %v4226 = vunpack.c.h.b16 %v3911
    %v4227 = vunpack.c.l.b16 %v3912
    %v4228 = vunpack.c.h.b16 %v3912
    %v4229 = vunpack.c.l.b16 %v3913
    %v4230 = vunpack.c.h.b16 %v3913
    %v4231 = vunpack.c.l.b16 %v3914
    %v4232 = vunpack.c.h.b16 %v3914
    %v4233 = vunpack.c.l.b16 %v3915
    %v4234 = vunpack.c.h.b16 %v3915
    %v4235 = vunpack.c.l.b16 %v3916
    %v4236 = vunpack.c.h.b16 %v3916
    %v4237 = vunpack.c.l.b16 %v3917
    %v4238 = vunpack.c.h.b16 %v3917
    %v4239 = vunpack.c.l.b16 %v3918
    %v4240 = vunpack.c.h.b16 %v3918
    %v4241 = vunpack.c.l.b16 %v3919
    %v4242 = vunpack.c.h.b16 %v3919
    %v4243 = vunpack.c.l.b16 %v3920
    %v4244 = vunpack.c.h.b16 %v3920
    %v4245 = vunpack.c.l.b16 %v3921
    %v4246 = vunpack.c.h.b16 %v3921
    %v4247 = vunpack.c.l.b16 %v3922
    %v4248 = vunpack.c.h.b16 %v3922
    %v4249 = vunpack.c.l.b16 %v3923
    %v4250 = vunpack.c.h.b16 %v3923
    %v4251 = vunpack.c.l.b16 %v3924
    %v4252 = vunpack.c.h.b16 %v3924
    %v4253 = vunpack.c.l.b16 %v3925
    %v4254 = vunpack.c.h.b16 %v3925
    %v4255 = vunpack.c.l.b16 %v3926
    %v4256 = vunpack.c.h.b16 %v3926
    %v4257 = vunpack.c.l.b16 %v3927
    %v4258 = vunpack.c.h.b16 %v3927
    %v4259 = vunpack.c.l.b16 %v3928
    %v4260 = vunpack.c.h.b16 %v3928
    %v4261 = vunpack.c.l.b16 %v3929
    %v4262 = vunpack.c.h.b16 %v3929
    %v4263 = vunpack.c.l.b16 %v3930
    %v4264 = vunpack.c.h.b16 %v3930
    %v4265 = vunpack.c.l.b16 %v3931
    %v4266 = vunpack.c.h.b16 %v3931
    %v4267 = vunpack.c.l.b16 %v3932
    %v4268 = vunpack.c.h.b16 %v3932
    %v4269 = vunpack.c.l.b16 %v3933
    %v4270 = vunpack.c.h.b16 %v3933
    %v4271 = vunpack.c.l.b16 %v3934
    %v4272 = vunpack.c.h.b16 %v3934
    %v4273 = vunpack.c.l.b16 %v3935
    %v4274 = vunpack.c.h.b16 %v3935
    %v4275 = vunpack.c.l.b16 %v3936
    %v4276 = vunpack.c.h.b16 %v3936
    %v4277 = vunpack.c.l.b16 %v3937
    %v4278 = vunpack.c.h.b16 %v3937
    %v4279 = vunpack.c.l.b16 %v3938
    %v4280 = vunpack.c.h.b16 %v3938
    %v4281 = vunpack.c.l.b16 %v3939
    %v4282 = vunpack.c.h.b16 %v3939
    %v4283 = vunpack.c.l.b16 %v3940
    %v4284 = vunpack.c.h.b16 %v3940
    %v4285 = vunpack.c.l.b16 %v3941
    %v4286 = vunpack.c.h.b16 %v3941
    %v4287 = vunpack.c.l.b16 %v3942
    %v4288 = vunpack.c.h.b16 %v3942
    %v4289 = vunpack.c.l.b16 %v3943
    %v4290 = vunpack.c.h.b16 %v3943
    %v4291 = vunpack.c.l.b16 %v3944
    %v4292 = vunpack.c.h.b16 %v3944
    %v4293 = vunpack.c.l.b16 %v3945
    %v4294 = vunpack.c.h.b16 %v3945
    %v4295 = vunpack.c.l.b16 %v3946
    %v4296 = vunpack.c.h.b16 %v3946
    %v4297 = vunpack.c.l.b16 %v3947
    %v4298 = vunpack.c.h.b16 %v3947
    %v4299 = vunpack.c.l.b16 %v3948
    %v4300 = vunpack.c.h.b16 %v3948
    %v4301 = vunpack.c.l.b16 %v3949
    %v4302 = vunpack.c.h.b16 %v3949
    %v4303 = vunpack.c.l.b16 %v3950
    %v4304 = vunpack.c.h.b16 %v3950
    %v4305 = vunpack.c.l.b16 %v3951
    %v4306 = vunpack.c.h.b16 %v3951
    %v4307 = vunpack.c.l.b16 %v3952
    %v4308 = vunpack.c.h.b16 %v3952
    %v4309 = vunpack.c.l.b16 %v3953
    %v4310 = vunpack.c.h.b16 %v3953
    %v4311 = vunpack.c.l.b16 %v3954
    %v4312 = vunpack.c.h.b16 %v3954
    %v4313 = vunpack.c.l.b16 %v3955
    %v4314 = vunpack.c.h.b16 %v3955
    %v4315 = vunpack.c.l.b16 %v3956
    %v4316 = vunpack.c.h.b16 %v3956
    %v4317 = vunpack.c.l.b16 %v3957
    %v4318 = vunpack.c.h.b16 %v3957
    %v4319 = vunpack.c.l.b16 %v3958
    %v4320 = vunpack.c.h.b16 %v3958
    %v4321 = vunpack.c.l.b16 %v3959
    %v4322 = vunpack.c.h.b16 %v3959
    %v4323 = vunpack.c.l.b16 %v3960
    %v4324 = vunpack.c.h.b16 %v3960
    %v4325 = vunpack.c.l.b16 %v3961
    %v4326 = vunpack.c.h.b16 %v3961
    %v4327 = vunpack.c.l.b16 %v3962
    %v4328 = vunpack.c.h.b16 %v3962
    %v4329 = vunpack.c.l.b16 %v3963
    %v4330 = vunpack.c.h.b16 %v3963
    %v4331 = vunpack.c.l.b16 %v3964
    %v4332 = vunpack.c.h.b16 %v3964
    %v4333 = vunpack.c.l.b16 %v3965
    %v4334 = vunpack.c.h.b16 %v3965
    %v4335 = vunpack.c.l.b16 %v3966
    %v4336 = vunpack.c.h.b16 %v3966
    %v4337 = vunpack.c.l.b16 %v3967
    %v4338 = vunpack.c.h.b16 %v3967
    %v4339 = vunpack.c.l.b16 %v3968
    %v4340 = vunpack.c.h.b16 %v3968
    %v4341 = vunpack.c.l.b16 %v3969
    %v4342 = vunpack.c.h.b16 %v3969
    %v4343 = vunpack.c.l.b16 %v3970
    %v4344 = vunpack.c.h.b16 %v3970
    %v4345 = vunpack.c.l.b16 %v3971
    %v4346 = vunpack.c.h.b16 %v3971
    %v4347 = vunpack.c.l.b16 %v3972
    %v4348 = vunpack.c.h.b16 %v3972
    %v4349 = vunpack.c.l.b16 %v3973
    %v4350 = vunpack.c.h.b16 %v3973
    %v4351 = vunpack.c.l.b16 %v3974
    %v4352 = vunpack.c.h.b16 %v3974
    %v4353 = vunpack.c.l.b16 %v3975
    %v4354 = vunpack.c.h.b16 %v3975
    %v4355 = vunpack.c.l.b16 %v3976
    %v4356 = vunpack.c.h.b16 %v3976
    %v4357 = vunpack.c.l.b16 %v3977
    %v4358 = vunpack.c.h.b16 %v3977
    %v4359 = vunpack.c.l.b16 %v3978
    %v4360 = vunpack.c.h.b16 %v3978
    %v4361 = vunpack.c.l.b16 %v3979
    %v4362 = vunpack.c.h.b16 %v3979
    %v4363 = vunpack.c.l.b16 %v3980
    %v4364 = vunpack.c.h.b16 %v3980
    %v4365 = vunpack.c.l.b16 %v3981
    %v4366 = vunpack.c.h.b16 %v3981
    %v4367 = vunpack.c.l.b16 %v3982
    %v4368 = vunpack.c.h.b16 %v3982
    %v4369 = vunpack.c.l.b16 %v3983
    %v4370 = vunpack.c.h.b16 %v3983
    %v4371 = vunpack.c.l.b16 %v3984
    %v4372 = vunpack.c.h.b16 %v3984
    %v4373 = vunpack.c.l.b16 %v3985
    %v4374 = vunpack.c.h.b16 %v3985
    %v4375 = vunpack.c.l.b16 %v3986
    %v4376 = vunpack.c.h.b16 %v3986
    %v4377 = vunpack.c.l.b16 %v3987
    %v4378 = vunpack.c.h.b16 %v3987
    %v4379 = vunpack.c.l.b16 %v3988
    %v4380 = vunpack.c.h.b16 %v3988
    %v4381 = vunpack.c.l.b16 %v3989
    %v4382 = vunpack.c.h.b16 %v3989
    %v4383 = vunpack.c.l.b16 %v3990
    %v4384 = vunpack.c.h.b16 %v3990
    %v4385 = vunpack.c.l.b16 %v3991
    %v4386 = vunpack.c.h.b16 %v3991
    %v4387 = vunpack.c.l.b16 %v3992
    %v4388 = vunpack.c.h.b16 %v3992
    %v4389 = vunpack.c.l.b16 %v3993
    %v4390 = vunpack.c.h.b16 %v3993
    %v4391 = vunpack.c.l.b16 %v3994
    %v4392 = vunpack.c.h.b16 %v3994
    %v4393 = vunpack.c.l.b16 %v3995
    %v4394 = vunpack.c.h.b16 %v3995
    %v4395 = vunpack.c.l.b16 %v3996
    %v4396 = vunpack.c.h.b16 %v3996
    %v4397 = vunpack.c.l.b16 %v3997
    %v4398 = vunpack.c.h.b16 %v3997
    %v4399 = vunpack.c.l.b16 %v3998
    %v4400 = vunpack.c.h.b16 %v3998
    %v4401 = vunpack.c.l.b16 %v3999
    %v4402 = vunpack.c.h.b16 %v3999
    %v4403 = vunpack.c.l.b16 %v4000
    %v4404 = vunpack.c.h.b16 %v4000
    %v4405 = vunpack.c.l.b16 %v4001
    %v4406 = vunpack.c.h.b16 %v4001
    %v4407 = vunpack.c.l.b16 %v4002
    %v4408 = vunpack.c.h.b16 %v4002
    %v4409 = vpack.c.b16 %v4157, %v4153
    %v4410 = vpack.c.b16 %v4158, %v4154
    %v4411 = vpack.c.b16 %v4159, %v4155
    %v4412 = vpack.c.b16 %v4160, %v4156
    %v4413 = vpack.c.b16 %v4165, %v4161
    %v4414 = vpack.c.b16 %v4166, %v4162
    %v4415 = vpack.c.b16 %v4167, %v4163
    %v4416 = vpack.c.b16 %v4168, %v4164
    %v4417 = vpack.c.b16 %v4173, %v4169
    %v4418 = vpack.c.b16 %v4174, %v4170
    %v4419 = vpack.c.b16 %v4175, %v4171
    %v4420 = vpack.c.b16 %v4176, %v4172
    %v4421 = vpack.c.b16 %v4181, %v4177
    %v4422 = vpack.c.b16 %v4182, %v4178
    %v4423 = vpack.c.b16 %v4183, %v4179
    %v4424 = vpack.c.b16 %v4184, %v4180
    %v4425 = vpack.c.b16 %v4189, %v4185
    %v4426 = vpack.c.b16 %v4190, %v4186
    %v4427 = vpack.c.b16 %v4191, %v4187
    %v4428 = vpack.c.b16 %v4192, %v4188
    %v4429 = vpack.c.b16 %v4197, %v4193
    %v4430 = vpack.c.b16 %v4198, %v4194
    %v4431 = vpack.c.b16 %v4199, %v4195
    %v4432 = vpack.c.b16 %v4200, %v4196
    %v4433 = vpack.c.b16 %v4205, %v4201
    %v4434 = vpack.c.b16 %v4206, %v4202
    %v4435 = vpack.c.b16 %v4207, %v4203
    %v4436 = vpack.c.b16 %v4208, %v4204
    %v4437 = vpack.c.b16 %v4213, %v4209
    %v4438 = vpack.c.b16 %v4214, %v4210
    %v4439 = vpack.c.b16 %v4215, %v4211
    %v4440 = vpack.c.b16 %v4216, %v4212
    %v4441 = vpack.c.b16 %v4221, %v4217
    %v4442 = vpack.c.b16 %v4222, %v4218
    %v4443 = vpack.c.b16 %v4223, %v4219
    %v4444 = vpack.c.b16 %v4224, %v4220
    %v4445 = vpack.c.b16 %v4229, %v4225
    %v4446 = vpack.c.b16 %v4230, %v4226
    %v4447 = vpack.c.b16 %v4231, %v4227
    %v4448 = vpack.c.b16 %v4232, %v4228
    %v4449 = vpack.c.b16 %v4237, %v4233
    %v4450 = vpack.c.b16 %v4238, %v4234
    %v4451 = vpack.c.b16 %v4239, %v4235
    %v4452 = vpack.c.b16 %v4240, %v4236
    %v4453 = vpack.c.b16 %v4245, %v4241
    %v4454 = vpack.c.b16 %v4246, %v4242
    %v4455 = vpack.c.b16 %v4247, %v4243
    %v4456 = vpack.c.b16 %v4248, %v4244
    %v4457 = vpack.c.b16 %v4253, %v4249
    %v4458 = vpack.c.b16 %v4254, %v4250
    %v4459 = vpack.c.b16 %v4255, %v4251
    %v4460 = vpack.c.b16 %v4256, %v4252
    %v4461 = vpack.c.b16 %v4261, %v4257
    %v4462 = vpack.c.b16 %v4262, %v4258
    %v4463 = vpack.c.b16 %v4263, %v4259
    %v4464 = vpack.c.b16 %v4264, %v4260
    %v4465 = vpack.c.b16 %v4269, %v4265
    %v4466 = vpack.c.b16 %v4270, %v4266
    %v4467 = vpack.c.b16 %v4271, %v4267
    %v4468 = vpack.c.b16 %v4272, %v4268
    %v4469 = vpack.c.b16 %v4277, %v4273
    %v4470 = vpack.c.b16 %v4278, %v4274
    %v4471 = vpack.c.b16 %v4279, %v4275
    %v4472 = vpack.c.b16 %v4280, %v4276
    %v4473 = vpack.c.b16 %v4285, %v4281
    %v4474 = vpack.c.b16 %v4286, %v4282
    %v4475 = vpack.c.b16 %v4287, %v4283
    %v4476 = vpack.c.b16 %v4288, %v4284
    %v4477 = vpack.c.b16 %v4293, %v4289
    %v4478 = vpack.c.b16 %v4294, %v4290
    %v4479 = vpack.c.b16 %v4295, %v4291
    %v4480 = vpack.c.b16 %v4296, %v4292
    %v4481 = vpack.c.b16 %v4301, %v4297
    %v4482 = vpack.c.b16 %v4302, %v4298
    %v4483 = vpack.c.b16 %v4303, %v4299
    %v4484 = vpack.c.b16 %v4304, %v4300
    %v4485 = vpack.c.b16 %v4309, %v4305
    %v4486 = vpack.c.b16 %v4310, %v4306
    %v4487 = vpack.c.b16 %v4311, %v4307
    %v4488 = vpack.c.b16 %v4312, %v4308
    %v4489 = vpack.c.b16 %v4317, %v4313
    %v4490 = vpack.c.b16 %v4318, %v4314
    %v4491 = vpack.c.b16 %v4319, %v4315
    %v4492 = vpack.c.b16 %v4320, %v4316
    %v4493 = vpack.c.b16 %v4325, %v4321
    %v4494 = vpack.c.b16 %v4326, %v4322
    %v4495 = vpack.c.b16 %v4327, %v4323
    %v4496 = vpack.c.b16 %v4328, %v4324
    %v4497 = vpack.c.b16 %v4333, %v4329
    %v4498 = vpack.c.b16 %v4334, %v4330
    %v4499 = vpack.c.b16 %v4335, %v4331
    %v4500 = vpack.c.b16 %v4336, %v4332
    %v4501 = vpack.c.b16 %v4341, %v4337
    %v4502 = vpack.c.b16 %v4342, %v4338
    %v4503 = vpack.c.b16 %v4343, %v4339
    %v4504 = vpack.c.b16 %v4344, %v4340
    %v4505 = vpack.c.b16 %v4349, %v4345
    %v4506 = vpack.c.b16 %v4350, %v4346
    %v4507 = vpack.c.b16 %v4351, %v4347
    %v4508 = vpack.c.b16 %v4352, %v4348
    %v4509 = vpack.c.b16 %v4357, %v4353
    %v4510 = vpack.c.b16 %v4358, %v4354
    %v4511 = vpack.c.b16 %v4359, %v4355
    %v4512 = vpack.c.b16 %v4360, %v4356
    %v4513 = vpack.c.b16 %v4365, %v4361
    %v4514 = vpack.c.b16 %v4366, %v4362
    %v4515 = vpack.c.b16 %v4367, %v4363
    %v4516 = vpack.c.b16 %v4368, %v4364
    %v4517 = vpack.c.b16 %v4373, %v4369
    %v4518 = vpack.c.b16 %v4374, %v4370
    %v4519 = vpack.c.b16 %v4375, %v4371
    %v4520 = vpack.c.b16 %v4376, %v4372
    %v4521 = vpack.c.b16 %v4381, %v4377
    %v4522 = vpack.c.b16 %v4382, %v4378
    %v4523 = vpack.c.b16 %v4383, %v4379
    %v4524 = vpack.c.b16 %v4384, %v4380
    %v4525 = vpack.c.b16 %v4389, %v4385
    %v4526 = vpack.c.b16 %v4390, %v4386
    %v4527 = vpack.c.b16 %v4391, %v4387
    %v4528 = vpack.c.b16 %v4392, %v4388
    %v4529 = vpack.c.b16 %v4397, %v4393
    %v4530 = vpack.c.b16 %v4398, %v4394
    %v4531 = vpack.c.b16 %v4399, %v4395
    %v4532 = vpack.c.b16 %v4400, %v4396
    %v4533 = vpack.c.b16 %v4405, %v4401
    %v4534 = vpack.c.b16 %v4406, %v4402
    %v4535 = vpack.c.b16 %v4407, %v4403
    %v4536 = vpack.c.b16 %v4408, %v4404
    %4665 = vmatprep.subr.bf16.mxu0 %v4410
    %4666 = vmatpush1.bf16.msra.mxu0 %v4409
    %4667 = vmatprep.subr.bf16.mxu0 %v4414
    %4668 = vmatpush1.bf16.msra.mxu0 %v4413
    %4669 = vmatprep.subr.bf16.mxu0 %v4418
    %4670 = vmatpush1.bf16.msra.mxu0 %v4417
    %4671 = vmatprep.subr.bf16.mxu0 %v4422
    %4672 = vmatpush1.bf16.msra.mxu0 %v4421
    %4673 = vmatprep.subr.bf16.mxu0 %v4426
    %4674 = vmatpush1.bf16.msra.mxu0 %v4425
    %4675 = vmatprep.subr.bf16.mxu0 %v4430
    %4676 = vmatpush1.bf16.msra.mxu0 %v4429
    %4677 = vmatprep.subr.bf16.mxu0 %v4434
    %4678 = vmatpush1.bf16.msra.mxu0 %v4433
    %4679 = vmatprep.subr.bf16.mxu0 %v4438
    %4680 = vmatpush1.bf16.msra.mxu0 %v4437
    %4681 = vmatprep.subr.bf16.mxu0 %v4442
    %4682 = vmatpush1.bf16.msra.mxu0 %v4441
    %4683 = vmatprep.subr.bf16.mxu0 %v4446
    %4684 = vmatpush1.bf16.msra.mxu0 %v4445
    %4685 = vmatprep.subr.bf16.mxu0 %v4450
    %4686 = vmatpush1.bf16.msra.mxu0 %v4449
    %4687 = vmatprep.subr.bf16.mxu0 %v4454
    %4688 = vmatpush1.bf16.msra.mxu0 %v4453
    %4689 = vmatprep.subr.bf16.mxu0 %v4458
    %4690 = vmatpush1.bf16.msra.mxu0 %v4457
    %4691 = vmatprep.subr.bf16.mxu0 %v4462
    %4692 = vmatpush1.bf16.msra.mxu0 %v4461
    %4693 = vmatprep.subr.bf16.mxu0 %v4466
    %4694 = vmatpush1.bf16.msra.mxu0 %v4465
    %4695 = vmatprep.subr.bf16.mxu0 %v4470
    %4696 = vmatpush1.bf16.msra.mxu0 %v4469
    %4697 = vmatprep.mubr.bf16.mxu0 %v3872
    %4698 = vmatmul.mubr.bf16.gmra.mrb[0].mxu0 %v3871
    %v4699 = vpop.f32.mrb[0].mxu0
    %v4700 = vadd.f32 %v4008, %v4699
    %v4701 = vpop.f32.mrb[0].mxu0
    %v4702 = vadd.f32 %v4012, %v4701
    %v4703 = vpop.f32.mrb[0].mxu0
    %v4704 = vadd.f32 %v4008, %v4703
    %v4705 = vpop.f32.mrb[0].mxu0
    %v4706 = vadd.f32 %v4012, %v4705
    %4707 = vdwg.mxu0
    %4708 = vmatprep.subr.bf16.mxu0 %v4474
    %4709 = vmatpush1.bf16.msra.mxu0 %v4473
    %4710 = vmatprep.subr.bf16.mxu0 %v4478
    %4711 = vmatpush1.bf16.msra.mxu0 %v4477
    %4712 = vmatprep.subr.bf16.mxu0 %v4482
    %4713 = vmatpush1.bf16.msra.mxu0 %v4481
    %4714 = vmatprep.subr.bf16.mxu0 %v4486
    %4715 = vmatpush1.bf16.msra.mxu0 %v4485
    %4716 = vmatprep.subr.bf16.mxu0 %v4490
    %4717 = vmatpush1.bf16.msra.mxu0 %v4489
    %4718 = vmatprep.subr.bf16.mxu0 %v4494
    %4719 = vmatpush1.bf16.msra.mxu0 %v4493
    %4720 = vmatprep.subr.bf16.mxu0 %v4498
    %4721 = vmatpush1.bf16.msra.mxu0 %v4497
    %4722 = vmatprep.subr.bf16.mxu0 %v4502
    %4723 = vmatpush1.bf16.msra.mxu0 %v4501
    %4724 = vmatprep.subr.bf16.mxu0 %v4506
    %4725 = vmatpush1.bf16.msra.mxu0 %v4505
    %4726 = vmatprep.subr.bf16.mxu0 %v4510
    %4727 = vmatpush1.bf16.msra.mxu0 %v4509
    %4728 = vmatprep.subr.bf16.mxu0 %v4514
    %4729 = vmatpush1.bf16.msra.mxu0 %v4513
    %4730 = vmatprep.subr.bf16.mxu0 %v4518
    %4731 = vmatpush1.bf16.msra.mxu0 %v4517
    %4732 = vmatprep.subr.bf16.mxu0 %v4522
    %4733 = vmatpush1.bf16.msra.mxu0 %v4521
    %4734 = vmatprep.subr.bf16.mxu0 %v4526
    %4735 = vmatpush1.bf16.msra.mxu0 %v4525
    %4736 = vmatprep.subr.bf16.mxu0 %v4530
    %4737 = vmatpush1.bf16.msra.mxu0 %v4529
    %4738 = vmatprep.subr.bf16.mxu0 %v4534
    %4739 = vmatpush1.bf16.msra.mxu0 %v4533
    %4740 = vmatprep.mubr.bf16.mxu0 %v3874
    %4741 = vmatmul.mubr.bf16.gmra.mrb[0].mxu0 %v3873
    %v4742 = vpop.f32.mrb[0].mxu0
    %v4743 = vadd.f32 %v4700, %v4742
    %v4744 = vpop.f32.mrb[0].mxu0
    %v4745 = vadd.f32 %v4702, %v4744
    %v4746 = vpop.f32.mrb[0].mxu0
    %v4747 = vadd.f32 %v4704, %v4746
    %v4748 = vpop.f32.mrb[0].mxu0
    %v4749 = vadd.f32 %v4706, %v4748
    %4750 = vdwg.mxu0
    %4751 = vmatprep.subr.bf16.mxu0 %v4412
    %4752 = vmatpush1.bf16.msra.mxu0 %v4411
    %4753 = vmatprep.subr.bf16.mxu0 %v4416
    %4754 = vmatpush1.bf16.msra.mxu0 %v4415
    %4755 = vmatprep.subr.bf16.mxu0 %v4420
    %4756 = vmatpush1.bf16.msra.mxu0 %v4419
    %4757 = vmatprep.subr.bf16.mxu0 %v4424
    %4758 = vmatpush1.bf16.msra.mxu0 %v4423
    %4759 = vmatprep.subr.bf16.mxu0 %v4428
    %4760 = vmatpush1.bf16.msra.mxu0 %v4427
    %4761 = vmatprep.subr.bf16.mxu0 %v4432
    %4762 = vmatpush1.bf16.msra.mxu0 %v4431
    %4763 = vmatprep.subr.bf16.mxu0 %v4436
    %4764 = vmatpush1.bf16.msra.mxu0 %v4435
    %4765 = vmatprep.subr.bf16.mxu0 %v4440
    %4766 = vmatpush1.bf16.msra.mxu0 %v4439
    %4767 = vmatprep.subr.bf16.mxu0 %v4444
    %4768 = vmatpush1.bf16.msra.mxu0 %v4443
    %4769 = vmatprep.subr.bf16.mxu0 %v4448
    %4770 = vmatpush1.bf16.msra.mxu0 %v4447
    %4771 = vmatprep.subr.bf16.mxu0 %v4452
    %4772 = vmatpush1.bf16.msra.mxu0 %v4451
    %4773 = vmatprep.subr.bf16.mxu0 %v4456
    %4774 = vmatpush1.bf16.msra.mxu0 %v4455
    %4775 = vmatprep.subr.bf16.mxu0 %v4460
    %4776 = vmatpush1.bf16.msra.mxu0 %v4459
    %4777 = vmatprep.subr.bf16.mxu0 %v4464
    %4778 = vmatpush1.bf16.msra.mxu0 %v4463
    %4779 = vmatprep.subr.bf16.mxu0 %v4468
    %4780 = vmatpush1.bf16.msra.mxu0 %v4467
    %4781 = vmatprep.subr.bf16.mxu0 %v4472
    %4782 = vmatpush1.bf16.msra.mxu0 %v4471
    %4783 = vmatprep.mubr.bf16.mxu0 %v3872
    %4784 = vmatmul.mubr.bf16.gmra.mrb[0].mxu0 %v3871
    %v4785 = vpop.f32.mrb[0].mxu0
    %v4786 = vadd.f32 %v4016, %v4785
    %v4787 = vpop.f32.mrb[0].mxu0
    %v4788 = vadd.f32 %v4020, %v4787
    %v4789 = vpop.f32.mrb[0].mxu0
    %v4790 = vadd.f32 %v4016, %v4789
    %v4791 = vpop.f32.mrb[0].mxu0
    %v4792 = vadd.f32 %v4020, %v4791
    %4793 = vdwg.mxu0
    %4794 = vmatprep.subr.bf16.mxu0 %v4476
    %4795 = vmatpush1.bf16.msra.mxu0 %v4475
    %4796 = vmatprep.subr.bf16.mxu0 %v4480
    %4797 = vmatpush1.bf16.msra.mxu0 %v4479
    %4798 = vmatprep.subr.bf16.mxu0 %v4484
    %4799 = vmatpush1.bf16.msra.mxu0 %v4483
    %4800 = vmatprep.subr.bf16.mxu0 %v4488
    %4801 = vmatpush1.bf16.msra.mxu0 %v4487
    %4802 = vmatprep.subr.bf16.mxu0 %v4492
    %4803 = vmatpush1.bf16.msra.mxu0 %v4491
    %4804 = vmatprep.subr.bf16.mxu0 %v4496
    %4805 = vmatpush1.bf16.msra.mxu0 %v4495
    %4806 = vmatprep.subr.bf16.mxu0 %v4500
    %4807 = vmatpush1.bf16.msra.mxu0 %v4499
    %4808 = vmatprep.subr.bf16.mxu0 %v4504
    %4809 = vmatpush1.bf16.msra.mxu0 %v4503
    %4810 = vmatprep.subr.bf16.mxu0 %v4508
    %4811 = vmatpush1.bf16.msra.mxu0 %v4507
    %4812 = vmatprep.subr.bf16.mxu0 %v4512
    %4813 = vmatpush1.bf16.msra.mxu0 %v4511
    %4814 = vmatprep.subr.bf16.mxu0 %v4516
    %4815 = vmatpush1.bf16.msra.mxu0 %v4515
    %4816 = vmatprep.subr.bf16.mxu0 %v4520
    %4817 = vmatpush1.bf16.msra.mxu0 %v4519
    %4818 = vmatprep.subr.bf16.mxu0 %v4524
    %4819 = vmatpush1.bf16.msra.mxu0 %v4523
    %4820 = vmatprep.subr.bf16.mxu0 %v4528
    %4821 = vmatpush1.bf16.msra.mxu0 %v4527
    %4822 = vmatprep.subr.bf16.mxu0 %v4532
    %4823 = vmatpush1.bf16.msra.mxu0 %v4531
    %4824 = vmatprep.subr.bf16.mxu0 %v4536
    %4825 = vmatpush1.bf16.msra.mxu0 %v4535
    %4826 = vmatprep.mubr.bf16.mxu0 %v3874
    %4827 = vmatmul.mubr.bf16.gmra.mrb[0].mxu0 %v3873
    %v4828 = vpop.f32.mrb[0].mxu0
    %v4829 = vadd.f32 %v4786, %v4828
    %v4830 = vpop.f32.mrb[0].mxu0
    %v4831 = vadd.f32 %v4788, %v4830
    %v4832 = vpop.f32.mrb[0].mxu0
    %v4833 = vadd.f32 %v4790, %v4832
    %v4834 = vpop.f32.mrb[0].mxu0
    %v4835 = vadd.f32 %v4792, %v4834
    %4836 = vdwg.mxu0
    %v4837 = vadd.f32 %v4743, %v2889
    %v4838 = vadd.f32 %v4745, %v2890
    %v4839 = vadd.f32 %v4829, %v2891
    %v4840 = vadd.f32 %v4831, %v2892
    %v4841 = vadd.f32 %v4747, %v2893
    %v4842 = vadd.f32 %v4749, %v2894
    %v4843 = vadd.f32 %v4833, %v2895
    %v4844 = vadd.f32 %v4835, %v2896
    %v4845 = vadd.f32 %v4837, %v925
    %v4846 = vadd.f32 %v4838, %v926
    %v4847 = vadd.f32 %v4839, %v927
    %v4848 = vadd.f32 %v4840, %v928
    %v4849 = vadd.f32 %v4841, %v933
    %v4850 = vadd.f32 %v4842, %v934
    %v4851 = vadd.f32 %v4843, %v935
    %v4852 = vadd.f32 %v4844, %v936
    %v4853 = vmax.f32 %v4845, 0.0
    %v4854 = vmax.f32 %v4846, 0.0
    %v4855 = vmax.f32 %v4847, 0.0
    %v4856 = vmax.f32 %v4848, 0.0
    %v4857 = vmax.f32 %v4849, 0.0
    %v4858 = vmax.f32 %v4850, 0.0
    %v4859 = vmax.f32 %v4851, 0.0
    %v4860 = vmax.f32 %v4852, 0.0
    %v4861 = vpack.c.bf16 %v4857, %v4853
    %v4862 = vpack.c.bf16 %v4858, %v4854
    %v4863 = vpack.c.bf16 %v4859, %v4855
    %v4864 = vpack.c.bf16 %v4860, %v4856
    %v4865 = vpack.c.bf16 %v937, %v929
    %v4866 = vpack.c.bf16 %v938, %v930
    %v4867 = vpack.c.bf16 %v939, %v931
    %v4868 = vpack.c.bf16 %v940, %v932
    %v4869 = vld [vmem:[#allocation14] sm:$0xff]
    %v4870 = vld [vmem:[#allocation14 + $0x8] sm:$0xff]
    %v4871 = vld [vmem:[#allocation14 + $0x10] sm:$0xff]
    %v4872 = vld [vmem:[#allocation14 + $0x18] sm:$0xff]
    %v4873 = vld [vmem:[#allocation14 + $0x20] sm:$0xff]
    %v4874 = vld [vmem:[#allocation14 + $0x28] sm:$0xff]
    %v4875 = vld [vmem:[#allocation14 + $0x30] sm:$0xff]
    %v4876 = vld [vmem:[#allocation14 + $0x38] sm:$0xff]
    %v4877 = vld [vmem:[#allocation14 + $0x40] sm:$0xff]
    %v4878 = vld [vmem:[#allocation14 + $0x48] sm:$0xff]
    %v4879 = vld [vmem:[#allocation14 + $0x50] sm:$0xff]
    %v4880 = vld [vmem:[#allocation14 + $0x58] sm:$0xff]
    %v4881 = vld [vmem:[#allocation14 + $0x60] sm:$0xff]
    %v4882 = vld [vmem:[#allocation14 + $0x68] sm:$0xff]
    %v4883 = vld [vmem:[#allocation14 + $0x70] sm:$0xff]
    %v4884 = vld [vmem:[#allocation14 + $0x78] sm:$0xff]
    %v4885 = vld [vmem:[#allocation14 + $0x80] sm:$0xff]
    %v4886 = vld [vmem:[#allocation14 + $0x88] sm:$0xff]
    %v4887 = vld [vmem:[#allocation14 + $0x90] sm:$0xff]
    %v4888 = vld [vmem:[#allocation14 + $0x98] sm:$0xff]
    %v4889 = vld [vmem:[#allocation14 + $0xa0] sm:$0xff]
    %v4890 = vld [vmem:[#allocation14 + $0xa8] sm:$0xff]
    %v4891 = vld [vmem:[#allocation14 + $0xb0] sm:$0xff]
    %v4892 = vld [vmem:[#allocation14 + $0xb8] sm:$0xff]
    %v4893 = vld [vmem:[#allocation14 + $0xc0] sm:$0xff]
    %v4894 = vld [vmem:[#allocation14 + $0xc8] sm:$0xff]
    %v4895 = vld [vmem:[#allocation14 + $0xd0] sm:$0xff]
    %v4896 = vld [vmem:[#allocation14 + $0xd8] sm:$0xff]
    %v4897 = vld [vmem:[#allocation14 + $0xe0] sm:$0xff]
    %v4898 = vld [vmem:[#allocation14 + $0xe8] sm:$0xff]
    %v4899 = vld [vmem:[#allocation14 + $0xf0] sm:$0xff]
    %v4900 = vld [vmem:[#allocation14 + $0xf8] sm:$0xff]
    %v4901 = vld [vmem:[#allocation14 + $0x100] sm:$0xff]
    %v4902 = vld [vmem:[#allocation14 + $0x108] sm:$0xff]
    %v4903 = vld [vmem:[#allocation14 + $0x110] sm:$0xff]
    %v4904 = vld [vmem:[#allocation14 + $0x118] sm:$0xff]
    %v4905 = vld [vmem:[#allocation14 + $0x120] sm:$0xff]
    %v4906 = vld [vmem:[#allocation14 + $0x128] sm:$0xff]
    %v4907 = vld [vmem:[#allocation14 + $0x130] sm:$0xff]
    %v4908 = vld [vmem:[#allocation14 + $0x138] sm:$0xff]
    %v4909 = vld [vmem:[#allocation14 + $0x140] sm:$0xff]
    %v4910 = vld [vmem:[#allocation14 + $0x148] sm:$0xff]
    %v4911 = vld [vmem:[#allocation14 + $0x150] sm:$0xff]
    %v4912 = vld [vmem:[#allocation14 + $0x158] sm:$0xff]
    %v4913 = vld [vmem:[#allocation14 + $0x160] sm:$0xff]
    %v4914 = vld [vmem:[#allocation14 + $0x168] sm:$0xff]
    %v4915 = vld [vmem:[#allocation14 + $0x170] sm:$0xff]
    %v4916 = vld [vmem:[#allocation14 + $0x178] sm:$0xff]
    %v4917 = vld [vmem:[#allocation14 + $0x180] sm:$0xff]
    %v4918 = vld [vmem:[#allocation14 + $0x188] sm:$0xff]
    %v4919 = vld [vmem:[#allocation14 + $0x190] sm:$0xff]
    %v4920 = vld [vmem:[#allocation14 + $0x198] sm:$0xff]
    %v4921 = vld [vmem:[#allocation14 + $0x1a0] sm:$0xff]
    %v4922 = vld [vmem:[#allocation14 + $0x1a8] sm:$0xff]
    %v4923 = vld [vmem:[#allocation14 + $0x1b0] sm:$0xff]
    %v4924 = vld [vmem:[#allocation14 + $0x1b8] sm:$0xff]
    %v4925 = vld [vmem:[#allocation14 + $0x1c0] sm:$0xff]
    %v4926 = vld [vmem:[#allocation14 + $0x1c8] sm:$0xff]
    %v4927 = vld [vmem:[#allocation14 + $0x1d0] sm:$0xff]
    %v4928 = vld [vmem:[#allocation14 + $0x1d8] sm:$0xff]
    %v4929 = vld [vmem:[#allocation14 + $0x1e0] sm:$0xff]
    %v4930 = vld [vmem:[#allocation14 + $0x1e8] sm:$0xff]
    %v4931 = vld [vmem:[#allocation14 + $0x1f0] sm:$0xff]
    %v4932 = vld [vmem:[#allocation14 + $0x1f8] sm:$0xff]
    %v4933 = vld [vmem:[#allocation14 + $0x200] sm:$0xff]
    %v4934 = vld [vmem:[#allocation14 + $0x208] sm:$0xff]
    %v4935 = vld [vmem:[#allocation14 + $0x210] sm:$0xff]
    %v4936 = vld [vmem:[#allocation14 + $0x218] sm:$0xff]
    %v4937 = vld [vmem:[#allocation14 + $0x220] sm:$0xff]
    %v4938 = vld [vmem:[#allocation14 + $0x228] sm:$0xff]
    %v4939 = vld [vmem:[#allocation14 + $0x230] sm:$0xff]
    %v4940 = vld [vmem:[#allocation14 + $0x238] sm:$0xff]
    %v4941 = vld [vmem:[#allocation14 + $0x240] sm:$0xff]
    %v4942 = vld [vmem:[#allocation14 + $0x248] sm:$0xff]
    %v4943 = vld [vmem:[#allocation14 + $0x250] sm:$0xff]
    %v4944 = vld [vmem:[#allocation14 + $0x258] sm:$0xff]
    %v4945 = vld [vmem:[#allocation14 + $0x260] sm:$0xff]
    %v4946 = vld [vmem:[#allocation14 + $0x268] sm:$0xff]
    %v4947 = vld [vmem:[#allocation14 + $0x270] sm:$0xff]
    %v4948 = vld [vmem:[#allocation14 + $0x278] sm:$0xff]
    %v4949 = vld [vmem:[#allocation14 + $0x280] sm:$0xff]
    %v4950 = vld [vmem:[#allocation14 + $0x288] sm:$0xff]
    %v4951 = vld [vmem:[#allocation14 + $0x290] sm:$0xff]
    %v4952 = vld [vmem:[#allocation14 + $0x298] sm:$0xff]
    %v4953 = vld [vmem:[#allocation14 + $0x2a0] sm:$0xff]
    %v4954 = vld [vmem:[#allocation14 + $0x2a8] sm:$0xff]
    %v4955 = vld [vmem:[#allocation14 + $0x2b0] sm:$0xff]
    %v4956 = vld [vmem:[#allocation14 + $0x2b8] sm:$0xff]
    %v4957 = vld [vmem:[#allocation14 + $0x2c0] sm:$0xff]
    %v4958 = vld [vmem:[#allocation14 + $0x2c8] sm:$0xff]
    %v4959 = vld [vmem:[#allocation14 + $0x2d0] sm:$0xff]
    %v4960 = vld [vmem:[#allocation14 + $0x2d8] sm:$0xff]
    %v4961 = vld [vmem:[#allocation14 + $0x2e0] sm:$0xff]
    %v4962 = vld [vmem:[#allocation14 + $0x2e8] sm:$0xff]
    %v4963 = vld [vmem:[#allocation14 + $0x2f0] sm:$0xff]
    %v4964 = vld [vmem:[#allocation14 + $0x2f8] sm:$0xff]
    %v4965 = vld [vmem:[#allocation14 + $0x300] sm:$0xff]
    %v4966 = vld [vmem:[#allocation14 + $0x308] sm:$0xff]
    %v4967 = vld [vmem:[#allocation14 + $0x310] sm:$0xff]
    %v4968 = vld [vmem:[#allocation14 + $0x318] sm:$0xff]
    %v4969 = vld [vmem:[#allocation14 + $0x320] sm:$0xff]
    %v4970 = vld [vmem:[#allocation14 + $0x328] sm:$0xff]
    %v4971 = vld [vmem:[#allocation14 + $0x330] sm:$0xff]
    %v4972 = vld [vmem:[#allocation14 + $0x338] sm:$0xff]
    %v4973 = vld [vmem:[#allocation14 + $0x340] sm:$0xff]
    %v4974 = vld [vmem:[#allocation14 + $0x348] sm:$0xff]
    %v4975 = vld [vmem:[#allocation14 + $0x350] sm:$0xff]
    %v4976 = vld [vmem:[#allocation14 + $0x358] sm:$0xff]
    %v4977 = vld [vmem:[#allocation14 + $0x360] sm:$0xff]
    %v4978 = vld [vmem:[#allocation14 + $0x368] sm:$0xff]
    %v4979 = vld [vmem:[#allocation14 + $0x370] sm:$0xff]
    %v4980 = vld [vmem:[#allocation14 + $0x378] sm:$0xff]
    %v4981 = vld [vmem:[#allocation14 + $0x380] sm:$0xff]
    %v4982 = vld [vmem:[#allocation14 + $0x388] sm:$0xff]
    %v4983 = vld [vmem:[#allocation14 + $0x390] sm:$0xff]
    %v4984 = vld [vmem:[#allocation14 + $0x398] sm:$0xff]
    %v4985 = vld [vmem:[#allocation14 + $0x3a0] sm:$0xff]
    %v4986 = vld [vmem:[#allocation14 + $0x3a8] sm:$0xff]
    %v4987 = vld [vmem:[#allocation14 + $0x3b0] sm:$0xff]
    %v4988 = vld [vmem:[#allocation14 + $0x3b8] sm:$0xff]
    %v4989 = vld [vmem:[#allocation14 + $0x3c0] sm:$0xff]
    %v4990 = vld [vmem:[#allocation14 + $0x3c8] sm:$0xff]
    %v4991 = vld [vmem:[#allocation14 + $0x3d0] sm:$0xff]
    %v4992 = vld [vmem:[#allocation14 + $0x3d8] sm:$0xff]
    %v4993 = vld [vmem:[#allocation14 + $0x3e0] sm:$0xff]
    %v4994 = vld [vmem:[#allocation14 + $0x3e8] sm:$0xff]
    %v4995 = vld [vmem:[#allocation14 + $0x3f0] sm:$0xff]
    %v4996 = vld [vmem:[#allocation14 + $0x3f8] sm:$0xff]
    %v4997 = vld [vmem:[#allocation16] sm:$0xf]
    %v4999 = vlaneseq
    %v5000 = vshrl.u32 %v4999, 7
    %v5001 = vsub.s32 0, %v5000
    %v5002 = vrot.slane %v4997, %v5001
    %v5003 = vlaneseq
    %v5004 = vshrl.u32 %v5003, 7
    %v5005 = vsub.s32 1, %v5004
    %v5006 = vrot.slane %v4997, %v5005
    %v5007 = vlaneseq
    %v5008 = vshrl.u32 %v5007, 7
    %v5009 = vsub.s32 2, %v5008
    %v5010 = vrot.slane %v4997, %v5009
    %v5011 = vlaneseq
    %v5012 = vshrl.u32 %v5011, 7
    %v5013 = vsub.s32 3, %v5012
    %v5014 = vrot.slane %v4997, %v5013
    %v5147 = vunpack.c.l.b16 %v4869
    %v5148 = vunpack.c.h.b16 %v4869
    %v5149 = vunpack.c.l.b16 %v4870
    %v5150 = vunpack.c.h.b16 %v4870
    %v5151 = vunpack.c.l.b16 %v4871
    %v5152 = vunpack.c.h.b16 %v4871
    %v5153 = vunpack.c.l.b16 %v4872
    %v5154 = vunpack.c.h.b16 %v4872
    %v5155 = vunpack.c.l.b16 %v4873
    %v5156 = vunpack.c.h.b16 %v4873
    %v5157 = vunpack.c.l.b16 %v4874
    %v5158 = vunpack.c.h.b16 %v4874
    %v5159 = vunpack.c.l.b16 %v4875
    %v5160 = vunpack.c.h.b16 %v4875
    %v5161 = vunpack.c.l.b16 %v4876
    %v5162 = vunpack.c.h.b16 %v4876
    %v5163 = vunpack.c.l.b16 %v4877
    %v5164 = vunpack.c.h.b16 %v4877
    %v5165 = vunpack.c.l.b16 %v4878
    %v5166 = vunpack.c.h.b16 %v4878
    %v5167 = vunpack.c.l.b16 %v4879
    %v5168 = vunpack.c.h.b16 %v4879
    %v5169 = vunpack.c.l.b16 %v4880
    %v5170 = vunpack.c.h.b16 %v4880
    %v5171 = vunpack.c.l.b16 %v4881
    %v5172 = vunpack.c.h.b16 %v4881
    %v5173 = vunpack.c.l.b16 %v4882
    %v5174 = vunpack.c.h.b16 %v4882
    %v5175 = vunpack.c.l.b16 %v4883
    %v5176 = vunpack.c.h.b16 %v4883
    %v5177 = vunpack.c.l.b16 %v4884
    %v5178 = vunpack.c.h.b16 %v4884
    %v5179 = vunpack.c.l.b16 %v4885
    %v5180 = vunpack.c.h.b16 %v4885
    %v5181 = vunpack.c.l.b16 %v4886
    %v5182 = vunpack.c.h.b16 %v4886
    %v5183 = vunpack.c.l.b16 %v4887
    %v5184 = vunpack.c.h.b16 %v4887
    %v5185 = vunpack.c.l.b16 %v4888
    %v5186 = vunpack.c.h.b16 %v4888
    %v5187 = vunpack.c.l.b16 %v4889
    %v5188 = vunpack.c.h.b16 %v4889
    %v5189 = vunpack.c.l.b16 %v4890
    %v5190 = vunpack.c.h.b16 %v4890
    %v5191 = vunpack.c.l.b16 %v4891
    %v5192 = vunpack.c.h.b16 %v4891
    %v5193 = vunpack.c.l.b16 %v4892
    %v5194 = vunpack.c.h.b16 %v4892
    %v5195 = vunpack.c.l.b16 %v4893
    %v5196 = vunpack.c.h.b16 %v4893
    %v5197 = vunpack.c.l.b16 %v4894
    %v5198 = vunpack.c.h.b16 %v4894
    %v5199 = vunpack.c.l.b16 %v4895
    %v5200 = vunpack.c.h.b16 %v4895
    %v5201 = vunpack.c.l.b16 %v4896
    %v5202 = vunpack.c.h.b16 %v4896
    %v5203 = vunpack.c.l.b16 %v4897
    %v5204 = vunpack.c.h.b16 %v4897
    %v5205 = vunpack.c.l.b16 %v4898
    %v5206 = vunpack.c.h.b16 %v4898
    %v5207 = vunpack.c.l.b16 %v4899
    %v5208 = vunpack.c.h.b16 %v4899
    %v5209 = vunpack.c.l.b16 %v4900
    %v5210 = vunpack.c.h.b16 %v4900
    %v5211 = vunpack.c.l.b16 %v4901
    %v5212 = vunpack.c.h.b16 %v4901
    %v5213 = vunpack.c.l.b16 %v4902
    %v5214 = vunpack.c.h.b16 %v4902
    %v5215 = vunpack.c.l.b16 %v4903
    %v5216 = vunpack.c.h.b16 %v4903
    %v5217 = vunpack.c.l.b16 %v4904
    %v5218 = vunpack.c.h.b16 %v4904
    %v5219 = vunpack.c.l.b16 %v4905
    %v5220 = vunpack.c.h.b16 %v4905
    %v5221 = vunpack.c.l.b16 %v4906
    %v5222 = vunpack.c.h.b16 %v4906
    %v5223 = vunpack.c.l.b16 %v4907
    %v5224 = vunpack.c.h.b16 %v4907
    %v5225 = vunpack.c.l.b16 %v4908
    %v5226 = vunpack.c.h.b16 %v4908
    %v5227 = vunpack.c.l.b16 %v4909
    %v5228 = vunpack.c.h.b16 %v4909
    %v5229 = vunpack.c.l.b16 %v4910
    %v5230 = vunpack.c.h.b16 %v4910
    %v5231 = vunpack.c.l.b16 %v4911
    %v5232 = vunpack.c.h.b16 %v4911
    %v5233 = vunpack.c.l.b16 %v4912
    %v5234 = vunpack.c.h.b16 %v4912
    %v5235 = vunpack.c.l.b16 %v4913
    %v5236 = vunpack.c.h.b16 %v4913
    %v5237 = vunpack.c.l.b16 %v4914
    %v5238 = vunpack.c.h.b16 %v4914
    %v5239 = vunpack.c.l.b16 %v4915
    %v5240 = vunpack.c.h.b16 %v4915
    %v5241 = vunpack.c.l.b16 %v4916
    %v5242 = vunpack.c.h.b16 %v4916
    %v5243 = vunpack.c.l.b16 %v4917
    %v5244 = vunpack.c.h.b16 %v4917
    %v5245 = vunpack.c.l.b16 %v4918
    %v5246 = vunpack.c.h.b16 %v4918
    %v5247 = vunpack.c.l.b16 %v4919
    %v5248 = vunpack.c.h.b16 %v4919
    %v5249 = vunpack.c.l.b16 %v4920
    %v5250 = vunpack.c.h.b16 %v4920
    %v5251 = vunpack.c.l.b16 %v4921
    %v5252 = vunpack.c.h.b16 %v4921
    %v5253 = vunpack.c.l.b16 %v4922
    %v5254 = vunpack.c.h.b16 %v4922
    %v5255 = vunpack.c.l.b16 %v4923
    %v5256 = vunpack.c.h.b16 %v4923
    %v5257 = vunpack.c.l.b16 %v4924
    %v5258 = vunpack.c.h.b16 %v4924
    %v5259 = vunpack.c.l.b16 %v4925
    %v5260 = vunpack.c.h.b16 %v4925
    %v5261 = vunpack.c.l.b16 %v4926
    %v5262 = vunpack.c.h.b16 %v4926
    %v5263 = vunpack.c.l.b16 %v4927
    %v5264 = vunpack.c.h.b16 %v4927
    %v5265 = vunpack.c.l.b16 %v4928
    %v5266 = vunpack.c.h.b16 %v4928
    %v5267 = vunpack.c.l.b16 %v4929
    %v5268 = vunpack.c.h.b16 %v4929
    %v5269 = vunpack.c.l.b16 %v4930
    %v5270 = vunpack.c.h.b16 %v4930
    %v5271 = vunpack.c.l.b16 %v4931
    %v5272 = vunpack.c.h.b16 %v4931
    %v5273 = vunpack.c.l.b16 %v4932
    %v5274 = vunpack.c.h.b16 %v4932
    %v5275 = vunpack.c.l.b16 %v4933
    %v5276 = vunpack.c.h.b16 %v4933
    %v5277 = vunpack.c.l.b16 %v4934
    %v5278 = vunpack.c.h.b16 %v4934
    %v5279 = vunpack.c.l.b16 %v4935
    %v5280 = vunpack.c.h.b16 %v4935
    %v5281 = vunpack.c.l.b16 %v4936
    %v5282 = vunpack.c.h.b16 %v4936
    %v5283 = vunpack.c.l.b16 %v4937
    %v5284 = vunpack.c.h.b16 %v4937
    %v5285 = vunpack.c.l.b16 %v4938
    %v5286 = vunpack.c.h.b16 %v4938
    %v5287 = vunpack.c.l.b16 %v4939
    %v5288 = vunpack.c.h.b16 %v4939
    %v5289 = vunpack.c.l.b16 %v4940
    %v5290 = vunpack.c.h.b16 %v4940
    %v5291 = vunpack.c.l.b16 %v4941
    %v5292 = vunpack.c.h.b16 %v4941
    %v5293 = vunpack.c.l.b16 %v4942
    %v5294 = vunpack.c.h.b16 %v4942
    %v5295 = vunpack.c.l.b16 %v4943
    %v5296 = vunpack.c.h.b16 %v4943
    %v5297 = vunpack.c.l.b16 %v4944
    %v5298 = vunpack.c.h.b16 %v4944
    %v5299 = vunpack.c.l.b16 %v4945
    %v5300 = vunpack.c.h.b16 %v4945
    %v5301 = vunpack.c.l.b16 %v4946
    %v5302 = vunpack.c.h.b16 %v4946
    %v5303 = vunpack.c.l.b16 %v4947
    %v5304 = vunpack.c.h.b16 %v4947
    %v5305 = vunpack.c.l.b16 %v4948
    %v5306 = vunpack.c.h.b16 %v4948
    %v5307 = vunpack.c.l.b16 %v4949
    %v5308 = vunpack.c.h.b16 %v4949
    %v5309 = vunpack.c.l.b16 %v4950
    %v5310 = vunpack.c.h.b16 %v4950
    %v5311 = vunpack.c.l.b16 %v4951
    %v5312 = vunpack.c.h.b16 %v4951
    %v5313 = vunpack.c.l.b16 %v4952
    %v5314 = vunpack.c.h.b16 %v4952
    %v5315 = vunpack.c.l.b16 %v4953
    %v5316 = vunpack.c.h.b16 %v4953
    %v5317 = vunpack.c.l.b16 %v4954
    %v5318 = vunpack.c.h.b16 %v4954
    %v5319 = vunpack.c.l.b16 %v4955
    %v5320 = vunpack.c.h.b16 %v4955
    %v5321 = vunpack.c.l.b16 %v4956
    %v5322 = vunpack.c.h.b16 %v4956
    %v5323 = vunpack.c.l.b16 %v4957
    %v5324 = vunpack.c.h.b16 %v4957
    %v5325 = vunpack.c.l.b16 %v4958
    %v5326 = vunpack.c.h.b16 %v4958
    %v5327 = vunpack.c.l.b16 %v4959
    %v5328 = vunpack.c.h.b16 %v4959
    %v5329 = vunpack.c.l.b16 %v4960
    %v5330 = vunpack.c.h.b16 %v4960
    %v5331 = vunpack.c.l.b16 %v4961
    %v5332 = vunpack.c.h.b16 %v4961
    %v5333 = vunpack.c.l.b16 %v4962
    %v5334 = vunpack.c.h.b16 %v4962
    %v5335 = vunpack.c.l.b16 %v4963
    %v5336 = vunpack.c.h.b16 %v4963
    %v5337 = vunpack.c.l.b16 %v4964
    %v5338 = vunpack.c.h.b16 %v4964
    %v5339 = vunpack.c.l.b16 %v4965
    %v5340 = vunpack.c.h.b16 %v4965
    %v5341 = vunpack.c.l.b16 %v4966
    %v5342 = vunpack.c.h.b16 %v4966
    %v5343 = vunpack.c.l.b16 %v4967
    %v5344 = vunpack.c.h.b16 %v4967
    %v5345 = vunpack.c.l.b16 %v4968
    %v5346 = vunpack.c.h.b16 %v4968
    %v5347 = vunpack.c.l.b16 %v4969
    %v5348 = vunpack.c.h.b16 %v4969
    %v5349 = vunpack.c.l.b16 %v4970
    %v5350 = vunpack.c.h.b16 %v4970
    %v5351 = vunpack.c.l.b16 %v4971
    %v5352 = vunpack.c.h.b16 %v4971
    %v5353 = vunpack.c.l.b16 %v4972
    %v5354 = vunpack.c.h.b16 %v4972
    %v5355 = vunpack.c.l.b16 %v4973
    %v5356 = vunpack.c.h.b16 %v4973
    %v5357 = vunpack.c.l.b16 %v4974
    %v5358 = vunpack.c.h.b16 %v4974
    %v5359 = vunpack.c.l.b16 %v4975
    %v5360 = vunpack.c.h.b16 %v4975
    %v5361 = vunpack.c.l.b16 %v4976
    %v5362 = vunpack.c.h.b16 %v4976
    %v5363 = vunpack.c.l.b16 %v4977
    %v5364 = vunpack.c.h.b16 %v4977
    %v5365 = vunpack.c.l.b16 %v4978
    %v5366 = vunpack.c.h.b16 %v4978
    %v5367 = vunpack.c.l.b16 %v4979
    %v5368 = vunpack.c.h.b16 %v4979
    %v5369 = vunpack.c.l.b16 %v4980
    %v5370 = vunpack.c.h.b16 %v4980
    %v5371 = vunpack.c.l.b16 %v4981
    %v5372 = vunpack.c.h.b16 %v4981
    %v5373 = vunpack.c.l.b16 %v4982
    %v5374 = vunpack.c.h.b16 %v4982
    %v5375 = vunpack.c.l.b16 %v4983
    %v5376 = vunpack.c.h.b16 %v4983
    %v5377 = vunpack.c.l.b16 %v4984
    %v5378 = vunpack.c.h.b16 %v4984
    %v5379 = vunpack.c.l.b16 %v4985
    %v5380 = vunpack.c.h.b16 %v4985
    %v5381 = vunpack.c.l.b16 %v4986
    %v5382 = vunpack.c.h.b16 %v4986
    %v5383 = vunpack.c.l.b16 %v4987
    %v5384 = vunpack.c.h.b16 %v4987
    %v5385 = vunpack.c.l.b16 %v4988
    %v5386 = vunpack.c.h.b16 %v4988
    %v5387 = vunpack.c.l.b16 %v4989
    %v5388 = vunpack.c.h.b16 %v4989
    %v5389 = vunpack.c.l.b16 %v4990
    %v5390 = vunpack.c.h.b16 %v4990
    %v5391 = vunpack.c.l.b16 %v4991
    %v5392 = vunpack.c.h.b16 %v4991
    %v5393 = vunpack.c.l.b16 %v4992
    %v5394 = vunpack.c.h.b16 %v4992
    %v5395 = vunpack.c.l.b16 %v4993
    %v5396 = vunpack.c.h.b16 %v4993
    %v5397 = vunpack.c.l.b16 %v4994
    %v5398 = vunpack.c.h.b16 %v4994
    %v5399 = vunpack.c.l.b16 %v4995
    %v5400 = vunpack.c.h.b16 %v4995
    %v5401 = vunpack.c.l.b16 %v4996
    %v5402 = vunpack.c.h.b16 %v4996
    %v5403 = vpack.c.b16 %v5151, %v5147
    %v5404 = vpack.c.b16 %v5152, %v5148
    %v5405 = vpack.c.b16 %v5153, %v5149
    %v5406 = vpack.c.b16 %v5154, %v5150
    %v5407 = vpack.c.b16 %v5159, %v5155
    %v5408 = vpack.c.b16 %v5160, %v5156
    %v5409 = vpack.c.b16 %v5161, %v5157
    %v5410 = vpack.c.b16 %v5162, %v5158
    %v5411 = vpack.c.b16 %v5167, %v5163
    %v5412 = vpack.c.b16 %v5168, %v5164
    %v5413 = vpack.c.b16 %v5169, %v5165
    %v5414 = vpack.c.b16 %v5170, %v5166
    %v5415 = vpack.c.b16 %v5175, %v5171
    %v5416 = vpack.c.b16 %v5176, %v5172
    %v5417 = vpack.c.b16 %v5177, %v5173
    %v5418 = vpack.c.b16 %v5178, %v5174
    %v5419 = vpack.c.b16 %v5183, %v5179
    %v5420 = vpack.c.b16 %v5184, %v5180
    %v5421 = vpack.c.b16 %v5185, %v5181
    %v5422 = vpack.c.b16 %v5186, %v5182
    %v5423 = vpack.c.b16 %v5191, %v5187
    %v5424 = vpack.c.b16 %v5192, %v5188
    %v5425 = vpack.c.b16 %v5193, %v5189
    %v5426 = vpack.c.b16 %v5194, %v5190
    %v5427 = vpack.c.b16 %v5199, %v5195
    %v5428 = vpack.c.b16 %v5200, %v5196
    %v5429 = vpack.c.b16 %v5201, %v5197
    %v5430 = vpack.c.b16 %v5202, %v5198
    %v5431 = vpack.c.b16 %v5207, %v5203
    %v5432 = vpack.c.b16 %v5208, %v5204
    %v5433 = vpack.c.b16 %v5209, %v5205
    %v5434 = vpack.c.b16 %v5210, %v5206
    %v5435 = vpack.c.b16 %v5215, %v5211
    %v5436 = vpack.c.b16 %v5216, %v5212
    %v5437 = vpack.c.b16 %v5217, %v5213
    %v5438 = vpack.c.b16 %v5218, %v5214
    %v5439 = vpack.c.b16 %v5223, %v5219
    %v5440 = vpack.c.b16 %v5224, %v5220
    %v5441 = vpack.c.b16 %v5225, %v5221
    %v5442 = vpack.c.b16 %v5226, %v5222
    %v5443 = vpack.c.b16 %v5231, %v5227
    %v5444 = vpack.c.b16 %v5232, %v5228
    %v5445 = vpack.c.b16 %v5233, %v5229
    %v5446 = vpack.c.b16 %v5234, %v5230
    %v5447 = vpack.c.b16 %v5239, %v5235
    %v5448 = vpack.c.b16 %v5240, %v5236
    %v5449 = vpack.c.b16 %v5241, %v5237
    %v5450 = vpack.c.b16 %v5242, %v5238
    %v5451 = vpack.c.b16 %v5247, %v5243
    %v5452 = vpack.c.b16 %v5248, %v5244
    %v5453 = vpack.c.b16 %v5249, %v5245
    %v5454 = vpack.c.b16 %v5250, %v5246
    %v5455 = vpack.c.b16 %v5255, %v5251
    %v5456 = vpack.c.b16 %v5256, %v5252
    %v5457 = vpack.c.b16 %v5257, %v5253
    %v5458 = vpack.c.b16 %v5258, %v5254
    %v5459 = vpack.c.b16 %v5263, %v5259
    %v5460 = vpack.c.b16 %v5264, %v5260
    %v5461 = vpack.c.b16 %v5265, %v5261
    %v5462 = vpack.c.b16 %v5266, %v5262
    %v5463 = vpack.c.b16 %v5271, %v5267
    %v5464 = vpack.c.b16 %v5272, %v5268
    %v5465 = vpack.c.b16 %v5273, %v5269
    %v5466 = vpack.c.b16 %v5274, %v5270
    %v5467 = vpack.c.b16 %v5279, %v5275
    %v5468 = vpack.c.b16 %v5280, %v5276
    %v5469 = vpack.c.b16 %v5281, %v5277
    %v5470 = vpack.c.b16 %v5282, %v5278
    %v5471 = vpack.c.b16 %v5287, %v5283
    %v5472 = vpack.c.b16 %v5288, %v5284
    %v5473 = vpack.c.b16 %v5289, %v5285
    %v5474 = vpack.c.b16 %v5290, %v5286
    %v5475 = vpack.c.b16 %v5295, %v5291
    %v5476 = vpack.c.b16 %v5296, %v5292
    %v5477 = vpack.c.b16 %v5297, %v5293
    %v5478 = vpack.c.b16 %v5298, %v5294
    %v5479 = vpack.c.b16 %v5303, %v5299
    %v5480 = vpack.c.b16 %v5304, %v5300
    %v5481 = vpack.c.b16 %v5305, %v5301
    %v5482 = vpack.c.b16 %v5306, %v5302
    %v5483 = vpack.c.b16 %v5311, %v5307
    %v5484 = vpack.c.b16 %v5312, %v5308
    %v5485 = vpack.c.b16 %v5313, %v5309
    %v5486 = vpack.c.b16 %v5314, %v5310
    %v5487 = vpack.c.b16 %v5319, %v5315
    %v5488 = vpack.c.b16 %v5320, %v5316
    %v5489 = vpack.c.b16 %v5321, %v5317
    %v5490 = vpack.c.b16 %v5322, %v5318
    %v5491 = vpack.c.b16 %v5327, %v5323
    %v5492 = vpack.c.b16 %v5328, %v5324
    %v5493 = vpack.c.b16 %v5329, %v5325
    %v5494 = vpack.c.b16 %v5330, %v5326
    %v5495 = vpack.c.b16 %v5335, %v5331
    %v5496 = vpack.c.b16 %v5336, %v5332
    %v5497 = vpack.c.b16 %v5337, %v5333
    %v5498 = vpack.c.b16 %v5338, %v5334
    %v5499 = vpack.c.b16 %v5343, %v5339
    %v5500 = vpack.c.b16 %v5344, %v5340
    %v5501 = vpack.c.b16 %v5345, %v5341
    %v5502 = vpack.c.b16 %v5346, %v5342
    %v5503 = vpack.c.b16 %v5351, %v5347
    %v5504 = vpack.c.b16 %v5352, %v5348
    %v5505 = vpack.c.b16 %v5353, %v5349
    %v5506 = vpack.c.b16 %v5354, %v5350
    %v5507 = vpack.c.b16 %v5359, %v5355
    %v5508 = vpack.c.b16 %v5360, %v5356
    %v5509 = vpack.c.b16 %v5361, %v5357
    %v5510 = vpack.c.b16 %v5362, %v5358
    %v5511 = vpack.c.b16 %v5367, %v5363
    %v5512 = vpack.c.b16 %v5368, %v5364
    %v5513 = vpack.c.b16 %v5369, %v5365
    %v5514 = vpack.c.b16 %v5370, %v5366
    %v5515 = vpack.c.b16 %v5375, %v5371
    %v5516 = vpack.c.b16 %v5376, %v5372
    %v5517 = vpack.c.b16 %v5377, %v5373
    %v5518 = vpack.c.b16 %v5378, %v5374
    %v5519 = vpack.c.b16 %v5383, %v5379
    %v5520 = vpack.c.b16 %v5384, %v5380
    %v5521 = vpack.c.b16 %v5385, %v5381
    %v5522 = vpack.c.b16 %v5386, %v5382
    %v5523 = vpack.c.b16 %v5391, %v5387
    %v5524 = vpack.c.b16 %v5392, %v5388
    %v5525 = vpack.c.b16 %v5393, %v5389
    %v5526 = vpack.c.b16 %v5394, %v5390
    %v5527 = vpack.c.b16 %v5399, %v5395
    %v5528 = vpack.c.b16 %v5400, %v5396
    %v5529 = vpack.c.b16 %v5401, %v5397
    %v5530 = vpack.c.b16 %v5402, %v5398
    %5659 = vmatprep.subr.bf16.mxu0 %v5404
    %5660 = vmatpush1.bf16.msra.mxu0 %v5403
    %5661 = vmatprep.subr.bf16.mxu0 %v5408
    %5662 = vmatpush1.bf16.msra.mxu0 %v5407
    %5663 = vmatprep.subr.bf16.mxu0 %v5412
    %5664 = vmatpush1.bf16.msra.mxu0 %v5411
    %5665 = vmatprep.subr.bf16.mxu0 %v5416
    %5666 = vmatpush1.bf16.msra.mxu0 %v5415
    %5667 = vmatprep.subr.bf16.mxu0 %v5420
    %5668 = vmatpush1.bf16.msra.mxu0 %v5419
    %5669 = vmatprep.subr.bf16.mxu0 %v5424
    %5670 = vmatpush1.bf16.msra.mxu0 %v5423
    %5671 = vmatprep.subr.bf16.mxu0 %v5428
    %5672 = vmatpush1.bf16.msra.mxu0 %v5427
    %5673 = vmatprep.subr.bf16.mxu0 %v5432
    %5674 = vmatpush1.bf16.msra.mxu0 %v5431
    %5675 = vmatprep.subr.bf16.mxu0 %v5436
    %5676 = vmatpush1.bf16.msra.mxu0 %v5435
    %5677 = vmatprep.subr.bf16.mxu0 %v5440
    %5678 = vmatpush1.bf16.msra.mxu0 %v5439
    %5679 = vmatprep.subr.bf16.mxu0 %v5444
    %5680 = vmatpush1.bf16.msra.mxu0 %v5443
    %5681 = vmatprep.subr.bf16.mxu0 %v5448
    %5682 = vmatpush1.bf16.msra.mxu0 %v5447
    %5683 = vmatprep.subr.bf16.mxu0 %v5452
    %5684 = vmatpush1.bf16.msra.mxu0 %v5451
    %5685 = vmatprep.subr.bf16.mxu0 %v5456
    %5686 = vmatpush1.bf16.msra.mxu0 %v5455
    %5687 = vmatprep.subr.bf16.mxu0 %v5460
    %5688 = vmatpush1.bf16.msra.mxu0 %v5459
    %5689 = vmatprep.subr.bf16.mxu0 %v5464
    %5690 = vmatpush1.bf16.msra.mxu0 %v5463
    %5691 = vmatprep.mubr.bf16.mxu0 %v4866
    %5692 = vmatmul.mubr.bf16.gmra.mrb[0].mxu0 %v4865
    %v5693 = vpop.f32.mrb[0].mxu0
    %v5694 = vadd.f32 %v5002, %v5693
    %v5695 = vpop.f32.mrb[0].mxu0
    %v5696 = vadd.f32 %v5006, %v5695
    %v5697 = vpop.f32.mrb[0].mxu0
    %v5698 = vadd.f32 %v5002, %v5697
    %v5699 = vpop.f32.mrb[0].mxu0
    %v5700 = vadd.f32 %v5006, %v5699
    %5701 = vdwg.mxu0
    %5702 = vmatprep.subr.bf16.mxu0 %v5468
    %5703 = vmatpush1.bf16.msra.mxu0 %v5467
    %5704 = vmatprep.subr.bf16.mxu0 %v5472
    %5705 = vmatpush1.bf16.msra.mxu0 %v5471
    %5706 = vmatprep.subr.bf16.mxu0 %v5476
    %5707 = vmatpush1.bf16.msra.mxu0 %v5475
    %5708 = vmatprep.subr.bf16.mxu0 %v5480
    %5709 = vmatpush1.bf16.msra.mxu0 %v5479
    %5710 = vmatprep.subr.bf16.mxu0 %v5484
    %5711 = vmatpush1.bf16.msra.mxu0 %v5483
    %5712 = vmatprep.subr.bf16.mxu0 %v5488
    %5713 = vmatpush1.bf16.msra.mxu0 %v5487
    %5714 = vmatprep.subr.bf16.mxu0 %v5492
    %5715 = vmatpush1.bf16.msra.mxu0 %v5491
    %5716 = vmatprep.subr.bf16.mxu0 %v5496
    %5717 = vmatpush1.bf16.msra.mxu0 %v5495
    %5718 = vmatprep.subr.bf16.mxu0 %v5500
    %5719 = vmatpush1.bf16.msra.mxu0 %v5499
    %5720 = vmatprep.subr.bf16.mxu0 %v5504
    %5721 = vmatpush1.bf16.msra.mxu0 %v5503
    %5722 = vmatprep.subr.bf16.mxu0 %v5508
    %5723 = vmatpush1.bf16.msra.mxu0 %v5507
    %5724 = vmatprep.subr.bf16.mxu0 %v5512
    %5725 = vmatpush1.bf16.msra.mxu0 %v5511
    %5726 = vmatprep.subr.bf16.mxu0 %v5516
    %5727 = vmatpush1.bf16.msra.mxu0 %v5515
    %5728 = vmatprep.subr.bf16.mxu0 %v5520
    %5729 = vmatpush1.bf16.msra.mxu0 %v5519
    %5730 = vmatprep.subr.bf16.mxu0 %v5524
    %5731 = vmatpush1.bf16.msra.mxu0 %v5523
    %5732 = vmatprep.subr.bf16.mxu0 %v5528
    %5733 = vmatpush1.bf16.msra.mxu0 %v5527
    %5734 = vmatprep.mubr.bf16.mxu0 %v4868
    %5735 = vmatmul.mubr.bf16.gmra.mrb[0].mxu0 %v4867
    %v5736 = vpop.f32.mrb[0].mxu0
    %v5737 = vadd.f32 %v5694, %v5736
    %v5738 = vpop.f32.mrb[0].mxu0
    %v5739 = vadd.f32 %v5696, %v5738
    %v5740 = vpop.f32.mrb[0].mxu0
    %v5741 = vadd.f32 %v5698, %v5740
    %v5742 = vpop.f32.mrb[0].mxu0
    %v5743 = vadd.f32 %v5700, %v5742
    %5744 = vdwg.mxu0
    %5745 = vmatprep.subr.bf16.mxu0 %v5406
    %5746 = vmatpush1.bf16.msra.mxu0 %v5405
    %5747 = vmatprep.subr.bf16.mxu0 %v5410
    %5748 = vmatpush1.bf16.msra.mxu0 %v5409
    %5749 = vmatprep.subr.bf16.mxu0 %v5414
    %5750 = vmatpush1.bf16.msra.mxu0 %v5413
    %5751 = vmatprep.subr.bf16.mxu0 %v5418
    %5752 = vmatpush1.bf16.msra.mxu0 %v5417
    %5753 = vmatprep.subr.bf16.mxu0 %v5422
    %5754 = vmatpush1.bf16.msra.mxu0 %v5421
    %5755 = vmatprep.subr.bf16.mxu0 %v5426
    %5756 = vmatpush1.bf16.msra.mxu0 %v5425
    %5757 = vmatprep.subr.bf16.mxu0 %v5430
    %5758 = vmatpush1.bf16.msra.mxu0 %v5429
    %5759 = vmatprep.subr.bf16.mxu0 %v5434
    %5760 = vmatpush1.bf16.msra.mxu0 %v5433
    %5761 = vmatprep.subr.bf16.mxu0 %v5438
    %5762 = vmatpush1.bf16.msra.mxu0 %v5437
    %5763 = vmatprep.subr.bf16.mxu0 %v5442
    %5764 = vmatpush1.bf16.msra.mxu0 %v5441
    %5765 = vmatprep.subr.bf16.mxu0 %v5446
    %5766 = vmatpush1.bf16.msra.mxu0 %v5445
    %5767 = vmatprep.subr.bf16.mxu0 %v5450
    %5768 = vmatpush1.bf16.msra.mxu0 %v5449
    %5769 = vmatprep.subr.bf16.mxu0 %v5454
    %5770 = vmatpush1.bf16.msra.mxu0 %v5453
    %5771 = vmatprep.subr.bf16.mxu0 %v5458
    %5772 = vmatpush1.bf16.msra.mxu0 %v5457
    %5773 = vmatprep.subr.bf16.mxu0 %v5462
    %5774 = vmatpush1.bf16.msra.mxu0 %v5461
    %5775 = vmatprep.subr.bf16.mxu0 %v5466
    %5776 = vmatpush1.bf16.msra.mxu0 %v5465
    %5777 = vmatprep.mubr.bf16.mxu0 %v4866
    %5778 = vmatmul.mubr.bf16.gmra.mrb[0].mxu0 %v4865
    %v5779 = vpop.f32.mrb[0].mxu0
    %v5780 = vadd.f32 %v5010, %v5779
    %v5781 = vpop.f32.mrb[0].mxu0
    %v5782 = vadd.f32 %v5014, %v5781
    %v5783 = vpop.f32.mrb[0].mxu0
    %v5784 = vadd.f32 %v5010, %v5783
    %v5785 = vpop.f32.mrb[0].mxu0
    %v5786 = vadd.f32 %v5014, %v5785
    %5787 = vdwg.mxu0
    %5788 = vmatprep.subr.bf16.mxu0 %v5470
    %5789 = vmatpush1.bf16.msra.mxu0 %v5469
    %5790 = vmatprep.subr.bf16.mxu0 %v5474
    %5791 = vmatpush1.bf16.msra.mxu0 %v5473
    %5792 = vmatprep.subr.bf16.mxu0 %v5478
    %5793 = vmatpush1.bf16.msra.mxu0 %v5477
    %5794 = vmatprep.subr.bf16.mxu0 %v5482
    %5795 = vmatpush1.bf16.msra.mxu0 %v5481
    %5796 = vmatprep.subr.bf16.mxu0 %v5486
    %5797 = vmatpush1.bf16.msra.mxu0 %v5485
    %5798 = vmatprep.subr.bf16.mxu0 %v5490
    %5799 = vmatpush1.bf16.msra.mxu0 %v5489
    %5800 = vmatprep.subr.bf16.mxu0 %v5494
    %5801 = vmatpush1.bf16.msra.mxu0 %v5493
    %5802 = vmatprep.subr.bf16.mxu0 %v5498
    %5803 = vmatpush1.bf16.msra.mxu0 %v5497
    %5804 = vmatprep.subr.bf16.mxu0 %v5502
    %5805 = vmatpush1.bf16.msra.mxu0 %v5501
    %5806 = vmatprep.subr.bf16.mxu0 %v5506
    %5807 = vmatpush1.bf16.msra.mxu0 %v5505
    %5808 = vmatprep.subr.bf16.mxu0 %v5510
    %5809 = vmatpush1.bf16.msra.mxu0 %v5509
    %5810 = vmatprep.subr.bf16.mxu0 %v5514
    %5811 = vmatpush1.bf16.msra.mxu0 %v5513
    %5812 = vmatprep.subr.bf16.mxu0 %v5518
    %5813 = vmatpush1.bf16.msra.mxu0 %v5517
    %5814 = vmatprep.subr.bf16.mxu0 %v5522
    %5815 = vmatpush1.bf16.msra.mxu0 %v5521
    %5816 = vmatprep.subr.bf16.mxu0 %v5526
    %5817 = vmatpush1.bf16.msra.mxu0 %v5525
    %5818 = vmatprep.subr.bf16.mxu0 %v5530
    %5819 = vmatpush1.bf16.msra.mxu0 %v5529
    %5820 = vmatprep.mubr.bf16.mxu0 %v4868
    %5821 = vmatmul.mubr.bf16.gmra.mrb[0].mxu0 %v4867
    %v5822 = vpop.f32.mrb[0].mxu0
    %v5823 = vadd.f32 %v5780, %v5822
    %v5824 = vpop.f32.mrb[0].mxu0
    %v5825 = vadd.f32 %v5782, %v5824
    %v5826 = vpop.f32.mrb[0].mxu0
    %v5827 = vadd.f32 %v5784, %v5826
    %v5828 = vpop.f32.mrb[0].mxu0
    %v5829 = vadd.f32 %v5786, %v5828
    %5830 = vdwg.mxu0
    %v5831 = vmax.f32 %v5737, 0.0
    %v5832 = vmax.f32 %v5739, 0.0
    %v5833 = vmax.f32 %v5823, 0.0
    %v5834 = vmax.f32 %v5825, 0.0
    %v5835 = vmax.f32 %v5741, 0.0
    %v5836 = vmax.f32 %v5743, 0.0
    %v5837 = vmax.f32 %v5827, 0.0
    %v5838 = vmax.f32 %v5829, 0.0
    %v5839 = vpack.c.bf16 %v5835, %v5831
    %v5840 = vpack.c.bf16 %v5836, %v5832
    %v5841 = vpack.c.bf16 %v5837, %v5833
    %v5842 = vpack.c.bf16 %v5838, %v5834
    %v5843 = vld [vmem:[#allocation17] sm:$0xff]
    %v5844 = vld [vmem:[#allocation17 + $0x8] sm:$0xff]
    %v5845 = vld [vmem:[#allocation17 + $0x10] sm:$0xff]
    %v5846 = vld [vmem:[#allocation17 + $0x18] sm:$0xff]
    %v5847 = vld [vmem:[#allocation17 + $0x20] sm:$0xff]
    %v5848 = vld [vmem:[#allocation17 + $0x28] sm:$0xff]
    %v5849 = vld [vmem:[#allocation17 + $0x30] sm:$0xff]
    %v5850 = vld [vmem:[#allocation17 + $0x38] sm:$0xff]
    %v5851 = vld [vmem:[#allocation17 + $0x40] sm:$0xff]
    %v5852 = vld [vmem:[#allocation17 + $0x48] sm:$0xff]
    %v5853 = vld [vmem:[#allocation17 + $0x50] sm:$0xff]
    %v5854 = vld [vmem:[#allocation17 + $0x58] sm:$0xff]
    %v5855 = vld [vmem:[#allocation17 + $0x60] sm:$0xff]
    %v5856 = vld [vmem:[#allocation17 + $0x68] sm:$0xff]
    %v5857 = vld [vmem:[#allocation17 + $0x70] sm:$0xff]
    %v5858 = vld [vmem:[#allocation17 + $0x78] sm:$0xff]
    %v5859 = vld [vmem:[#allocation17 + $0x80] sm:$0xff]
    %v5860 = vld [vmem:[#allocation17 + $0x88] sm:$0xff]
    %v5861 = vld [vmem:[#allocation17 + $0x90] sm:$0xff]
    %v5862 = vld [vmem:[#allocation17 + $0x98] sm:$0xff]
    %v5863 = vld [vmem:[#allocation17 + $0xa0] sm:$0xff]
    %v5864 = vld [vmem:[#allocation17 + $0xa8] sm:$0xff]
    %v5865 = vld [vmem:[#allocation17 + $0xb0] sm:$0xff]
    %v5866 = vld [vmem:[#allocation17 + $0xb8] sm:$0xff]
    %v5867 = vld [vmem:[#allocation17 + $0xc0] sm:$0xff]
    %v5868 = vld [vmem:[#allocation17 + $0xc8] sm:$0xff]
    %v5869 = vld [vmem:[#allocation17 + $0xd0] sm:$0xff]
    %v5870 = vld [vmem:[#allocation17 + $0xd8] sm:$0xff]
    %v5871 = vld [vmem:[#allocation17 + $0xe0] sm:$0xff]
    %v5872 = vld [vmem:[#allocation17 + $0xe8] sm:$0xff]
    %v5873 = vld [vmem:[#allocation17 + $0xf0] sm:$0xff]
    %v5874 = vld [vmem:[#allocation17 + $0xf8] sm:$0xff]
    %v5875 = vld [vmem:[#allocation17 + $0x100] sm:$0xff]
    %v5876 = vld [vmem:[#allocation17 + $0x108] sm:$0xff]
    %v5877 = vld [vmem:[#allocation17 + $0x110] sm:$0xff]
    %v5878 = vld [vmem:[#allocation17 + $0x118] sm:$0xff]
    %v5879 = vld [vmem:[#allocation17 + $0x120] sm:$0xff]
    %v5880 = vld [vmem:[#allocation17 + $0x128] sm:$0xff]
    %v5881 = vld [vmem:[#allocation17 + $0x130] sm:$0xff]
    %v5882 = vld [vmem:[#allocation17 + $0x138] sm:$0xff]
    %v5883 = vld [vmem:[#allocation17 + $0x140] sm:$0xff]
    %v5884 = vld [vmem:[#allocation17 + $0x148] sm:$0xff]
    %v5885 = vld [vmem:[#allocation17 + $0x150] sm:$0xff]
    %v5886 = vld [vmem:[#allocation17 + $0x158] sm:$0xff]
    %v5887 = vld [vmem:[#allocation17 + $0x160] sm:$0xff]
    %v5888 = vld [vmem:[#allocation17 + $0x168] sm:$0xff]
    %v5889 = vld [vmem:[#allocation17 + $0x170] sm:$0xff]
    %v5890 = vld [vmem:[#allocation17 + $0x178] sm:$0xff]
    %v5891 = vld [vmem:[#allocation17 + $0x180] sm:$0xff]
    %v5892 = vld [vmem:[#allocation17 + $0x188] sm:$0xff]
    %v5893 = vld [vmem:[#allocation17 + $0x190] sm:$0xff]
    %v5894 = vld [vmem:[#allocation17 + $0x198] sm:$0xff]
    %v5895 = vld [vmem:[#allocation17 + $0x1a0] sm:$0xff]
    %v5896 = vld [vmem:[#allocation17 + $0x1a8] sm:$0xff]
    %v5897 = vld [vmem:[#allocation17 + $0x1b0] sm:$0xff]
    %v5898 = vld [vmem:[#allocation17 + $0x1b8] sm:$0xff]
    %v5899 = vld [vmem:[#allocation17 + $0x1c0] sm:$0xff]
    %v5900 = vld [vmem:[#allocation17 + $0x1c8] sm:$0xff]
    %v5901 = vld [vmem:[#allocation17 + $0x1d0] sm:$0xff]
    %v5902 = vld [vmem:[#allocation17 + $0x1d8] sm:$0xff]
    %v5903 = vld [vmem:[#allocation17 + $0x1e0] sm:$0xff]
    %v5904 = vld [vmem:[#allocation17 + $0x1e8] sm:$0xff]
    %v5905 = vld [vmem:[#allocation17 + $0x1f0] sm:$0xff]
    %v5906 = vld [vmem:[#allocation17 + $0x1f8] sm:$0xff]
    %v5907 = vld [vmem:[#allocation17 + $0x200] sm:$0xff]
    %v5908 = vld [vmem:[#allocation17 + $0x208] sm:$0xff]
    %v5909 = vld [vmem:[#allocation17 + $0x210] sm:$0xff]
    %v5910 = vld [vmem:[#allocation17 + $0x218] sm:$0xff]
    %v5911 = vld [vmem:[#allocation17 + $0x220] sm:$0xff]
    %v5912 = vld [vmem:[#allocation17 + $0x228] sm:$0xff]
    %v5913 = vld [vmem:[#allocation17 + $0x230] sm:$0xff]
    %v5914 = vld [vmem:[#allocation17 + $0x238] sm:$0xff]
    %v5915 = vld [vmem:[#allocation17 + $0x240] sm:$0xff]
    %v5916 = vld [vmem:[#allocation17 + $0x248] sm:$0xff]
    %v5917 = vld [vmem:[#allocation17 + $0x250] sm:$0xff]
    %v5918 = vld [vmem:[#allocation17 + $0x258] sm:$0xff]
    %v5919 = vld [vmem:[#allocation17 + $0x260] sm:$0xff]
    %v5920 = vld [vmem:[#allocation17 + $0x268] sm:$0xff]
    %v5921 = vld [vmem:[#allocation17 + $0x270] sm:$0xff]
    %v5922 = vld [vmem:[#allocation17 + $0x278] sm:$0xff]
    %v5923 = vld [vmem:[#allocation17 + $0x280] sm:$0xff]
    %v5924 = vld [vmem:[#allocation17 + $0x288] sm:$0xff]
    %v5925 = vld [vmem:[#allocation17 + $0x290] sm:$0xff]
    %v5926 = vld [vmem:[#allocation17 + $0x298] sm:$0xff]
    %v5927 = vld [vmem:[#allocation17 + $0x2a0] sm:$0xff]
    %v5928 = vld [vmem:[#allocation17 + $0x2a8] sm:$0xff]
    %v5929 = vld [vmem:[#allocation17 + $0x2b0] sm:$0xff]
    %v5930 = vld [vmem:[#allocation17 + $0x2b8] sm:$0xff]
    %v5931 = vld [vmem:[#allocation17 + $0x2c0] sm:$0xff]
    %v5932 = vld [vmem:[#allocation17 + $0x2c8] sm:$0xff]
    %v5933 = vld [vmem:[#allocation17 + $0x2d0] sm:$0xff]
    %v5934 = vld [vmem:[#allocation17 + $0x2d8] sm:$0xff]
    %v5935 = vld [vmem:[#allocation17 + $0x2e0] sm:$0xff]
    %v5936 = vld [vmem:[#allocation17 + $0x2e8] sm:$0xff]
    %v5937 = vld [vmem:[#allocation17 + $0x2f0] sm:$0xff]
    %v5938 = vld [vmem:[#allocation17 + $0x2f8] sm:$0xff]
    %v5939 = vld [vmem:[#allocation17 + $0x300] sm:$0xff]
    %v5940 = vld [vmem:[#allocation17 + $0x308] sm:$0xff]
    %v5941 = vld [vmem:[#allocation17 + $0x310] sm:$0xff]
    %v5942 = vld [vmem:[#allocation17 + $0x318] sm:$0xff]
    %v5943 = vld [vmem:[#allocation17 + $0x320] sm:$0xff]
    %v5944 = vld [vmem:[#allocation17 + $0x328] sm:$0xff]
    %v5945 = vld [vmem:[#allocation17 + $0x330] sm:$0xff]
    %v5946 = vld [vmem:[#allocation17 + $0x338] sm:$0xff]
    %v5947 = vld [vmem:[#allocation17 + $0x340] sm:$0xff]
    %v5948 = vld [vmem:[#allocation17 + $0x348] sm:$0xff]
    %v5949 = vld [vmem:[#allocation17 + $0x350] sm:$0xff]
    %v5950 = vld [vmem:[#allocation17 + $0x358] sm:$0xff]
    %v5951 = vld [vmem:[#allocation17 + $0x360] sm:$0xff]
    %v5952 = vld [vmem:[#allocation17 + $0x368] sm:$0xff]
    %v5953 = vld [vmem:[#allocation17 + $0x370] sm:$0xff]
    %v5954 = vld [vmem:[#allocation17 + $0x378] sm:$0xff]
    %v5955 = vld [vmem:[#allocation17 + $0x380] sm:$0xff]
    %v5956 = vld [vmem:[#allocation17 + $0x388] sm:$0xff]
    %v5957 = vld [vmem:[#allocation17 + $0x390] sm:$0xff]
    %v5958 = vld [vmem:[#allocation17 + $0x398] sm:$0xff]
    %v5959 = vld [vmem:[#allocation17 + $0x3a0] sm:$0xff]
    %v5960 = vld [vmem:[#allocation17 + $0x3a8] sm:$0xff]
    %v5961 = vld [vmem:[#allocation17 + $0x3b0] sm:$0xff]
    %v5962 = vld [vmem:[#allocation17 + $0x3b8] sm:$0xff]
    %v5963 = vld [vmem:[#allocation17 + $0x3c0] sm:$0xff]
    %v5964 = vld [vmem:[#allocation17 + $0x3c8] sm:$0xff]
    %v5965 = vld [vmem:[#allocation17 + $0x3d0] sm:$0xff]
    %v5966 = vld [vmem:[#allocation17 + $0x3d8] sm:$0xff]
    %v5967 = vld [vmem:[#allocation17 + $0x3e0] sm:$0xff]
    %v5968 = vld [vmem:[#allocation17 + $0x3e8] sm:$0xff]
    %v5969 = vld [vmem:[#allocation17 + $0x3f0] sm:$0xff]
    %v5970 = vld [vmem:[#allocation17 + $0x3f8] sm:$0xff]
    %v5971 = vld [vmem:[#allocation19] sm:$0xf]
    %v5973 = vlaneseq
    %v5974 = vshrl.u32 %v5973, 7
    %v5975 = vsub.s32 0, %v5974
    %v5976 = vrot.slane %v5971, %v5975
    %v5977 = vlaneseq
    %v5978 = vshrl.u32 %v5977, 7
    %v5979 = vsub.s32 1, %v5978
    %v5980 = vrot.slane %v5971, %v5979
    %v5981 = vlaneseq
    %v5982 = vshrl.u32 %v5981, 7
    %v5983 = vsub.s32 2, %v5982
    %v5984 = vrot.slane %v5971, %v5983
    %v5985 = vlaneseq
    %v5986 = vshrl.u32 %v5985, 7
    %v5987 = vsub.s32 3, %v5986
    %v5988 = vrot.slane %v5971, %v5987
    %v6121 = vunpack.c.l.b16 %v5843
    %v6122 = vunpack.c.h.b16 %v5843
    %v6123 = vunpack.c.l.b16 %v5844
    %v6124 = vunpack.c.h.b16 %v5844
    %v6125 = vunpack.c.l.b16 %v5845
    %v6126 = vunpack.c.h.b16 %v5845
    %v6127 = vunpack.c.l.b16 %v5846
    %v6128 = vunpack.c.h.b16 %v5846
    %v6129 = vunpack.c.l.b16 %v5847
    %v6130 = vunpack.c.h.b16 %v5847
    %v6131 = vunpack.c.l.b16 %v5848
    %v6132 = vunpack.c.h.b16 %v5848
    %v6133 = vunpack.c.l.b16 %v5849
    %v6134 = vunpack.c.h.b16 %v5849
    %v6135 = vunpack.c.l.b16 %v5850
    %v6136 = vunpack.c.h.b16 %v5850
    %v6137 = vunpack.c.l.b16 %v5851
    %v6138 = vunpack.c.h.b16 %v5851
    %v6139 = vunpack.c.l.b16 %v5852
    %v6140 = vunpack.c.h.b16 %v5852
    %v6141 = vunpack.c.l.b16 %v5853
    %v6142 = vunpack.c.h.b16 %v5853
    %v6143 = vunpack.c.l.b16 %v5854
    %v6144 = vunpack.c.h.b16 %v5854
    %v6145 = vunpack.c.l.b16 %v5855
    %v6146 = vunpack.c.h.b16 %v5855
    %v6147 = vunpack.c.l.b16 %v5856
    %v6148 = vunpack.c.h.b16 %v5856
    %v6149 = vunpack.c.l.b16 %v5857
    %v6150 = vunpack.c.h.b16 %v5857
    %v6151 = vunpack.c.l.b16 %v5858
    %v6152 = vunpack.c.h.b16 %v5858
    %v6153 = vunpack.c.l.b16 %v5859
    %v6154 = vunpack.c.h.b16 %v5859
    %v6155 = vunpack.c.l.b16 %v5860
    %v6156 = vunpack.c.h.b16 %v5860
    %v6157 = vunpack.c.l.b16 %v5861
    %v6158 = vunpack.c.h.b16 %v5861
    %v6159 = vunpack.c.l.b16 %v5862
    %v6160 = vunpack.c.h.b16 %v5862
    %v6161 = vunpack.c.l.b16 %v5863
    %v6162 = vunpack.c.h.b16 %v5863
    %v6163 = vunpack.c.l.b16 %v5864
    %v6164 = vunpack.c.h.b16 %v5864
    %v6165 = vunpack.c.l.b16 %v5865
    %v6166 = vunpack.c.h.b16 %v5865
    %v6167 = vunpack.c.l.b16 %v5866
    %v6168 = vunpack.c.h.b16 %v5866
    %v6169 = vunpack.c.l.b16 %v5867
    %v6170 = vunpack.c.h.b16 %v5867
    %v6171 = vunpack.c.l.b16 %v5868
    %v6172 = vunpack.c.h.b16 %v5868
    %v6173 = vunpack.c.l.b16 %v5869
    %v6174 = vunpack.c.h.b16 %v5869
    %v6175 = vunpack.c.l.b16 %v5870
    %v6176 = vunpack.c.h.b16 %v5870
    %v6177 = vunpack.c.l.b16 %v5871
    %v6178 = vunpack.c.h.b16 %v5871
    %v6179 = vunpack.c.l.b16 %v5872
    %v6180 = vunpack.c.h.b16 %v5872
    %v6181 = vunpack.c.l.b16 %v5873
    %v6182 = vunpack.c.h.b16 %v5873
    %v6183 = vunpack.c.l.b16 %v5874
    %v6184 = vunpack.c.h.b16 %v5874
    %v6185 = vunpack.c.l.b16 %v5875
    %v6186 = vunpack.c.h.b16 %v5875
    %v6187 = vunpack.c.l.b16 %v5876
    %v6188 = vunpack.c.h.b16 %v5876
    %v6189 = vunpack.c.l.b16 %v5877
    %v6190 = vunpack.c.h.b16 %v5877
    %v6191 = vunpack.c.l.b16 %v5878
    %v6192 = vunpack.c.h.b16 %v5878
    %v6193 = vunpack.c.l.b16 %v5879
    %v6194 = vunpack.c.h.b16 %v5879
    %v6195 = vunpack.c.l.b16 %v5880
    %v6196 = vunpack.c.h.b16 %v5880
    %v6197 = vunpack.c.l.b16 %v5881
    %v6198 = vunpack.c.h.b16 %v5881
    %v6199 = vunpack.c.l.b16 %v5882
    %v6200 = vunpack.c.h.b16 %v5882
    %v6201 = vunpack.c.l.b16 %v5883
    %v6202 = vunpack.c.h.b16 %v5883
    %v6203 = vunpack.c.l.b16 %v5884
    %v6204 = vunpack.c.h.b16 %v5884
    %v6205 = vunpack.c.l.b16 %v5885
    %v6206 = vunpack.c.h.b16 %v5885
    %v6207 = vunpack.c.l.b16 %v5886
    %v6208 = vunpack.c.h.b16 %v5886
    %v6209 = vunpack.c.l.b16 %v5887
    %v6210 = vunpack.c.h.b16 %v5887
    %v6211 = vunpack.c.l.b16 %v5888
    %v6212 = vunpack.c.h.b16 %v5888
    %v6213 = vunpack.c.l.b16 %v5889
    %v6214 = vunpack.c.h.b16 %v5889
    %v6215 = vunpack.c.l.b16 %v5890
    %v6216 = vunpack.c.h.b16 %v5890
    %v6217 = vunpack.c.l.b16 %v5891
    %v6218 = vunpack.c.h.b16 %v5891
    %v6219 = vunpack.c.l.b16 %v5892
    %v6220 = vunpack.c.h.b16 %v5892
    %v6221 = vunpack.c.l.b16 %v5893
    %v6222 = vunpack.c.h.b16 %v5893
    %v6223 = vunpack.c.l.b16 %v5894
    %v6224 = vunpack.c.h.b16 %v5894
    %v6225 = vunpack.c.l.b16 %v5895
    %v6226 = vunpack.c.h.b16 %v5895
    %v6227 = vunpack.c.l.b16 %v5896
    %v6228 = vunpack.c.h.b16 %v5896
    %v6229 = vunpack.c.l.b16 %v5897
    %v6230 = vunpack.c.h.b16 %v5897
    %v6231 = vunpack.c.l.b16 %v5898
    %v6232 = vunpack.c.h.b16 %v5898
    %v6233 = vunpack.c.l.b16 %v5899
    %v6234 = vunpack.c.h.b16 %v5899
    %v6235 = vunpack.c.l.b16 %v5900
    %v6236 = vunpack.c.h.b16 %v5900
    %v6237 = vunpack.c.l.b16 %v5901
    %v6238 = vunpack.c.h.b16 %v5901
    %v6239 = vunpack.c.l.b16 %v5902
    %v6240 = vunpack.c.h.b16 %v5902
    %v6241 = vunpack.c.l.b16 %v5903
    %v6242 = vunpack.c.h.b16 %v5903
    %v6243 = vunpack.c.l.b16 %v5904
    %v6244 = vunpack.c.h.b16 %v5904
    %v6245 = vunpack.c.l.b16 %v5905
    %v6246 = vunpack.c.h.b16 %v5905
    %v6247 = vunpack.c.l.b16 %v5906
    %v6248 = vunpack.c.h.b16 %v5906
    %v6249 = vunpack.c.l.b16 %v5907
    %v6250 = vunpack.c.h.b16 %v5907
    %v6251 = vunpack.c.l.b16 %v5908
    %v6252 = vunpack.c.h.b16 %v5908
    %v6253 = vunpack.c.l.b16 %v5909
    %v6254 = vunpack.c.h.b16 %v5909
    %v6255 = vunpack.c.l.b16 %v5910
    %v6256 = vunpack.c.h.b16 %v5910
    %v6257 = vunpack.c.l.b16 %v5911
    %v6258 = vunpack.c.h.b16 %v5911
    %v6259 = vunpack.c.l.b16 %v5912
    %v6260 = vunpack.c.h.b16 %v5912
    %v6261 = vunpack.c.l.b16 %v5913
    %v6262 = vunpack.c.h.b16 %v5913
    %v6263 = vunpack.c.l.b16 %v5914
    %v6264 = vunpack.c.h.b16 %v5914
    %v6265 = vunpack.c.l.b16 %v5915
    %v6266 = vunpack.c.h.b16 %v5915
    %v6267 = vunpack.c.l.b16 %v5916
    %v6268 = vunpack.c.h.b16 %v5916
    %v6269 = vunpack.c.l.b16 %v5917
    %v6270 = vunpack.c.h.b16 %v5917
    %v6271 = vunpack.c.l.b16 %v5918
    %v6272 = vunpack.c.h.b16 %v5918
    %v6273 = vunpack.c.l.b16 %v5919
    %v6274 = vunpack.c.h.b16 %v5919
    %v6275 = vunpack.c.l.b16 %v5920
    %v6276 = vunpack.c.h.b16 %v5920
    %v6277 = vunpack.c.l.b16 %v5921
    %v6278 = vunpack.c.h.b16 %v5921
    %v6279 = vunpack.c.l.b16 %v5922
    %v6280 = vunpack.c.h.b16 %v5922
    %v6281 = vunpack.c.l.b16 %v5923
    %v6282 = vunpack.c.h.b16 %v5923
    %v6283 = vunpack.c.l.b16 %v5924
    %v6284 = vunpack.c.h.b16 %v5924
    %v6285 = vunpack.c.l.b16 %v5925
    %v6286 = vunpack.c.h.b16 %v5925
    %v6287 = vunpack.c.l.b16 %v5926
    %v6288 = vunpack.c.h.b16 %v5926
    %v6289 = vunpack.c.l.b16 %v5927
    %v6290 = vunpack.c.h.b16 %v5927
    %v6291 = vunpack.c.l.b16 %v5928
    %v6292 = vunpack.c.h.b16 %v5928
    %v6293 = vunpack.c.l.b16 %v5929
    %v6294 = vunpack.c.h.b16 %v5929
    %v6295 = vunpack.c.l.b16 %v5930
    %v6296 = vunpack.c.h.b16 %v5930
    %v6297 = vunpack.c.l.b16 %v5931
    %v6298 = vunpack.c.h.b16 %v5931
    %v6299 = vunpack.c.l.b16 %v5932
    %v6300 = vunpack.c.h.b16 %v5932
    %v6301 = vunpack.c.l.b16 %v5933
    %v6302 = vunpack.c.h.b16 %v5933
    %v6303 = vunpack.c.l.b16 %v5934
    %v6304 = vunpack.c.h.b16 %v5934
    %v6305 = vunpack.c.l.b16 %v5935
    %v6306 = vunpack.c.h.b16 %v5935
    %v6307 = vunpack.c.l.b16 %v5936
    %v6308 = vunpack.c.h.b16 %v5936
    %v6309 = vunpack.c.l.b16 %v5937
    %v6310 = vunpack.c.h.b16 %v5937
    %v6311 = vunpack.c.l.b16 %v5938
    %v6312 = vunpack.c.h.b16 %v5938
    %v6313 = vunpack.c.l.b16 %v5939
    %v6314 = vunpack.c.h.b16 %v5939
    %v6315 = vunpack.c.l.b16 %v5940
    %v6316 = vunpack.c.h.b16 %v5940
    %v6317 = vunpack.c.l.b16 %v5941
    %v6318 = vunpack.c.h.b16 %v5941
    %v6319 = vunpack.c.l.b16 %v5942
    %v6320 = vunpack.c.h.b16 %v5942
    %v6321 = vunpack.c.l.b16 %v5943
    %v6322 = vunpack.c.h.b16 %v5943
    %v6323 = vunpack.c.l.b16 %v5944
    %v6324 = vunpack.c.h.b16 %v5944
    %v6325 = vunpack.c.l.b16 %v5945
    %v6326 = vunpack.c.h.b16 %v5945
    %v6327 = vunpack.c.l.b16 %v5946
    %v6328 = vunpack.c.h.b16 %v5946
    %v6329 = vunpack.c.l.b16 %v5947
    %v6330 = vunpack.c.h.b16 %v5947
    %v6331 = vunpack.c.l.b16 %v5948
    %v6332 = vunpack.c.h.b16 %v5948
    %v6333 = vunpack.c.l.b16 %v5949
    %v6334 = vunpack.c.h.b16 %v5949
    %v6335 = vunpack.c.l.b16 %v5950
    %v6336 = vunpack.c.h.b16 %v5950
    %v6337 = vunpack.c.l.b16 %v5951
    %v6338 = vunpack.c.h.b16 %v5951
    %v6339 = vunpack.c.l.b16 %v5952
    %v6340 = vunpack.c.h.b16 %v5952
    %v6341 = vunpack.c.l.b16 %v5953
    %v6342 = vunpack.c.h.b16 %v5953
    %v6343 = vunpack.c.l.b16 %v5954
    %v6344 = vunpack.c.h.b16 %v5954
    %v6345 = vunpack.c.l.b16 %v5955
    %v6346 = vunpack.c.h.b16 %v5955
    %v6347 = vunpack.c.l.b16 %v5956
    %v6348 = vunpack.c.h.b16 %v5956
    %v6349 = vunpack.c.l.b16 %v5957
    %v6350 = vunpack.c.h.b16 %v5957
    %v6351 = vunpack.c.l.b16 %v5958
    %v6352 = vunpack.c.h.b16 %v5958
    %v6353 = vunpack.c.l.b16 %v5959
    %v6354 = vunpack.c.h.b16 %v5959
    %v6355 = vunpack.c.l.b16 %v5960
    %v6356 = vunpack.c.h.b16 %v5960
    %v6357 = vunpack.c.l.b16 %v5961
    %v6358 = vunpack.c.h.b16 %v5961
    %v6359 = vunpack.c.l.b16 %v5962
    %v6360 = vunpack.c.h.b16 %v5962
    %v6361 = vunpack.c.l.b16 %v5963
    %v6362 = vunpack.c.h.b16 %v5963
    %v6363 = vunpack.c.l.b16 %v5964
    %v6364 = vunpack.c.h.b16 %v5964
    %v6365 = vunpack.c.l.b16 %v5965
    %v6366 = vunpack.c.h.b16 %v5965
    %v6367 = vunpack.c.l.b16 %v5966
    %v6368 = vunpack.c.h.b16 %v5966
    %v6369 = vunpack.c.l.b16 %v5967
    %v6370 = vunpack.c.h.b16 %v5967
    %v6371 = vunpack.c.l.b16 %v5968
    %v6372 = vunpack.c.h.b16 %v5968
    %v6373 = vunpack.c.l.b16 %v5969
    %v6374 = vunpack.c.h.b16 %v5969
    %v6375 = vunpack.c.l.b16 %v5970
    %v6376 = vunpack.c.h.b16 %v5970
    %v6377 = vpack.c.b16 %v6125, %v6121
    %v6378 = vpack.c.b16 %v6126, %v6122
    %v6379 = vpack.c.b16 %v6127, %v6123
    %v6380 = vpack.c.b16 %v6128, %v6124
    %v6381 = vpack.c.b16 %v6133, %v6129
    %v6382 = vpack.c.b16 %v6134, %v6130
    %v6383 = vpack.c.b16 %v6135, %v6131
    %v6384 = vpack.c.b16 %v6136, %v6132
    %v6385 = vpack.c.b16 %v6141, %v6137
    %v6386 = vpack.c.b16 %v6142, %v6138
    %v6387 = vpack.c.b16 %v6143, %v6139
    %v6388 = vpack.c.b16 %v6144, %v6140
    %v6389 = vpack.c.b16 %v6149, %v6145
    %v6390 = vpack.c.b16 %v6150, %v6146
    %v6391 = vpack.c.b16 %v6151, %v6147
    %v6392 = vpack.c.b16 %v6152, %v6148
    %v6393 = vpack.c.b16 %v6157, %v6153
    %v6394 = vpack.c.b16 %v6158, %v6154
    %v6395 = vpack.c.b16 %v6159, %v6155
    %v6396 = vpack.c.b16 %v6160, %v6156
    %v6397 = vpack.c.b16 %v6165, %v6161
    %v6398 = vpack.c.b16 %v6166, %v6162
    %v6399 = vpack.c.b16 %v6167, %v6163
    %v6400 = vpack.c.b16 %v6168, %v6164
    %v6401 = vpack.c.b16 %v6173, %v6169
    %v6402 = vpack.c.b16 %v6174, %v6170
    %v6403 = vpack.c.b16 %v6175, %v6171
    %v6404 = vpack.c.b16 %v6176, %v6172
    %v6405 = vpack.c.b16 %v6181, %v6177
    %v6406 = vpack.c.b16 %v6182, %v6178
    %v6407 = vpack.c.b16 %v6183, %v6179
    %v6408 = vpack.c.b16 %v6184, %v6180
    %v6409 = vpack.c.b16 %v6189, %v6185
    %v6410 = vpack.c.b16 %v6190, %v6186
    %v6411 = vpack.c.b16 %v6191, %v6187
    %v6412 = vpack.c.b16 %v6192, %v6188
    %v6413 = vpack.c.b16 %v6197, %v6193
    %v6414 = vpack.c.b16 %v6198, %v6194
    %v6415 = vpack.c.b16 %v6199, %v6195
    %v6416 = vpack.c.b16 %v6200, %v6196
    %v6417 = vpack.c.b16 %v6205, %v6201
    %v6418 = vpack.c.b16 %v6206, %v6202
    %v6419 = vpack.c.b16 %v6207, %v6203
    %v6420 = vpack.c.b16 %v6208, %v6204
    %v6421 = vpack.c.b16 %v6213, %v6209
    %v6422 = vpack.c.b16 %v6214, %v6210
    %v6423 = vpack.c.b16 %v6215, %v6211
    %v6424 = vpack.c.b16 %v6216, %v6212
    %v6425 = vpack.c.b16 %v6221, %v6217
    %v6426 = vpack.c.b16 %v6222, %v6218
    %v6427 = vpack.c.b16 %v6223, %v6219
    %v6428 = vpack.c.b16 %v6224, %v6220
    %v6429 = vpack.c.b16 %v6229, %v6225
    %v6430 = vpack.c.b16 %v6230, %v6226
    %v6431 = vpack.c.b16 %v6231, %v6227
    %v6432 = vpack.c.b16 %v6232, %v6228
    %v6433 = vpack.c.b16 %v6237, %v6233
    %v6434 = vpack.c.b16 %v6238, %v6234
    %v6435 = vpack.c.b16 %v6239, %v6235
    %v6436 = vpack.c.b16 %v6240, %v6236
    %v6437 = vpack.c.b16 %v6245, %v6241
    %v6438 = vpack.c.b16 %v6246, %v6242
    %v6439 = vpack.c.b16 %v6247, %v6243
    %v6440 = vpack.c.b16 %v6248, %v6244
    %v6441 = vpack.c.b16 %v6253, %v6249
    %v6442 = vpack.c.b16 %v6254, %v6250
    %v6443 = vpack.c.b16 %v6255, %v6251
    %v6444 = vpack.c.b16 %v6256, %v6252
    %v6445 = vpack.c.b16 %v6261, %v6257
    %v6446 = vpack.c.b16 %v6262, %v6258
    %v6447 = vpack.c.b16 %v6263, %v6259
    %v6448 = vpack.c.b16 %v6264, %v6260
    %v6449 = vpack.c.b16 %v6269, %v6265
    %v6450 = vpack.c.b16 %v6270, %v6266
    %v6451 = vpack.c.b16 %v6271, %v6267
    %v6452 = vpack.c.b16 %v6272, %v6268
    %v6453 = vpack.c.b16 %v6277, %v6273
    %v6454 = vpack.c.b16 %v6278, %v6274
    %v6455 = vpack.c.b16 %v6279, %v6275
    %v6456 = vpack.c.b16 %v6280, %v6276
    %v6457 = vpack.c.b16 %v6285, %v6281
    %v6458 = vpack.c.b16 %v6286, %v6282
    %v6459 = vpack.c.b16 %v6287, %v6283
    %v6460 = vpack.c.b16 %v6288, %v6284
    %v6461 = vpack.c.b16 %v6293, %v6289
    %v6462 = vpack.c.b16 %v6294, %v6290
    %v6463 = vpack.c.b16 %v6295, %v6291
    %v6464 = vpack.c.b16 %v6296, %v6292
    %v6465 = vpack.c.b16 %v6301, %v6297
    %v6466 = vpack.c.b16 %v6302, %v6298
    %v6467 = vpack.c.b16 %v6303, %v6299
    %v6468 = vpack.c.b16 %v6304, %v6300
    %v6469 = vpack.c.b16 %v6309, %v6305
    %v6470 = vpack.c.b16 %v6310, %v6306
    %v6471 = vpack.c.b16 %v6311, %v6307
    %v6472 = vpack.c.b16 %v6312, %v6308
    %v6473 = vpack.c.b16 %v6317, %v6313
    %v6474 = vpack.c.b16 %v6318, %v6314
    %v6475 = vpack.c.b16 %v6319, %v6315
    %v6476 = vpack.c.b16 %v6320, %v6316
    %v6477 = vpack.c.b16 %v6325, %v6321
    %v6478 = vpack.c.b16 %v6326, %v6322
    %v6479 = vpack.c.b16 %v6327, %v6323
    %v6480 = vpack.c.b16 %v6328, %v6324
    %v6481 = vpack.c.b16 %v6333, %v6329
    %v6482 = vpack.c.b16 %v6334, %v6330
    %v6483 = vpack.c.b16 %v6335, %v6331
    %v6484 = vpack.c.b16 %v6336, %v6332
    %v6485 = vpack.c.b16 %v6341, %v6337
    %v6486 = vpack.c.b16 %v6342, %v6338
    %v6487 = vpack.c.b16 %v6343, %v6339
    %v6488 = vpack.c.b16 %v6344, %v6340
    %v6489 = vpack.c.b16 %v6349, %v6345
    %v6490 = vpack.c.b16 %v6350, %v6346
    %v6491 = vpack.c.b16 %v6351, %v6347
    %v6492 = vpack.c.b16 %v6352, %v6348
    %v6493 = vpack.c.b16 %v6357, %v6353
    %v6494 = vpack.c.b16 %v6358, %v6354
    %v6495 = vpack.c.b16 %v6359, %v6355
    %v6496 = vpack.c.b16 %v6360, %v6356
    %v6497 = vpack.c.b16 %v6365, %v6361
    %v6498 = vpack.c.b16 %v6366, %v6362
    %v6499 = vpack.c.b16 %v6367, %v6363
    %v6500 = vpack.c.b16 %v6368, %v6364
    %v6501 = vpack.c.b16 %v6373, %v6369
    %v6502 = vpack.c.b16 %v6374, %v6370
    %v6503 = vpack.c.b16 %v6375, %v6371
    %v6504 = vpack.c.b16 %v6376, %v6372
    %6633 = vmatprep.subr.bf16.mxu0 %v6378
    %6634 = vmatpush1.bf16.msra.mxu0 %v6377
    %6635 = vmatprep.subr.bf16.mxu0 %v6382
    %6636 = vmatpush1.bf16.msra.mxu0 %v6381
    %6637 = vmatprep.subr.bf16.mxu0 %v6386
    %6638 = vmatpush1.bf16.msra.mxu0 %v6385
    %6639 = vmatprep.subr.bf16.mxu0 %v6390
    %6640 = vmatpush1.bf16.msra.mxu0 %v6389
    %6641 = vmatprep.subr.bf16.mxu0 %v6394
    %6642 = vmatpush1.bf16.msra.mxu0 %v6393
    %6643 = vmatprep.subr.bf16.mxu0 %v6398
    %6644 = vmatpush1.bf16.msra.mxu0 %v6397
    %6645 = vmatprep.subr.bf16.mxu0 %v6402
    %6646 = vmatpush1.bf16.msra.mxu0 %v6401
    %6647 = vmatprep.subr.bf16.mxu0 %v6406
    %6648 = vmatpush1.bf16.msra.mxu0 %v6405
    %6649 = vmatprep.subr.bf16.mxu0 %v6410
    %6650 = vmatpush1.bf16.msra.mxu0 %v6409
    %6651 = vmatprep.subr.bf16.mxu0 %v6414
    %6652 = vmatpush1.bf16.msra.mxu0 %v6413
    %6653 = vmatprep.subr.bf16.mxu0 %v6418
    %6654 = vmatpush1.bf16.msra.mxu0 %v6417
    %6655 = vmatprep.subr.bf16.mxu0 %v6422
    %6656 = vmatpush1.bf16.msra.mxu0 %v6421
    %6657 = vmatprep.subr.bf16.mxu0 %v6426
    %6658 = vmatpush1.bf16.msra.mxu0 %v6425
    %6659 = vmatprep.subr.bf16.mxu0 %v6430
    %6660 = vmatpush1.bf16.msra.mxu0 %v6429
    %6661 = vmatprep.subr.bf16.mxu0 %v6434
    %6662 = vmatpush1.bf16.msra.mxu0 %v6433
    %6663 = vmatprep.subr.bf16.mxu0 %v6438
    %6664 = vmatpush1.bf16.msra.mxu0 %v6437
    %6665 = vmatprep.mubr.bf16.mxu0 %v5840
    %6666 = vmatmul.mubr.bf16.gmra.mrb[0].mxu0 %v5839
    %v6667 = vpop.f32.mrb[0].mxu0
    %v6668 = vadd.f32 %v5976, %v6667
    %v6669 = vpop.f32.mrb[0].mxu0
    %v6670 = vadd.f32 %v5980, %v6669
    %v6671 = vpop.f32.mrb[0].mxu0
    %v6672 = vadd.f32 %v5976, %v6671
    %v6673 = vpop.f32.mrb[0].mxu0
    %v6674 = vadd.f32 %v5980, %v6673
    %6675 = vdwg.mxu0
    %6676 = vmatprep.subr.bf16.mxu0 %v6442
    %6677 = vmatpush1.bf16.msra.mxu0 %v6441
    %6678 = vmatprep.subr.bf16.mxu0 %v6446
    %6679 = vmatpush1.bf16.msra.mxu0 %v6445
    %6680 = vmatprep.subr.bf16.mxu0 %v6450
    %6681 = vmatpush1.bf16.msra.mxu0 %v6449
    %6682 = vmatprep.subr.bf16.mxu0 %v6454
    %6683 = vmatpush1.bf16.msra.mxu0 %v6453
    %6684 = vmatprep.subr.bf16.mxu0 %v6458
    %6685 = vmatpush1.bf16.msra.mxu0 %v6457
    %6686 = vmatprep.subr.bf16.mxu0 %v6462
    %6687 = vmatpush1.bf16.msra.mxu0 %v6461
    %6688 = vmatprep.subr.bf16.mxu0 %v6466
    %6689 = vmatpush1.bf16.msra.mxu0 %v6465
    %6690 = vmatprep.subr.bf16.mxu0 %v6470
    %6691 = vmatpush1.bf16.msra.mxu0 %v6469
    %6692 = vmatprep.subr.bf16.mxu0 %v6474
    %6693 = vmatpush1.bf16.msra.mxu0 %v6473
    %6694 = vmatprep.subr.bf16.mxu0 %v6478
    %6695 = vmatpush1.bf16.msra.mxu0 %v6477
    %6696 = vmatprep.subr.bf16.mxu0 %v6482
    %6697 = vmatpush1.bf16.msra.mxu0 %v6481
    %6698 = vmatprep.subr.bf16.mxu0 %v6486
    %6699 = vmatpush1.bf16.msra.mxu0 %v6485
    %6700 = vmatprep.subr.bf16.mxu0 %v6490
    %6701 = vmatpush1.bf16.msra.mxu0 %v6489
    %6702 = vmatprep.subr.bf16.mxu0 %v6494
    %6703 = vmatpush1.bf16.msra.mxu0 %v6493
    %6704 = vmatprep.subr.bf16.mxu0 %v6498
    %6705 = vmatpush1.bf16.msra.mxu0 %v6497
    %6706 = vmatprep.subr.bf16.mxu0 %v6502
    %6707 = vmatpush1.bf16.msra.mxu0 %v6501
    %6708 = vmatprep.mubr.bf16.mxu0 %v5842
    %6709 = vmatmul.mubr.bf16.gmra.mrb[0].mxu0 %v5841
    %v6710 = vpop.f32.mrb[0].mxu0
    %v6711 = vadd.f32 %v6668, %v6710
    %v6712 = vpop.f32.mrb[0].mxu0
    %v6713 = vadd.f32 %v6670, %v6712
    %v6714 = vpop.f32.mrb[0].mxu0
    %v6715 = vadd.f32 %v6672, %v6714
    %v6716 = vpop.f32.mrb[0].mxu0
    %v6717 = vadd.f32 %v6674, %v6716
    %6718 = vdwg.mxu0
    %6719 = vmatprep.subr.bf16.mxu0 %v6380
    %6720 = vmatpush1.bf16.msra.mxu0 %v6379
    %6721 = vmatprep.subr.bf16.mxu0 %v6384
    %6722 = vmatpush1.bf16.msra.mxu0 %v6383
    %6723 = vmatprep.subr.bf16.mxu0 %v6388
    %6724 = vmatpush1.bf16.msra.mxu0 %v6387
    %6725 = vmatprep.subr.bf16.mxu0 %v6392
    %6726 = vmatpush1.bf16.msra.mxu0 %v6391
    %6727 = vmatprep.subr.bf16.mxu0 %v6396
    %6728 = vmatpush1.bf16.msra.mxu0 %v6395
    %6729 = vmatprep.subr.bf16.mxu0 %v6400
    %6730 = vmatpush1.bf16.msra.mxu0 %v6399
    %6731 = vmatprep.subr.bf16.mxu0 %v6404
    %6732 = vmatpush1.bf16.msra.mxu0 %v6403
    %6733 = vmatprep.subr.bf16.mxu0 %v6408
    %6734 = vmatpush1.bf16.msra.mxu0 %v6407
    %6735 = vmatprep.subr.bf16.mxu0 %v6412
    %6736 = vmatpush1.bf16.msra.mxu0 %v6411
    %6737 = vmatprep.subr.bf16.mxu0 %v6416
    %6738 = vmatpush1.bf16.msra.mxu0 %v6415
    %6739 = vmatprep.subr.bf16.mxu0 %v6420
    %6740 = vmatpush1.bf16.msra.mxu0 %v6419
    %6741 = vmatprep.subr.bf16.mxu0 %v6424
    %6742 = vmatpush1.bf16.msra.mxu0 %v6423
    %6743 = vmatprep.subr.bf16.mxu0 %v6428
    %6744 = vmatpush1.bf16.msra.mxu0 %v6427
    %6745 = vmatprep.subr.bf16.mxu0 %v6432
    %6746 = vmatpush1.bf16.msra.mxu0 %v6431
    %6747 = vmatprep.subr.bf16.mxu0 %v6436
    %6748 = vmatpush1.bf16.msra.mxu0 %v6435
    %6749 = vmatprep.subr.bf16.mxu0 %v6440
    %6750 = vmatpush1.bf16.msra.mxu0 %v6439
    %6751 = vmatprep.mubr.bf16.mxu0 %v5840
    %6752 = vmatmul.mubr.bf16.gmra.mrb[0].mxu0 %v5839
    %v6753 = vpop.f32.mrb[0].mxu0
    %v6754 = vadd.f32 %v5984, %v6753
    %v6755 = vpop.f32.mrb[0].mxu0
    %v6756 = vadd.f32 %v5988, %v6755
    %v6757 = vpop.f32.mrb[0].mxu0
    %v6758 = vadd.f32 %v5984, %v6757
    %v6759 = vpop.f32.mrb[0].mxu0
    %v6760 = vadd.f32 %v5988, %v6759
    %6761 = vdwg.mxu0
    %6762 = vmatprep.subr.bf16.mxu0 %v6444
    %6763 = vmatpush1.bf16.msra.mxu0 %v6443
    %6764 = vmatprep.subr.bf16.mxu0 %v6448
    %6765 = vmatpush1.bf16.msra.mxu0 %v6447
    %6766 = vmatprep.subr.bf16.mxu0 %v6452
    %6767 = vmatpush1.bf16.msra.mxu0 %v6451
    %6768 = vmatprep.subr.bf16.mxu0 %v6456
    %6769 = vmatpush1.bf16.msra.mxu0 %v6455
    %6770 = vmatprep.subr.bf16.mxu0 %v6460
    %6771 = vmatpush1.bf16.msra.mxu0 %v6459
    %6772 = vmatprep.subr.bf16.mxu0 %v6464
    %6773 = vmatpush1.bf16.msra.mxu0 %v6463
    %6774 = vmatprep.subr.bf16.mxu0 %v6468
    %6775 = vmatpush1.bf16.msra.mxu0 %v6467
    %6776 = vmatprep.subr.bf16.mxu0 %v6472
    %6777 = vmatpush1.bf16.msra.mxu0 %v6471
    %6778 = vmatprep.subr.bf16.mxu0 %v6476
    %6779 = vmatpush1.bf16.msra.mxu0 %v6475
    %6780 = vmatprep.subr.bf16.mxu0 %v6480
    %6781 = vmatpush1.bf16.msra.mxu0 %v6479
    %6782 = vmatprep.subr.bf16.mxu0 %v6484
    %6783 = vmatpush1.bf16.msra.mxu0 %v6483
    %6784 = vmatprep.subr.bf16.mxu0 %v6488
    %6785 = vmatpush1.bf16.msra.mxu0 %v6487
    %6786 = vmatprep.subr.bf16.mxu0 %v6492
    %6787 = vmatpush1.bf16.msra.mxu0 %v6491
    %6788 = vmatprep.subr.bf16.mxu0 %v6496
    %6789 = vmatpush1.bf16.msra.mxu0 %v6495
    %6790 = vmatprep.subr.bf16.mxu0 %v6500
    %6791 = vmatpush1.bf16.msra.mxu0 %v6499
    %6792 = vmatprep.subr.bf16.mxu0 %v6504
    %6793 = vmatpush1.bf16.msra.mxu0 %v6503
    %6794 = vmatprep.mubr.bf16.mxu0 %v5842
    %6795 = vmatmul.mubr.bf16.gmra.mrb[0].mxu0 %v5841
    %v6796 = vpop.f32.mrb[0].mxu0
    %v6797 = vadd.f32 %v6754, %v6796
    %v6798 = vpop.f32.mrb[0].mxu0
    %v6799 = vadd.f32 %v6756, %v6798
    %v6800 = vpop.f32.mrb[0].mxu0
    %v6801 = vadd.f32 %v6758, %v6800
    %v6802 = vpop.f32.mrb[0].mxu0
    %v6803 = vadd.f32 %v6760, %v6802
    %6804 = vdwg.mxu0
    %v6805 = vadd.f32 %v6711, %v929
    %v6806 = vadd.f32 %v6713, %v930
    %v6807 = vadd.f32 %v6797, %v931
    %v6808 = vadd.f32 %v6799, %v932
    %v6809 = vadd.f32 %v6715, %v937
    %v6810 = vadd.f32 %v6717, %v938
    %v6811 = vadd.f32 %v6801, %v939
    %v6812 = vadd.f32 %v6803, %v940
    %v6813 = vmax.f32 %v6805, 0.0
    %v6814 = vmax.f32 %v6806, 0.0
    %v6815 = vmax.f32 %v6807, 0.0
    %v6816 = vmax.f32 %v6808, 0.0
    %v6817 = vmax.f32 %v6809, 0.0
    %v6818 = vmax.f32 %v6810, 0.0
    %v6819 = vmax.f32 %v6811, 0.0
    %v6820 = vmax.f32 %v6812, 0.0
    %v6821 = vpack.c.bf16 %v6817, %v6813
    %v6822 = vpack.c.bf16 %v6818, %v6814
    %v6823 = vpack.c.bf16 %v6819, %v6815
    %v6824 = vpack.c.bf16 %v6820, %v6816
    %v6825 = vld [vmem:[#allocation20] sm:$0xff]
    %v6826 = vld [vmem:[#allocation20 + $0x8] sm:$0xff]
    %v6827 = vld [vmem:[#allocation20 + $0x10] sm:$0xff]
    %v6828 = vld [vmem:[#allocation20 + $0x18] sm:$0xff]
    %v6829 = vld [vmem:[#allocation20 + $0x20] sm:$0xff]
    %v6830 = vld [vmem:[#allocation20 + $0x28] sm:$0xff]
    %v6831 = vld [vmem:[#allocation20 + $0x30] sm:$0xff]
    %v6832 = vld [vmem:[#allocation20 + $0x38] sm:$0xff]
    %v6833 = vld [vmem:[#allocation20 + $0x40] sm:$0xff]
    %v6834 = vld [vmem:[#allocation20 + $0x48] sm:$0xff]
    %v6835 = vld [vmem:[#allocation20 + $0x50] sm:$0xff]
    %v6836 = vld [vmem:[#allocation20 + $0x58] sm:$0xff]
    %v6837 = vld [vmem:[#allocation20 + $0x60] sm:$0xff]
    %v6838 = vld [vmem:[#allocation20 + $0x68] sm:$0xff]
    %v6839 = vld [vmem:[#allocation20 + $0x70] sm:$0xff]
    %v6840 = vld [vmem:[#allocation20 + $0x78] sm:$0xff]
    %v6841 = vld [vmem:[#allocation20 + $0x80] sm:$0xff]
    %v6842 = vld [vmem:[#allocation20 + $0x88] sm:$0xff]
    %v6843 = vld [vmem:[#allocation20 + $0x90] sm:$0xff]
    %v6844 = vld [vmem:[#allocation20 + $0x98] sm:$0xff]
    %v6845 = vld [vmem:[#allocation20 + $0xa0] sm:$0xff]
    %v6846 = vld [vmem:[#allocation20 + $0xa8] sm:$0xff]
    %v6847 = vld [vmem:[#allocation20 + $0xb0] sm:$0xff]
    %v6848 = vld [vmem:[#allocation20 + $0xb8] sm:$0xff]
    %v6849 = vld [vmem:[#allocation20 + $0xc0] sm:$0xff]
    %v6850 = vld [vmem:[#allocation20 + $0xc8] sm:$0xff]
    %v6851 = vld [vmem:[#allocation20 + $0xd0] sm:$0xff]
    %v6852 = vld [vmem:[#allocation20 + $0xd8] sm:$0xff]
    %v6853 = vld [vmem:[#allocation20 + $0xe0] sm:$0xff]
    %v6854 = vld [vmem:[#allocation20 + $0xe8] sm:$0xff]
    %v6855 = vld [vmem:[#allocation20 + $0xf0] sm:$0xff]
    %v6856 = vld [vmem:[#allocation20 + $0xf8] sm:$0xff]
    %v6857 = vld [vmem:[#allocation20 + $0x100] sm:$0xff]
    %v6858 = vld [vmem:[#allocation20 + $0x108] sm:$0xff]
    %v6859 = vld [vmem:[#allocation20 + $0x110] sm:$0xff]
    %v6860 = vld [vmem:[#allocation20 + $0x118] sm:$0xff]
    %v6861 = vld [vmem:[#allocation20 + $0x120] sm:$0xff]
    %v6862 = vld [vmem:[#allocation20 + $0x128] sm:$0xff]
    %v6863 = vld [vmem:[#allocation20 + $0x130] sm:$0xff]
    %v6864 = vld [vmem:[#allocation20 + $0x138] sm:$0xff]
    %v6865 = vld [vmem:[#allocation20 + $0x140] sm:$0xff]
    %v6866 = vld [vmem:[#allocation20 + $0x148] sm:$0xff]
    %v6867 = vld [vmem:[#allocation20 + $0x150] sm:$0xff]
    %v6868 = vld [vmem:[#allocation20 + $0x158] sm:$0xff]
    %v6869 = vld [vmem:[#allocation20 + $0x160] sm:$0xff]
    %v6870 = vld [vmem:[#allocation20 + $0x168] sm:$0xff]
    %v6871 = vld [vmem:[#allocation20 + $0x170] sm:$0xff]
    %v6872 = vld [vmem:[#allocation20 + $0x178] sm:$0xff]
    %v6873 = vld [vmem:[#allocation20 + $0x180] sm:$0xff]
    %v6874 = vld [vmem:[#allocation20 + $0x188] sm:$0xff]
    %v6875 = vld [vmem:[#allocation20 + $0x190] sm:$0xff]
    %v6876 = vld [vmem:[#allocation20 + $0x198] sm:$0xff]
    %v6877 = vld [vmem:[#allocation20 + $0x1a0] sm:$0xff]
    %v6878 = vld [vmem:[#allocation20 + $0x1a8] sm:$0xff]
    %v6879 = vld [vmem:[#allocation20 + $0x1b0] sm:$0xff]
    %v6880 = vld [vmem:[#allocation20 + $0x1b8] sm:$0xff]
    %v6881 = vld [vmem:[#allocation20 + $0x1c0] sm:$0xff]
    %v6882 = vld [vmem:[#allocation20 + $0x1c8] sm:$0xff]
    %v6883 = vld [vmem:[#allocation20 + $0x1d0] sm:$0xff]
    %v6884 = vld [vmem:[#allocation20 + $0x1d8] sm:$0xff]
    %v6885 = vld [vmem:[#allocation20 + $0x1e0] sm:$0xff]
    %v6886 = vld [vmem:[#allocation20 + $0x1e8] sm:$0xff]
    %v6887 = vld [vmem:[#allocation20 + $0x1f0] sm:$0xff]
    %v6888 = vld [vmem:[#allocation20 + $0x1f8] sm:$0xff]
    %v6889 = vld [vmem:[#allocation20 + $0x200] sm:$0xff]
    %v6890 = vld [vmem:[#allocation20 + $0x208] sm:$0xff]
    %v6891 = vld [vmem:[#allocation20 + $0x210] sm:$0xff]
    %v6892 = vld [vmem:[#allocation20 + $0x218] sm:$0xff]
    %v6893 = vld [vmem:[#allocation20 + $0x220] sm:$0xff]
    %v6894 = vld [vmem:[#allocation20 + $0x228] sm:$0xff]
    %v6895 = vld [vmem:[#allocation20 + $0x230] sm:$0xff]
    %v6896 = vld [vmem:[#allocation20 + $0x238] sm:$0xff]
    %v6897 = vld [vmem:[#allocation20 + $0x240] sm:$0xff]
    %v6898 = vld [vmem:[#allocation20 + $0x248] sm:$0xff]
    %v6899 = vld [vmem:[#allocation20 + $0x250] sm:$0xff]
    %v6900 = vld [vmem:[#allocation20 + $0x258] sm:$0xff]
    %v6901 = vld [vmem:[#allocation20 + $0x260] sm:$0xff]
    %v6902 = vld [vmem:[#allocation20 + $0x268] sm:$0xff]
    %v6903 = vld [vmem:[#allocation20 + $0x270] sm:$0xff]
    %v6904 = vld [vmem:[#allocation20 + $0x278] sm:$0xff]
    %v6905 = vld [vmem:[#allocation20 + $0x280] sm:$0xff]
    %v6906 = vld [vmem:[#allocation20 + $0x288] sm:$0xff]
    %v6907 = vld [vmem:[#allocation20 + $0x290] sm:$0xff]
    %v6908 = vld [vmem:[#allocation20 + $0x298] sm:$0xff]
    %v6909 = vld [vmem:[#allocation20 + $0x2a0] sm:$0xff]
    %v6910 = vld [vmem:[#allocation20 + $0x2a8] sm:$0xff]
    %v6911 = vld [vmem:[#allocation20 + $0x2b0] sm:$0xff]
    %v6912 = vld [vmem:[#allocation20 + $0x2b8] sm:$0xff]
    %v6913 = vld [vmem:[#allocation20 + $0x2c0] sm:$0xff]
    %v6914 = vld [vmem:[#allocation20 + $0x2c8] sm:$0xff]
    %v6915 = vld [vmem:[#allocation20 + $0x2d0] sm:$0xff]
    %v6916 = vld [vmem:[#allocation20 + $0x2d8] sm:$0xff]
    %v6917 = vld [vmem:[#allocation20 + $0x2e0] sm:$0xff]
    %v6918 = vld [vmem:[#allocation20 + $0x2e8] sm:$0xff]
    %v6919 = vld [vmem:[#allocation20 + $0x2f0] sm:$0xff]
    %v6920 = vld [vmem:[#allocation20 + $0x2f8] sm:$0xff]
    %v6921 = vld [vmem:[#allocation20 + $0x300] sm:$0xff]
    %v6922 = vld [vmem:[#allocation20 + $0x308] sm:$0xff]
    %v6923 = vld [vmem:[#allocation20 + $0x310] sm:$0xff]
    %v6924 = vld [vmem:[#allocation20 + $0x318] sm:$0xff]
    %v6925 = vld [vmem:[#allocation20 + $0x320] sm:$0xff]
    %v6926 = vld [vmem:[#allocation20 + $0x328] sm:$0xff]
    %v6927 = vld [vmem:[#allocation20 + $0x330] sm:$0xff]
    %v6928 = vld [vmem:[#allocation20 + $0x338] sm:$0xff]
    %v6929 = vld [vmem:[#allocation20 + $0x340] sm:$0xff]
    %v6930 = vld [vmem:[#allocation20 + $0x348] sm:$0xff]
    %v6931 = vld [vmem:[#allocation20 + $0x350] sm:$0xff]
    %v6932 = vld [vmem:[#allocation20 + $0x358] sm:$0xff]
    %v6933 = vld [vmem:[#allocation20 + $0x360] sm:$0xff]
    %v6934 = vld [vmem:[#allocation20 + $0x368] sm:$0xff]
    %v6935 = vld [vmem:[#allocation20 + $0x370] sm:$0xff]
    %v6936 = vld [vmem:[#allocation20 + $0x378] sm:$0xff]
    %v6937 = vld [vmem:[#allocation20 + $0x380] sm:$0xff]
    %v6938 = vld [vmem:[#allocation20 + $0x388] sm:$0xff]
    %v6939 = vld [vmem:[#allocation20 + $0x390] sm:$0xff]
    %v6940 = vld [vmem:[#allocation20 + $0x398] sm:$0xff]
    %v6941 = vld [vmem:[#allocation20 + $0x3a0] sm:$0xff]
    %v6942 = vld [vmem:[#allocation20 + $0x3a8] sm:$0xff]
    %v6943 = vld [vmem:[#allocation20 + $0x3b0] sm:$0xff]
    %v6944 = vld [vmem:[#allocation20 + $0x3b8] sm:$0xff]
    %v6945 = vld [vmem:[#allocation20 + $0x3c0] sm:$0xff]
    %v6946 = vld [vmem:[#allocation20 + $0x3c8] sm:$0xff]
    %v6947 = vld [vmem:[#allocation20 + $0x3d0] sm:$0xff]
    %v6948 = vld [vmem:[#allocation20 + $0x3d8] sm:$0xff]
    %v6949 = vld [vmem:[#allocation20 + $0x3e0] sm:$0xff]
    %v6950 = vld [vmem:[#allocation20 + $0x3e8] sm:$0xff]
    %v6951 = vld [vmem:[#allocation20 + $0x3f0] sm:$0xff]
    %v6952 = vld [vmem:[#allocation20 + $0x3f8] sm:$0xff]
    %v6953 = vld [vmem:[#allocation22] sm:$0xf]
    %v6955 = vlaneseq
    %v6956 = vshrl.u32 %v6955, 7
    %v6957 = vsub.s32 0, %v6956
    %v6958 = vrot.slane %v6953, %v6957
    %v6959 = vlaneseq
    %v6960 = vshrl.u32 %v6959, 7
    %v6961 = vsub.s32 1, %v6960
    %v6962 = vrot.slane %v6953, %v6961
    %v6963 = vlaneseq
    %v6964 = vshrl.u32 %v6963, 7
    %v6965 = vsub.s32 2, %v6964
    %v6966 = vrot.slane %v6953, %v6965
    %v6967 = vlaneseq
    %v6968 = vshrl.u32 %v6967, 7
    %v6969 = vsub.s32 3, %v6968
    %v6970 = vrot.slane %v6953, %v6969
    %v7103 = vunpack.c.l.b16 %v6825
    %v7104 = vunpack.c.h.b16 %v6825
    %v7105 = vunpack.c.l.b16 %v6826
    %v7106 = vunpack.c.h.b16 %v6826
    %v7107 = vunpack.c.l.b16 %v6827
    %v7108 = vunpack.c.h.b16 %v6827
    %v7109 = vunpack.c.l.b16 %v6828
    %v7110 = vunpack.c.h.b16 %v6828
    %v7111 = vunpack.c.l.b16 %v6829
    %v7112 = vunpack.c.h.b16 %v6829
    %v7113 = vunpack.c.l.b16 %v6830
    %v7114 = vunpack.c.h.b16 %v6830
    %v7115 = vunpack.c.l.b16 %v6831
    %v7116 = vunpack.c.h.b16 %v6831
    %v7117 = vunpack.c.l.b16 %v6832
    %v7118 = vunpack.c.h.b16 %v6832
    %v7119 = vunpack.c.l.b16 %v6833
    %v7120 = vunpack.c.h.b16 %v6833
    %v7121 = vunpack.c.l.b16 %v6834
    %v7122 = vunpack.c.h.b16 %v6834
    %v7123 = vunpack.c.l.b16 %v6835
    %v7124 = vunpack.c.h.b16 %v6835
    %v7125 = vunpack.c.l.b16 %v6836
    %v7126 = vunpack.c.h.b16 %v6836
    %v7127 = vunpack.c.l.b16 %v6837
    %v7128 = vunpack.c.h.b16 %v6837
    %v7129 = vunpack.c.l.b16 %v6838
    %v7130 = vunpack.c.h.b16 %v6838
    %v7131 = vunpack.c.l.b16 %v6839
    %v7132 = vunpack.c.h.b16 %v6839
    %v7133 = vunpack.c.l.b16 %v6840
    %v7134 = vunpack.c.h.b16 %v6840
    %v7135 = vunpack.c.l.b16 %v6841
    %v7136 = vunpack.c.h.b16 %v6841
    %v7137 = vunpack.c.l.b16 %v6842
    %v7138 = vunpack.c.h.b16 %v6842
    %v7139 = vunpack.c.l.b16 %v6843
    %v7140 = vunpack.c.h.b16 %v6843
    %v7141 = vunpack.c.l.b16 %v6844
    %v7142 = vunpack.c.h.b16 %v6844
    %v7143 = vunpack.c.l.b16 %v6845
    %v7144 = vunpack.c.h.b16 %v6845
    %v7145 = vunpack.c.l.b16 %v6846
    %v7146 = vunpack.c.h.b16 %v6846
    %v7147 = vunpack.c.l.b16 %v6847
    %v7148 = vunpack.c.h.b16 %v6847
    %v7149 = vunpack.c.l.b16 %v6848
    %v7150 = vunpack.c.h.b16 %v6848
    %v7151 = vunpack.c.l.b16 %v6849
    %v7152 = vunpack.c.h.b16 %v6849
    %v7153 = vunpack.c.l.b16 %v6850
    %v7154 = vunpack.c.h.b16 %v6850
    %v7155 = vunpack.c.l.b16 %v6851
    %v7156 = vunpack.c.h.b16 %v6851
    %v7157 = vunpack.c.l.b16 %v6852
    %v7158 = vunpack.c.h.b16 %v6852
    %v7159 = vunpack.c.l.b16 %v6853
    %v7160 = vunpack.c.h.b16 %v6853
    %v7161 = vunpack.c.l.b16 %v6854
    %v7162 = vunpack.c.h.b16 %v6854
    %v7163 = vunpack.c.l.b16 %v6855
    %v7164 = vunpack.c.h.b16 %v6855
    %v7165 = vunpack.c.l.b16 %v6856
    %v7166 = vunpack.c.h.b16 %v6856
    %v7167 = vunpack.c.l.b16 %v6857
    %v7168 = vunpack.c.h.b16 %v6857
    %v7169 = vunpack.c.l.b16 %v6858
    %v7170 = vunpack.c.h.b16 %v6858
    %v7171 = vunpack.c.l.b16 %v6859
    %v7172 = vunpack.c.h.b16 %v6859
    %v7173 = vunpack.c.l.b16 %v6860
    %v7174 = vunpack.c.h.b16 %v6860
    %v7175 = vunpack.c.l.b16 %v6861
    %v7176 = vunpack.c.h.b16 %v6861
    %v7177 = vunpack.c.l.b16 %v6862
    %v7178 = vunpack.c.h.b16 %v6862
    %v7179 = vunpack.c.l.b16 %v6863
    %v7180 = vunpack.c.h.b16 %v6863
    %v7181 = vunpack.c.l.b16 %v6864
    %v7182 = vunpack.c.h.b16 %v6864
    %v7183 = vunpack.c.l.b16 %v6865
    %v7184 = vunpack.c.h.b16 %v6865
    %v7185 = vunpack.c.l.b16 %v6866
    %v7186 = vunpack.c.h.b16 %v6866
    %v7187 = vunpack.c.l.b16 %v6867
    %v7188 = vunpack.c.h.b16 %v6867
    %v7189 = vunpack.c.l.b16 %v6868
    %v7190 = vunpack.c.h.b16 %v6868
    %v7191 = vunpack.c.l.b16 %v6869
    %v7192 = vunpack.c.h.b16 %v6869
    %v7193 = vunpack.c.l.b16 %v6870
    %v7194 = vunpack.c.h.b16 %v6870
    %v7195 = vunpack.c.l.b16 %v6871
    %v7196 = vunpack.c.h.b16 %v6871
    %v7197 = vunpack.c.l.b16 %v6872
    %v7198 = vunpack.c.h.b16 %v6872
    %v7199 = vunpack.c.l.b16 %v6873
    %v7200 = vunpack.c.h.b16 %v6873
    %v7201 = vunpack.c.l.b16 %v6874
    %v7202 = vunpack.c.h.b16 %v6874
    %v7203 = vunpack.c.l.b16 %v6875
    %v7204 = vunpack.c.h.b16 %v6875
    %v7205 = vunpack.c.l.b16 %v6876
    %v7206 = vunpack.c.h.b16 %v6876
    %v7207 = vunpack.c.l.b16 %v6877
    %v7208 = vunpack.c.h.b16 %v6877
    %v7209 = vunpack.c.l.b16 %v6878
    %v7210 = vunpack.c.h.b16 %v6878
    %v7211 = vunpack.c.l.b16 %v6879
    %v7212 = vunpack.c.h.b16 %v6879
    %v7213 = vunpack.c.l.b16 %v6880
    %v7214 = vunpack.c.h.b16 %v6880
    %v7215 = vunpack.c.l.b16 %v6881
    %v7216 = vunpack.c.h.b16 %v6881
    %v7217 = vunpack.c.l.b16 %v6882
    %v7218 = vunpack.c.h.b16 %v6882
    %v7219 = vunpack.c.l.b16 %v6883
    %v7220 = vunpack.c.h.b16 %v6883
    %v7221 = vunpack.c.l.b16 %v6884
    %v7222 = vunpack.c.h.b16 %v6884
    %v7223 = vunpack.c.l.b16 %v6885
    %v7224 = vunpack.c.h.b16 %v6885
    %v7225 = vunpack.c.l.b16 %v6886
    %v7226 = vunpack.c.h.b16 %v6886
    %v7227 = vunpack.c.l.b16 %v6887
    %v7228 = vunpack.c.h.b16 %v6887
    %v7229 = vunpack.c.l.b16 %v6888
    %v7230 = vunpack.c.h.b16 %v6888
    %v7231 = vunpack.c.l.b16 %v6889
    %v7232 = vunpack.c.h.b16 %v6889
    %v7233 = vunpack.c.l.b16 %v6890
    %v7234 = vunpack.c.h.b16 %v6890
    %v7235 = vunpack.c.l.b16 %v6891
    %v7236 = vunpack.c.h.b16 %v6891
    %v7237 = vunpack.c.l.b16 %v6892
    %v7238 = vunpack.c.h.b16 %v6892
    %v7239 = vunpack.c.l.b16 %v6893
    %v7240 = vunpack.c.h.b16 %v6893
    %v7241 = vunpack.c.l.b16 %v6894
    %v7242 = vunpack.c.h.b16 %v6894
    %v7243 = vunpack.c.l.b16 %v6895
    %v7244 = vunpack.c.h.b16 %v6895
    %v7245 = vunpack.c.l.b16 %v6896
    %v7246 = vunpack.c.h.b16 %v6896
    %v7247 = vunpack.c.l.b16 %v6897
    %v7248 = vunpack.c.h.b16 %v6897
    %v7249 = vunpack.c.l.b16 %v6898
    %v7250 = vunpack.c.h.b16 %v6898
    %v7251 = vunpack.c.l.b16 %v6899
    %v7252 = vunpack.c.h.b16 %v6899
    %v7253 = vunpack.c.l.b16 %v6900
    %v7254 = vunpack.c.h.b16 %v6900
    %v7255 = vunpack.c.l.b16 %v6901
    %v7256 = vunpack.c.h.b16 %v6901
    %v7257 = vunpack.c.l.b16 %v6902
    %v7258 = vunpack.c.h.b16 %v6902
    %v7259 = vunpack.c.l.b16 %v6903
    %v7260 = vunpack.c.h.b16 %v6903
    %v7261 = vunpack.c.l.b16 %v6904
    %v7262 = vunpack.c.h.b16 %v6904
    %v7263 = vunpack.c.l.b16 %v6905
    %v7264 = vunpack.c.h.b16 %v6905
    %v7265 = vunpack.c.l.b16 %v6906
    %v7266 = vunpack.c.h.b16 %v6906
    %v7267 = vunpack.c.l.b16 %v6907
    %v7268 = vunpack.c.h.b16 %v6907
    %v7269 = vunpack.c.l.b16 %v6908
    %v7270 = vunpack.c.h.b16 %v6908
    %v7271 = vunpack.c.l.b16 %v6909
    %v7272 = vunpack.c.h.b16 %v6909
    %v7273 = vunpack.c.l.b16 %v6910
    %v7274 = vunpack.c.h.b16 %v6910
    %v7275 = vunpack.c.l.b16 %v6911
    %v7276 = vunpack.c.h.b16 %v6911
    %v7277 = vunpack.c.l.b16 %v6912
    %v7278 = vunpack.c.h.b16 %v6912
    %v7279 = vunpack.c.l.b16 %v6913
    %v7280 = vunpack.c.h.b16 %v6913
    %v7281 = vunpack.c.l.b16 %v6914
    %v7282 = vunpack.c.h.b16 %v6914
    %v7283 = vunpack.c.l.b16 %v6915
    %v7284 = vunpack.c.h.b16 %v6915
    %v7285 = vunpack.c.l.b16 %v6916
    %v7286 = vunpack.c.h.b16 %v6916
    %v7287 = vunpack.c.l.b16 %v6917
    %v7288 = vunpack.c.h.b16 %v6917
    %v7289 = vunpack.c.l.b16 %v6918
    %v7290 = vunpack.c.h.b16 %v6918
    %v7291 = vunpack.c.l.b16 %v6919
    %v7292 = vunpack.c.h.b16 %v6919
    %v7293 = vunpack.c.l.b16 %v6920
    %v7294 = vunpack.c.h.b16 %v6920
    %v7295 = vunpack.c.l.b16 %v6921
    %v7296 = vunpack.c.h.b16 %v6921
    %v7297 = vunpack.c.l.b16 %v6922
    %v7298 = vunpack.c.h.b16 %v6922
    %v7299 = vunpack.c.l.b16 %v6923
    %v7300 = vunpack.c.h.b16 %v6923
    %v7301 = vunpack.c.l.b16 %v6924
    %v7302 = vunpack.c.h.b16 %v6924
    %v7303 = vunpack.c.l.b16 %v6925
    %v7304 = vunpack.c.h.b16 %v6925
    %v7305 = vunpack.c.l.b16 %v6926
    %v7306 = vunpack.c.h.b16 %v6926
    %v7307 = vunpack.c.l.b16 %v6927
    %v7308 = vunpack.c.h.b16 %v6927
    %v7309 = vunpack.c.l.b16 %v6928
    %v7310 = vunpack.c.h.b16 %v6928
    %v7311 = vunpack.c.l.b16 %v6929
    %v7312 = vunpack.c.h.b16 %v6929
    %v7313 = vunpack.c.l.b16 %v6930
    %v7314 = vunpack.c.h.b16 %v6930
    %v7315 = vunpack.c.l.b16 %v6931
    %v7316 = vunpack.c.h.b16 %v6931
    %v7317 = vunpack.c.l.b16 %v6932
    %v7318 = vunpack.c.h.b16 %v6932
    %v7319 = vunpack.c.l.b16 %v6933
    %v7320 = vunpack.c.h.b16 %v6933
    %v7321 = vunpack.c.l.b16 %v6934
    %v7322 = vunpack.c.h.b16 %v6934
    %v7323 = vunpack.c.l.b16 %v6935
    %v7324 = vunpack.c.h.b16 %v6935
    %v7325 = vunpack.c.l.b16 %v6936
    %v7326 = vunpack.c.h.b16 %v6936
    %v7327 = vunpack.c.l.b16 %v6937
    %v7328 = vunpack.c.h.b16 %v6937
    %v7329 = vunpack.c.l.b16 %v6938
    %v7330 = vunpack.c.h.b16 %v6938
    %v7331 = vunpack.c.l.b16 %v6939
    %v7332 = vunpack.c.h.b16 %v6939
    %v7333 = vunpack.c.l.b16 %v6940
    %v7334 = vunpack.c.h.b16 %v6940
    %v7335 = vunpack.c.l.b16 %v6941
    %v7336 = vunpack.c.h.b16 %v6941
    %v7337 = vunpack.c.l.b16 %v6942
    %v7338 = vunpack.c.h.b16 %v6942
    %v7339 = vunpack.c.l.b16 %v6943
    %v7340 = vunpack.c.h.b16 %v6943
    %v7341 = vunpack.c.l.b16 %v6944
    %v7342 = vunpack.c.h.b16 %v6944
    %v7343 = vunpack.c.l.b16 %v6945
    %v7344 = vunpack.c.h.b16 %v6945
    %v7345 = vunpack.c.l.b16 %v6946
    %v7346 = vunpack.c.h.b16 %v6946
    %v7347 = vunpack.c.l.b16 %v6947
    %v7348 = vunpack.c.h.b16 %v6947
    %v7349 = vunpack.c.l.b16 %v6948
    %v7350 = vunpack.c.h.b16 %v6948
    %v7351 = vunpack.c.l.b16 %v6949
    %v7352 = vunpack.c.h.b16 %v6949
    %v7353 = vunpack.c.l.b16 %v6950
    %v7354 = vunpack.c.h.b16 %v6950
    %v7355 = vunpack.c.l.b16 %v6951
    %v7356 = vunpack.c.h.b16 %v6951
    %v7357 = vunpack.c.l.b16 %v6952
    %v7358 = vunpack.c.h.b16 %v6952
    %v7359 = vpack.c.b16 %v7107, %v7103
    %v7360 = vpack.c.b16 %v7108, %v7104
    %v7361 = vpack.c.b16 %v7109, %v7105
    %v7362 = vpack.c.b16 %v7110, %v7106
    %v7363 = vpack.c.b16 %v7115, %v7111
    %v7364 = vpack.c.b16 %v7116, %v7112
    %v7365 = vpack.c.b16 %v7117, %v7113
    %v7366 = vpack.c.b16 %v7118, %v7114
    %v7367 = vpack.c.b16 %v7123, %v7119
    %v7368 = vpack.c.b16 %v7124, %v7120
    %v7369 = vpack.c.b16 %v7125, %v7121
    %v7370 = vpack.c.b16 %v7126, %v7122
    %v7371 = vpack.c.b16 %v7131, %v7127
    %v7372 = vpack.c.b16 %v7132, %v7128
    %v7373 = vpack.c.b16 %v7133, %v7129
    %v7374 = vpack.c.b16 %v7134, %v7130
    %v7375 = vpack.c.b16 %v7139, %v7135
    %v7376 = vpack.c.b16 %v7140, %v7136
    %v7377 = vpack.c.b16 %v7141, %v7137
    %v7378 = vpack.c.b16 %v7142, %v7138
    %v7379 = vpack.c.b16 %v7147, %v7143
    %v7380 = vpack.c.b16 %v7148, %v7144
    %v7381 = vpack.c.b16 %v7149, %v7145
    %v7382 = vpack.c.b16 %v7150, %v7146
    %v7383 = vpack.c.b16 %v7155, %v7151
    %v7384 = vpack.c.b16 %v7156, %v7152
    %v7385 = vpack.c.b16 %v7157, %v7153
    %v7386 = vpack.c.b16 %v7158, %v7154
    %v7387 = vpack.c.b16 %v7163, %v7159
    %v7388 = vpack.c.b16 %v7164, %v7160
    %v7389 = vpack.c.b16 %v7165, %v7161
    %v7390 = vpack.c.b16 %v7166, %v7162
    %v7391 = vpack.c.b16 %v7171, %v7167
    %v7392 = vpack.c.b16 %v7172, %v7168
    %v7393 = vpack.c.b16 %v7173, %v7169
    %v7394 = vpack.c.b16 %v7174, %v7170
    %v7395 = vpack.c.b16 %v7179, %v7175
    %v7396 = vpack.c.b16 %v7180, %v7176
    %v7397 = vpack.c.b16 %v7181, %v7177
    %v7398 = vpack.c.b16 %v7182, %v7178
    %v7399 = vpack.c.b16 %v7187, %v7183
    %v7400 = vpack.c.b16 %v7188, %v7184
    %v7401 = vpack.c.b16 %v7189, %v7185
    %v7402 = vpack.c.b16 %v7190, %v7186
    %v7403 = vpack.c.b16 %v7195, %v7191
    %v7404 = vpack.c.b16 %v7196, %v7192
    %v7405 = vpack.c.b16 %v7197, %v7193
    %v7406 = vpack.c.b16 %v7198, %v7194
    %v7407 = vpack.c.b16 %v7203, %v7199
    %v7408 = vpack.c.b16 %v7204, %v7200
    %v7409 = vpack.c.b16 %v7205, %v7201
    %v7410 = vpack.c.b16 %v7206, %v7202
    %v7411 = vpack.c.b16 %v7211, %v7207
    %v7412 = vpack.c.b16 %v7212, %v7208
    %v7413 = vpack.c.b16 %v7213, %v7209
    %v7414 = vpack.c.b16 %v7214, %v7210
    %v7415 = vpack.c.b16 %v7219, %v7215
    %v7416 = vpack.c.b16 %v7220, %v7216
    %v7417 = vpack.c.b16 %v7221, %v7217
    %v7418 = vpack.c.b16 %v7222, %v7218
    %v7419 = vpack.c.b16 %v7227, %v7223
    %v7420 = vpack.c.b16 %v7228, %v7224
    %v7421 = vpack.c.b16 %v7229, %v7225
    %v7422 = vpack.c.b16 %v7230, %v7226
    %v7423 = vpack.c.b16 %v7235, %v7231
    %v7424 = vpack.c.b16 %v7236, %v7232
    %v7425 = vpack.c.b16 %v7237, %v7233
    %v7426 = vpack.c.b16 %v7238, %v7234
    %v7427 = vpack.c.b16 %v7243, %v7239
    %v7428 = vpack.c.b16 %v7244, %v7240
    %v7429 = vpack.c.b16 %v7245, %v7241
    %v7430 = vpack.c.b16 %v7246, %v7242
    %v7431 = vpack.c.b16 %v7251, %v7247
    %v7432 = vpack.c.b16 %v7252, %v7248
    %v7433 = vpack.c.b16 %v7253, %v7249
    %v7434 = vpack.c.b16 %v7254, %v7250
    %v7435 = vpack.c.b16 %v7259, %v7255
    %v7436 = vpack.c.b16 %v7260, %v7256
    %v7437 = vpack.c.b16 %v7261, %v7257
    %v7438 = vpack.c.b16 %v7262, %v7258
    %v7439 = vpack.c.b16 %v7267, %v7263
    %v7440 = vpack.c.b16 %v7268, %v7264
    %v7441 = vpack.c.b16 %v7269, %v7265
    %v7442 = vpack.c.b16 %v7270, %v7266
    %v7443 = vpack.c.b16 %v7275, %v7271
    %v7444 = vpack.c.b16 %v7276, %v7272
    %v7445 = vpack.c.b16 %v7277, %v7273
    %v7446 = vpack.c.b16 %v7278, %v7274
    %v7447 = vpack.c.b16 %v7283, %v7279
    %v7448 = vpack.c.b16 %v7284, %v7280
    %v7449 = vpack.c.b16 %v7285, %v7281
    %v7450 = vpack.c.b16 %v7286, %v7282
    %v7451 = vpack.c.b16 %v7291, %v7287
    %v7452 = vpack.c.b16 %v7292, %v7288
    %v7453 = vpack.c.b16 %v7293, %v7289
    %v7454 = vpack.c.b16 %v7294, %v7290
    %v7455 = vpack.c.b16 %v7299, %v7295
    %v7456 = vpack.c.b16 %v7300, %v7296
    %v7457 = vpack.c.b16 %v7301, %v7297
    %v7458 = vpack.c.b16 %v7302, %v7298
    %v7459 = vpack.c.b16 %v7307, %v7303
    %v7460 = vpack.c.b16 %v7308, %v7304
    %v7461 = vpack.c.b16 %v7309, %v7305
    %v7462 = vpack.c.b16 %v7310, %v7306
    %v7463 = vpack.c.b16 %v7315, %v7311
    %v7464 = vpack.c.b16 %v7316, %v7312
    %v7465 = vpack.c.b16 %v7317, %v7313
    %v7466 = vpack.c.b16 %v7318, %v7314
    %v7467 = vpack.c.b16 %v7323, %v7319
    %v7468 = vpack.c.b16 %v7324, %v7320
    %v7469 = vpack.c.b16 %v7325, %v7321
    %v7470 = vpack.c.b16 %v7326, %v7322
    %v7471 = vpack.c.b16 %v7331, %v7327
    %v7472 = vpack.c.b16 %v7332, %v7328
    %v7473 = vpack.c.b16 %v7333, %v7329
    %v7474 = vpack.c.b16 %v7334, %v7330
    %v7475 = vpack.c.b16 %v7339, %v7335
    %v7476 = vpack.c.b16 %v7340, %v7336
    %v7477 = vpack.c.b16 %v7341, %v7337
    %v7478 = vpack.c.b16 %v7342, %v7338
    %v7479 = vpack.c.b16 %v7347, %v7343
    %v7480 = vpack.c.b16 %v7348, %v7344
    %v7481 = vpack.c.b16 %v7349, %v7345
    %v7482 = vpack.c.b16 %v7350, %v7346
    %v7483 = vpack.c.b16 %v7355, %v7351
    %v7484 = vpack.c.b16 %v7356, %v7352
    %v7485 = vpack.c.b16 %v7357, %v7353
    %v7486 = vpack.c.b16 %v7358, %v7354
    %7615 = vmatprep.subr.bf16.mxu0 %v7360
    %7616 = vmatpush1.bf16.msra.mxu0 %v7359
    %7617 = vmatprep.subr.bf16.mxu0 %v7364
    %7618 = vmatpush1.bf16.msra.mxu0 %v7363
    %7619 = vmatprep.subr.bf16.mxu0 %v7368
    %7620 = vmatpush1.bf16.msra.mxu0 %v7367
    %7621 = vmatprep.subr.bf16.mxu0 %v7372
    %7622 = vmatpush1.bf16.msra.mxu0 %v7371
    %7623 = vmatprep.subr.bf16.mxu0 %v7376
    %7624 = vmatpush1.bf16.msra.mxu0 %v7375
    %7625 = vmatprep.subr.bf16.mxu0 %v7380
    %7626 = vmatpush1.bf16.msra.mxu0 %v7379
    %7627 = vmatprep.subr.bf16.mxu0 %v7384
    %7628 = vmatpush1.bf16.msra.mxu0 %v7383
    %7629 = vmatprep.subr.bf16.mxu0 %v7388
    %7630 = vmatpush1.bf16.msra.mxu0 %v7387
    %7631 = vmatprep.subr.bf16.mxu0 %v7392
    %7632 = vmatpush1.bf16.msra.mxu0 %v7391
    %7633 = vmatprep.subr.bf16.mxu0 %v7396
    %7634 = vmatpush1.bf16.msra.mxu0 %v7395
    %7635 = vmatprep.subr.bf16.mxu0 %v7400
    %7636 = vmatpush1.bf16.msra.mxu0 %v7399
    %7637 = vmatprep.subr.bf16.mxu0 %v7404
    %7638 = vmatpush1.bf16.msra.mxu0 %v7403
    %7639 = vmatprep.subr.bf16.mxu0 %v7408
    %7640 = vmatpush1.bf16.msra.mxu0 %v7407
    %7641 = vmatprep.subr.bf16.mxu0 %v7412
    %7642 = vmatpush1.bf16.msra.mxu0 %v7411
    %7643 = vmatprep.subr.bf16.mxu0 %v7416
    %7644 = vmatpush1.bf16.msra.mxu0 %v7415
    %7645 = vmatprep.subr.bf16.mxu0 %v7420
    %7646 = vmatpush1.bf16.msra.mxu0 %v7419
    %7647 = vmatprep.mubr.bf16.mxu0 %v6822
    %7648 = vmatmul.mubr.bf16.gmra.mrb[0].mxu0 %v6821
    %v7649 = vpop.f32.mrb[0].mxu0
    %v7650 = vadd.f32 %v6958, %v7649
    %v7651 = vpop.f32.mrb[0].mxu0
    %v7652 = vadd.f32 %v6962, %v7651
    %v7653 = vpop.f32.mrb[0].mxu0
    %v7654 = vadd.f32 %v6958, %v7653
    %v7655 = vpop.f32.mrb[0].mxu0
    %v7656 = vadd.f32 %v6962, %v7655
    %7657 = vdwg.mxu0
    %7658 = vmatprep.subr.bf16.mxu0 %v7424
    %7659 = vmatpush1.bf16.msra.mxu0 %v7423
    %7660 = vmatprep.subr.bf16.mxu0 %v7428
    %7661 = vmatpush1.bf16.msra.mxu0 %v7427
    %7662 = vmatprep.subr.bf16.mxu0 %v7432
    %7663 = vmatpush1.bf16.msra.mxu0 %v7431
    %7664 = vmatprep.subr.bf16.mxu0 %v7436
    %7665 = vmatpush1.bf16.msra.mxu0 %v7435
    %7666 = vmatprep.subr.bf16.mxu0 %v7440
    %7667 = vmatpush1.bf16.msra.mxu0 %v7439
    %7668 = vmatprep.subr.bf16.mxu0 %v7444
    %7669 = vmatpush1.bf16.msra.mxu0 %v7443
    %7670 = vmatprep.subr.bf16.mxu0 %v7448
    %7671 = vmatpush1.bf16.msra.mxu0 %v7447
    %7672 = vmatprep.subr.bf16.mxu0 %v7452
    %7673 = vmatpush1.bf16.msra.mxu0 %v7451
    %7674 = vmatprep.subr.bf16.mxu0 %v7456
    %7675 = vmatpush1.bf16.msra.mxu0 %v7455
    %7676 = vmatprep.subr.bf16.mxu0 %v7460
    %7677 = vmatpush1.bf16.msra.mxu0 %v7459
    %7678 = vmatprep.subr.bf16.mxu0 %v7464
    %7679 = vmatpush1.bf16.msra.mxu0 %v7463
    %7680 = vmatprep.subr.bf16.mxu0 %v7468
    %7681 = vmatpush1.bf16.msra.mxu0 %v7467
    %7682 = vmatprep.subr.bf16.mxu0 %v7472
    %7683 = vmatpush1.bf16.msra.mxu0 %v7471
    %7684 = vmatprep.subr.bf16.mxu0 %v7476
    %7685 = vmatpush1.bf16.msra.mxu0 %v7475
    %7686 = vmatprep.subr.bf16.mxu0 %v7480
    %7687 = vmatpush1.bf16.msra.mxu0 %v7479
    %7688 = vmatprep.subr.bf16.mxu0 %v7484
    %7689 = vmatpush1.bf16.msra.mxu0 %v7483
    %7690 = vmatprep.mubr.bf16.mxu0 %v6824
    %7691 = vmatmul.mubr.bf16.gmra.mrb[0].mxu0 %v6823
    %v7692 = vpop.f32.mrb[0].mxu0
    %v7693 = vadd.f32 %v7650, %v7692
    %v7694 = vpop.f32.mrb[0].mxu0
    %v7695 = vadd.f32 %v7652, %v7694
    %v7696 = vpop.f32.mrb[0].mxu0
    %v7697 = vadd.f32 %v7654, %v7696
    %v7698 = vpop.f32.mrb[0].mxu0
    %v7699 = vadd.f32 %v7656, %v7698
    %7700 = vdwg.mxu0
    %7701 = vmatprep.subr.bf16.mxu0 %v7362
    %7702 = vmatpush1.bf16.msra.mxu0 %v7361
    %7703 = vmatprep.subr.bf16.mxu0 %v7366
    %7704 = vmatpush1.bf16.msra.mxu0 %v7365
    %7705 = vmatprep.subr.bf16.mxu0 %v7370
    %7706 = vmatpush1.bf16.msra.mxu0 %v7369
    %7707 = vmatprep.subr.bf16.mxu0 %v7374
    %7708 = vmatpush1.bf16.msra.mxu0 %v7373
    %7709 = vmatprep.subr.bf16.mxu0 %v7378
    %7710 = vmatpush1.bf16.msra.mxu0 %v7377
    %7711 = vmatprep.subr.bf16.mxu0 %v7382
    %7712 = vmatpush1.bf16.msra.mxu0 %v7381
    %7713 = vmatprep.subr.bf16.mxu0 %v7386
    %7714 = vmatpush1.bf16.msra.mxu0 %v7385
    %7715 = vmatprep.subr.bf16.mxu0 %v7390
    %7716 = vmatpush1.bf16.msra.mxu0 %v7389
    %7717 = vmatprep.subr.bf16.mxu0 %v7394
    %7718 = vmatpush1.bf16.msra.mxu0 %v7393
    %7719 = vmatprep.subr.bf16.mxu0 %v7398
    %7720 = vmatpush1.bf16.msra.mxu0 %v7397
    %7721 = vmatprep.subr.bf16.mxu0 %v7402
    %7722 = vmatpush1.bf16.msra.mxu0 %v7401
    %7723 = vmatprep.subr.bf16.mxu0 %v7406
    %7724 = vmatpush1.bf16.msra.mxu0 %v7405
    %7725 = vmatprep.subr.bf16.mxu0 %v7410
    %7726 = vmatpush1.bf16.msra.mxu0 %v7409
    %7727 = vmatprep.subr.bf16.mxu0 %v7414
    %7728 = vmatpush1.bf16.msra.mxu0 %v7413
    %7729 = vmatprep.subr.bf16.mxu0 %v7418
    %7730 = vmatpush1.bf16.msra.mxu0 %v7417
    %7731 = vmatprep.subr.bf16.mxu0 %v7422
    %7732 = vmatpush1.bf16.msra.mxu0 %v7421
    %7733 = vmatprep.mubr.bf16.mxu0 %v6822
    %7734 = vmatmul.mubr.bf16.gmra.mrb[0].mxu0 %v6821
    %v7735 = vpop.f32.mrb[0].mxu0
    %v7736 = vadd.f32 %v6966, %v7735
    %v7737 = vpop.f32.mrb[0].mxu0
    %v7738 = vadd.f32 %v6970, %v7737
    %v7739 = vpop.f32.mrb[0].mxu0
    %v7740 = vadd.f32 %v6966, %v7739
    %v7741 = vpop.f32.mrb[0].mxu0
    %v7742 = vadd.f32 %v6970, %v7741
    %7743 = vdwg.mxu0
    %7744 = vmatprep.subr.bf16.mxu0 %v7426
    %7745 = vmatpush1.bf16.msra.mxu0 %v7425
    %7746 = vmatprep.subr.bf16.mxu0 %v7430
    %7747 = vmatpush1.bf16.msra.mxu0 %v7429
    %7748 = vmatprep.subr.bf16.mxu0 %v7434
    %7749 = vmatpush1.bf16.msra.mxu0 %v7433
    %7750 = vmatprep.subr.bf16.mxu0 %v7438
    %7751 = vmatpush1.bf16.msra.mxu0 %v7437
    %7752 = vmatprep.subr.bf16.mxu0 %v7442
    %7753 = vmatpush1.bf16.msra.mxu0 %v7441
    %7754 = vmatprep.subr.bf16.mxu0 %v7446
    %7755 = vmatpush1.bf16.msra.mxu0 %v7445
    %7756 = vmatprep.subr.bf16.mxu0 %v7450
    %7757 = vmatpush1.bf16.msra.mxu0 %v7449
    %7758 = vmatprep.subr.bf16.mxu0 %v7454
    %7759 = vmatpush1.bf16.msra.mxu0 %v7453
    %7760 = vmatprep.subr.bf16.mxu0 %v7458
    %7761 = vmatpush1.bf16.msra.mxu0 %v7457
    %7762 = vmatprep.subr.bf16.mxu0 %v7462
    %7763 = vmatpush1.bf16.msra.mxu0 %v7461
    %7764 = vmatprep.subr.bf16.mxu0 %v7466
    %7765 = vmatpush1.bf16.msra.mxu0 %v7465
    %7766 = vmatprep.subr.bf16.mxu0 %v7470
    %7767 = vmatpush1.bf16.msra.mxu0 %v7469
    %7768 = vmatprep.subr.bf16.mxu0 %v7474
    %7769 = vmatpush1.bf16.msra.mxu0 %v7473
    %7770 = vmatprep.subr.bf16.mxu0 %v7478
    %7771 = vmatpush1.bf16.msra.mxu0 %v7477
    %7772 = vmatprep.subr.bf16.mxu0 %v7482
    %7773 = vmatpush1.bf16.msra.mxu0 %v7481
    %7774 = vmatprep.subr.bf16.mxu0 %v7486
    %7775 = vmatpush1.bf16.msra.mxu0 %v7485
    %7776 = vmatprep.mubr.bf16.mxu0 %v6824
    %7777 = vmatmul.mubr.bf16.gmra.mrb[0].mxu0 %v6823
    %v7778 = vpop.f32.mrb[0].mxu0
    %v7779 = vadd.f32 %v7736, %v7778
    %v7780 = vpop.f32.mrb[0].mxu0
    %v7781 = vadd.f32 %v7738, %v7780
    %v7782 = vpop.f32.mrb[0].mxu0
    %v7783 = vadd.f32 %v7740, %v7782
    %v7784 = vpop.f32.mrb[0].mxu0
    %v7785 = vadd.f32 %v7742, %v7784
    %7786 = vdwg.mxu0
    %v7787 = vmax.f32 %v7693, 0.0
    %v7788 = vmax.f32 %v7695, 0.0
    %v7789 = vmax.f32 %v7779, 0.0
    %v7790 = vmax.f32 %v7781, 0.0
    %v7791 = vmax.f32 %v7697, 0.0
    %v7792 = vmax.f32 %v7699, 0.0
    %v7793 = vmax.f32 %v7783, 0.0
    %v7794 = vmax.f32 %v7785, 0.0
    %v7795 = vpack.c.bf16 %v7791, %v7787
    %v7796 = vpack.c.bf16 %v7792, %v7788
    %v7797 = vpack.c.bf16 %v7793, %v7789
    %v7798 = vpack.c.bf16 %v7794, %v7790
    %v7799 = vld [vmem:[#allocation23] sm:$0xff]
    %v7800 = vld [vmem:[#allocation23 + $0x8] sm:$0xff]
    %v7801 = vld [vmem:[#allocation23 + $0x10] sm:$0xff]
    %v7802 = vld [vmem:[#allocation23 + $0x18] sm:$0xff]
    %v7803 = vld [vmem:[#allocation23 + $0x20] sm:$0xff]
    %v7804 = vld [vmem:[#allocation23 + $0x28] sm:$0xff]
    %v7805 = vld [vmem:[#allocation23 + $0x30] sm:$0xff]
    %v7806 = vld [vmem:[#allocation23 + $0x38] sm:$0xff]
    %v7807 = vld [vmem:[#allocation23 + $0x40] sm:$0xff]
    %v7808 = vld [vmem:[#allocation23 + $0x48] sm:$0xff]
    %v7809 = vld [vmem:[#allocation23 + $0x50] sm:$0xff]
    %v7810 = vld [vmem:[#allocation23 + $0x58] sm:$0xff]
    %v7811 = vld [vmem:[#allocation23 + $0x60] sm:$0xff]
    %v7812 = vld [vmem:[#allocation23 + $0x68] sm:$0xff]
    %v7813 = vld [vmem:[#allocation23 + $0x70] sm:$0xff]
    %v7814 = vld [vmem:[#allocation23 + $0x78] sm:$0xff]
    %v7815 = vld [vmem:[#allocation23 + $0x80] sm:$0xff]
    %v7816 = vld [vmem:[#allocation23 + $0x88] sm:$0xff]
    %v7817 = vld [vmem:[#allocation23 + $0x90] sm:$0xff]
    %v7818 = vld [vmem:[#allocation23 + $0x98] sm:$0xff]
    %v7819 = vld [vmem:[#allocation23 + $0xa0] sm:$0xff]
    %v7820 = vld [vmem:[#allocation23 + $0xa8] sm:$0xff]
    %v7821 = vld [vmem:[#allocation23 + $0xb0] sm:$0xff]
    %v7822 = vld [vmem:[#allocation23 + $0xb8] sm:$0xff]
    %v7823 = vld [vmem:[#allocation23 + $0xc0] sm:$0xff]
    %v7824 = vld [vmem:[#allocation23 + $0xc8] sm:$0xff]
    %v7825 = vld [vmem:[#allocation23 + $0xd0] sm:$0xff]
    %v7826 = vld [vmem:[#allocation23 + $0xd8] sm:$0xff]
    %v7827 = vld [vmem:[#allocation23 + $0xe0] sm:$0xff]
    %v7828 = vld [vmem:[#allocation23 + $0xe8] sm:$0xff]
    %v7829 = vld [vmem:[#allocation23 + $0xf0] sm:$0xff]
    %v7830 = vld [vmem:[#allocation23 + $0xf8] sm:$0xff]
    %v7831 = vld [vmem:[#allocation23 + $0x100] sm:$0xff]
    %v7832 = vld [vmem:[#allocation23 + $0x108] sm:$0xff]
    %v7833 = vld [vmem:[#allocation23 + $0x110] sm:$0xff]
    %v7834 = vld [vmem:[#allocation23 + $0x118] sm:$0xff]
    %v7835 = vld [vmem:[#allocation23 + $0x120] sm:$0xff]
    %v7836 = vld [vmem:[#allocation23 + $0x128] sm:$0xff]
    %v7837 = vld [vmem:[#allocation23 + $0x130] sm:$0xff]
    %v7838 = vld [vmem:[#allocation23 + $0x138] sm:$0xff]
    %v7839 = vld [vmem:[#allocation23 + $0x140] sm:$0xff]
    %v7840 = vld [vmem:[#allocation23 + $0x148] sm:$0xff]
    %v7841 = vld [vmem:[#allocation23 + $0x150] sm:$0xff]
    %v7842 = vld [vmem:[#allocation23 + $0x158] sm:$0xff]
    %v7843 = vld [vmem:[#allocation23 + $0x160] sm:$0xff]
    %v7844 = vld [vmem:[#allocation23 + $0x168] sm:$0xff]
    %v7845 = vld [vmem:[#allocation23 + $0x170] sm:$0xff]
    %v7846 = vld [vmem:[#allocation23 + $0x178] sm:$0xff]
    %v7847 = vld [vmem:[#allocation23 + $0x180] sm:$0xff]
    %v7848 = vld [vmem:[#allocation23 + $0x188] sm:$0xff]
    %v7849 = vld [vmem:[#allocation23 + $0x190] sm:$0xff]
    %v7850 = vld [vmem:[#allocation23 + $0x198] sm:$0xff]
    %v7851 = vld [vmem:[#allocation23 + $0x1a0] sm:$0xff]
    %v7852 = vld [vmem:[#allocation23 + $0x1a8] sm:$0xff]
    %v7853 = vld [vmem:[#allocation23 + $0x1b0] sm:$0xff]
    %v7854 = vld [vmem:[#allocation23 + $0x1b8] sm:$0xff]
    %v7855 = vld [vmem:[#allocation23 + $0x1c0] sm:$0xff]
    %v7856 = vld [vmem:[#allocation23 + $0x1c8] sm:$0xff]
    %v7857 = vld [vmem:[#allocation23 + $0x1d0] sm:$0xff]
    %v7858 = vld [vmem:[#allocation23 + $0x1d8] sm:$0xff]
    %v7859 = vld [vmem:[#allocation23 + $0x1e0] sm:$0xff]
    %v7860 = vld [vmem:[#allocation23 + $0x1e8] sm:$0xff]
    %v7861 = vld [vmem:[#allocation23 + $0x1f0] sm:$0xff]
    %v7862 = vld [vmem:[#allocation23 + $0x1f8] sm:$0xff]
    %v7863 = vld [vmem:[#allocation23 + $0x200] sm:$0xff]
    %v7864 = vld [vmem:[#allocation23 + $0x208] sm:$0xff]
    %v7865 = vld [vmem:[#allocation23 + $0x210] sm:$0xff]
    %v7866 = vld [vmem:[#allocation23 + $0x218] sm:$0xff]
    %v7867 = vld [vmem:[#allocation23 + $0x220] sm:$0xff]
    %v7868 = vld [vmem:[#allocation23 + $0x228] sm:$0xff]
    %v7869 = vld [vmem:[#allocation23 + $0x230] sm:$0xff]
    %v7870 = vld [vmem:[#allocation23 + $0x238] sm:$0xff]
    %v7871 = vld [vmem:[#allocation23 + $0x240] sm:$0xff]
    %v7872 = vld [vmem:[#allocation23 + $0x248] sm:$0xff]
    %v7873 = vld [vmem:[#allocation23 + $0x250] sm:$0xff]
    %v7874 = vld [vmem:[#allocation23 + $0x258] sm:$0xff]
    %v7875 = vld [vmem:[#allocation23 + $0x260] sm:$0xff]
    %v7876 = vld [vmem:[#allocation23 + $0x268] sm:$0xff]
    %v7877 = vld [vmem:[#allocation23 + $0x270] sm:$0xff]
    %v7878 = vld [vmem:[#allocation23 + $0x278] sm:$0xff]
    %v7879 = vld [vmem:[#allocation23 + $0x280] sm:$0xff]
    %v7880 = vld [vmem:[#allocation23 + $0x288] sm:$0xff]
    %v7881 = vld [vmem:[#allocation23 + $0x290] sm:$0xff]
    %v7882 = vld [vmem:[#allocation23 + $0x298] sm:$0xff]
    %v7883 = vld [vmem:[#allocation23 + $0x2a0] sm:$0xff]
    %v7884 = vld [vmem:[#allocation23 + $0x2a8] sm:$0xff]
    %v7885 = vld [vmem:[#allocation23 + $0x2b0] sm:$0xff]
    %v7886 = vld [vmem:[#allocation23 + $0x2b8] sm:$0xff]
    %v7887 = vld [vmem:[#allocation23 + $0x2c0] sm:$0xff]
    %v7888 = vld [vmem:[#allocation23 + $0x2c8] sm:$0xff]
    %v7889 = vld [vmem:[#allocation23 + $0x2d0] sm:$0xff]
    %v7890 = vld [vmem:[#allocation23 + $0x2d8] sm:$0xff]
    %v7891 = vld [vmem:[#allocation23 + $0x2e0] sm:$0xff]
    %v7892 = vld [vmem:[#allocation23 + $0x2e8] sm:$0xff]
    %v7893 = vld [vmem:[#allocation23 + $0x2f0] sm:$0xff]
    %v7894 = vld [vmem:[#allocation23 + $0x2f8] sm:$0xff]
    %v7895 = vld [vmem:[#allocation23 + $0x300] sm:$0xff]
    %v7896 = vld [vmem:[#allocation23 + $0x308] sm:$0xff]
    %v7897 = vld [vmem:[#allocation23 + $0x310] sm:$0xff]
    %v7898 = vld [vmem:[#allocation23 + $0x318] sm:$0xff]
    %v7899 = vld [vmem:[#allocation23 + $0x320] sm:$0xff]
    %v7900 = vld [vmem:[#allocation23 + $0x328] sm:$0xff]
    %v7901 = vld [vmem:[#allocation23 + $0x330] sm:$0xff]
    %v7902 = vld [vmem:[#allocation23 + $0x338] sm:$0xff]
    %v7903 = vld [vmem:[#allocation23 + $0x340] sm:$0xff]
    %v7904 = vld [vmem:[#allocation23 + $0x348] sm:$0xff]
    %v7905 = vld [vmem:[#allocation23 + $0x350] sm:$0xff]
    %v7906 = vld [vmem:[#allocation23 + $0x358] sm:$0xff]
    %v7907 = vld [vmem:[#allocation23 + $0x360] sm:$0xff]
    %v7908 = vld [vmem:[#allocation23 + $0x368] sm:$0xff]
    %v7909 = vld [vmem:[#allocation23 + $0x370] sm:$0xff]
    %v7910 = vld [vmem:[#allocation23 + $0x378] sm:$0xff]
    %v7911 = vld [vmem:[#allocation23 + $0x380] sm:$0xff]
    %v7912 = vld [vmem:[#allocation23 + $0x388] sm:$0xff]
    %v7913 = vld [vmem:[#allocation23 + $0x390] sm:$0xff]
    %v7914 = vld [vmem:[#allocation23 + $0x398] sm:$0xff]
    %v7915 = vld [vmem:[#allocation23 + $0x3a0] sm:$0xff]
    %v7916 = vld [vmem:[#allocation23 + $0x3a8] sm:$0xff]
    %v7917 = vld [vmem:[#allocation23 + $0x3b0] sm:$0xff]
    %v7918 = vld [vmem:[#allocation23 + $0x3b8] sm:$0xff]
    %v7919 = vld [vmem:[#allocation23 + $0x3c0] sm:$0xff]
    %v7920 = vld [vmem:[#allocation23 + $0x3c8] sm:$0xff]
    %v7921 = vld [vmem:[#allocation23 + $0x3d0] sm:$0xff]
    %v7922 = vld [vmem:[#allocation23 + $0x3d8] sm:$0xff]
    %v7923 = vld [vmem:[#allocation23 + $0x3e0] sm:$0xff]
    %v7924 = vld [vmem:[#allocation23 + $0x3e8] sm:$0xff]
    %v7925 = vld [vmem:[#allocation23 + $0x3f0] sm:$0xff]
    %v7926 = vld [vmem:[#allocation23 + $0x3f8] sm:$0xff]
    %v7927 = vld [vmem:[#allocation25] sm:$0xf]
    %v7929 = vlaneseq
    %v7930 = vshrl.u32 %v7929, 7
    %v7931 = vsub.s32 0, %v7930
    %v7932 = vrot.slane %v7927, %v7931
    %v7933 = vlaneseq
    %v7934 = vshrl.u32 %v7933, 7
    %v7935 = vsub.s32 1, %v7934
    %v7936 = vrot.slane %v7927, %v7935
    %v7937 = vlaneseq
    %v7938 = vshrl.u32 %v7937, 7
    %v7939 = vsub.s32 2, %v7938
    %v7940 = vrot.slane %v7927, %v7939
    %v7941 = vlaneseq
    %v7942 = vshrl.u32 %v7941, 7
    %v7943 = vsub.s32 3, %v7942
    %v7944 = vrot.slane %v7927, %v7943
    %v8077 = vunpack.c.l.b16 %v7799
    %v8078 = vunpack.c.h.b16 %v7799
    %v8079 = vunpack.c.l.b16 %v7800
    %v8080 = vunpack.c.h.b16 %v7800
    %v8081 = vunpack.c.l.b16 %v7801
    %v8082 = vunpack.c.h.b16 %v7801
    %v8083 = vunpack.c.l.b16 %v7802
    %v8084 = vunpack.c.h.b16 %v7802
    %v8085 = vunpack.c.l.b16 %v7803
    %v8086 = vunpack.c.h.b16 %v7803
    %v8087 = vunpack.c.l.b16 %v7804
    %v8088 = vunpack.c.h.b16 %v7804
    %v8089 = vunpack.c.l.b16 %v7805
    %v8090 = vunpack.c.h.b16 %v7805
    %v8091 = vunpack.c.l.b16 %v7806
    %v8092 = vunpack.c.h.b16 %v7806
    %v8093 = vunpack.c.l.b16 %v7807
    %v8094 = vunpack.c.h.b16 %v7807
    %v8095 = vunpack.c.l.b16 %v7808
    %v8096 = vunpack.c.h.b16 %v7808
    %v8097 = vunpack.c.l.b16 %v7809
    %v8098 = vunpack.c.h.b16 %v7809
    %v8099 = vunpack.c.l.b16 %v7810
    %v8100 = vunpack.c.h.b16 %v7810
    %v8101 = vunpack.c.l.b16 %v7811
    %v8102 = vunpack.c.h.b16 %v7811
    %v8103 = vunpack.c.l.b16 %v7812
    %v8104 = vunpack.c.h.b16 %v7812
    %v8105 = vunpack.c.l.b16 %v7813
    %v8106 = vunpack.c.h.b16 %v7813
    %v8107 = vunpack.c.l.b16 %v7814
    %v8108 = vunpack.c.h.b16 %v7814
    %v8109 = vunpack.c.l.b16 %v7815
    %v8110 = vunpack.c.h.b16 %v7815
    %v8111 = vunpack.c.l.b16 %v7816
    %v8112 = vunpack.c.h.b16 %v7816
    %v8113 = vunpack.c.l.b16 %v7817
    %v8114 = vunpack.c.h.b16 %v7817
    %v8115 = vunpack.c.l.b16 %v7818
    %v8116 = vunpack.c.h.b16 %v7818
    %v8117 = vunpack.c.l.b16 %v7819
    %v8118 = vunpack.c.h.b16 %v7819
    %v8119 = vunpack.c.l.b16 %v7820
    %v8120 = vunpack.c.h.b16 %v7820
    %v8121 = vunpack.c.l.b16 %v7821
    %v8122 = vunpack.c.h.b16 %v7821
    %v8123 = vunpack.c.l.b16 %v7822
    %v8124 = vunpack.c.h.b16 %v7822
    %v8125 = vunpack.c.l.b16 %v7823
    %v8126 = vunpack.c.h.b16 %v7823
    %v8127 = vunpack.c.l.b16 %v7824
    %v8128 = vunpack.c.h.b16 %v7824
    %v8129 = vunpack.c.l.b16 %v7825
    %v8130 = vunpack.c.h.b16 %v7825
    %v8131 = vunpack.c.l.b16 %v7826
    %v8132 = vunpack.c.h.b16 %v7826
    %v8133 = vunpack.c.l.b16 %v7827
    %v8134 = vunpack.c.h.b16 %v7827
    %v8135 = vunpack.c.l.b16 %v7828
    %v8136 = vunpack.c.h.b16 %v7828
    %v8137 = vunpack.c.l.b16 %v7829
    %v8138 = vunpack.c.h.b16 %v7829
    %v8139 = vunpack.c.l.b16 %v7830
    %v8140 = vunpack.c.h.b16 %v7830
    %v8141 = vunpack.c.l.b16 %v7831
    %v8142 = vunpack.c.h.b16 %v7831
    %v8143 = vunpack.c.l.b16 %v7832
    %v8144 = vunpack.c.h.b16 %v7832
    %v8145 = vunpack.c.l.b16 %v7833
    %v8146 = vunpack.c.h.b16 %v7833
    %v8147 = vunpack.c.l.b16 %v7834
    %v8148 = vunpack.c.h.b16 %v7834
    %v8149 = vunpack.c.l.b16 %v7835
    %v8150 = vunpack.c.h.b16 %v7835
    %v8151 = vunpack.c.l.b16 %v7836
    %v8152 = vunpack.c.h.b16 %v7836
    %v8153 = vunpack.c.l.b16 %v7837
    %v8154 = vunpack.c.h.b16 %v7837
    %v8155 = vunpack.c.l.b16 %v7838
    %v8156 = vunpack.c.h.b16 %v7838
    %v8157 = vunpack.c.l.b16 %v7839
    %v8158 = vunpack.c.h.b16 %v7839
    %v8159 = vunpack.c.l.b16 %v7840
    %v8160 = vunpack.c.h.b16 %v7840
    %v8161 = vunpack.c.l.b16 %v7841
    %v8162 = vunpack.c.h.b16 %v7841
    %v8163 = vunpack.c.l.b16 %v7842
    %v8164 = vunpack.c.h.b16 %v7842
    %v8165 = vunpack.c.l.b16 %v7843
    %v8166 = vunpack.c.h.b16 %v7843
    %v8167 = vunpack.c.l.b16 %v7844
    %v8168 = vunpack.c.h.b16 %v7844
    %v8169 = vunpack.c.l.b16 %v7845
    %v8170 = vunpack.c.h.b16 %v7845
    %v8171 = vunpack.c.l.b16 %v7846
    %v8172 = vunpack.c.h.b16 %v7846
    %v8173 = vunpack.c.l.b16 %v7847
    %v8174 = vunpack.c.h.b16 %v7847
    %v8175 = vunpack.c.l.b16 %v7848
    %v8176 = vunpack.c.h.b16 %v7848
    %v8177 = vunpack.c.l.b16 %v7849
    %v8178 = vunpack.c.h.b16 %v7849
    %v8179 = vunpack.c.l.b16 %v7850
    %v8180 = vunpack.c.h.b16 %v7850
    %v8181 = vunpack.c.l.b16 %v7851
    %v8182 = vunpack.c.h.b16 %v7851
    %v8183 = vunpack.c.l.b16 %v7852
    %v8184 = vunpack.c.h.b16 %v7852
    %v8185 = vunpack.c.l.b16 %v7853
    %v8186 = vunpack.c.h.b16 %v7853
    %v8187 = vunpack.c.l.b16 %v7854
    %v8188 = vunpack.c.h.b16 %v7854
    %v8189 = vunpack.c.l.b16 %v7855
    %v8190 = vunpack.c.h.b16 %v7855
    %v8191 = vunpack.c.l.b16 %v7856
    %v8192 = vunpack.c.h.b16 %v7856
    %v8193 = vunpack.c.l.b16 %v7857
    %v8194 = vunpack.c.h.b16 %v7857
    %v8195 = vunpack.c.l.b16 %v7858
    %v8196 = vunpack.c.h.b16 %v7858
    %v8197 = vunpack.c.l.b16 %v7859
    %v8198 = vunpack.c.h.b16 %v7859
    %v8199 = vunpack.c.l.b16 %v7860
    %v8200 = vunpack.c.h.b16 %v7860
    %v8201 = vunpack.c.l.b16 %v7861
    %v8202 = vunpack.c.h.b16 %v7861
    %v8203 = vunpack.c.l.b16 %v7862
    %v8204 = vunpack.c.h.b16 %v7862
    %v8205 = vunpack.c.l.b16 %v7863
    %v8206 = vunpack.c.h.b16 %v7863
    %v8207 = vunpack.c.l.b16 %v7864
    %v8208 = vunpack.c.h.b16 %v7864
    %v8209 = vunpack.c.l.b16 %v7865
    %v8210 = vunpack.c.h.b16 %v7865
    %v8211 = vunpack.c.l.b16 %v7866
    %v8212 = vunpack.c.h.b16 %v7866
    %v8213 = vunpack.c.l.b16 %v7867
    %v8214 = vunpack.c.h.b16 %v7867
    %v8215 = vunpack.c.l.b16 %v7868
    %v8216 = vunpack.c.h.b16 %v7868
    %v8217 = vunpack.c.l.b16 %v7869
    %v8218 = vunpack.c.h.b16 %v7869
    %v8219 = vunpack.c.l.b16 %v7870
    %v8220 = vunpack.c.h.b16 %v7870
    %v8221 = vunpack.c.l.b16 %v7871
    %v8222 = vunpack.c.h.b16 %v7871
    %v8223 = vunpack.c.l.b16 %v7872
    %v8224 = vunpack.c.h.b16 %v7872
    %v8225 = vunpack.c.l.b16 %v7873
    %v8226 = vunpack.c.h.b16 %v7873
    %v8227 = vunpack.c.l.b16 %v7874
    %v8228 = vunpack.c.h.b16 %v7874
    %v8229 = vunpack.c.l.b16 %v7875
    %v8230 = vunpack.c.h.b16 %v7875
    %v8231 = vunpack.c.l.b16 %v7876
    %v8232 = vunpack.c.h.b16 %v7876
    %v8233 = vunpack.c.l.b16 %v7877
    %v8234 = vunpack.c.h.b16 %v7877
    %v8235 = vunpack.c.l.b16 %v7878
    %v8236 = vunpack.c.h.b16 %v7878
    %v8237 = vunpack.c.l.b16 %v7879
    %v8238 = vunpack.c.h.b16 %v7879
    %v8239 = vunpack.c.l.b16 %v7880
    %v8240 = vunpack.c.h.b16 %v7880
    %v8241 = vunpack.c.l.b16 %v7881
    %v8242 = vunpack.c.h.b16 %v7881
    %v8243 = vunpack.c.l.b16 %v7882
    %v8244 = vunpack.c.h.b16 %v7882
    %v8245 = vunpack.c.l.b16 %v7883
    %v8246 = vunpack.c.h.b16 %v7883
    %v8247 = vunpack.c.l.b16 %v7884
    %v8248 = vunpack.c.h.b16 %v7884
    %v8249 = vunpack.c.l.b16 %v7885
    %v8250 = vunpack.c.h.b16 %v7885
    %v8251 = vunpack.c.l.b16 %v7886
    %v8252 = vunpack.c.h.b16 %v7886
    %v8253 = vunpack.c.l.b16 %v7887
    %v8254 = vunpack.c.h.b16 %v7887
    %v8255 = vunpack.c.l.b16 %v7888
    %v8256 = vunpack.c.h.b16 %v7888
    %v8257 = vunpack.c.l.b16 %v7889
    %v8258 = vunpack.c.h.b16 %v7889
    %v8259 = vunpack.c.l.b16 %v7890
    %v8260 = vunpack.c.h.b16 %v7890
    %v8261 = vunpack.c.l.b16 %v7891
    %v8262 = vunpack.c.h.b16 %v7891
    %v8263 = vunpack.c.l.b16 %v7892
    %v8264 = vunpack.c.h.b16 %v7892
    %v8265 = vunpack.c.l.b16 %v7893
    %v8266 = vunpack.c.h.b16 %v7893
    %v8267 = vunpack.c.l.b16 %v7894
    %v8268 = vunpack.c.h.b16 %v7894
    %v8269 = vunpack.c.l.b16 %v7895
    %v8270 = vunpack.c.h.b16 %v7895
    %v8271 = vunpack.c.l.b16 %v7896
    %v8272 = vunpack.c.h.b16 %v7896
    %v8273 = vunpack.c.l.b16 %v7897
    %v8274 = vunpack.c.h.b16 %v7897
    %v8275 = vunpack.c.l.b16 %v7898
    %v8276 = vunpack.c.h.b16 %v7898
    %v8277 = vunpack.c.l.b16 %v7899
    %v8278 = vunpack.c.h.b16 %v7899
    %v8279 = vunpack.c.l.b16 %v7900
    %v8280 = vunpack.c.h.b16 %v7900
    %v8281 = vunpack.c.l.b16 %v7901
    %v8282 = vunpack.c.h.b16 %v7901
    %v8283 = vunpack.c.l.b16 %v7902
    %v8284 = vunpack.c.h.b16 %v7902
    %v8285 = vunpack.c.l.b16 %v7903
    %v8286 = vunpack.c.h.b16 %v7903
    %v8287 = vunpack.c.l.b16 %v7904
    %v8288 = vunpack.c.h.b16 %v7904
    %v8289 = vunpack.c.l.b16 %v7905
    %v8290 = vunpack.c.h.b16 %v7905
    %v8291 = vunpack.c.l.b16 %v7906
    %v8292 = vunpack.c.h.b16 %v7906
    %v8293 = vunpack.c.l.b16 %v7907
    %v8294 = vunpack.c.h.b16 %v7907
    %v8295 = vunpack.c.l.b16 %v7908
    %v8296 = vunpack.c.h.b16 %v7908
    %v8297 = vunpack.c.l.b16 %v7909
    %v8298 = vunpack.c.h.b16 %v7909
    %v8299 = vunpack.c.l.b16 %v7910
    %v8300 = vunpack.c.h.b16 %v7910
    %v8301 = vunpack.c.l.b16 %v7911
    %v8302 = vunpack.c.h.b16 %v7911
    %v8303 = vunpack.c.l.b16 %v7912
    %v8304 = vunpack.c.h.b16 %v7912
    %v8305 = vunpack.c.l.b16 %v7913
    %v8306 = vunpack.c.h.b16 %v7913
    %v8307 = vunpack.c.l.b16 %v7914
    %v8308 = vunpack.c.h.b16 %v7914
    %v8309 = vunpack.c.l.b16 %v7915
    %v8310 = vunpack.c.h.b16 %v7915
    %v8311 = vunpack.c.l.b16 %v7916
    %v8312 = vunpack.c.h.b16 %v7916
    %v8313 = vunpack.c.l.b16 %v7917
    %v8314 = vunpack.c.h.b16 %v7917
    %v8315 = vunpack.c.l.b16 %v7918
    %v8316 = vunpack.c.h.b16 %v7918
    %v8317 = vunpack.c.l.b16 %v7919
    %v8318 = vunpack.c.h.b16 %v7919
    %v8319 = vunpack.c.l.b16 %v7920
    %v8320 = vunpack.c.h.b16 %v7920
    %v8321 = vunpack.c.l.b16 %v7921
    %v8322 = vunpack.c.h.b16 %v7921
    %v8323 = vunpack.c.l.b16 %v7922
    %v8324 = vunpack.c.h.b16 %v7922
    %v8325 = vunpack.c.l.b16 %v7923
    %v8326 = vunpack.c.h.b16 %v7923
    %v8327 = vunpack.c.l.b16 %v7924
    %v8328 = vunpack.c.h.b16 %v7924
    %v8329 = vunpack.c.l.b16 %v7925
    %v8330 = vunpack.c.h.b16 %v7925
    %v8331 = vunpack.c.l.b16 %v7926
    %v8332 = vunpack.c.h.b16 %v7926
    %v8333 = vpack.c.b16 %v8081, %v8077
    %v8334 = vpack.c.b16 %v8082, %v8078
    %v8335 = vpack.c.b16 %v8083, %v8079
    %v8336 = vpack.c.b16 %v8084, %v8080
    %v8337 = vpack.c.b16 %v8089, %v8085
    %v8338 = vpack.c.b16 %v8090, %v8086
    %v8339 = vpack.c.b16 %v8091, %v8087
    %v8340 = vpack.c.b16 %v8092, %v8088
    %v8341 = vpack.c.b16 %v8097, %v8093
    %v8342 = vpack.c.b16 %v8098, %v8094
    %v8343 = vpack.c.b16 %v8099, %v8095
    %v8344 = vpack.c.b16 %v8100, %v8096
    %v8345 = vpack.c.b16 %v8105, %v8101
    %v8346 = vpack.c.b16 %v8106, %v8102
    %v8347 = vpack.c.b16 %v8107, %v8103
    %v8348 = vpack.c.b16 %v8108, %v8104
    %v8349 = vpack.c.b16 %v8113, %v8109
    %v8350 = vpack.c.b16 %v8114, %v8110
    %v8351 = vpack.c.b16 %v8115, %v8111
    %v8352 = vpack.c.b16 %v8116, %v8112
    %v8353 = vpack.c.b16 %v8121, %v8117
    %v8354 = vpack.c.b16 %v8122, %v8118
    %v8355 = vpack.c.b16 %v8123, %v8119
    %v8356 = vpack.c.b16 %v8124, %v8120
    %v8357 = vpack.c.b16 %v8129, %v8125
    %v8358 = vpack.c.b16 %v8130, %v8126
    %v8359 = vpack.c.b16 %v8131, %v8127
    %v8360 = vpack.c.b16 %v8132, %v8128
    %v8361 = vpack.c.b16 %v8137, %v8133
    %v8362 = vpack.c.b16 %v8138, %v8134
    %v8363 = vpack.c.b16 %v8139, %v8135
    %v8364 = vpack.c.b16 %v8140, %v8136
    %v8365 = vpack.c.b16 %v8145, %v8141
    %v8366 = vpack.c.b16 %v8146, %v8142
    %v8367 = vpack.c.b16 %v8147, %v8143
    %v8368 = vpack.c.b16 %v8148, %v8144
    %v8369 = vpack.c.b16 %v8153, %v8149
    %v8370 = vpack.c.b16 %v8154, %v8150
    %v8371 = vpack.c.b16 %v8155, %v8151
    %v8372 = vpack.c.b16 %v8156, %v8152
    %v8373 = vpack.c.b16 %v8161, %v8157
    %v8374 = vpack.c.b16 %v8162, %v8158
    %v8375 = vpack.c.b16 %v8163, %v8159
    %v8376 = vpack.c.b16 %v8164, %v8160
    %v8377 = vpack.c.b16 %v8169, %v8165
    %v8378 = vpack.c.b16 %v8170, %v8166
    %v8379 = vpack.c.b16 %v8171, %v8167
    %v8380 = vpack.c.b16 %v8172, %v8168
    %v8381 = vpack.c.b16 %v8177, %v8173
    %v8382 = vpack.c.b16 %v8178, %v8174
    %v8383 = vpack.c.b16 %v8179, %v8175
    %v8384 = vpack.c.b16 %v8180, %v8176
    %v8385 = vpack.c.b16 %v8185, %v8181
    %v8386 = vpack.c.b16 %v8186, %v8182
    %v8387 = vpack.c.b16 %v8187, %v8183
    %v8388 = vpack.c.b16 %v8188, %v8184
    %v8389 = vpack.c.b16 %v8193, %v8189
    %v8390 = vpack.c.b16 %v8194, %v8190
    %v8391 = vpack.c.b16 %v8195, %v8191
    %v8392 = vpack.c.b16 %v8196, %v8192
    %v8393 = vpack.c.b16 %v8201, %v8197
    %v8394 = vpack.c.b16 %v8202, %v8198
    %v8395 = vpack.c.b16 %v8203, %v8199
    %v8396 = vpack.c.b16 %v8204, %v8200
    %v8397 = vpack.c.b16 %v8209, %v8205
    %v8398 = vpack.c.b16 %v8210, %v8206
    %v8399 = vpack.c.b16 %v8211, %v8207
    %v8400 = vpack.c.b16 %v8212, %v8208
    %v8401 = vpack.c.b16 %v8217, %v8213
    %v8402 = vpack.c.b16 %v8218, %v8214
    %v8403 = vpack.c.b16 %v8219, %v8215
    %v8404 = vpack.c.b16 %v8220, %v8216
    %v8405 = vpack.c.b16 %v8225, %v8221
    %v8406 = vpack.c.b16 %v8226, %v8222
    %v8407 = vpack.c.b16 %v8227, %v8223
    %v8408 = vpack.c.b16 %v8228, %v8224
    %v8409 = vpack.c.b16 %v8233, %v8229
    %v8410 = vpack.c.b16 %v8234, %v8230
    %v8411 = vpack.c.b16 %v8235, %v8231
    %v8412 = vpack.c.b16 %v8236, %v8232
    %v8413 = vpack.c.b16 %v8241, %v8237
    %v8414 = vpack.c.b16 %v8242, %v8238
    %v8415 = vpack.c.b16 %v8243, %v8239
    %v8416 = vpack.c.b16 %v8244, %v8240
    %v8417 = vpack.c.b16 %v8249, %v8245
    %v8418 = vpack.c.b16 %v8250, %v8246
    %v8419 = vpack.c.b16 %v8251, %v8247
    %v8420 = vpack.c.b16 %v8252, %v8248
    %v8421 = vpack.c.b16 %v8257, %v8253
    %v8422 = vpack.c.b16 %v8258, %v8254
    %v8423 = vpack.c.b16 %v8259, %v8255
    %v8424 = vpack.c.b16 %v8260, %v8256
    %v8425 = vpack.c.b16 %v8265, %v8261
    %v8426 = vpack.c.b16 %v8266, %v8262
    %v8427 = vpack.c.b16 %v8267, %v8263
    %v8428 = vpack.c.b16 %v8268, %v8264
    %v8429 = vpack.c.b16 %v8273, %v8269
    %v8430 = vpack.c.b16 %v8274, %v8270
    %v8431 = vpack.c.b16 %v8275, %v8271
    %v8432 = vpack.c.b16 %v8276, %v8272
    %v8433 = vpack.c.b16 %v8281, %v8277
    %v8434 = vpack.c.b16 %v8282, %v8278
    %v8435 = vpack.c.b16 %v8283, %v8279
    %v8436 = vpack.c.b16 %v8284, %v8280
    %v8437 = vpack.c.b16 %v8289, %v8285
    %v8438 = vpack.c.b16 %v8290, %v8286
    %v8439 = vpack.c.b16 %v8291, %v8287
    %v8440 = vpack.c.b16 %v8292, %v8288
    %v8441 = vpack.c.b16 %v8297, %v8293
    %v8442 = vpack.c.b16 %v8298, %v8294
    %v8443 = vpack.c.b16 %v8299, %v8295
    %v8444 = vpack.c.b16 %v8300, %v8296
    %v8445 = vpack.c.b16 %v8305, %v8301
    %v8446 = vpack.c.b16 %v8306, %v8302
    %v8447 = vpack.c.b16 %v8307, %v8303
    %v8448 = vpack.c.b16 %v8308, %v8304
    %v8449 = vpack.c.b16 %v8313, %v8309
    %v8450 = vpack.c.b16 %v8314, %v8310
    %v8451 = vpack.c.b16 %v8315, %v8311
    %v8452 = vpack.c.b16 %v8316, %v8312
    %v8453 = vpack.c.b16 %v8321, %v8317
    %v8454 = vpack.c.b16 %v8322, %v8318
    %v8455 = vpack.c.b16 %v8323, %v8319
    %v8456 = vpack.c.b16 %v8324, %v8320
    %v8457 = vpack.c.b16 %v8329, %v8325
    %v8458 = vpack.c.b16 %v8330, %v8326
    %v8459 = vpack.c.b16 %v8331, %v8327
    %v8460 = vpack.c.b16 %v8332, %v8328
    %8589 = vmatprep.subr.bf16.mxu0 %v8334
    %8590 = vmatpush1.bf16.msra.mxu0 %v8333
    %8591 = vmatprep.subr.bf16.mxu0 %v8338
    %8592 = vmatpush1.bf16.msra.mxu0 %v8337
    %8593 = vmatprep.subr.bf16.mxu0 %v8342
    %8594 = vmatpush1.bf16.msra.mxu0 %v8341
    %8595 = vmatprep.subr.bf16.mxu0 %v8346
    %8596 = vmatpush1.bf16.msra.mxu0 %v8345
    %8597 = vmatprep.subr.bf16.mxu0 %v8350
    %8598 = vmatpush1.bf16.msra.mxu0 %v8349
    %8599 = vmatprep.subr.bf16.mxu0 %v8354
    %8600 = vmatpush1.bf16.msra.mxu0 %v8353
    %8601 = vmatprep.subr.bf16.mxu0 %v8358
    %8602 = vmatpush1.bf16.msra.mxu0 %v8357
    %8603 = vmatprep.subr.bf16.mxu0 %v8362
    %8604 = vmatpush1.bf16.msra.mxu0 %v8361
    %8605 = vmatprep.subr.bf16.mxu0 %v8366
    %8606 = vmatpush1.bf16.msra.mxu0 %v8365
    %8607 = vmatprep.subr.bf16.mxu0 %v8370
    %8608 = vmatpush1.bf16.msra.mxu0 %v8369
    %8609 = vmatprep.subr.bf16.mxu0 %v8374
    %8610 = vmatpush1.bf16.msra.mxu0 %v8373
    %8611 = vmatprep.subr.bf16.mxu0 %v8378
    %8612 = vmatpush1.bf16.msra.mxu0 %v8377
    %8613 = vmatprep.subr.bf16.mxu0 %v8382
    %8614 = vmatpush1.bf16.msra.mxu0 %v8381
    %8615 = vmatprep.subr.bf16.mxu0 %v8386
    %8616 = vmatpush1.bf16.msra.mxu0 %v8385
    %8617 = vmatprep.subr.bf16.mxu0 %v8390
    %8618 = vmatpush1.bf16.msra.mxu0 %v8389
    %8619 = vmatprep.subr.bf16.mxu0 %v8394
    %8620 = vmatpush1.bf16.msra.mxu0 %v8393
    %8621 = vmatprep.mubr.bf16.mxu0 %v7796
    %8622 = vmatmul.mubr.bf16.gmra.mrb[0].mxu0 %v7795
    %v8623 = vpop.f32.mrb[0].mxu0
    %v8624 = vadd.f32 %v7932, %v8623
    %v8625 = vpop.f32.mrb[0].mxu0
    %v8626 = vadd.f32 %v7936, %v8625
    %v8627 = vpop.f32.mrb[0].mxu0
    %v8628 = vadd.f32 %v7932, %v8627
    %v8629 = vpop.f32.mrb[0].mxu0
    %v8630 = vadd.f32 %v7936, %v8629
    %8631 = vdwg.mxu0
    %8632 = vmatprep.subr.bf16.mxu0 %v8398
    %8633 = vmatpush1.bf16.msra.mxu0 %v8397
    %8634 = vmatprep.subr.bf16.mxu0 %v8402
    %8635 = vmatpush1.bf16.msra.mxu0 %v8401
    %8636 = vmatprep.subr.bf16.mxu0 %v8406
    %8637 = vmatpush1.bf16.msra.mxu0 %v8405
    %8638 = vmatprep.subr.bf16.mxu0 %v8410
    %8639 = vmatpush1.bf16.msra.mxu0 %v8409
    %8640 = vmatprep.subr.bf16.mxu0 %v8414
    %8641 = vmatpush1.bf16.msra.mxu0 %v8413
    %8642 = vmatprep.subr.bf16.mxu0 %v8418
    %8643 = vmatpush1.bf16.msra.mxu0 %v8417
    %8644 = vmatprep.subr.bf16.mxu0 %v8422
    %8645 = vmatpush1.bf16.msra.mxu0 %v8421
    %8646 = vmatprep.subr.bf16.mxu0 %v8426
    %8647 = vmatpush1.bf16.msra.mxu0 %v8425
    %8648 = vmatprep.subr.bf16.mxu0 %v8430
    %8649 = vmatpush1.bf16.msra.mxu0 %v8429
    %8650 = vmatprep.subr.bf16.mxu0 %v8434
    %8651 = vmatpush1.bf16.msra.mxu0 %v8433
    %8652 = vmatprep.subr.bf16.mxu0 %v8438
    %8653 = vmatpush1.bf16.msra.mxu0 %v8437
    %8654 = vmatprep.subr.bf16.mxu0 %v8442
    %8655 = vmatpush1.bf16.msra.mxu0 %v8441
    %8656 = vmatprep.subr.bf16.mxu0 %v8446
    %8657 = vmatpush1.bf16.msra.mxu0 %v8445
    %8658 = vmatprep.subr.bf16.mxu0 %v8450
    %8659 = vmatpush1.bf16.msra.mxu0 %v8449
    %8660 = vmatprep.subr.bf16.mxu0 %v8454
    %8661 = vmatpush1.bf16.msra.mxu0 %v8453
    %8662 = vmatprep.subr.bf16.mxu0 %v8458
    %8663 = vmatpush1.bf16.msra.mxu0 %v8457
    %8664 = vmatprep.mubr.bf16.mxu0 %v7798
    %8665 = vmatmul.mubr.bf16.gmra.mrb[0].mxu0 %v7797
    %v8666 = vpop.f32.mrb[0].mxu0
    %v8667 = vadd.f32 %v8624, %v8666
    %v8668 = vpop.f32.mrb[0].mxu0
    %v8669 = vadd.f32 %v8626, %v8668
    %v8670 = vpop.f32.mrb[0].mxu0
    %v8671 = vadd.f32 %v8628, %v8670
    %v8672 = vpop.f32.mrb[0].mxu0
    %v8673 = vadd.f32 %v8630, %v8672
    %8674 = vdwg.mxu0
    %8675 = vmatprep.subr.bf16.mxu0 %v8336
    %8676 = vmatpush1.bf16.msra.mxu0 %v8335
    %8677 = vmatprep.subr.bf16.mxu0 %v8340
    %8678 = vmatpush1.bf16.msra.mxu0 %v8339
    %8679 = vmatprep.subr.bf16.mxu0 %v8344
    %8680 = vmatpush1.bf16.msra.mxu0 %v8343
    %8681 = vmatprep.subr.bf16.mxu0 %v8348
    %8682 = vmatpush1.bf16.msra.mxu0 %v8347
    %8683 = vmatprep.subr.bf16.mxu0 %v8352
    %8684 = vmatpush1.bf16.msra.mxu0 %v8351
    %8685 = vmatprep.subr.bf16.mxu0 %v8356
    %8686 = vmatpush1.bf16.msra.mxu0 %v8355
    %8687 = vmatprep.subr.bf16.mxu0 %v8360
    %8688 = vmatpush1.bf16.msra.mxu0 %v8359
    %8689 = vmatprep.subr.bf16.mxu0 %v8364
    %8690 = vmatpush1.bf16.msra.mxu0 %v8363
    %8691 = vmatprep.subr.bf16.mxu0 %v8368
    %8692 = vmatpush1.bf16.msra.mxu0 %v8367
    %8693 = vmatprep.subr.bf16.mxu0 %v8372
    %8694 = vmatpush1.bf16.msra.mxu0 %v8371
    %8695 = vmatprep.subr.bf16.mxu0 %v8376
    %8696 = vmatpush1.bf16.msra.mxu0 %v8375
    %8697 = vmatprep.subr.bf16.mxu0 %v8380
    %8698 = vmatpush1.bf16.msra.mxu0 %v8379
    %8699 = vmatprep.subr.bf16.mxu0 %v8384
    %8700 = vmatpush1.bf16.msra.mxu0 %v8383
    %8701 = vmatprep.subr.bf16.mxu0 %v8388
    %8702 = vmatpush1.bf16.msra.mxu0 %v8387
    %8703 = vmatprep.subr.bf16.mxu0 %v8392
    %8704 = vmatpush1.bf16.msra.mxu0 %v8391
    %8705 = vmatprep.subr.bf16.mxu0 %v8396
    %8706 = vmatpush1.bf16.msra.mxu0 %v8395
    %8707 = vmatprep.mubr.bf16.mxu0 %v7796
    %8708 = vmatmul.mubr.bf16.gmra.mrb[0].mxu0 %v7795
    %v8709 = vpop.f32.mrb[0].mxu0
    %v8710 = vadd.f32 %v7940, %v8709
    %v8711 = vpop.f32.mrb[0].mxu0
    %v8712 = vadd.f32 %v7944, %v8711
    %v8713 = vpop.f32.mrb[0].mxu0
    %v8714 = vadd.f32 %v7940, %v8713
    %v8715 = vpop.f32.mrb[0].mxu0
    %v8716 = vadd.f32 %v7944, %v8715
    %8717 = vdwg.mxu0
    %8718 = vmatprep.subr.bf16.mxu0 %v8400
    %8719 = vmatpush1.bf16.msra.mxu0 %v8399
    %8720 = vmatprep.subr.bf16.mxu0 %v8404
    %8721 = vmatpush1.bf16.msra.mxu0 %v8403
    %8722 = vmatprep.subr.bf16.mxu0 %v8408
    %8723 = vmatpush1.bf16.msra.mxu0 %v8407
    %8724 = vmatprep.subr.bf16.mxu0 %v8412
    %8725 = vmatpush1.bf16.msra.mxu0 %v8411
    %8726 = vmatprep.subr.bf16.mxu0 %v8416
    %8727 = vmatpush1.bf16.msra.mxu0 %v8415
    %8728 = vmatprep.subr.bf16.mxu0 %v8420
    %8729 = vmatpush1.bf16.msra.mxu0 %v8419
    %8730 = vmatprep.subr.bf16.mxu0 %v8424
    %8731 = vmatpush1.bf16.msra.mxu0 %v8423
    %8732 = vmatprep.subr.bf16.mxu0 %v8428
    %8733 = vmatpush1.bf16.msra.mxu0 %v8427
    %8734 = vmatprep.subr.bf16.mxu0 %v8432
    %8735 = vmatpush1.bf16.msra.mxu0 %v8431
    %8736 = vmatprep.subr.bf16.mxu0 %v8436
    %8737 = vmatpush1.bf16.msra.mxu0 %v8435
    %8738 = vmatprep.subr.bf16.mxu0 %v8440
    %8739 = vmatpush1.bf16.msra.mxu0 %v8439
    %8740 = vmatprep.subr.bf16.mxu0 %v8444
    %8741 = vmatpush1.bf16.msra.mxu0 %v8443
    %8742 = vmatprep.subr.bf16.mxu0 %v8448
    %8743 = vmatpush1.bf16.msra.mxu0 %v8447
    %8744 = vmatprep.subr.bf16.mxu0 %v8452
    %8745 = vmatpush1.bf16.msra.mxu0 %v8451
    %8746 = vmatprep.subr.bf16.mxu0 %v8456
    %8747 = vmatpush1.bf16.msra.mxu0 %v8455
    %8748 = vmatprep.subr.bf16.mxu0 %v8460
    %8749 = vmatpush1.bf16.msra.mxu0 %v8459
    %8750 = vmatprep.mubr.bf16.mxu0 %v7798
    %8751 = vmatmul.mubr.bf16.gmra.mrb[0].mxu0 %v7797
    %v8752 = vpop.f32.mrb[0].mxu0
    %v8753 = vadd.f32 %v8710, %v8752
    %v8754 = vpop.f32.mrb[0].mxu0
    %v8755 = vadd.f32 %v8712, %v8754
    %v8756 = vpop.f32.mrb[0].mxu0
    %v8757 = vadd.f32 %v8714, %v8756
    %v8758 = vpop.f32.mrb[0].mxu0
    %v8759 = vadd.f32 %v8716, %v8758
    %8760 = vdwg.mxu0
    %v8761 = vadd.f32 %v8667, %v6813
    %v8762 = vadd.f32 %v8669, %v6814
    %v8763 = vadd.f32 %v8753, %v6815
    %v8764 = vadd.f32 %v8755, %v6816
    %v8765 = vadd.f32 %v8671, %v6817
    %v8766 = vadd.f32 %v8673, %v6818
    %v8767 = vadd.f32 %v8757, %v6819
    %v8768 = vadd.f32 %v8759, %v6820
    %v8769 = vadd.f32 %v8761, %v929
    %v8770 = vadd.f32 %v8762, %v930
    %v8771 = vadd.f32 %v8763, %v931
    %v8772 = vadd.f32 %v8764, %v932
    %v8773 = vadd.f32 %v8765, %v937
    %v8774 = vadd.f32 %v8766, %v938
    %v8775 = vadd.f32 %v8767, %v939
    %v8776 = vadd.f32 %v8768, %v940
    %v8777 = vmax.f32 %v8769, 0.0
    %v8778 = vmax.f32 %v8770, 0.0
    %v8779 = vmax.f32 %v8771, 0.0
    %v8780 = vmax.f32 %v8772, 0.0
    %v8781 = vmax.f32 %v8773, 0.0
    %v8782 = vmax.f32 %v8774, 0.0
    %v8783 = vmax.f32 %v8775, 0.0
    %v8784 = vmax.f32 %v8776, 0.0
    %v8785 = vpack.c.bf16 %v8781, %v8777
    %v8786 = vpack.c.bf16 %v8782, %v8778
    %v8787 = vpack.c.bf16 %v8783, %v8779
    %v8788 = vpack.c.bf16 %v8784, %v8780
    %v8789 = vld [vmem:[#allocation26] sm:$0xf]
    %v8790 = vld [vmem:[#allocation26 + $0x4] sm:$0xf]
    %v8791 = vld [vmem:[#allocation26 + $0x8] sm:$0xf]
    %v8792 = vld [vmem:[#allocation26 + $0xc] sm:$0xf]
    %v8793 = vld [vmem:[#allocation26 + $0x10] sm:$0xf]
    %v8794 = vld [vmem:[#allocation26 + $0x14] sm:$0xf]
    %v8795 = vld [vmem:[#allocation26 + $0x18] sm:$0xf]
    %v8796 = vld [vmem:[#allocation26 + $0x1c] sm:$0xf]
    %v8797 = vld [vmem:[#allocation26 + $0x20] sm:$0xf]
    %v8798 = vld [vmem:[#allocation26 + $0x24] sm:$0xf]
    %v8799 = vld [vmem:[#allocation26 + $0x28] sm:$0xf]
    %v8800 = vld [vmem:[#allocation26 + $0x2c] sm:$0xf]
    %v8801 = vld [vmem:[#allocation26 + $0x30] sm:$0xf]
    %v8802 = vld [vmem:[#allocation26 + $0x34] sm:$0xf]
    %v8803 = vld [vmem:[#allocation26 + $0x38] sm:$0xf]
    %v8804 = vld [vmem:[#allocation26 + $0x3c] sm:$0xf]
    %v8805 = vld [vmem:[#allocation26 + $0x40] sm:$0xf]
    %v8806 = vld [vmem:[#allocation26 + $0x44] sm:$0xf]
    %v8807 = vld [vmem:[#allocation26 + $0x48] sm:$0xf]
    %v8808 = vld [vmem:[#allocation26 + $0x4c] sm:$0xf]
    %v8809 = vld [vmem:[#allocation26 + $0x50] sm:$0xf]
    %v8810 = vld [vmem:[#allocation26 + $0x54] sm:$0xf]
    %v8811 = vld [vmem:[#allocation26 + $0x58] sm:$0xf]
    %v8812 = vld [vmem:[#allocation26 + $0x5c] sm:$0xf]
    %v8813 = vld [vmem:[#allocation26 + $0x60] sm:$0xf]
    %v8814 = vld [vmem:[#allocation26 + $0x64] sm:$0xf]
    %v8815 = vld [vmem:[#allocation26 + $0x68] sm:$0xf]
    %v8816 = vld [vmem:[#allocation26 + $0x6c] sm:$0xf]
    %v8817 = vld [vmem:[#allocation26 + $0x70] sm:$0xf]
    %v8818 = vld [vmem:[#allocation26 + $0x74] sm:$0xf]
    %v8819 = vld [vmem:[#allocation26 + $0x78] sm:$0xf]
    %v8820 = vld [vmem:[#allocation26 + $0x7c] sm:$0xf]
    %v8821 = vld [vmem:[#allocation26 + $0x80] sm:$0xf]
    %v8822 = vld [vmem:[#allocation26 + $0x84] sm:$0xf]
    %v8823 = vld [vmem:[#allocation26 + $0x88] sm:$0xf]
    %v8824 = vld [vmem:[#allocation26 + $0x8c] sm:$0xf]
    %v8825 = vld [vmem:[#allocation26 + $0x90] sm:$0xf]
    %v8826 = vld [vmem:[#allocation26 + $0x94] sm:$0xf]
    %v8827 = vld [vmem:[#allocation26 + $0x98] sm:$0xf]
    %v8828 = vld [vmem:[#allocation26 + $0x9c] sm:$0xf]
    %v8829 = vld [vmem:[#allocation26 + $0xa0] sm:$0xf]
    %v8830 = vld [vmem:[#allocation26 + $0xa4] sm:$0xf]
    %v8831 = vld [vmem:[#allocation26 + $0xa8] sm:$0xf]
    %v8832 = vld [vmem:[#allocation26 + $0xac] sm:$0xf]
    %v8833 = vld [vmem:[#allocation26 + $0xb0] sm:$0xf]
    %v8834 = vld [vmem:[#allocation26 + $0xb4] sm:$0xf]
    %v8835 = vld [vmem:[#allocation26 + $0xb8] sm:$0xf]
    %v8836 = vld [vmem:[#allocation26 + $0xbc] sm:$0xf]
    %v8837 = vld [vmem:[#allocation26 + $0xc0] sm:$0xf]
    %v8838 = vld [vmem:[#allocation26 + $0xc4] sm:$0xf]
    %v8839 = vld [vmem:[#allocation26 + $0xc8] sm:$0xf]
    %v8840 = vld [vmem:[#allocation26 + $0xcc] sm:$0xf]
    %v8841 = vld [vmem:[#allocation26 + $0xd0] sm:$0xf]
    %v8842 = vld [vmem:[#allocation26 + $0xd4] sm:$0xf]
    %v8843 = vld [vmem:[#allocation26 + $0xd8] sm:$0xf]
    %v8844 = vld [vmem:[#allocation26 + $0xdc] sm:$0xf]
    %v8845 = vld [vmem:[#allocation26 + $0xe0] sm:$0xf]
    %v8846 = vld [vmem:[#allocation26 + $0xe4] sm:$0xf]
    %v8847 = vld [vmem:[#allocation26 + $0xe8] sm:$0xf]
    %v8848 = vld [vmem:[#allocation26 + $0xec] sm:$0xf]
    %v8849 = vld [vmem:[#allocation26 + $0xf0] sm:$0xf]
    %v8850 = vld [vmem:[#allocation26 + $0xf4] sm:$0xf]
    %v8851 = vld [vmem:[#allocation26 + $0xf8] sm:$0xf]
    %v8852 = vld [vmem:[#allocation26 + $0xfc] sm:$0xf]
    %v8853 = vld [vmem:[#allocation28] sm:$0xf]
    %v8854 = vld [vmem:[#allocation28 + $0x4] sm:$0xf]
    %v8855 = vld [vmem:[#allocation28 + $0x8] sm:$0xf]
    %v8856 = vld [vmem:[#allocation28 + $0xc] sm:$0xf]
    %v8857 = vld [vmem:[#allocation28 + $0x10] sm:$0xf]
    %v8858 = vld [vmem:[#allocation28 + $0x14] sm:$0xf]
    %v8859 = vld [vmem:[#allocation28 + $0x18] sm:$0xf]
    %v8860 = vld [vmem:[#allocation28 + $0x1c] sm:$0xf]
    %v8861 = vld [vmem:[#allocation28 + $0x20] sm:$0xf]
    %v8862 = vld [vmem:[#allocation28 + $0x24] sm:$0xf]
    %v8863 = vld [vmem:[#allocation28 + $0x28] sm:$0xf]
    %v8864 = vld [vmem:[#allocation28 + $0x2c] sm:$0xf]
    %v8865 = vld [vmem:[#allocation28 + $0x30] sm:$0xf]
    %v8866 = vld [vmem:[#allocation28 + $0x34] sm:$0xf]
    %v8867 = vld [vmem:[#allocation28 + $0x38] sm:$0xf]
    %v8868 = vld [vmem:[#allocation28 + $0x3c] sm:$0xf]
    %v8869 = vld [vmem:[#allocation28 + $0x40] sm:$0xf]
    %v8870 = vld [vmem:[#allocation28 + $0x44] sm:$0xf]
    %v8871 = vld [vmem:[#allocation28 + $0x48] sm:$0xf]
    %v8872 = vld [vmem:[#allocation28 + $0x4c] sm:$0xf]
    %v8873 = vld [vmem:[#allocation28 + $0x50] sm:$0xf]
    %v8874 = vld [vmem:[#allocation28 + $0x54] sm:$0xf]
    %v8875 = vld [vmem:[#allocation28 + $0x58] sm:$0xf]
    %v8876 = vld [vmem:[#allocation28 + $0x5c] sm:$0xf]
    %v8877 = vld [vmem:[#allocation28 + $0x60] sm:$0xf]
    %v8878 = vld [vmem:[#allocation28 + $0x64] sm:$0xf]
    %v8879 = vld [vmem:[#allocation28 + $0x68] sm:$0xf]
    %v8880 = vld [vmem:[#allocation28 + $0x6c] sm:$0xf]
    %v8881 = vld [vmem:[#allocation28 + $0x70] sm:$0xf]
    %v8882 = vld [vmem:[#allocation28 + $0x74] sm:$0xf]
    %v8883 = vld [vmem:[#allocation28 + $0x78] sm:$0xf]
    %v8884 = vld [vmem:[#allocation28 + $0x7c] sm:$0xf]
    %v8885 = vld [vmem:[#allocation28 + $0x80] sm:$0xf]
    %v8886 = vld [vmem:[#allocation28 + $0x84] sm:$0xf]
    %v8887 = vld [vmem:[#allocation28 + $0x88] sm:$0xf]
    %v8888 = vld [vmem:[#allocation28 + $0x8c] sm:$0xf]
    %v8889 = vld [vmem:[#allocation28 + $0x90] sm:$0xf]
    %v8890 = vld [vmem:[#allocation28 + $0x94] sm:$0xf]
    %v8891 = vld [vmem:[#allocation28 + $0x98] sm:$0xf]
    %v8892 = vld [vmem:[#allocation28 + $0x9c] sm:$0xf]
    %v8893 = vld [vmem:[#allocation28 + $0xa0] sm:$0xf]
    %v8894 = vld [vmem:[#allocation28 + $0xa4] sm:$0xf]
    %v8895 = vld [vmem:[#allocation28 + $0xa8] sm:$0xf]
    %v8896 = vld [vmem:[#allocation28 + $0xac] sm:$0xf]
    %v8897 = vld [vmem:[#allocation28 + $0xb0] sm:$0xf]
    %v8898 = vld [vmem:[#allocation28 + $0xb4] sm:$0xf]
    %v8899 = vld [vmem:[#allocation28 + $0xb8] sm:$0xf]
    %v8900 = vld [vmem:[#allocation28 + $0xbc] sm:$0xf]
    %v8901 = vld [vmem:[#allocation28 + $0xc0] sm:$0xf]
    %v8902 = vld [vmem:[#allocation28 + $0xc4] sm:$0xf]
    %v8903 = vld [vmem:[#allocation28 + $0xc8] sm:$0xf]
    %v8904 = vld [vmem:[#allocation28 + $0xcc] sm:$0xf]
    %v8905 = vld [vmem:[#allocation28 + $0xd0] sm:$0xf]
    %v8906 = vld [vmem:[#allocation28 + $0xd4] sm:$0xf]
    %v8907 = vld [vmem:[#allocation28 + $0xd8] sm:$0xf]
    %v8908 = vld [vmem:[#allocation28 + $0xdc] sm:$0xf]
    %v8909 = vld [vmem:[#allocation28 + $0xe0] sm:$0xf]
    %v8910 = vld [vmem:[#allocation28 + $0xe4] sm:$0xf]
    %v8911 = vld [vmem:[#allocation28 + $0xe8] sm:$0xf]
    %v8912 = vld [vmem:[#allocation28 + $0xec] sm:$0xf]
    %v8913 = vld [vmem:[#allocation28 + $0xf0] sm:$0xf]
    %v8914 = vld [vmem:[#allocation28 + $0xf4] sm:$0xf]
    %v8915 = vld [vmem:[#allocation28 + $0xf8] sm:$0xf]
    %v8916 = vld [vmem:[#allocation28 + $0xfc] sm:$0xf]
    %v8981 = vunpack.c.l.b16 %v8853
    %v8982 = vunpack.c.l.b16 %v8854
    %v8983 = vunpack.c.l.b16 %v8855
    %v8984 = vunpack.c.l.b16 %v8856
    %v8985 = vunpack.c.l.b16 %v8857
    %v8986 = vunpack.c.l.b16 %v8858
    %v8987 = vunpack.c.l.b16 %v8859
    %v8988 = vunpack.c.l.b16 %v8860
    %v8989 = vunpack.c.l.b16 %v8861
    %v8990 = vunpack.c.l.b16 %v8862
    %v8991 = vunpack.c.l.b16 %v8863
    %v8992 = vunpack.c.l.b16 %v8864
    %v8993 = vunpack.c.l.b16 %v8865
    %v8994 = vunpack.c.l.b16 %v8866
    %v8995 = vunpack.c.l.b16 %v8867
    %v8996 = vunpack.c.l.b16 %v8868
    %v8997 = vunpack.c.l.b16 %v8869
    %v8998 = vunpack.c.l.b16 %v8870
    %v8999 = vunpack.c.l.b16 %v8871
    %v9000 = vunpack.c.l.b16 %v8872
    %v9001 = vunpack.c.l.b16 %v8873
    %v9002 = vunpack.c.l.b16 %v8874
    %v9003 = vunpack.c.l.b16 %v8875
    %v9004 = vunpack.c.l.b16 %v8876
    %v9005 = vunpack.c.l.b16 %v8877
    %v9006 = vunpack.c.l.b16 %v8878
    %v9007 = vunpack.c.l.b16 %v8879
    %v9008 = vunpack.c.l.b16 %v8880
    %v9009 = vunpack.c.l.b16 %v8881
    %v9010 = vunpack.c.l.b16 %v8882
    %v9011 = vunpack.c.l.b16 %v8883
    %v9012 = vunpack.c.l.b16 %v8884
    %v9013 = vunpack.c.l.b16 %v8885
    %v9014 = vunpack.c.l.b16 %v8886
    %v9015 = vunpack.c.l.b16 %v8887
    %v9016 = vunpack.c.l.b16 %v8888
    %v9017 = vunpack.c.l.b16 %v8889
    %v9018 = vunpack.c.l.b16 %v8890
    %v9019 = vunpack.c.l.b16 %v8891
    %v9020 = vunpack.c.l.b16 %v8892
    %v9021 = vunpack.c.l.b16 %v8893
    %v9022 = vunpack.c.l.b16 %v8894
    %v9023 = vunpack.c.l.b16 %v8895
    %v9024 = vunpack.c.l.b16 %v8896
    %v9025 = vunpack.c.l.b16 %v8897
    %v9026 = vunpack.c.l.b16 %v8898
    %v9027 = vunpack.c.l.b16 %v8899
    %v9028 = vunpack.c.l.b16 %v8900
    %v9029 = vunpack.c.l.b16 %v8901
    %v9030 = vunpack.c.l.b16 %v8902
    %v9031 = vunpack.c.l.b16 %v8903
    %v9032 = vunpack.c.l.b16 %v8904
    %v9033 = vunpack.c.l.b16 %v8905
    %v9034 = vunpack.c.l.b16 %v8906
    %v9035 = vunpack.c.l.b16 %v8907
    %v9036 = vunpack.c.l.b16 %v8908
    %v9037 = vunpack.c.l.b16 %v8909
    %v9038 = vunpack.c.l.b16 %v8910
    %v9039 = vunpack.c.l.b16 %v8911
    %v9040 = vunpack.c.l.b16 %v8912
    %v9041 = vunpack.c.l.b16 %v8913
    %v9042 = vunpack.c.l.b16 %v8914
    %v9043 = vunpack.c.l.b16 %v8915
    %v9044 = vunpack.c.l.b16 %v8916
    %v9045 = vpack.c.b16 %v8982, %v8981
    %v9046 = vpack.c.b16 %v8984, %v8983
    %v9047 = vpack.c.b16 %v8986, %v8985
    %v9048 = vpack.c.b16 %v8988, %v8987
    %v9049 = vpack.c.b16 %v8990, %v8989
    %v9050 = vpack.c.b16 %v8992, %v8991
    %v9051 = vpack.c.b16 %v8994, %v8993
    %v9052 = vpack.c.b16 %v8996, %v8995
    %v9053 = vpack.c.b16 %v8998, %v8997
    %v9054 = vpack.c.b16 %v9000, %v8999
    %v9055 = vpack.c.b16 %v9002, %v9001
    %v9056 = vpack.c.b16 %v9004, %v9003
    %v9057 = vpack.c.b16 %v9006, %v9005
    %v9058 = vpack.c.b16 %v9008, %v9007
    %v9059 = vpack.c.b16 %v9010, %v9009
    %v9060 = vpack.c.b16 %v9012, %v9011
    %v9061 = vpack.c.b16 %v9014, %v9013
    %v9062 = vpack.c.b16 %v9016, %v9015
    %v9063 = vpack.c.b16 %v9018, %v9017
    %v9064 = vpack.c.b16 %v9020, %v9019
    %v9065 = vpack.c.b16 %v9022, %v9021
    %v9066 = vpack.c.b16 %v9024, %v9023
    %v9067 = vpack.c.b16 %v9026, %v9025
    %v9068 = vpack.c.b16 %v9028, %v9027
    %v9069 = vpack.c.b16 %v9030, %v9029
    %v9070 = vpack.c.b16 %v9032, %v9031
    %v9071 = vpack.c.b16 %v9034, %v9033
    %v9072 = vpack.c.b16 %v9036, %v9035
    %v9073 = vpack.c.b16 %v9038, %v9037
    %v9074 = vpack.c.b16 %v9040, %v9039
    %v9075 = vpack.c.b16 %v9042, %v9041
    %v9076 = vpack.c.b16 %v9044, %v9043
    %9109 = vmatprep.subr.bf16.mxu0 0
    %9110 = vmatpush1.bf16.msra.mxu0 %v9045
    %9111 = vmatprep.subr.bf16.mxu0 0
    %9112 = vmatpush1.bf16.msra.mxu0 %v9046
    %9113 = vmatprep.subr.bf16.mxu0 0
    %9114 = vmatpush1.bf16.msra.mxu0 %v9047
    %9115 = vmatprep.subr.bf16.mxu0 0
    %9116 = vmatpush1.bf16.msra.mxu0 %v9048
    %9117 = vmatprep.subr.bf16.mxu0 0
    %9118 = vmatpush1.bf16.msra.mxu0 %v9049
    %9119 = vmatprep.subr.bf16.mxu0 0
    %9120 = vmatpush1.bf16.msra.mxu0 %v9050
    %9121 = vmatprep.subr.bf16.mxu0 0
    %9122 = vmatpush1.bf16.msra.mxu0 %v9051
    %9123 = vmatprep.subr.bf16.mxu0 0
    %9124 = vmatpush1.bf16.msra.mxu0 %v9052
    %9125 = vmatprep.subr.bf16.mxu0 0
    %9126 = vmatpush1.bf16.msra.mxu0 %v9053
    %9127 = vmatprep.subr.bf16.mxu0 0
    %9128 = vmatpush1.bf16.msra.mxu0 %v9054
    %9129 = vmatprep.subr.bf16.mxu0 0
    %9130 = vmatpush1.bf16.msra.mxu0 %v9055
    %9131 = vmatprep.subr.bf16.mxu0 0
    %9132 = vmatpush1.bf16.msra.mxu0 %v9056
    %9133 = vmatprep.subr.bf16.mxu0 0
    %9134 = vmatpush1.bf16.msra.mxu0 %v9057
    %9135 = vmatprep.subr.bf16.mxu0 0
    %9136 = vmatpush1.bf16.msra.mxu0 %v9058
    %9137 = vmatprep.subr.bf16.mxu0 0
    %9138 = vmatpush1.bf16.msra.mxu0 %v9059
    %9139 = vmatprep.subr.bf16.mxu0 0
    %9140 = vmatpush1.bf16.msra.mxu0 %v9060
    %9141 = vmatprep.mubr.bf16.mxu0 %v8786
    %9142 = vmatmul.mubr.bf16.gmra.mrb[0].mxu0 %v8785
    %v9143 = vpop.f32.mrb[0].mxu0
    %v9144 = vadd.f32 0.0, %v9143
    %v9145 = vpop.f32.mrb[0].mxu0
    %v9146 = vpop.f32.mrb[0].mxu0
    %v9147 = vadd.f32 0.0, %v9146
    %v9148 = vpop.f32.mrb[0].mxu0
    %9149 = vdwg.mxu0
    %9150 = vmatprep.subr.bf16.mxu0 0
    %9151 = vmatpush1.bf16.msra.mxu0 %v9061
    %9152 = vmatprep.subr.bf16.mxu0 0
    %9153 = vmatpush1.bf16.msra.mxu0 %v9062
    %9154 = vmatprep.subr.bf16.mxu0 0
    %9155 = vmatpush1.bf16.msra.mxu0 %v9063
    %9156 = vmatprep.subr.bf16.mxu0 0
    %9157 = vmatpush1.bf16.msra.mxu0 %v9064
    %9158 = vmatprep.subr.bf16.mxu0 0
    %9159 = vmatpush1.bf16.msra.mxu0 %v9065
    %9160 = vmatprep.subr.bf16.mxu0 0
    %9161 = vmatpush1.bf16.msra.mxu0 %v9066
    %9162 = vmatprep.subr.bf16.mxu0 0
    %9163 = vmatpush1.bf16.msra.mxu0 %v9067
    %9164 = vmatprep.subr.bf16.mxu0 0
    %9165 = vmatpush1.bf16.msra.mxu0 %v9068
    %9166 = vmatprep.subr.bf16.mxu0 0
    %9167 = vmatpush1.bf16.msra.mxu0 %v9069
    %9168 = vmatprep.subr.bf16.mxu0 0
    %9169 = vmatpush1.bf16.msra.mxu0 %v9070
    %9170 = vmatprep.subr.bf16.mxu0 0
    %9171 = vmatpush1.bf16.msra.mxu0 %v9071
    %9172 = vmatprep.subr.bf16.mxu0 0
    %9173 = vmatpush1.bf16.msra.mxu0 %v9072
    %9174 = vmatprep.subr.bf16.mxu0 0
    %9175 = vmatpush1.bf16.msra.mxu0 %v9073
    %9176 = vmatprep.subr.bf16.mxu0 0
    %9177 = vmatpush1.bf16.msra.mxu0 %v9074
    %9178 = vmatprep.subr.bf16.mxu0 0
    %9179 = vmatpush1.bf16.msra.mxu0 %v9075
    %9180 = vmatprep.subr.bf16.mxu0 0
    %9181 = vmatpush1.bf16.msra.mxu0 %v9076
    %9182 = vmatprep.mubr.bf16.mxu0 %v8788
    %9183 = vmatmul.mubr.bf16.gmra.mrb[0].mxu0 %v8787
    %v9184 = vpop.f32.mrb[0].mxu0
    %v9185 = vadd.f32 %v9144, %v9184
    %v9186 = vpop.f32.mrb[0].mxu0
    %v9187 = vpop.f32.mrb[0].mxu0
    %v9188 = vadd.f32 %v9147, %v9187
    %v9189 = vpop.f32.mrb[0].mxu0
    %9190 = vdwg.mxu0
    %v9255 = vunpack.c.l.b16 %v8789
    %v9256 = vunpack.c.l.b16 %v8790
    %v9257 = vunpack.c.l.b16 %v8791
    %v9258 = vunpack.c.l.b16 %v8792
    %v9259 = vunpack.c.l.b16 %v8793
    %v9260 = vunpack.c.l.b16 %v8794
    %v9261 = vunpack.c.l.b16 %v8795
    %v9262 = vunpack.c.l.b16 %v8796
    %v9263 = vunpack.c.l.b16 %v8797
    %v9264 = vunpack.c.l.b16 %v8798
    %v9265 = vunpack.c.l.b16 %v8799
    %v9266 = vunpack.c.l.b16 %v8800
    %v9267 = vunpack.c.l.b16 %v8801
    %v9268 = vunpack.c.l.b16 %v8802
    %v9269 = vunpack.c.l.b16 %v8803
    %v9270 = vunpack.c.l.b16 %v8804
    %v9271 = vunpack.c.l.b16 %v8805
    %v9272 = vunpack.c.l.b16 %v8806
    %v9273 = vunpack.c.l.b16 %v8807
    %v9274 = vunpack.c.l.b16 %v8808
    %v9275 = vunpack.c.l.b16 %v8809
    %v9276 = vunpack.c.l.b16 %v8810
    %v9277 = vunpack.c.l.b16 %v8811
    %v9278 = vunpack.c.l.b16 %v8812
    %v9279 = vunpack.c.l.b16 %v8813
    %v9280 = vunpack.c.l.b16 %v8814
    %v9281 = vunpack.c.l.b16 %v8815
    %v9282 = vunpack.c.l.b16 %v8816
    %v9283 = vunpack.c.l.b16 %v8817
    %v9284 = vunpack.c.l.b16 %v8818
    %v9285 = vunpack.c.l.b16 %v8819
    %v9286 = vunpack.c.l.b16 %v8820
    %v9287 = vunpack.c.l.b16 %v8821
    %v9288 = vunpack.c.l.b16 %v8822
    %v9289 = vunpack.c.l.b16 %v8823
    %v9290 = vunpack.c.l.b16 %v8824
    %v9291 = vunpack.c.l.b16 %v8825
    %v9292 = vunpack.c.l.b16 %v8826
    %v9293 = vunpack.c.l.b16 %v8827
    %v9294 = vunpack.c.l.b16 %v8828
    %v9295 = vunpack.c.l.b16 %v8829
    %v9296 = vunpack.c.l.b16 %v8830
    %v9297 = vunpack.c.l.b16 %v8831
    %v9298 = vunpack.c.l.b16 %v8832
    %v9299 = vunpack.c.l.b16 %v8833
    %v9300 = vunpack.c.l.b16 %v8834
    %v9301 = vunpack.c.l.b16 %v8835
    %v9302 = vunpack.c.l.b16 %v8836
    %v9303 = vunpack.c.l.b16 %v8837
    %v9304 = vunpack.c.l.b16 %v8838
    %v9305 = vunpack.c.l.b16 %v8839
    %v9306 = vunpack.c.l.b16 %v8840
    %v9307 = vunpack.c.l.b16 %v8841
    %v9308 = vunpack.c.l.b16 %v8842
    %v9309 = vunpack.c.l.b16 %v8843
    %v9310 = vunpack.c.l.b16 %v8844
    %v9311 = vunpack.c.l.b16 %v8845
    %v9312 = vunpack.c.l.b16 %v8846
    %v9313 = vunpack.c.l.b16 %v8847
    %v9314 = vunpack.c.l.b16 %v8848
    %v9315 = vunpack.c.l.b16 %v8849
    %v9316 = vunpack.c.l.b16 %v8850
    %v9317 = vunpack.c.l.b16 %v8851
    %v9318 = vunpack.c.l.b16 %v8852
    %v9319 = vpack.c.b16 %v9256, %v9255
    %v9320 = vpack.c.b16 %v9258, %v9257
    %v9321 = vpack.c.b16 %v9260, %v9259
    %v9322 = vpack.c.b16 %v9262, %v9261
    %v9323 = vpack.c.b16 %v9264, %v9263
    %v9324 = vpack.c.b16 %v9266, %v9265
    %v9325 = vpack.c.b16 %v9268, %v9267
    %v9326 = vpack.c.b16 %v9270, %v9269
    %v9327 = vpack.c.b16 %v9272, %v9271
    %v9328 = vpack.c.b16 %v9274, %v9273
    %v9329 = vpack.c.b16 %v9276, %v9275
    %v9330 = vpack.c.b16 %v9278, %v9277
    %v9331 = vpack.c.b16 %v9280, %v9279
    %v9332 = vpack.c.b16 %v9282, %v9281
    %v9333 = vpack.c.b16 %v9284, %v9283
    %v9334 = vpack.c.b16 %v9286, %v9285
    %v9335 = vpack.c.b16 %v9288, %v9287
    %v9336 = vpack.c.b16 %v9290, %v9289
    %v9337 = vpack.c.b16 %v9292, %v9291
    %v9338 = vpack.c.b16 %v9294, %v9293
    %v9339 = vpack.c.b16 %v9296, %v9295
    %v9340 = vpack.c.b16 %v9298, %v9297
    %v9341 = vpack.c.b16 %v9300, %v9299
    %v9342 = vpack.c.b16 %v9302, %v9301
    %v9343 = vpack.c.b16 %v9304, %v9303
    %v9344 = vpack.c.b16 %v9306, %v9305
    %v9345 = vpack.c.b16 %v9308, %v9307
    %v9346 = vpack.c.b16 %v9310, %v9309
    %v9347 = vpack.c.b16 %v9312, %v9311
    %v9348 = vpack.c.b16 %v9314, %v9313
    %v9349 = vpack.c.b16 %v9316, %v9315
    %v9350 = vpack.c.b16 %v9318, %v9317
    %9383 = vmatprep.subr.bf16.mxu0 0
    %9384 = vmatpush1.bf16.msra.mxu0 %v9319
    %9385 = vmatprep.subr.bf16.mxu0 0
    %9386 = vmatpush1.bf16.msra.mxu0 %v9320
    %9387 = vmatprep.subr.bf16.mxu0 0
    %9388 = vmatpush1.bf16.msra.mxu0 %v9321
    %9389 = vmatprep.subr.bf16.mxu0 0
    %9390 = vmatpush1.bf16.msra.mxu0 %v9322
    %9391 = vmatprep.subr.bf16.mxu0 0
    %9392 = vmatpush1.bf16.msra.mxu0 %v9323
    %9393 = vmatprep.subr.bf16.mxu0 0
    %9394 = vmatpush1.bf16.msra.mxu0 %v9324
    %9395 = vmatprep.subr.bf16.mxu0 0
    %9396 = vmatpush1.bf16.msra.mxu0 %v9325
    %9397 = vmatprep.subr.bf16.mxu0 0
    %9398 = vmatpush1.bf16.msra.mxu0 %v9326
    %9399 = vmatprep.subr.bf16.mxu0 0
    %9400 = vmatpush1.bf16.msra.mxu0 %v9327
    %9401 = vmatprep.subr.bf16.mxu0 0
    %9402 = vmatpush1.bf16.msra.mxu0 %v9328
    %9403 = vmatprep.subr.bf16.mxu0 0
    %9404 = vmatpush1.bf16.msra.mxu0 %v9329
    %9405 = vmatprep.subr.bf16.mxu0 0
    %9406 = vmatpush1.bf16.msra.mxu0 %v9330
    %9407 = vmatprep.subr.bf16.mxu0 0
    %9408 = vmatpush1.bf16.msra.mxu0 %v9331
    %9409 = vmatprep.subr.bf16.mxu0 0
    %9410 = vmatpush1.bf16.msra.mxu0 %v9332
    %9411 = vmatprep.subr.bf16.mxu0 0
    %9412 = vmatpush1.bf16.msra.mxu0 %v9333
    %9413 = vmatprep.subr.bf16.mxu0 0
    %9414 = vmatpush1.bf16.msra.mxu0 %v9334
    %9415 = vmatprep.mubr.bf16.mxu0 %v4862
    %9416 = vmatmul.mubr.bf16.gmra.mrb[0].mxu0 %v4861
    %v9417 = vpop.f32.mrb[0].mxu0
    %v9418 = vadd.f32 %v9185, %v9417
    %v9419 = vpop.f32.mrb[0].mxu0
    %v9420 = vpop.f32.mrb[0].mxu0
    %v9421 = vadd.f32 %v9188, %v9420
    %v9422 = vpop.f32.mrb[0].mxu0
    %9423 = vdwg.mxu0
    %9424 = vmatprep.subr.bf16.mxu0 0
    %9425 = vmatpush1.bf16.msra.mxu0 %v9335
    %9426 = vmatprep.subr.bf16.mxu0 0
    %9427 = vmatpush1.bf16.msra.mxu0 %v9336
    %9428 = vmatprep.subr.bf16.mxu0 0
    %9429 = vmatpush1.bf16.msra.mxu0 %v9337
    %9430 = vmatprep.subr.bf16.mxu0 0
    %9431 = vmatpush1.bf16.msra.mxu0 %v9338
    %9432 = vmatprep.subr.bf16.mxu0 0
    %9433 = vmatpush1.bf16.msra.mxu0 %v9339
    %9434 = vmatprep.subr.bf16.mxu0 0
    %9435 = vmatpush1.bf16.msra.mxu0 %v9340
    %9436 = vmatprep.subr.bf16.mxu0 0
    %9437 = vmatpush1.bf16.msra.mxu0 %v9341
    %9438 = vmatprep.subr.bf16.mxu0 0
    %9439 = vmatpush1.bf16.msra.mxu0 %v9342
    %9440 = vmatprep.subr.bf16.mxu0 0
    %9441 = vmatpush1.bf16.msra.mxu0 %v9343
    %9442 = vmatprep.subr.bf16.mxu0 0
    %9443 = vmatpush1.bf16.msra.mxu0 %v9344
    %9444 = vmatprep.subr.bf16.mxu0 0
    %9445 = vmatpush1.bf16.msra.mxu0 %v9345
    %9446 = vmatprep.subr.bf16.mxu0 0
    %9447 = vmatpush1.bf16.msra.mxu0 %v9346
    %9448 = vmatprep.subr.bf16.mxu0 0
    %9449 = vmatpush1.bf16.msra.mxu0 %v9347
    %9450 = vmatprep.subr.bf16.mxu0 0
    %9451 = vmatpush1.bf16.msra.mxu0 %v9348
    %9452 = vmatprep.subr.bf16.mxu0 0
    %9453 = vmatpush1.bf16.msra.mxu0 %v9349
    %9454 = vmatprep.subr.bf16.mxu0 0
    %9455 = vmatpush1.bf16.msra.mxu0 %v9350
    %9456 = vmatprep.mubr.bf16.mxu0 %v4864
    %9457 = vmatmul.mubr.bf16.gmra.mrb[0].mxu0 %v4863
    %v9458 = vpop.f32.mrb[0].mxu0
    %v9459 = vadd.f32 %v9418, %v9458
    %v9460 = vpop.f32.mrb[0].mxu0
    %v9461 = vpop.f32.mrb[0].mxu0
    %v9462 = vadd.f32 %v9421, %v9461
    %v9463 = vpop.f32.mrb[0].mxu0
    %9464 = vdwg.mxu0
    %v9465 = vld [vmem:[%s21] sm:$0x1]
    %v9467 = vlaneseq
    %v9468 = vshrl.u32 %v9467, 7
    %v9469 = vsub.s32 0, %v9468
    %v9470 = vrot.slane %v9465, %v9469
    %v9472 = vadd.f32 %v9459, %v9470
    %v9473 = vadd.f32 %v9462, %v9470
    %v9474 = vmax.f32 %v9472, 0.0
    %v9475 = vmax.f32 %v9473, 0.0
    %v9476 = vpack.c.bf16 %v9475, %v9474
    %v9477 = vld [vmem:[%s22] sm:$0xf]
    %v9478 = vld [vmem:[%s22 + $0x4] sm:$0xf]
    %v9479 = vld [vmem:[%s22 + $0x8] sm:$0xf]
    %v9480 = vld [vmem:[%s22 + $0xc] sm:$0xf]
    %v9481 = vld [vmem:[%s22 + $0x10] sm:$0xf]
    %v9482 = vld [vmem:[%s22 + $0x14] sm:$0xf]
    %v9483 = vld [vmem:[%s22 + $0x18] sm:$0xf]
    %v9484 = vld [vmem:[%s22 + $0x1c] sm:$0xf]
    %v9485 = vld [vmem:[%s22 + $0x20] sm:$0xf]
    %v9486 = vld [vmem:[%s22 + $0x24] sm:$0xf]
    %v9487 = vld [vmem:[%s22 + $0x28] sm:$0xf]
    %v9488 = vld [vmem:[%s22 + $0x2c] sm:$0xf]
    %v9489 = vld [vmem:[%s22 + $0x30] sm:$0xf]
    %v9490 = vld [vmem:[%s22 + $0x34] sm:$0xf]
    %v9491 = vld [vmem:[%s22 + $0x38] sm:$0xf]
    %v9492 = vld [vmem:[%s22 + $0x3c] sm:$0xf]
    %v9493 = vld [vmem:[%s23] sm:$0x1]
    %v9495 = vlaneseq
    %v9496 = vshrl.u32 %v9495, 7
    %v9497 = vsub.s32 0, %v9496
    %v9498 = vrot.slane %v9493, %v9497
    %v9516 = vunpack.c.l.b16 %v9477
    %v9517 = vunpack.c.l.b16 %v9478
    %v9518 = vunpack.c.l.b16 %v9479
    %v9519 = vunpack.c.l.b16 %v9480
    %v9520 = vunpack.c.l.b16 %v9481
    %v9521 = vunpack.c.l.b16 %v9482
    %v9522 = vunpack.c.l.b16 %v9483
    %v9523 = vunpack.c.l.b16 %v9484
    %v9524 = vunpack.c.l.b16 %v9485
    %v9525 = vunpack.c.l.b16 %v9486
    %v9526 = vunpack.c.l.b16 %v9487
    %v9527 = vunpack.c.l.b16 %v9488
    %v9528 = vunpack.c.l.b16 %v9489
    %v9529 = vunpack.c.l.b16 %v9490
    %v9530 = vunpack.c.l.b16 %v9491
    %v9531 = vunpack.c.l.b16 %v9492
    %v9532 = vpack.c.b16 %v9517, %v9516
    %v9533 = vpack.c.b16 %v9519, %v9518
    %v9534 = vpack.c.b16 %v9521, %v9520
    %v9535 = vpack.c.b16 %v9523, %v9522
    %v9536 = vpack.c.b16 %v9525, %v9524
    %v9537 = vpack.c.b16 %v9527, %v9526
    %v9538 = vpack.c.b16 %v9529, %v9528
    %v9539 = vpack.c.b16 %v9531, %v9530
    %9548 = vmatprep.subr.bf16.mxu0 0
    %9549 = vmatpush1.bf16.msra.mxu0 %v9532
    %9550 = vmatprep.subr.bf16.mxu0 0
    %9551 = vmatpush1.bf16.msra.mxu0 %v9533
    %9552 = vmatprep.subr.bf16.mxu0 0
    %9553 = vmatpush1.bf16.msra.mxu0 %v9534
    %9554 = vmatprep.subr.bf16.mxu0 0
    %9555 = vmatpush1.bf16.msra.mxu0 %v9535
    %9556 = vmatprep.subr.bf16.mxu0 0
    %9557 = vmatpush1.bf16.msra.mxu0 %v9536
    %9558 = vmatprep.subr.bf16.mxu0 0
    %9559 = vmatpush1.bf16.msra.mxu0 %v9537
    %9560 = vmatprep.subr.bf16.mxu0 0
    %9561 = vmatpush1.bf16.msra.mxu0 %v9538
    %9562 = vmatprep.subr.bf16.mxu0 0
    %9563 = vmatpush1.bf16.msra.mxu0 %v9539
    %9564 = vmatprep.subr.bf16.mxu0 0
    %9565 = vmatpush1.bf16.msra.mxu0 0
    %9566 = vmatprep.subr.bf16.mxu0 0
    %9567 = vmatpush1.bf16.msra.mxu0 0
    %9568 = vmatprep.subr.bf16.mxu0 0
    %9569 = vmatpush1.bf16.msra.mxu0 0
    %9570 = vmatprep.subr.bf16.mxu0 0
    %9571 = vmatpush1.bf16.msra.mxu0 0
    %9572 = vmatprep.subr.bf16.mxu0 0
    %9573 = vmatpush1.bf16.msra.mxu0 0
    %9574 = vmatprep.subr.bf16.mxu0 0
    %9575 = vmatpush1.bf16.msra.mxu0 0
    %9576 = vmatprep.subr.bf16.mxu0 0
    %9577 = vmatpush1.bf16.msra.mxu0 0
    %9578 = vmatprep.subr.bf16.mxu0 0
    %9579 = vmatpush1.bf16.msra.mxu0 0
    %9580 = vmatprep.mubr.bf16.mxu0 0
    %9581 = vmatmul.mubr.bf16.gmra.mrb[0].mxu0 %v9476
    %v9582 = vpop.f32.mrb[0].mxu0
    %v9583 = vadd.f32 %v9498, %v9582
    %v9584 = vpop.f32.mrb[0].mxu0
    %v9585 = vpop.f32.mrb[0].mxu0
    %v9586 = vadd.f32 %v9498, %v9585
    %v9587 = vpop.f32.mrb[0].mxu0
    %9588 = vdwg.mxu0
    %v9589 = vmax.f32 %v9583, 0.0
    %v9590 = vmax.f32 %v9586, 0.0
    %v9591 = vpack.c.bf16 %v9590, %v9589
    %v9592 = vld [vmem:[#allocation29] sm:$0xf]
    %v9593 = vld [vmem:[#allocation29 + $0x4] sm:$0xf]
    %v9594 = vld [vmem:[#allocation29 + $0x8] sm:$0xf]
    %v9595 = vld [vmem:[#allocation29 + $0xc] sm:$0xf]
    %v9596 = vld [vmem:[#allocation29 + $0x10] sm:$0xf]
    %v9597 = vld [vmem:[#allocation29 + $0x14] sm:$0xf]
    %v9598 = vld [vmem:[#allocation29 + $0x18] sm:$0xf]
    %v9599 = vld [vmem:[#allocation29 + $0x1c] sm:$0xf]
    %v9600 = vld [vmem:[#allocation29 + $0x20] sm:$0xf]
    %v9601 = vld [vmem:[#allocation29 + $0x24] sm:$0xf]
    %v9602 = vld [vmem:[#allocation29 + $0x28] sm:$0xf]
    %v9603 = vld [vmem:[#allocation29 + $0x2c] sm:$0xf]
    %v9604 = vld [vmem:[#allocation29 + $0x30] sm:$0xf]
    %v9605 = vld [vmem:[#allocation29 + $0x34] sm:$0xf]
    %v9606 = vld [vmem:[#allocation29 + $0x38] sm:$0xf]
    %v9607 = vld [vmem:[#allocation29 + $0x3c] sm:$0xf]
    %v9608 = vld [vmem:[%s25] sm:$0x1]
    %v9610 = vlaneseq
    %v9611 = vshrl.u32 %v9610, 7
    %v9612 = vsub.s32 0, %v9611
    %v9613 = vrot.slane %v9608, %v9612
    %v9631 = vunpack.c.l.b16 %v9592
    %v9632 = vunpack.c.l.b16 %v9593
    %v9633 = vunpack.c.l.b16 %v9594
    %v9634 = vunpack.c.l.b16 %v9595
    %v9635 = vunpack.c.l.b16 %v9596
    %v9636 = vunpack.c.l.b16 %v9597
    %v9637 = vunpack.c.l.b16 %v9598
    %v9638 = vunpack.c.l.b16 %v9599
    %v9639 = vunpack.c.l.b16 %v9600
    %v9640 = vunpack.c.l.b16 %v9601
    %v9641 = vunpack.c.l.b16 %v9602
    %v9642 = vunpack.c.l.b16 %v9603
    %v9643 = vunpack.c.l.b16 %v9604
    %v9644 = vunpack.c.l.b16 %v9605
    %v9645 = vunpack.c.l.b16 %v9606
    %v9646 = vunpack.c.l.b16 %v9607
    %v9647 = vpack.c.b16 %v9632, %v9631
    %v9648 = vpack.c.b16 %v9634, %v9633
    %v9649 = vpack.c.b16 %v9636, %v9635
    %v9650 = vpack.c.b16 %v9638, %v9637
    %v9651 = vpack.c.b16 %v9640, %v9639
    %v9652 = vpack.c.b16 %v9642, %v9641
    %v9653 = vpack.c.b16 %v9644, %v9643
    %v9654 = vpack.c.b16 %v9646, %v9645
    %9663 = vmatprep.subr.bf16.mxu0 0
    %9664 = vmatpush1.bf16.msra.mxu0 %v9647
    %9665 = vmatprep.subr.bf16.mxu0 0
    %9666 = vmatpush1.bf16.msra.mxu0 %v9648
    %9667 = vmatprep.subr.bf16.mxu0 0
    %9668 = vmatpush1.bf16.msra.mxu0 %v9649
    %9669 = vmatprep.subr.bf16.mxu0 0
    %9670 = vmatpush1.bf16.msra.mxu0 %v9650
    %9671 = vmatprep.subr.bf16.mxu0 0
    %9672 = vmatpush1.bf16.msra.mxu0 %v9651
    %9673 = vmatprep.subr.bf16.mxu0 0
    %9674 = vmatpush1.bf16.msra.mxu0 %v9652
    %9675 = vmatprep.subr.bf16.mxu0 0
    %9676 = vmatpush1.bf16.msra.mxu0 %v9653
    %9677 = vmatprep.subr.bf16.mxu0 0
    %9678 = vmatpush1.bf16.msra.mxu0 %v9654
    %9679 = vmatprep.subr.bf16.mxu0 0
    %9680 = vmatpush1.bf16.msra.mxu0 0
    %9681 = vmatprep.subr.bf16.mxu0 0
    %9682 = vmatpush1.bf16.msra.mxu0 0
    %9683 = vmatprep.subr.bf16.mxu0 0
    %9684 = vmatpush1.bf16.msra.mxu0 0
    %9685 = vmatprep.subr.bf16.mxu0 0
    %9686 = vmatpush1.bf16.msra.mxu0 0
    %9687 = vmatprep.subr.bf16.mxu0 0
    %9688 = vmatpush1.bf16.msra.mxu0 0
    %9689 = vmatprep.subr.bf16.mxu0 0
    %9690 = vmatpush1.bf16.msra.mxu0 0
    %9691 = vmatprep.subr.bf16.mxu0 0
    %9692 = vmatpush1.bf16.msra.mxu0 0
    %9693 = vmatprep.subr.bf16.mxu0 0
    %9694 = vmatpush1.bf16.msra.mxu0 0
    %9695 = vmatprep.mubr.bf16.mxu0 0
    %9696 = vmatmul.mubr.bf16.gmra.mrb[0].mxu0 %v9591
    %v9697 = vpop.f32.mrb[0].mxu0
    %v9698 = vadd.f32 %v9613, %v9697
    %v9699 = vpop.f32.mrb[0].mxu0
    %v9700 = vpop.f32.mrb[0].mxu0
    %v9701 = vadd.f32 %v9613, %v9700
    %v9702 = vpop.f32.mrb[0].mxu0
    %9703 = vdwg.mxu0
    %9704 = vst [vmem:[#allocation31] sm:$0xff] %v9698
    %9705 = vst [vmem:[#allocation31 + $0x8] sm:$0xff] %v9701
    // Predicated region
    $region178: #{tpu_custom_call.1} parent=1 // pred_check
      _
    $region179: #{tpu_custom_call.1} parent=1 // pred_check_branch
      %9707 = sbr.rel (0) target = $region181
    $region180: #{tpu_custom_call.1} parent=1 // pred_region
      %s9709 = ssub.s32 256, 256
      %9710 = vsyncadd [#allocation4], %s9709
      %s9711 = sshll.u32 [#allocation31], 4
      %s9712 = int_to_ptr.vmem [resolvable:$true] %s9711
      %9717 = dma.vmem_to_hbm [thread:$0]  %s9712, 256, %s26, [#allocation4], 128, 128, 8
    $region181: #{tpu_custom_call.1} parent=1 // pred_fallthru
      _
    // Predicated region
    $region182: #{tpu_custom_call.1} parent=1 // pred_check
      _
    $region183: #{tpu_custom_call.1} parent=1 // pred_check_branch
      %9719 = sbr.rel (0) target = $region185
    $region184: #{tpu_custom_call.1} parent=1 // pred_region
      %9720 = dma.done [#allocation4], 256
    $region185: #{tpu_custom_call.1} parent=1 // pred_fallthru
      _
    %9721 = vsyncpa [#allocation3], 1
    %9722 = vsyncpa [#allocation6], 1
    %9723 = vsyncpa [#allocation9], 1
    %9724 = vsyncpa [#allocation12], 1
    %9725 = vsyncpa [#allocation15], 1
    %9726 = vsyncpa [#allocation18], 1
    %9727 = vsyncpa [#allocation21], 1
    %9728 = vsyncpa [#allocation24], 1
    %9729 = vsyncpa [#allocation27], 1
    %9730 = vsyncpa [#allocation30], 1
    %9731 = vsyncpa [#allocation4], 1

</llo_original>
